<compile_context>
chip_gen: v5e
topology: v5e:2x2
jax: 0.10.0
libtpu: 0.0.40
codegen_flags: <defaults>
</compile_context>

<pallas_src>
import functools

import jax
import jax.numpy as jnp
from jax.experimental import pallas as pl
from jax.experimental.pallas import tpu as pltpu

SELU_SCALE = 1.0507009873554804934193349852946
SELU_ALPHA = 1.6732632423543772848170429916717


def _selu(v):
    return SELU_SCALE * jnp.where(v > 0, v, SELU_ALPHA * (jnp.exp(v) - 1.0))


def _rcu_kernel(x_ref, w1_ref, w2_ref, o_ref, pad_ref, shift_ref, acc_ref,
                *, H, W, C):
    """One batch element per grid step.

    pad_ref   : (H+2, W+2, C) f32   zero-bordered activation (shared by both convs)
    shift_ref : (H+2, W, 3C)  bf16  kx-shifted slabs, concatenated on the lane axis
    acc_ref   : (H*W, C)      f32   conv accumulator
    """
    # --- zero only the 1-wide halo border, once per grid step (cheap, and
    #     correct regardless of how the "parallel" grid is split across cores).
    zrow = jnp.zeros((1, W + 2, C), jnp.float32)
    zcol = jnp.zeros((H, 2, C), jnp.float32)
    pad_ref[0:1, :, :] = zrow
    pad_ref[H + 1:H + 2, :, :] = zrow
    pad_ref[1:H + 1, 0:2, :] = zcol          # cols 0,1   (col 1 re-written below)
    pad_ref[1:H + 1, W:W + 2, :] = zcol      # cols W,W+1 (col W re-written below)

    def conv3x3(w_ref):
        """pad_ref interior must hold the conv input; result lands in acc_ref."""
        # Build the three kx-shifted slabs once (3 sublane-shift copies),
        # cast to bf16 for the MXU; destination lane offsets are 128-aligned.
        for kx in range(3):
            shift_ref[:, :, kx * C:(kx + 1) * C] = (
                pad_ref[:, kx:kx + W, :].astype(jnp.bfloat16))
        # Three fused K=3C matmuls (one per ky); the ky slices are free
        # leading-dim slices.  f32 accumulation streams through VMEM scratch.
        for ky in range(3):
            win = shift_ref[ky:ky + H, :, :].reshape(H * W, 3 * C)
            part = jnp.dot(win, w_ref[ky], preferred_element_type=jnp.float32)
            if ky == 0:
                acc_ref[...] = part
            else:
                acc_ref[...] += part

    # conv1: SELU(x) -> conv
    pad_ref[1:H + 1, 1:W + 1, :] = _selu(x_ref[0])
    conv3x3(w1_ref)
    # conv2: SELU(conv1) -> conv
    pad_ref[1:H + 1, 1:W + 1, :] = _selu(acc_ref[...]).reshape(H, W, C)
    conv3x3(w2_ref)
    # residual add (re-read x_ref; don't keep x live across both convs)
    o_ref[0] = (acc_ref[...].reshape(H, W, C) + x_ref[0]).astype(o_ref.dtype)


def rcu_forward_nhwc(x_nhwc, w1_hwio, w2_hwio):
    """x: (N, H, W, C) f32; weights: (3, 3, C, C) HWIO f32. Returns (N, H, W, C)."""
    N, H, W, C = x_nhwc.shape
    # Flatten (kx, Cin) -> K=3C per kernel row and pre-cast once to bf16.
    w1f = w1_hwio.astype(jnp.bfloat16).reshape(3, 3 * C, C)
    w2f = w2_hwio.astype(jnp.bfloat16).reshape(3, 3 * C, C)

    kernel = functools.partial(_rcu_kernel, H=H, W=W, C=C)

    return pl.pallas_call(
        kernel,
        out_shape=jax.ShapeDtypeStruct((N, H, W, C), jnp.float32),
        grid_spec=pltpu.PrefetchScalarGridSpec(
            num_scalar_prefetch=0,
            grid=(N,),
            in_specs=[
                pl.BlockSpec((1, H, W, C), lambda n: (n, 0, 0, 0)),
                pl.BlockSpec((3, 3 * C, C), lambda n: (0, 0, 0)),
                pl.BlockSpec((3, 3 * C, C), lambda n: (0, 0, 0)),
            ],
            out_specs=pl.BlockSpec((1, H, W, C), lambda n: (n, 0, 0, 0)),
            scratch_shapes=[
                pltpu.VMEM((H + 2, W + 2, C), jnp.float32),    # padded activation
                pltpu.VMEM((H + 2, W, 3 * C), jnp.bfloat16),   # kx-shifted slabs
                pltpu.VMEM((H * W, C), jnp.float32),           # conv accumulator
            ],
        ),
        compiler_params=pltpu.CompilerParams(
            dimension_semantics=("parallel",)),
    )(x_nhwc, w1f, w2f)


def rcu_forward_nchw(x_nchw, w1_hwio, w2_hwio):
    """PyTorch-layout convenience wrapper (prefer the NHWC entry point)."""
    out = rcu_forward_nhwc(jnp.transpose(x_nchw, (0, 2, 3, 1)), w1_hwio, w2_hwio)
    return jnp.transpose(out, (0, 3, 1, 2))


def rcu_reference_nhwc(x, w1_hwio, w2_hwio):
    """Pure-JAX reference with matching bf16-operand / f32-accumulate precision."""
    dn = jax.lax.conv_dimension_numbers(x.shape, w1_hwio.shape,
                                        ("NHWC", "HWIO", "NHWC"))

    def conv(a, w):
        return jax.lax.conv_general_dilated(
            a.astype(jnp.bfloat16), w.astype(jnp.bfloat16), (1, 1), "SAME",
            dimension_numbers=dn, preferred_element_type=jnp.float32)

    h = conv(_selu(x), w1_hwio)
    h = conv(_selu(h), w2_hwio)
    return h + x


if __name__ == "__main__":
    # RCU needs inplanes == planes (residual add).  C=128 keeps the lane axis /
    # MXU columns / output stores dense, as in production RefineNet (C=256/512),
    # while staying small.
    N, C, H, W = 2, 128, 16, 16

    key = jax.random.PRNGKey(0)
    k_x, k_w1, k_w2 = jax.random.split(key, 3)
    x = jax.random.normal(k_x, (N, H, W, C), dtype=jnp.float32)
    w1 = jax.random.normal(k_w1, (3, 3, C, C), dtype=jnp.float32) * 0.05
    w2 = jax.random.normal(k_w2, (3, 3, C, C), dtype=jnp.float32) * 0.05

    out = jax.block_until_ready(rcu_forward_nhwc(x, w1, w2))
    ref = jax.block_until_ready(rcu_reference_nhwc(x, w1, w2))

    assert out.shape == (N, H, W, C), out.shape
    max_err = float(jnp.max(jnp.abs(out - ref)))
    assert jnp.allclose(out, ref, atol=1e-2, rtol=1e-2), max_err
    print("KERNEL_OK")
</pallas_src>

<mosaic_0001>
module attributes {stable_mosaic.version = 11 : i64} {
  func.func @_rcu_kernel(%arg0: i32, %arg1: memref<1x16x16x128xf32, #tpu.memory_space<vmem>>, %arg2: memref<3x384x128xbf16, #tpu.memory_space<vmem>>, %arg3: memref<3x384x128xbf16, #tpu.memory_space<vmem>>, %arg4: memref<1x16x16x128xf32, #tpu.memory_space<vmem>>, %arg5: memref<18x18x128xf32, #tpu.memory_space<vmem>>, %arg6: memref<18x16x384xbf16, #tpu.memory_space<vmem>>, %arg7: memref<256x128xf32, #tpu.memory_space<vmem>>) attributes {dimension_semantics = [#tpu.dimension_semantics<parallel>], iteration_bounds = array<i64: 2>, scalar_prefetch = 0 : i64, scratch_operands = 3 : i64, tpu.core_type = #tpu.core_type<tc>, window_params = [{transform_indices = @transform_0, window_bounds = array<i64: 1, 16, 16, 128>}, {pipeline_mode = #tpu.pipeline_mode<synchronous>, transform_indices = @transform_1, window_bounds = array<i64: 3, 384, 128>}, {pipeline_mode = #tpu.pipeline_mode<synchronous>, transform_indices = @transform_2, window_bounds = array<i64: 3, 384, 128>}, {transform_indices = @transform_3, window_bounds = array<i64: 1, 16, 16, 128>}]} {
    %cst = arith.constant 0.000000e+00 : f32
    %0 = vector.broadcast %cst : f32 to vector<1x18x128xf32>
    %cst_0 = arith.constant 0.000000e+00 : f32
    %1 = vector.broadcast %cst_0 : f32 to vector<16x2x128xf32>
    %c0 = arith.constant 0 : index
    %c0_1 = arith.constant 0 : index
    %c0_2 = arith.constant 0 : index
    %2 = vector.load %arg5[%c0, %c0_1, %c0_2] : memref<18x18x128xf32, #tpu.memory_space<vmem>>, vector<1x18x128xf32>
    tpu.vector_store %arg5[%c0, %c0_1, %c0_2], %0 {strides = array<i32>} : memref<18x18x128xf32, #tpu.memory_space<vmem>>, vector<1x18x128xf32>,
    %c17 = arith.constant 17 : index
    %c0_3 = arith.constant 0 : index
    %c0_4 = arith.constant 0 : index
    %3 = vector.load %arg5[%c17, %c0_3, %c0_4] : memref<18x18x128xf32, #tpu.memory_space<vmem>>, vector<1x18x128xf32>
    tpu.vector_store %arg5[%c17, %c0_3, %c0_4], %0 {strides = array<i32>} : memref<18x18x128xf32, #tpu.memory_space<vmem>>, vector<1x18x128xf32>,
    %c1 = arith.constant 1 : index
    %c0_5 = arith.constant 0 : index
    %c0_6 = arith.constant 0 : index
    %4 = vector.load %arg5[%c1, %c0_5, %c0_6] : memref<18x18x128xf32, #tpu.memory_space<vmem>>, vector<16x2x128xf32>
    tpu.vector_store %arg5[%c1, %c0_5, %c0_6], %1 {strides = array<i32>} : memref<18x18x128xf32, #tpu.memory_space<vmem>>, vector<16x2x128xf32>,
    %c1_7 = arith.constant 1 : index
    %c16 = arith.constant 16 : index
    %c0_8 = arith.constant 0 : index
    %5 = vector.load %arg5[%c1_7, %c16, %c0_8] : memref<18x18x128xf32, #tpu.memory_space<vmem>>, vector<16x2x128xf32>
    tpu.vector_store %arg5[%c1_7, %c16, %c0_8], %1 {strides = array<i32>} : memref<18x18x128xf32, #tpu.memory_space<vmem>>, vector<16x2x128xf32>,
    %c0_9 = arith.constant 0 : index
    %c0_10 = arith.constant 0 : index
    %c0_11 = arith.constant 0 : index
    %c0_12 = arith.constant 0 : index
    %6 = vector.load %arg1[%c0_9, %c0_10, %c0_11, %c0_12] : memref<1x16x16x128xf32, #tpu.memory_space<vmem>>, vector<1x16x16x128xf32>
    %7 = vector.shape_cast %6 : vector<1x16x16x128xf32> to vector<16x16x128xf32>
    %cst_13 = arith.constant 0.000000e+00 : f32
    %8 = vector.broadcast %cst_13 : f32 to vector<16x16x128xf32>
    %9 = arith.cmpf ogt, %7, %8 : vector<16x16x128xf32>
    %10 = math.exp %7 : vector<16x16x128xf32>
    %cst_14 = arith.constant 1.000000e+00 : f32
    %11 = vector.broadcast %cst_14 : f32 to vector<16x16x128xf32>
    %12 = arith.subf %10, %11 : vector<16x16x128xf32>
    %cst_15 = arith.constant 1.67326319 : f32
    %13 = vector.broadcast %cst_15 : f32 to vector<16x16x128xf32>
    %14 = arith.mulf %13, %12 : vector<16x16x128xf32>
    %15 = arith.select %9, %7, %14 : vector<16x16x128xi1>, vector<16x16x128xf32>
    %cst_16 = arith.constant 1.05070102 : f32
    %16 = vector.broadcast %cst_16 : f32 to vector<16x16x128xf32>
    %17 = arith.mulf %16, %15 : vector<16x16x128xf32>
    %c1_17 = arith.constant 1 : index
    %c1_18 = arith.constant 1 : index
    %c0_19 = arith.constant 0 : index
    %18 = vector.load %arg5[%c1_17, %c1_18, %c0_19] : memref<18x18x128xf32, #tpu.memory_space<vmem>>, vector<16x16x128xf32>
    tpu.vector_store %arg5[%c1_17, %c1_18, %c0_19], %17 {strides = array<i32>} : memref<18x18x128xf32, #tpu.memory_space<vmem>>, vector<16x16x128xf32>,
    %c0_20 = arith.constant 0 : index
    %c0_21 = arith.constant 0 : index
    %c0_22 = arith.constant 0 : index
    %19 = vector.load %arg5[%c0_20, %c0_21, %c0_22] : memref<18x18x128xf32, #tpu.memory_space<vmem>>, vector<18x16x128xf32>
    %20 = arith.truncf %19 : vector<18x16x128xf32> to vector<18x16x128xbf16>
    %c0_23 = arith.constant 0 : index
    %c0_24 = arith.constant 0 : index
    %c0_25 = arith.constant 0 : index
    %21 = vector.load %arg6[%c0_23, %c0_24, %c0_25] : memref<18x16x384xbf16, #tpu.memory_space<vmem>>, vector<18x16x128xbf16>
    tpu.vector_store %arg6[%c0_23, %c0_24, %c0_25], %20 {strides = array<i32>} : memref<18x16x384xbf16, #tpu.memory_space<vmem>>, vector<18x16x128xbf16>,
    %c0_26 = arith.constant 0 : index
    %c1_27 = arith.constant 1 : index
    %c0_28 = arith.constant 0 : index
    %22 = vector.load %arg5[%c0_26, %c1_27, %c0_28] : memref<18x18x128xf32, #tpu.memory_space<vmem>>, vector<18x16x128xf32>
    %23 = arith.truncf %22 : vector<18x16x128xf32> to vector<18x16x128xbf16>
    %c0_29 = arith.constant 0 : index
    %c0_30 = arith.constant 0 : index
    %c128 = arith.constant 128 : index
    %24 = vector.load %arg6[%c0_29, %c0_30, %c128] : memref<18x16x384xbf16, #tpu.memory_space<vmem>>, vector<18x16x128xbf16>
    tpu.vector_store %arg6[%c0_29, %c0_30, %c128], %23 {strides = array<i32>} : memref<18x16x384xbf16, #tpu.memory_space<vmem>>, vector<18x16x128xbf16>,
    %c0_31 = arith.constant 0 : index
    %c2 = arith.constant 2 : index
    %c0_32 = arith.constant 0 : index
    %25 = vector.load %arg5[%c0_31, %c2, %c0_32] : memref<18x18x128xf32, #tpu.memory_space<vmem>>, vector<18x16x128xf32>
    %26 = arith.truncf %25 : vector<18x16x128xf32> to vector<18x16x128xbf16>
    %c0_33 = arith.constant 0 : index
    %c0_34 = arith.constant 0 : index
    %c256 = arith.constant 256 : index
    %27 = vector.load %arg6[%c0_33, %c0_34, %c256] : memref<18x16x384xbf16, #tpu.memory_space<vmem>>, vector<18x16x128xbf16>
    tpu.vector_store %arg6[%c0_33, %c0_34, %c256], %26 {strides = array<i32>} : memref<18x16x384xbf16, #tpu.memory_space<vmem>>, vector<18x16x128xbf16>,
    %c0_35 = arith.constant 0 : index
    %c0_36 = arith.constant 0 : index
    %c0_37 = arith.constant 0 : index
    %28 = vector.load %arg6[%c0_35, %c0_36, %c0_37] : memref<18x16x384xbf16, #tpu.memory_space<vmem>>, vector<16x16x384xbf16>
    %29 = vector.shape_cast %28 : vector<16x16x384xbf16> to vector<256x384xbf16>
    %c0_38 = arith.constant 0 : index
    %c0_39 = arith.constant 0 : index
    %c0_40 = arith.constant 0 : index
    %30 = vector.load %arg2[%c0_38, %c0_39, %c0_40] : memref<3x384x128xbf16, #tpu.memory_space<vmem>>, vector<1x384x128xbf16>
    %31 = vector.shape_cast %30 : vector<1x384x128xbf16> to vector<384x128xbf16>
    %cst_41 = arith.constant dense<0.000000e+00> : vector<256x128xf32>
    %32 = tpu.matmul %29, %31, %cst_41 {dimension_numbers = #tpu.dot_dimension_numbers<[1], [0], [0], [1], [0, 0, 1, 1], [], []>} : vector<256x384xbf16>, vector<384x128xbf16>, vector<256x128xf32> -> vector<256x128xf32>
    %c0_42 = arith.constant 0 : index
    %c0_43 = arith.constant 0 : index
    %33 = vector.load %arg7[%c0_42, %c0_43] : memref<256x128xf32, #tpu.memory_space<vmem>>, vector<256x128xf32>
    tpu.vector_store %arg7[%c0_42, %c0_43], %32 {strides = array<i32>} : memref<256x128xf32, #tpu.memory_space<vmem>>, vector<256x128xf32>,
    %c1_44 = arith.constant 1 : index
    %c0_45 = arith.constant 0 : index
    %c0_46 = arith.constant 0 : index
    %34 = vector.load %arg6[%c1_44, %c0_45, %c0_46] : memref<18x16x384xbf16, #tpu.memory_space<vmem>>, vector<16x16x384xbf16>
    %35 = vector.shape_cast %34 : vector<16x16x384xbf16> to vector<256x384xbf16>
    %c1_47 = arith.constant 1 : index
    %c0_48 = arith.constant 0 : index
    %c0_49 = arith.constant 0 : index
    %36 = vector.load %arg2[%c1_47, %c0_48, %c0_49] : memref<3x384x128xbf16, #tpu.memory_space<vmem>>, vector<1x384x128xbf16>
    %37 = vector.shape_cast %36 : vector<1x384x128xbf16> to vector<384x128xbf16>
    %cst_50 = arith.constant dense<0.000000e+00> : vector<256x128xf32>
    %38 = tpu.matmul %35, %37, %cst_50 {dimension_numbers = #tpu.dot_dimension_numbers<[1], [0], [0], [1], [0, 0, 1, 1], [], []>} : vector<256x384xbf16>, vector<384x128xbf16>, vector<256x128xf32> -> vector<256x128xf32>
    %c0_51 = arith.constant 0 : index
    %c0_52 = arith.constant 0 : index
    %39 = vector.load %arg7[%c0_51, %c0_52] : memref<256x128xf32, #tpu.memory_space<vmem>>, vector<256x128xf32>
    %40 = arith.addf %39, %38 : vector<256x128xf32>
    %c0_53 = arith.constant 0 : index
    %c0_54 = arith.constant 0 : index
    %41 = vector.load %arg7[%c0_53, %c0_54] : memref<256x128xf32, #tpu.memory_space<vmem>>, vector<256x128xf32>
    tpu.vector_store %arg7[%c0_53, %c0_54], %40 {strides = array<i32>} : memref<256x128xf32, #tpu.memory_space<vmem>>, vector<256x128xf32>,
    %c2_55 = arith.constant 2 : index
    %c0_56 = arith.constant 0 : index
    %c0_57 = arith.constant 0 : index
    %42 = vector.load %arg6[%c2_55, %c0_56, %c0_57] : memref<18x16x384xbf16, #tpu.memory_space<vmem>>, vector<16x16x384xbf16>
    %43 = vector.shape_cast %42 : vector<16x16x384xbf16> to vector<256x384xbf16>
    %c2_58 = arith.constant 2 : index
    %c0_59 = arith.constant 0 : index
    %c0_60 = arith.constant 0 : index
    %44 = vector.load %arg2[%c2_58, %c0_59, %c0_60] : memref<3x384x128xbf16, #tpu.memory_space<vmem>>, vector<1x384x128xbf16>
    %45 = vector.shape_cast %44 : vector<1x384x128xbf16> to vector<384x128xbf16>
    %cst_61 = arith.constant dense<0.000000e+00> : vector<256x128xf32>
    %46 = tpu.matmul %43, %45, %cst_61 {dimension_numbers = #tpu.dot_dimension_numbers<[1], [0], [0], [1], [0, 0, 1, 1], [], []>} : vector<256x384xbf16>, vector<384x128xbf16>, vector<256x128xf32> -> vector<256x128xf32>
    %c0_62 = arith.constant 0 : index
    %c0_63 = arith.constant 0 : index
    %47 = vector.load %arg7[%c0_62, %c0_63] : memref<256x128xf32, #tpu.memory_space<vmem>>, vector<256x128xf32>
    %48 = arith.addf %47, %46 : vector<256x128xf32>
    %c0_64 = arith.constant 0 : index
    %c0_65 = arith.constant 0 : index
    %49 = vector.load %arg7[%c0_64, %c0_65] : memref<256x128xf32, #tpu.memory_space<vmem>>, vector<256x128xf32>
    tpu.vector_store %arg7[%c0_64, %c0_65], %48 {strides = array<i32>} : memref<256x128xf32, #tpu.memory_space<vmem>>, vector<256x128xf32>,
    %c0_66 = arith.constant 0 : index
    %c0_67 = arith.constant 0 : index
    %50 = vector.load %arg7[%c0_66, %c0_67] : memref<256x128xf32, #tpu.memory_space<vmem>>, vector<256x128xf32>
    %cst_68 = arith.constant 0.000000e+00 : f32
    %51 = vector.broadcast %cst_68 : f32 to vector<256x128xf32>
    %52 = arith.cmpf ogt, %50, %51 : vector<256x128xf32>
    %53 = math.exp %50 : vector<256x128xf32>
    %cst_69 = arith.constant 1.000000e+00 : f32
    %54 = vector.broadcast %cst_69 : f32 to vector<256x128xf32>
    %55 = arith.subf %53, %54 : vector<256x128xf32>
    %cst_70 = arith.constant 1.67326319 : f32
    %56 = vector.broadcast %cst_70 : f32 to vector<256x128xf32>
    %57 = arith.mulf %56, %55 : vector<256x128xf32>
    %58 = arith.select %52, %50, %57 : vector<256x128xi1>, vector<256x128xf32>
    %cst_71 = arith.constant 1.05070102 : f32
    %59 = vector.broadcast %cst_71 : f32 to vector<256x128xf32>
    %60 = arith.mulf %59, %58 : vector<256x128xf32>
    %61 = vector.shape_cast %60 : vector<256x128xf32> to vector<16x16x128xf32>
    %c1_72 = arith.constant 1 : index
    %c1_73 = arith.constant 1 : index
    %c0_74 = arith.constant 0 : index
    %62 = vector.load %arg5[%c1_72, %c1_73, %c0_74] : memref<18x18x128xf32, #tpu.memory_space<vmem>>, vector<16x16x128xf32>
    tpu.vector_store %arg5[%c1_72, %c1_73, %c0_74], %61 {strides = array<i32>} : memref<18x18x128xf32, #tpu.memory_space<vmem>>, vector<16x16x128xf32>,
    %c0_75 = arith.constant 0 : index
    %c0_76 = arith.constant 0 : index
    %c0_77 = arith.constant 0 : index
    %63 = vector.load %arg5[%c0_75, %c0_76, %c0_77] : memref<18x18x128xf32, #tpu.memory_space<vmem>>, vector<18x16x128xf32>
    %64 = arith.truncf %63 : vector<18x16x128xf32> to vector<18x16x128xbf16>
    %c0_78 = arith.constant 0 : index
    %c0_79 = arith.constant 0 : index
    %c0_80 = arith.constant 0 : index
    %65 = vector.load %arg6[%c0_78, %c0_79, %c0_80] : memref<18x16x384xbf16, #tpu.memory_space<vmem>>, vector<18x16x128xbf16>
    tpu.vector_store %arg6[%c0_78, %c0_79, %c0_80], %64 {strides = array<i32>} : memref<18x16x384xbf16, #tpu.memory_space<vmem>>, vector<18x16x128xbf16>,
    %c0_81 = arith.constant 0 : index
    %c1_82 = arith.constant 1 : index
    %c0_83 = arith.constant 0 : index
    %66 = vector.load %arg5[%c0_81, %c1_82, %c0_83] : memref<18x18x128xf32, #tpu.memory_space<vmem>>, vector<18x16x128xf32>
    %67 = arith.truncf %66 : vector<18x16x128xf32> to vector<18x16x128xbf16>
    %c0_84 = arith.constant 0 : index
    %c0_85 = arith.constant 0 : index
    %c128_86 = arith.constant 128 : index
    %68 = vector.load %arg6[%c0_84, %c0_85, %c128_86] : memref<18x16x384xbf16, #tpu.memory_space<vmem>>, vector<18x16x128xbf16>
    tpu.vector_store %arg6[%c0_84, %c0_85, %c128_86], %67 {strides = array<i32>} : memref<18x16x384xbf16, #tpu.memory_space<vmem>>, vector<18x16x128xbf16>,
    %c0_87 = arith.constant 0 : index
    %c2_88 = arith.constant 2 : index
    %c0_89 = arith.constant 0 : index
    %69 = vector.load %arg5[%c0_87, %c2_88, %c0_89] : memref<18x18x128xf32, #tpu.memory_space<vmem>>, vector<18x16x128xf32>
    %70 = arith.truncf %69 : vector<18x16x128xf32> to vector<18x16x128xbf16>
    %c0_90 = arith.constant 0 : index
    %c0_91 = arith.constant 0 : index
    %c256_92 = arith.constant 256 : index
    %71 = vector.load %arg6[%c0_90, %c0_91, %c256_92] : memref<18x16x384xbf16, #tpu.memory_space<vmem>>, vector<18x16x128xbf16>
    tpu.vector_store %arg6[%c0_90, %c0_91, %c256_92], %70 {strides = array<i32>} : memref<18x16x384xbf16, #tpu.memory_space<vmem>>, vector<18x16x128xbf16>,
    %c0_93 = arith.constant 0 : index
    %c0_94 = arith.constant 0 : index
    %c0_95 = arith.constant 0 : index
    %72 = vector.load %arg6[%c0_93, %c0_94, %c0_95] : memref<18x16x384xbf16, #tpu.memory_space<vmem>>, vector<16x16x384xbf16>
    %73 = vector.shape_cast %72 : vector<16x16x384xbf16> to vector<256x384xbf16>
    %c0_96 = arith.constant 0 : index
    %c0_97 = arith.constant 0 : index
    %c0_98 = arith.constant 0 : index
    %74 = vector.load %arg3[%c0_96, %c0_97, %c0_98] : memref<3x384x128xbf16, #tpu.memory_space<vmem>>, vector<1x384x128xbf16>
    %75 = vector.shape_cast %74 : vector<1x384x128xbf16> to vector<384x128xbf16>
    %cst_99 = arith.constant dense<0.000000e+00> : vector<256x128xf32>
    %76 = tpu.matmul %73, %75, %cst_99 {dimension_numbers = #tpu.dot_dimension_numbers<[1], [0], [0], [1], [0, 0, 1, 1], [], []>} : vector<256x384xbf16>, vector<384x128xbf16>, vector<256x128xf32> -> vector<256x128xf32>
    %c0_100 = arith.constant 0 : index
    %c0_101 = arith.constant 0 : index
    %77 = vector.load %arg7[%c0_100, %c0_101] : memref<256x128xf32, #tpu.memory_space<vmem>>, vector<256x128xf32>
    tpu.vector_store %arg7[%c0_100, %c0_101], %76 {strides = array<i32>} : memref<256x128xf32, #tpu.memory_space<vmem>>, vector<256x128xf32>,
    %c1_102 = arith.constant 1 : index
    %c0_103 = arith.constant 0 : index
    %c0_104 = arith.constant 0 : index
    %78 = vector.load %arg6[%c1_102, %c0_103, %c0_104] : memref<18x16x384xbf16, #tpu.memory_space<vmem>>, vector<16x16x384xbf16>
    %79 = vector.shape_cast %78 : vector<16x16x384xbf16> to vector<256x384xbf16>
    %c1_105 = arith.constant 1 : index
    %c0_106 = arith.constant 0 : index
    %c0_107 = arith.constant 0 : index
    %80 = vector.load %arg3[%c1_105, %c0_106, %c0_107] : memref<3x384x128xbf16, #tpu.memory_space<vmem>>, vector<1x384x128xbf16>
    %81 = vector.shape_cast %80 : vector<1x384x128xbf16> to vector<384x128xbf16>
    %cst_108 = arith.constant dense<0.000000e+00> : vector<256x128xf32>
    %82 = tpu.matmul %79, %81, %cst_108 {dimension_numbers = #tpu.dot_dimension_numbers<[1], [0], [0], [1], [0, 0, 1, 1], [], []>} : vector<256x384xbf16>, vector<384x128xbf16>, vector<256x128xf32> -> vector<256x128xf32>
    %c0_109 = arith.constant 0 : index
    %c0_110 = arith.constant 0 : index
    %83 = vector.load %arg7[%c0_109, %c0_110] : memref<256x128xf32, #tpu.memory_space<vmem>>, vector<256x128xf32>
    %84 = arith.addf %83, %82 : vector<256x128xf32>
    %c0_111 = arith.constant 0 : index
    %c0_112 = arith.constant 0 : index
    %85 = vector.load %arg7[%c0_111, %c0_112] : memref<256x128xf32, #tpu.memory_space<vmem>>, vector<256x128xf32>
    tpu.vector_store %arg7[%c0_111, %c0_112], %84 {strides = array<i32>} : memref<256x128xf32, #tpu.memory_space<vmem>>, vector<256x128xf32>,
    %c2_113 = arith.constant 2 : index
    %c0_114 = arith.constant 0 : index
    %c0_115 = arith.constant 0 : index
    %86 = vector.load %arg6[%c2_113, %c0_114, %c0_115] : memref<18x16x384xbf16, #tpu.memory_space<vmem>>, vector<16x16x384xbf16>
    %87 = vector.shape_cast %86 : vector<16x16x384xbf16> to vector<256x384xbf16>
    %c2_116 = arith.constant 2 : index
    %c0_117 = arith.constant 0 : index
    %c0_118 = arith.constant 0 : index
    %88 = vector.load %arg3[%c2_116, %c0_117, %c0_118] : memref<3x384x128xbf16, #tpu.memory_space<vmem>>, vector<1x384x128xbf16>
    %89 = vector.shape_cast %88 : vector<1x384x128xbf16> to vector<384x128xbf16>
    %cst_119 = arith.constant dense<0.000000e+00> : vector<256x128xf32>
    %90 = tpu.matmul %87, %89, %cst_119 {dimension_numbers = #tpu.dot_dimension_numbers<[1], [0], [0], [1], [0, 0, 1, 1], [], []>} : vector<256x384xbf16>, vector<384x128xbf16>, vector<256x128xf32> -> vector<256x128xf32>
    %c0_120 = arith.constant 0 : index
    %c0_121 = arith.constant 0 : index
    %91 = vector.load %arg7[%c0_120, %c0_121] : memref<256x128xf32, #tpu.memory_space<vmem>>, vector<256x128xf32>
    %92 = arith.addf %91, %90 : vector<256x128xf32>
    %c0_122 = arith.constant 0 : index
    %c0_123 = arith.constant 0 : index
    %93 = vector.load %arg7[%c0_122, %c0_123] : memref<256x128xf32, #tpu.memory_space<vmem>>, vector<256x128xf32>
    tpu.vector_store %arg7[%c0_122, %c0_123], %92 {strides = array<i32>} : memref<256x128xf32, #tpu.memory_space<vmem>>, vector<256x128xf32>,
    %c0_124 = arith.constant 0 : index
    %c0_125 = arith.constant 0 : index
    %94 = vector.load %arg7[%c0_124, %c0_125] : memref<256x128xf32, #tpu.memory_space<vmem>>, vector<256x128xf32>
    %95 = vector.shape_cast %94 : vector<256x128xf32> to vector<16x16x128xf32>
    %c0_126 = arith.constant 0 : index
    %c0_127 = arith.constant 0 : index
    %c0_128 = arith.constant 0 : index
    %c0_129 = arith.constant 0 : index
    %96 = vector.load %arg1[%c0_126, %c0_127, %c0_128, %c0_129] : memref<1x16x16x128xf32, #tpu.memory_space<vmem>>, vector<1x16x16x128xf32>
    %97 = vector.shape_cast %96 : vector<1x16x16x128xf32> to vector<16x16x128xf32>
    %98 = arith.addf %95, %97 : vector<16x16x128xf32>
    %c0_130 = arith.constant 0 : index
    %c0_131 = arith.constant 0 : index
    %c0_132 = arith.constant 0 : index
    %c0_133 = arith.constant 0 : index
    %99 = vector.load %arg4[%c0_130, %c0_131, %c0_132, %c0_133] : memref<1x16x16x128xf32, #tpu.memory_space<vmem>>, vector<1x16x16x128xf32>
    %100 = vector.shape_cast %99 : vector<1x16x16x128xf32> to vector<16x16x128xf32>
    %101 = vector.shape_cast %98 : vector<16x16x128xf32> to vector<1x16x16x128xf32>
    tpu.vector_store %arg4[%c0_130, %c0_131, %c0_132, %c0_133], %101 {strides = array<i32>} : memref<1x16x16x128xf32, #tpu.memory_space<vmem>>, vector<1x16x16x128xf32>,
    return
  }
  func.func @transform_0(%arg0: i32) -> (i32, i32, i32, i32) {
    %c0_i32 = arith.constant 0 : i32
    %c0_i32_0 = arith.constant 0 : i32
    %c0_i32_1 = arith.constant 0 : i32
    %c0_i32_2 = arith.constant 0 : i32
    return %arg0, %c0_i32, %c0_i32_0, %c0_i32_1 : i32, i32, i32, i32
  }
  func.func @transform_1(%arg0: i32) -> (i32, i32, i32) {
    %c0_i32 = arith.constant 0 : i32
    %c0_i32_0 = arith.constant 0 : i32
    %c0_i32_1 = arith.constant 0 : i32
    %c0_i32_2 = arith.constant 0 : i32
    return %c0_i32, %c0_i32_0, %c0_i32_1 : i32, i32, i32
  }
  func.func @transform_2(%arg0: i32) -> (i32, i32, i32) {
    %c0_i32 = arith.constant 0 : i32
    %c0_i32_0 = arith.constant 0 : i32
    %c0_i32_1 = arith.constant 0 : i32
    %c0_i32_2 = arith.constant 0 : i32
    return %c0_i32, %c0_i32_0, %c0_i32_1 : i32, i32, i32
  }
  func.func @transform_3(%arg0: i32) -> (i32, i32, i32, i32) {
    %c0_i32 = arith.constant 0 : i32
    %c0_i32_0 = arith.constant 0 : i32
    %c0_i32_1 = arith.constant 0 : i32
    %c0_i32_2 = arith.constant 0 : i32
    return %arg0, %c0_i32, %c0_i32_0, %c0_i32_1 : i32, i32, i32, i32
  }
}

</mosaic_0001>

<llo_original>
// kernel: tpu_custom_call.1
$region0: #{tpu_custom_call.1}
  #allocation0 [shape = 'u32[]', space=smem, size = 0x4, offset = 0x4, fixed_abs, tag = 'smem constant byte address 0x4 - core index']
  #allocation1 [shape = 'u32[72,128]{1,0:T(1,128)}', space=vmem, size = 0x9000, scoped, tag = 'internal scratch']
  #allocation2 [shape = 'f32[18,18,128]{2,1,0:T(8,128)}', space=vmem, size = 0x36000, scoped, tag = 'scratch operand']
  #allocation3 [shape = 'bf16[18,16,384]{2,1,0:T(8,128)(2,1)}', space=vmem, size = 0x36000, scoped, tag = 'scratch operand']
  #allocation4 [shape = 'f32[256,128]{1,0:T(8,128)}', space=vmem, size = 0x20000, scoped, tag = 'scratch operand']
  %s0 = inlined_call_operand.hbm [shape: f32[2,16,16,128], index: 0, kind: input, shape index: {}]
  %s1 = inlined_call_operand.hbm [shape: bf16[3,384,128], index: 1, kind: input, shape index: {}]
  %s2 = inlined_call_operand.hbm [shape: bf16[3,384,128], index: 2, kind: input, shape index: {}]
  %s3 = inlined_call_operand.hbm [shape: f32[2,16,16,128], index: 3, kind: output, shape index: {}]
  %s4 = sld [smem:[#allocation0]]
  $region57: #{tpu_custom_call.1} parent=0
    _
  %s6 = ssub.s32 1, %s4
  %s7 = scalar_select 0, %s6, %s4
  $region1: #{tpu_custom_call.1} parent=0
    #allocation5 [shape = 'u8[262144]{0}', space=vmem, size = 0x40000, scoped, tag = 'input window, operand 0']
    #allocation6 [shape = 's32[2]{0}', space=sflag, size = 0x8, scoped, tag = 'scoped memory for tpu_custom_call.1']
    #allocation7 [shape = 's32[2]{0}', space=sflag, size = 0x8, scoped, tag = 'scoped memory for tpu_custom_call.1']
    #allocation8 [shape = 'u8[294912]{0}', space=vmem, size = 0x48000, scoped, tag = 'input window, operand 1, single buffered']
    #allocation9 [shape = 's32[1]{0}', space=sflag, size = 0x4, scoped, tag = 'scoped memory for tpu_custom_call.1']
    #allocation10 [shape = 'u8[294912]{0}', space=vmem, size = 0x48000, scoped, tag = 'input window, operand 2, single buffered']
    #allocation11 [shape = 'u8[262144]{0}', space=vmem, size = 0x40000, scoped, tag = 'output window, operand 0']
    %8 = vsyncpa [#allocation6], 0
    %s9 = scalar_lea.sflag [#allocation6], 1
    %10 = vsyncpa %s9, 0
    %11 = vsyncpa [#allocation9], 0
    %12 = vsyncpa [#allocation7], 0
    %s13 = scalar_lea.sflag [#allocation7], 1
    %14 = vsyncpa %s13, 0
    loop: start=0, step=1, limit=4
    $region2: #{tpu_custom_call.1} parent=1 // loop_pre_header
      _
    $region3: #{tpu_custom_call.1} parent=1 // loop_header
      %s16 = sphi 0, %s20
      %p17 = scmp.ge.s32.totalorder %s16, 4
      %s26 = sphi 0, %s28
      %s29 = sphi 0, %s26
      %s30 = sphi 0, %s29
      %s46 = sphi 0, %s30
      %s50 = sphi 0, %s50
      %s52 = sphi 0, %s50
      %s53 = sphi 0, %s52
      %s67 = sphi 0, %s53
      %s71 = sphi 0, %s71
      %s73 = sphi 0, %s71
      %s74 = sphi 0, %s73
      %s88 = sphi 0, %s74
      %s94 = sphi 0, %s96
      %s97 = sphi 0, %s94
      %s98 = sphi 0, %s97
      %s114 = sphi 0, %s98
    $region4: #{tpu_custom_call.1} parent=1 // loop_header_branch
      %19 = sbr.rel (%p17) target = $region8
    $region5: #{tpu_custom_call.1} parent=1 // loop_body
      %s21 = ssub.s32 %s16, 1
      %s22 = ssub.s32 %s16, 2
      %s23 = sadd.s32 %s16, 1
      %s24 = ssub.s32 %s16, %s23
      %p25 = scmp.eq.s32.totalorder %s24, 0
      %s27 = sadd.s32 %s26, 1
      %s28 = scalar_select %p25, %s26, %s27
      %p31 = pneg %p25
      %p32 = scmp.eq.s32.totalorder %s16, 1
      %p33 = por %p31, %p32
      %p34 = scmp.ne.s32.totalorder %s26, %s29
      %p35 = scmp.eq.s32.totalorder %s16, 0
      %p36 = por %p34, %p35
      %p37 = scmp.ne.s32.totalorder %s26, %s29
      %p38 = scmp.eq.s32.totalorder %s21, 1
      %p39 = por %p37, %p38
      %p40 = scmp.ne.s32.totalorder %s29, %s30
      %p41 = scmp.eq.s32.totalorder %s21, 0
      %p42 = por %p40, %p41
      %p43 = scmp.ne.s32.totalorder %s29, %s30
      %p44 = scmp.eq.s32.totalorder %s22, 1
      %p45 = por %p43, %p44
      %p47 = scmp.ne.s32.totalorder %s30, %s46
      %p48 = scmp.eq.s32.totalorder %s22, 0
      %p49 = por %p47, %p48
      %s51 = sadd.s32 %s50, 1
      %p54 = scmp.eq.s32.totalorder %s16, 1
      %p55 = scmp.ne.s32.totalorder %s50, %s52
      %p56 = scmp.eq.s32.totalorder %s16, 0
      %p57 = por %p55, %p56
      %p58 = scmp.ne.s32.totalorder %s50, %s52
      %p59 = scmp.eq.s32.totalorder %s21, 1
      %p60 = por %p58, %p59
      %p61 = scmp.ne.s32.totalorder %s52, %s53
      %p62 = scmp.eq.s32.totalorder %s21, 0
      %p63 = por %p61, %p62
      %p64 = scmp.ne.s32.totalorder %s52, %s53
      %p65 = scmp.eq.s32.totalorder %s22, 1
      %p66 = por %p64, %p65
      %p68 = scmp.ne.s32.totalorder %s53, %s67
      %p69 = scmp.eq.s32.totalorder %s22, 0
      %p70 = por %p68, %p69
      %s72 = sadd.s32 %s71, 1
      %p75 = scmp.eq.s32.totalorder %s16, 1
      %p76 = scmp.ne.s32.totalorder %s71, %s73
      %p77 = scmp.eq.s32.totalorder %s16, 0
      %p78 = por %p76, %p77
      %p79 = scmp.ne.s32.totalorder %s71, %s73
      %p80 = scmp.eq.s32.totalorder %s21, 1
      %p81 = por %p79, %p80
      %p82 = scmp.ne.s32.totalorder %s73, %s74
      %p83 = scmp.eq.s32.totalorder %s21, 0
      %p84 = por %p82, %p83
      %p85 = scmp.ne.s32.totalorder %s73, %s74
      %p86 = scmp.eq.s32.totalorder %s22, 1
      %p87 = por %p85, %p86
      %p89 = scmp.ne.s32.totalorder %s74, %s88
      %p90 = scmp.eq.s32.totalorder %s22, 0
      %p91 = por %p89, %p90
      %s92 = ssub.s32 %s16, %s23
      %p93 = scmp.eq.s32.totalorder %s92, 0
      %s95 = sadd.s32 %s94, 1
      %s96 = scalar_select %p93, %s94, %s95
      %p99 = pneg %p93
      %p100 = scmp.eq.s32.totalorder %s16, 1
      %p101 = por %p99, %p100
      %p102 = scmp.ne.s32.totalorder %s94, %s97
      %p103 = scmp.eq.s32.totalorder %s16, 0
      %p104 = por %p102, %p103
      %p105 = scmp.ne.s32.totalorder %s94, %s97
      %p106 = scmp.eq.s32.totalorder %s21, 1
      %p107 = por %p105, %p106
      %p108 = scmp.ne.s32.totalorder %s97, %s98
      %p109 = scmp.eq.s32.totalorder %s21, 0
      %p110 = por %p108, %p109
      %p111 = scmp.ne.s32.totalorder %s97, %s98
      %p112 = scmp.eq.s32.totalorder %s22, 1
      %p113 = por %p111, %p112
      %p115 = scmp.ne.s32.totalorder %s98, %s114
      %p116 = scmp.eq.s32.totalorder %s22, 0
      %p117 = por %p115, %p116
      %p118 = scmp.le.s32.totalorder 1, %s16
      %p119 = scmp.lt.s32.totalorder %s16, 3
      %p120 = pnand %p118, %p119
      %p121 = pneg %p120
      // Predicated region
      $region9: #{tpu_custom_call.1} parent=5 // pred_check
        _
      $region10: #{tpu_custom_call.1} parent=5 // pred_check_branch
        %123 = sbr.rel (%p120) target = $region12
      $region11: #{tpu_custom_call.1} parent=5 // pred_region
        %s124 = ssub.s32 %s16, 1
        // Predicated region
        $region13: #{tpu_custom_call.1} parent=11 // pred_check
          %p125 = pneg %p63
        $region14: #{tpu_custom_call.1} parent=11 // pred_check_branch
          %127 = sbr.rel (%p125) target = $region16
        $region15: #{tpu_custom_call.1} parent=11 // pred_region
          %129 = vsyncadd [#allocation9], 0
          %s130 = sshll.u32 %s1, 4
          %s131 = int_to_ptr.hbm [resolvable:$true] %s130
          %s132 = sshll.u32 [#allocation8], 4
          %s133 = int_to_ptr.vmem [resolvable:$true] %s132
          %138 = dma.hbm_to_vmem [thread:$0]  %s131, 9216, %s133, [#allocation9], 64, 64, 4
        $region16: #{tpu_custom_call.1} parent=11 // pred_fallthru
          _
        // Predicated region
        $region17: #{tpu_custom_call.1} parent=11 // pred_check
          %p139 = pneg %p84
        $region18: #{tpu_custom_call.1} parent=11 // pred_check_branch
          %141 = sbr.rel (%p139) target = $region20
        $region19: #{tpu_custom_call.1} parent=11 // pred_region
          %143 = vsyncadd [#allocation9], 0
          %s144 = sshll.u32 %s2, 4
          %s145 = int_to_ptr.hbm [resolvable:$true] %s144
          %s146 = sshll.u32 [#allocation10], 4
          %s147 = int_to_ptr.vmem [resolvable:$true] %s146
          %152 = dma.hbm_to_vmem [thread:$0]  %s145, 9216, %s147, [#allocation9], 64, 64, 4
        $region20: #{tpu_custom_call.1} parent=11 // pred_fallthru
          _
      $region12: #{tpu_custom_call.1} parent=5 // pred_fallthru
        _
      %p153 = scmp.lt.s32.totalorder %s16, 2
      // Predicated region
      $region21: #{tpu_custom_call.1} parent=5 // pred_check
        %p154 = pneg %p153
      $region22: #{tpu_custom_call.1} parent=5 // pred_check_branch
        %156 = sbr.rel (%p154) target = $region24
      $region23: #{tpu_custom_call.1} parent=5 // pred_region
        // Predicated region
        $region25: #{tpu_custom_call.1} parent=23 // pred_check
          %p157 = pneg %p36
        $region26: #{tpu_custom_call.1} parent=23 // pred_check_branch
          %159 = sbr.rel (%p157) target = $region28
        $region27: #{tpu_custom_call.1} parent=23 // pred_region
          %s160 = sand.u32 %s26, 1
          %s161 = scalar_lea.sflag [#allocation6], %s160
          %s162 = sand.u32 %s26, 1
          %s163 = smul.addr %s162, 256
          %s164 = scalar_lea.vmem [#allocation5], %s163
          %166 = vsyncadd %s161, 0
          %s167 = smul.addr %s16, 32
          %s168 = smul.addr %s167, 8
          %s169 = scalar_lea.hbm %s0, %s168
          %s170 = sshll.u32 %s169, 4
          %s171 = int_to_ptr.hbm [resolvable:$true] %s170
          %s172 = sshll.u32 %s164, 4
          %s173 = int_to_ptr.vmem [resolvable:$true] %s172
          %178 = dma.hbm_to_vmem [thread:$0]  %s171, 4096, %s173, %s161, 128, 128, 8
        $region28: #{tpu_custom_call.1} parent=23 // pred_fallthru
          _
      $region24: #{tpu_custom_call.1} parent=5 // pred_fallthru
        _
      %p179 = scmp.le.s32.totalorder 1, %s16
      %p180 = scmp.lt.s32.totalorder %s16, 3
      %p181 = pnand %p179, %p180
      %p182 = pneg %p181
      // Predicated region
      $region29: #{tpu_custom_call.1} parent=5 // pred_check
        _
      $region30: #{tpu_custom_call.1} parent=5 // pred_check_branch
        %184 = sbr.rel (%p181) target = $region32
      $region31: #{tpu_custom_call.1} parent=5 // pred_region
        %s185 = ssub.s32 %s16, 1
        %s186 = sand.u32 %s29, 1
        %s187 = scalar_lea.sflag [#allocation6], %s186
        %s188 = sand.u32 %s29, 1
        %s189 = smul.addr %s188, 256
        %s190 = scalar_lea.vmem [#allocation5], %s189
        // Predicated region
        $region33: #{tpu_custom_call.1} parent=31 // pred_check
          %p191 = pneg %p42
        $region34: #{tpu_custom_call.1} parent=31 // pred_check_branch
          %193 = sbr.rel (%p191) target = $region36
        $region35: #{tpu_custom_call.1} parent=31 // pred_region
          %195 = dma.done %s187, 4096
        $region36: #{tpu_custom_call.1} parent=31 // pred_fallthru
          _
        // Predicated region
        $region37: #{tpu_custom_call.1} parent=31 // pred_check
          %p196 = pneg %p63
        $region38: #{tpu_custom_call.1} parent=31 // pred_check_branch
          %198 = sbr.rel (%p196) target = $region40
        $region39: #{tpu_custom_call.1} parent=31 // pred_region
          %200 = dma.done [#allocation9], 9216
        $region40: #{tpu_custom_call.1} parent=31 // pred_fallthru
          _
        // Predicated region
        $region41: #{tpu_custom_call.1} parent=31 // pred_check
          %p201 = pneg %p84
        $region42: #{tpu_custom_call.1} parent=31 // pred_check_branch
          %203 = sbr.rel (%p201) target = $region44
        $region43: #{tpu_custom_call.1} parent=31 // pred_region
          %205 = dma.done [#allocation9], 9216
        $region44: #{tpu_custom_call.1} parent=31 // pred_fallthru
          _
        %s206 = sand.u32 %s29, 1
        %s207 = scalar_lea.sflag [#allocation6], %s206
        %s208 = sand.u32 %s29, 1
        %s209 = smul.addr %s208, 256
        %s210 = scalar_lea.vmem [#allocation5], %s209
        %p211 = pneg %p42
        %p212 = pneg %p39
        %p213 = pneg %p63
        %p214 = pneg %p60
        %p215 = pneg %p84
        %p216 = pneg %p81
        %p217 = pneg %p110
        %p218 = pneg %p107
        %s219 = sand.u32 %s97, 1
        %s220 = scalar_lea.sflag [#allocation7], %s219
        %s221 = sand.u32 %s97, 1
        %s222 = smul.addr %s221, 256
        %s223 = scalar_lea.vmem [#allocation11], %s222
        %224 = vst [vmem:[#allocation2] sm:$0xff] 0.0
        %225 = vst [vmem:[#allocation2 + $0x8] sm:$0xff] 0.0
        %226 = vst [vmem:[#allocation2 + $0x10] sm:$0x3] 0.0
        %s227 = scalar_lea.vmem [#allocation2], 408
        %228 = vst [vmem:[%s227] sm:$0xff] 0.0
        %229 = vst [vmem:[%s227 + $0x8] sm:$0xff] 0.0
        %230 = vst [vmem:[%s227 + $0x10] sm:$0x3] 0.0
        %s231 = scalar_lea.vmem [#allocation2], 24
        %232 = vst [vmem:[%s231] sm:$0x3] 0.0
        %233 = vst [vmem:[%s231 + $0x18] sm:$0x3] 0.0
        %234 = vst [vmem:[%s231 + $0x30] sm:$0x3] 0.0
        %235 = vst [vmem:[%s231 + $0x48] sm:$0x3] 0.0
        %236 = vst [vmem:[%s231 + $0x60] sm:$0x3] 0.0
        %237 = vst [vmem:[%s231 + $0x78] sm:$0x3] 0.0
        %238 = vst [vmem:[%s231 + $0x90] sm:$0x3] 0.0
        %239 = vst [vmem:[%s231 + $0xa8] sm:$0x3] 0.0
        %240 = vst [vmem:[%s231 + $0xc0] sm:$0x3] 0.0
        %241 = vst [vmem:[%s231 + $0xd8] sm:$0x3] 0.0
        %242 = vst [vmem:[%s231 + $0xf0] sm:$0x3] 0.0
        %243 = vst [vmem:[%s231 + $0x108] sm:$0x3] 0.0
        %244 = vst [vmem:[%s231 + $0x120] sm:$0x3] 0.0
        %245 = vst [vmem:[%s231 + $0x138] sm:$0x3] 0.0
        %246 = vst [vmem:[%s231 + $0x150] sm:$0x3] 0.0
        %247 = vst [vmem:[%s231 + $0x168] sm:$0x3] 0.0
        %248 = vst [vmem:[%s231 + $0x10] sm:$0x3] 0.0
        %249 = vst [vmem:[%s231 + $0x28] sm:$0x3] 0.0
        %250 = vst [vmem:[%s231 + $0x40] sm:$0x3] 0.0
        %251 = vst [vmem:[%s231 + $0x58] sm:$0x3] 0.0
        %252 = vst [vmem:[%s231 + $0x70] sm:$0x3] 0.0
        %253 = vst [vmem:[%s231 + $0x88] sm:$0x3] 0.0
        %254 = vst [vmem:[%s231 + $0xa0] sm:$0x3] 0.0
        %255 = vst [vmem:[%s231 + $0xb8] sm:$0x3] 0.0
        %256 = vst [vmem:[%s231 + $0xd0] sm:$0x3] 0.0
        %257 = vst [vmem:[%s231 + $0xe8] sm:$0x3] 0.0
        %258 = vst [vmem:[%s231 + $0x100] sm:$0x3] 0.0
        %259 = vst [vmem:[%s231 + $0x118] sm:$0x3] 0.0
        %260 = vst [vmem:[%s231 + $0x130] sm:$0x3] 0.0
        %261 = vst [vmem:[%s231 + $0x148] sm:$0x3] 0.0
        %262 = vst [vmem:[%s231 + $0x160] sm:$0x3] 0.0
        %263 = vst [vmem:[%s231 + $0x178] sm:$0x3] 0.0
        %v264 = vld [vmem:[%s190] sm:$0xff]
        %v265 = vld [vmem:[%s190 + $0x8] sm:$0xff]
        %v266 = vld [vmem:[%s190 + $0x10] sm:$0xff]
        %v267 = vld [vmem:[%s190 + $0x18] sm:$0xff]
        %v268 = vld [vmem:[%s190 + $0x20] sm:$0xff]
        %v269 = vld [vmem:[%s190 + $0x28] sm:$0xff]
        %v270 = vld [vmem:[%s190 + $0x30] sm:$0xff]
        %v271 = vld [vmem:[%s190 + $0x38] sm:$0xff]
        %v272 = vld [vmem:[%s190 + $0x40] sm:$0xff]
        %v273 = vld [vmem:[%s190 + $0x48] sm:$0xff]
        %v274 = vld [vmem:[%s190 + $0x50] sm:$0xff]
        %v275 = vld [vmem:[%s190 + $0x58] sm:$0xff]
        %v276 = vld [vmem:[%s190 + $0x60] sm:$0xff]
        %v277 = vld [vmem:[%s190 + $0x68] sm:$0xff]
        %v278 = vld [vmem:[%s190 + $0x70] sm:$0xff]
        %v279 = vld [vmem:[%s190 + $0x78] sm:$0xff]
        %v280 = vld [vmem:[%s190 + $0x80] sm:$0xff]
        %v281 = vld [vmem:[%s190 + $0x88] sm:$0xff]
        %v282 = vld [vmem:[%s190 + $0x90] sm:$0xff]
        %v283 = vld [vmem:[%s190 + $0x98] sm:$0xff]
        %v284 = vld [vmem:[%s190 + $0xa0] sm:$0xff]
        %v285 = vld [vmem:[%s190 + $0xa8] sm:$0xff]
        %v286 = vld [vmem:[%s190 + $0xb0] sm:$0xff]
        %v287 = vld [vmem:[%s190 + $0xb8] sm:$0xff]
        %v288 = vld [vmem:[%s190 + $0xc0] sm:$0xff]
        %v289 = vld [vmem:[%s190 + $0xc8] sm:$0xff]
        %v290 = vld [vmem:[%s190 + $0xd0] sm:$0xff]
        %v291 = vld [vmem:[%s190 + $0xd8] sm:$0xff]
        %v292 = vld [vmem:[%s190 + $0xe0] sm:$0xff]
        %v293 = vld [vmem:[%s190 + $0xe8] sm:$0xff]
        %v294 = vld [vmem:[%s190 + $0xf0] sm:$0xff]
        %v295 = vld [vmem:[%s190 + $0xf8] sm:$0xff]
        %vm296 = vcmp.gt.f32.partialorder %v264, 0.0
        %vm297 = vcmp.gt.f32.partialorder %v265, 0.0
        %vm298 = vcmp.gt.f32.partialorder %v266, 0.0
        %vm299 = vcmp.gt.f32.partialorder %v267, 0.0
        %vm300 = vcmp.gt.f32.partialorder %v268, 0.0
        %vm301 = vcmp.gt.f32.partialorder %v269, 0.0
        %vm302 = vcmp.gt.f32.partialorder %v270, 0.0
        %vm303 = vcmp.gt.f32.partialorder %v271, 0.0
        %vm304 = vcmp.gt.f32.partialorder %v272, 0.0
        %vm305 = vcmp.gt.f32.partialorder %v273, 0.0
        %vm306 = vcmp.gt.f32.partialorder %v274, 0.0
        %vm307 = vcmp.gt.f32.partialorder %v275, 0.0
        %vm308 = vcmp.gt.f32.partialorder %v276, 0.0
        %vm309 = vcmp.gt.f32.partialorder %v277, 0.0
        %vm310 = vcmp.gt.f32.partialorder %v278, 0.0
        %vm311 = vcmp.gt.f32.partialorder %v279, 0.0
        %vm312 = vcmp.gt.f32.partialorder %v280, 0.0
        %vm313 = vcmp.gt.f32.partialorder %v281, 0.0
        %vm314 = vcmp.gt.f32.partialorder %v282, 0.0
        %vm315 = vcmp.gt.f32.partialorder %v283, 0.0
        %vm316 = vcmp.gt.f32.partialorder %v284, 0.0
        %vm317 = vcmp.gt.f32.partialorder %v285, 0.0
        %vm318 = vcmp.gt.f32.partialorder %v286, 0.0
        %vm319 = vcmp.gt.f32.partialorder %v287, 0.0
        %vm320 = vcmp.gt.f32.partialorder %v288, 0.0
        %vm321 = vcmp.gt.f32.partialorder %v289, 0.0
        %vm322 = vcmp.gt.f32.partialorder %v290, 0.0
        %vm323 = vcmp.gt.f32.partialorder %v291, 0.0
        %vm324 = vcmp.gt.f32.partialorder %v292, 0.0
        %vm325 = vcmp.gt.f32.partialorder %v293, 0.0
        %vm326 = vcmp.gt.f32.partialorder %v294, 0.0
        %vm327 = vcmp.gt.f32.partialorder %v295, 0.0
        %v328 = vmul.f32 %v264, 1.442695
        %v329 = vpow.pop %v328
        %v330 = vmul.f32 %v265, 1.442695
        %v331 = vpow.pop %v330
        %v332 = vmul.f32 %v266, 1.442695
        %v333 = vpow.pop %v332
        %v334 = vmul.f32 %v267, 1.442695
        %v335 = vpow.pop %v334
        %v336 = vmul.f32 %v268, 1.442695
        %v337 = vpow.pop %v336
        %v338 = vmul.f32 %v269, 1.442695
        %v339 = vpow.pop %v338
        %v340 = vmul.f32 %v270, 1.442695
        %v341 = vpow.pop %v340
        %v342 = vmul.f32 %v271, 1.442695
        %v343 = vpow.pop %v342
        %v344 = vmul.f32 %v272, 1.442695
        %v345 = vpow.pop %v344
        %v346 = vmul.f32 %v273, 1.442695
        %v347 = vpow.pop %v346
        %v348 = vmul.f32 %v274, 1.442695
        %v349 = vpow.pop %v348
        %v350 = vmul.f32 %v275, 1.442695
        %v351 = vpow.pop %v350
        %v352 = vmul.f32 %v276, 1.442695
        %v353 = vpow.pop %v352
        %v354 = vmul.f32 %v277, 1.442695
        %v355 = vpow.pop %v354
        %v356 = vmul.f32 %v278, 1.442695
        %v357 = vpow.pop %v356
        %v358 = vmul.f32 %v279, 1.442695
        %v359 = vpow.pop %v358
        %v360 = vmul.f32 %v280, 1.442695
        %v361 = vpow.pop %v360
        %v362 = vmul.f32 %v281, 1.442695
        %v363 = vpow.pop %v362
        %v364 = vmul.f32 %v282, 1.442695
        %v365 = vpow.pop %v364
        %v366 = vmul.f32 %v283, 1.442695
        %v367 = vpow.pop %v366
        %v368 = vmul.f32 %v284, 1.442695
        %v369 = vpow.pop %v368
        %v370 = vmul.f32 %v285, 1.442695
        %v371 = vpow.pop %v370
        %v372 = vmul.f32 %v286, 1.442695
        %v373 = vpow.pop %v372
        %v374 = vmul.f32 %v287, 1.442695
        %v375 = vpow.pop %v374
        %v376 = vmul.f32 %v288, 1.442695
        %v377 = vpow.pop %v376
        %v378 = vmul.f32 %v289, 1.442695
        %v379 = vpow.pop %v378
        %v380 = vmul.f32 %v290, 1.442695
        %v381 = vpow.pop %v380
        %v382 = vmul.f32 %v291, 1.442695
        %v383 = vpow.pop %v382
        %v384 = vmul.f32 %v292, 1.442695
        %v385 = vpow.pop %v384
        %v386 = vmul.f32 %v293, 1.442695
        %v387 = vpow.pop %v386
        %v388 = vmul.f32 %v294, 1.442695
        %v389 = vpow.pop %v388
        %v390 = vmul.f32 %v295, 1.442695
        %v391 = vpow.pop %v390
        %v392 = vsub.f32 %v329, 1.0
        %v393 = vsub.f32 %v331, 1.0
        %v394 = vsub.f32 %v333, 1.0
        %v395 = vsub.f32 %v335, 1.0
        %v396 = vsub.f32 %v337, 1.0
        %v397 = vsub.f32 %v339, 1.0
        %v398 = vsub.f32 %v341, 1.0
        %v399 = vsub.f32 %v343, 1.0
        %v400 = vsub.f32 %v345, 1.0
        %v401 = vsub.f32 %v347, 1.0
        %v402 = vsub.f32 %v349, 1.0
        %v403 = vsub.f32 %v351, 1.0
        %v404 = vsub.f32 %v353, 1.0
        %v405 = vsub.f32 %v355, 1.0
        %v406 = vsub.f32 %v357, 1.0
        %v407 = vsub.f32 %v359, 1.0
        %v408 = vsub.f32 %v361, 1.0
        %v409 = vsub.f32 %v363, 1.0
        %v410 = vsub.f32 %v365, 1.0
        %v411 = vsub.f32 %v367, 1.0
        %v412 = vsub.f32 %v369, 1.0
        %v413 = vsub.f32 %v371, 1.0
        %v414 = vsub.f32 %v373, 1.0
        %v415 = vsub.f32 %v375, 1.0
        %v416 = vsub.f32 %v377, 1.0
        %v417 = vsub.f32 %v379, 1.0
        %v418 = vsub.f32 %v381, 1.0
        %v419 = vsub.f32 %v383, 1.0
        %v420 = vsub.f32 %v385, 1.0
        %v421 = vsub.f32 %v387, 1.0
        %v422 = vsub.f32 %v389, 1.0
        %v423 = vsub.f32 %v391, 1.0
        %v424 = vmul.f32 %v392, 1.6732632
        %v425 = vmul.f32 %v393, 1.6732632
        %v426 = vmul.f32 %v394, 1.6732632
        %v427 = vmul.f32 %v395, 1.6732632
        %v428 = vmul.f32 %v396, 1.6732632
        %v429 = vmul.f32 %v397, 1.6732632
        %v430 = vmul.f32 %v398, 1.6732632
        %v431 = vmul.f32 %v399, 1.6732632
        %v432 = vmul.f32 %v400, 1.6732632
        %v433 = vmul.f32 %v401, 1.6732632
        %v434 = vmul.f32 %v402, 1.6732632
        %v435 = vmul.f32 %v403, 1.6732632
        %v436 = vmul.f32 %v404, 1.6732632
        %v437 = vmul.f32 %v405, 1.6732632
        %v438 = vmul.f32 %v406, 1.6732632
        %v439 = vmul.f32 %v407, 1.6732632
        %v440 = vmul.f32 %v408, 1.6732632
        %v441 = vmul.f32 %v409, 1.6732632
        %v442 = vmul.f32 %v410, 1.6732632
        %v443 = vmul.f32 %v411, 1.6732632
        %v444 = vmul.f32 %v412, 1.6732632
        %v445 = vmul.f32 %v413, 1.6732632
        %v446 = vmul.f32 %v414, 1.6732632
        %v447 = vmul.f32 %v415, 1.6732632
        %v448 = vmul.f32 %v416, 1.6732632
        %v449 = vmul.f32 %v417, 1.6732632
        %v450 = vmul.f32 %v418, 1.6732632
        %v451 = vmul.f32 %v419, 1.6732632
        %v452 = vmul.f32 %v420, 1.6732632
        %v453 = vmul.f32 %v421, 1.6732632
        %v454 = vmul.f32 %v422, 1.6732632
        %v455 = vmul.f32 %v423, 1.6732632
        %v456 = vsel %vm296, %v264, %v424
        %v457 = vsel %vm297, %v265, %v425
        %v458 = vsel %vm298, %v266, %v426
        %v459 = vsel %vm299, %v267, %v427
        %v460 = vsel %vm300, %v268, %v428
        %v461 = vsel %vm301, %v269, %v429
        %v462 = vsel %vm302, %v270, %v430
        %v463 = vsel %vm303, %v271, %v431
        %v464 = vsel %vm304, %v272, %v432
        %v465 = vsel %vm305, %v273, %v433
        %v466 = vsel %vm306, %v274, %v434
        %v467 = vsel %vm307, %v275, %v435
        %v468 = vsel %vm308, %v276, %v436
        %v469 = vsel %vm309, %v277, %v437
        %v470 = vsel %vm310, %v278, %v438
        %v471 = vsel %vm311, %v279, %v439
        %v472 = vsel %vm312, %v280, %v440
        %v473 = vsel %vm313, %v281, %v441
        %v474 = vsel %vm314, %v282, %v442
        %v475 = vsel %vm315, %v283, %v443
        %v476 = vsel %vm316, %v284, %v444
        %v477 = vsel %vm317, %v285, %v445
        %v478 = vsel %vm318, %v286, %v446
        %v479 = vsel %vm319, %v287, %v447
        %v480 = vsel %vm320, %v288, %v448
        %v481 = vsel %vm321, %v289, %v449
        %v482 = vsel %vm322, %v290, %v450
        %v483 = vsel %vm323, %v291, %v451
        %v484 = vsel %vm324, %v292, %v452
        %v485 = vsel %vm325, %v293, %v453
        %v486 = vsel %vm326, %v294, %v454
        %v487 = vsel %vm327, %v295, %v455
        %v488 = vmul.f32 %v456, 1.050701
        %v489 = vmul.f32 %v457, 1.050701
        %v490 = vmul.f32 %v458, 1.050701
        %v491 = vmul.f32 %v459, 1.050701
        %v492 = vmul.f32 %v460, 1.050701
        %v493 = vmul.f32 %v461, 1.050701
        %v494 = vmul.f32 %v462, 1.050701
        %v495 = vmul.f32 %v463, 1.050701
        %v496 = vmul.f32 %v464, 1.050701
        %v497 = vmul.f32 %v465, 1.050701
        %v498 = vmul.f32 %v466, 1.050701
        %v499 = vmul.f32 %v467, 1.050701
        %v500 = vmul.f32 %v468, 1.050701
        %v501 = vmul.f32 %v469, 1.050701
        %v502 = vmul.f32 %v470, 1.050701
        %v503 = vmul.f32 %v471, 1.050701
        %v504 = vmul.f32 %v472, 1.050701
        %v505 = vmul.f32 %v473, 1.050701
        %v506 = vmul.f32 %v474, 1.050701
        %v507 = vmul.f32 %v475, 1.050701
        %v508 = vmul.f32 %v476, 1.050701
        %v509 = vmul.f32 %v477, 1.050701
        %v510 = vmul.f32 %v478, 1.050701
        %v511 = vmul.f32 %v479, 1.050701
        %v512 = vmul.f32 %v480, 1.050701
        %v513 = vmul.f32 %v481, 1.050701
        %v514 = vmul.f32 %v482, 1.050701
        %v515 = vmul.f32 %v483, 1.050701
        %v516 = vmul.f32 %v484, 1.050701
        %v517 = vmul.f32 %v485, 1.050701
        %v518 = vmul.f32 %v486, 1.050701
        %v519 = vmul.f32 %v487, 1.050701
        %520 = vst [vmem:[%s231 + $0x1] sm:$0xff] %v488
        %521 = vst [vmem:[%s231 + $0x9] sm:$0xff] %v489
        %522 = vst [vmem:[%s231 + $0x19] sm:$0xff] %v490
        %523 = vst [vmem:[%s231 + $0x21] sm:$0xff] %v491
        %524 = vst [vmem:[%s231 + $0x31] sm:$0xff] %v492
        %525 = vst [vmem:[%s231 + $0x39] sm:$0xff] %v493
        %526 = vst [vmem:[%s231 + $0x49] sm:$0xff] %v494
        %527 = vst [vmem:[%s231 + $0x51] sm:$0xff] %v495
        %528 = vst [vmem:[%s231 + $0x61] sm:$0xff] %v496
        %529 = vst [vmem:[%s231 + $0x69] sm:$0xff] %v497
        %530 = vst [vmem:[%s231 + $0x79] sm:$0xff] %v498
        %531 = vst [vmem:[%s231 + $0x81] sm:$0xff] %v499
        %532 = vst [vmem:[%s231 + $0x91] sm:$0xff] %v500
        %533 = vst [vmem:[%s231 + $0x99] sm:$0xff] %v501
        %534 = vst [vmem:[%s231 + $0xa9] sm:$0xff] %v502
        %535 = vst [vmem:[%s231 + $0xb1] sm:$0xff] %v503
        %536 = vst [vmem:[%s231 + $0xc1] sm:$0xff] %v504
        %537 = vst [vmem:[%s231 + $0xc9] sm:$0xff] %v505
        %538 = vst [vmem:[%s231 + $0xd9] sm:$0xff] %v506
        %539 = vst [vmem:[%s231 + $0xe1] sm:$0xff] %v507
        %540 = vst [vmem:[%s231 + $0xf1] sm:$0xff] %v508
        %541 = vst [vmem:[%s231 + $0xf9] sm:$0xff] %v509
        %542 = vst [vmem:[%s231 + $0x109] sm:$0xff] %v510
        %543 = vst [vmem:[%s231 + $0x111] sm:$0xff] %v511
        %544 = vst [vmem:[%s231 + $0x121] sm:$0xff] %v512
        %545 = vst [vmem:[%s231 + $0x129] sm:$0xff] %v513
        %546 = vst [vmem:[%s231 + $0x139] sm:$0xff] %v514
        %547 = vst [vmem:[%s231 + $0x141] sm:$0xff] %v515
        %548 = vst [vmem:[%s231 + $0x151] sm:$0xff] %v516
        %549 = vst [vmem:[%s231 + $0x159] sm:$0xff] %v517
        %550 = vst [vmem:[%s231 + $0x169] sm:$0xff] %v518
        %551 = vst [vmem:[%s231 + $0x171] sm:$0xff] %v519
        %v552 = vld [vmem:[#allocation2] sm:$0xff]
        %v553 = vld [vmem:[#allocation2 + $0x8] sm:$0xff]
        %v554 = vld [vmem:[#allocation2 + $0x18] sm:$0xff]
        %v555 = vld [vmem:[#allocation2 + $0x20] sm:$0xff]
        %v556 = vld [vmem:[#allocation2 + $0x30] sm:$0xff]
        %v557 = vld [vmem:[#allocation2 + $0x38] sm:$0xff]
        %v558 = vld [vmem:[#allocation2 + $0x48] sm:$0xff]
        %v559 = vld [vmem:[#allocation2 + $0x50] sm:$0xff]
        %v560 = vld [vmem:[#allocation2 + $0x60] sm:$0xff]
        %v561 = vld [vmem:[#allocation2 + $0x68] sm:$0xff]
        %v562 = vld [vmem:[#allocation2 + $0x78] sm:$0xff]
        %v563 = vld [vmem:[#allocation2 + $0x80] sm:$0xff]
        %v564 = vld [vmem:[#allocation2 + $0x90] sm:$0xff]
        %v565 = vld [vmem:[#allocation2 + $0x98] sm:$0xff]
        %v566 = vld [vmem:[#allocation2 + $0xa8] sm:$0xff]
        %v567 = vld [vmem:[#allocation2 + $0xb0] sm:$0xff]
        %v568 = vld [vmem:[#allocation2 + $0xc0] sm:$0xff]
        %v569 = vld [vmem:[#allocation2 + $0xc8] sm:$0xff]
        %v570 = vld [vmem:[#allocation2 + $0xd8] sm:$0xff]
        %v571 = vld [vmem:[#allocation2 + $0xe0] sm:$0xff]
        %v572 = vld [vmem:[#allocation2 + $0xf0] sm:$0xff]
        %v573 = vld [vmem:[#allocation2 + $0xf8] sm:$0xff]
        %v574 = vld [vmem:[#allocation2 + $0x108] sm:$0xff]
        %v575 = vld [vmem:[#allocation2 + $0x110] sm:$0xff]
        %v576 = vld [vmem:[#allocation2 + $0x120] sm:$0xff]
        %v577 = vld [vmem:[#allocation2 + $0x128] sm:$0xff]
        %v578 = vld [vmem:[#allocation2 + $0x138] sm:$0xff]
        %v579 = vld [vmem:[#allocation2 + $0x140] sm:$0xff]
        %v580 = vld [vmem:[#allocation2 + $0x150] sm:$0xff]
        %v581 = vld [vmem:[#allocation2 + $0x158] sm:$0xff]
        %v582 = vld [vmem:[#allocation2 + $0x168] sm:$0xff]
        %v583 = vld [vmem:[#allocation2 + $0x170] sm:$0xff]
        %v584 = vld [vmem:[#allocation2 + $0x180] sm:$0xff]
        %v585 = vld [vmem:[#allocation2 + $0x188] sm:$0xff]
        %v586 = vld [vmem:[#allocation2 + $0x198] sm:$0xff]
        %v587 = vld [vmem:[#allocation2 + $0x1a0] sm:$0xff]
        %v588 = vpack.c.bf16 %v552, %v552
        %v589 = vpack.c.bf16 %v553, %v553
        %v590 = vpack.c.bf16 %v554, %v554
        %v591 = vpack.c.bf16 %v555, %v555
        %v592 = vpack.c.bf16 %v556, %v556
        %v593 = vpack.c.bf16 %v557, %v557
        %v594 = vpack.c.bf16 %v558, %v558
        %v595 = vpack.c.bf16 %v559, %v559
        %v596 = vpack.c.bf16 %v560, %v560
        %v597 = vpack.c.bf16 %v561, %v561
        %v598 = vpack.c.bf16 %v562, %v562
        %v599 = vpack.c.bf16 %v563, %v563
        %v600 = vpack.c.bf16 %v564, %v564
        %v601 = vpack.c.bf16 %v565, %v565
        %v602 = vpack.c.bf16 %v566, %v566
        %v603 = vpack.c.bf16 %v567, %v567
        %v604 = vpack.c.bf16 %v568, %v568
        %v605 = vpack.c.bf16 %v569, %v569
        %v606 = vpack.c.bf16 %v570, %v570
        %v607 = vpack.c.bf16 %v571, %v571
        %v608 = vpack.c.bf16 %v572, %v572
        %v609 = vpack.c.bf16 %v573, %v573
        %v610 = vpack.c.bf16 %v574, %v574
        %v611 = vpack.c.bf16 %v575, %v575
        %v612 = vpack.c.bf16 %v576, %v576
        %v613 = vpack.c.bf16 %v577, %v577
        %v614 = vpack.c.bf16 %v578, %v578
        %v615 = vpack.c.bf16 %v579, %v579
        %v616 = vpack.c.bf16 %v580, %v580
        %v617 = vpack.c.bf16 %v581, %v581
        %v618 = vpack.c.bf16 %v582, %v582
        %v619 = vpack.c.bf16 %v583, %v583
        %v620 = vpack.c.bf16 %v584, %v584
        %v621 = vpack.c.bf16 %v585, %v585
        %v622 = vpack.c.bf16 %v586, %v586
        %v623 = vpack.c.bf16 %v587, %v587
        %624 = vst [vmem:[#allocation3] sm:$0xf] %v588
        %625 = vst [vmem:[#allocation3 + $0xc] sm:$0xf] %v589
        %626 = vst [vmem:[#allocation3 + $0x18] sm:$0xf] %v590
        %627 = vst [vmem:[#allocation3 + $0x24] sm:$0xf] %v591
        %628 = vst [vmem:[#allocation3 + $0x30] sm:$0xf] %v592
        %629 = vst [vmem:[#allocation3 + $0x3c] sm:$0xf] %v593
        %630 = vst [vmem:[#allocation3 + $0x48] sm:$0xf] %v594
        %631 = vst [vmem:[#allocation3 + $0x54] sm:$0xf] %v595
        %632 = vst [vmem:[#allocation3 + $0x60] sm:$0xf] %v596
        %633 = vst [vmem:[#allocation3 + $0x6c] sm:$0xf] %v597
        %634 = vst [vmem:[#allocation3 + $0x78] sm:$0xf] %v598
        %635 = vst [vmem:[#allocation3 + $0x84] sm:$0xf] %v599
        %636 = vst [vmem:[#allocation3 + $0x90] sm:$0xf] %v600
        %637 = vst [vmem:[#allocation3 + $0x9c] sm:$0xf] %v601
        %638 = vst [vmem:[#allocation3 + $0xa8] sm:$0xf] %v602
        %639 = vst [vmem:[#allocation3 + $0xb4] sm:$0xf] %v603
        %640 = vst [vmem:[#allocation3 + $0xc0] sm:$0xf] %v604
        %641 = vst [vmem:[#allocation3 + $0xcc] sm:$0xf] %v605
        %642 = vst [vmem:[#allocation3 + $0xd8] sm:$0xf] %v606
        %643 = vst [vmem:[#allocation3 + $0xe4] sm:$0xf] %v607
        %644 = vst [vmem:[#allocation3 + $0xf0] sm:$0xf] %v608
        %645 = vst [vmem:[#allocation3 + $0xfc] sm:$0xf] %v609
        %646 = vst [vmem:[#allocation3 + $0x108] sm:$0xf] %v610
        %647 = vst [vmem:[#allocation3 + $0x114] sm:$0xf] %v611
        %648 = vst [vmem:[#allocation3 + $0x120] sm:$0xf] %v612
        %649 = vst [vmem:[#allocation3 + $0x12c] sm:$0xf] %v613
        %650 = vst [vmem:[#allocation3 + $0x138] sm:$0xf] %v614
        %651 = vst [vmem:[#allocation3 + $0x144] sm:$0xf] %v615
        %652 = vst [vmem:[#allocation3 + $0x150] sm:$0xf] %v616
        %653 = vst [vmem:[#allocation3 + $0x15c] sm:$0xf] %v617
        %654 = vst [vmem:[#allocation3 + $0x168] sm:$0xf] %v618
        %655 = vst [vmem:[#allocation3 + $0x174] sm:$0xf] %v619
        %656 = vst [vmem:[#allocation3 + $0x180] sm:$0xf] %v620
        %657 = vst [vmem:[#allocation3 + $0x18c] sm:$0xf] %v621
        %658 = vst [vmem:[#allocation3 + $0x198] sm:$0xf] %v622
        %659 = vst [vmem:[#allocation3 + $0x1a4] sm:$0xf] %v623
        %v660 = vld [vmem:[#allocation2 + $0x1] sm:$0xff]
        %v661 = vld [vmem:[#allocation2 + $0x9] sm:$0xff]
        %v662 = vld [vmem:[#allocation2 + $0x19] sm:$0xff]
        %v663 = vld [vmem:[#allocation2 + $0x21] sm:$0xff]
        %v664 = vld [vmem:[#allocation2 + $0x31] sm:$0xff]
        %v665 = vld [vmem:[#allocation2 + $0x39] sm:$0xff]
        %v666 = vld [vmem:[#allocation2 + $0x49] sm:$0xff]
        %v667 = vld [vmem:[#allocation2 + $0x51] sm:$0xff]
        %v668 = vld [vmem:[#allocation2 + $0x61] sm:$0xff]
        %v669 = vld [vmem:[#allocation2 + $0x69] sm:$0xff]
        %v670 = vld [vmem:[#allocation2 + $0x79] sm:$0xff]
        %v671 = vld [vmem:[#allocation2 + $0x81] sm:$0xff]
        %v672 = vld [vmem:[#allocation2 + $0x91] sm:$0xff]
        %v673 = vld [vmem:[#allocation2 + $0x99] sm:$0xff]
        %v674 = vld [vmem:[#allocation2 + $0xa9] sm:$0xff]
        %v675 = vld [vmem:[#allocation2 + $0xb1] sm:$0xff]
        %v676 = vld [vmem:[#allocation2 + $0xc1] sm:$0xff]
        %v677 = vld [vmem:[#allocation2 + $0xc9] sm:$0xff]
        %v678 = vld [vmem:[#allocation2 + $0xd9] sm:$0xff]
        %v679 = vld [vmem:[#allocation2 + $0xe1] sm:$0xff]
        %v680 = vld [vmem:[#allocation2 + $0xf1] sm:$0xff]
        %v681 = vld [vmem:[#allocation2 + $0xf9] sm:$0xff]
        %v682 = vld [vmem:[#allocation2 + $0x109] sm:$0xff]
        %v683 = vld [vmem:[#allocation2 + $0x111] sm:$0xff]
        %v684 = vld [vmem:[#allocation2 + $0x121] sm:$0xff]
        %v685 = vld [vmem:[#allocation2 + $0x129] sm:$0xff]
        %v686 = vld [vmem:[#allocation2 + $0x139] sm:$0xff]
        %v687 = vld [vmem:[#allocation2 + $0x141] sm:$0xff]
        %v688 = vld [vmem:[#allocation2 + $0x151] sm:$0xff]
        %v689 = vld [vmem:[#allocation2 + $0x159] sm:$0xff]
        %v690 = vld [vmem:[#allocation2 + $0x169] sm:$0xff]
        %v691 = vld [vmem:[#allocation2 + $0x171] sm:$0xff]
        %v692 = vld [vmem:[#allocation2 + $0x181] sm:$0xff]
        %v693 = vld [vmem:[#allocation2 + $0x189] sm:$0xff]
        %v694 = vld [vmem:[#allocation2 + $0x199] sm:$0xff]
        %v695 = vld [vmem:[#allocation2 + $0x1a1] sm:$0xff]
        %v696 = vpack.c.bf16 %v660, %v660
        %v697 = vpack.c.bf16 %v661, %v661
        %v698 = vpack.c.bf16 %v662, %v662
        %v699 = vpack.c.bf16 %v663, %v663
        %v700 = vpack.c.bf16 %v664, %v664
        %v701 = vpack.c.bf16 %v665, %v665
        %v702 = vpack.c.bf16 %v666, %v666
        %v703 = vpack.c.bf16 %v667, %v667
        %v704 = vpack.c.bf16 %v668, %v668
        %v705 = vpack.c.bf16 %v669, %v669
        %v706 = vpack.c.bf16 %v670, %v670
        %v707 = vpack.c.bf16 %v671, %v671
        %v708 = vpack.c.bf16 %v672, %v672
        %v709 = vpack.c.bf16 %v673, %v673
        %v710 = vpack.c.bf16 %v674, %v674
        %v711 = vpack.c.bf16 %v675, %v675
        %v712 = vpack.c.bf16 %v676, %v676
        %v713 = vpack.c.bf16 %v677, %v677
        %v714 = vpack.c.bf16 %v678, %v678
        %v715 = vpack.c.bf16 %v679, %v679
        %v716 = vpack.c.bf16 %v680, %v680
        %v717 = vpack.c.bf16 %v681, %v681
        %v718 = vpack.c.bf16 %v682, %v682
        %v719 = vpack.c.bf16 %v683, %v683
        %v720 = vpack.c.bf16 %v684, %v684
        %v721 = vpack.c.bf16 %v685, %v685
        %v722 = vpack.c.bf16 %v686, %v686
        %v723 = vpack.c.bf16 %v687, %v687
        %v724 = vpack.c.bf16 %v688, %v688
        %v725 = vpack.c.bf16 %v689, %v689
        %v726 = vpack.c.bf16 %v690, %v690
        %v727 = vpack.c.bf16 %v691, %v691
        %v728 = vpack.c.bf16 %v692, %v692
        %v729 = vpack.c.bf16 %v693, %v693
        %v730 = vpack.c.bf16 %v694, %v694
        %v731 = vpack.c.bf16 %v695, %v695
        %732 = vst [vmem:[#allocation3 + $0x4] sm:$0xf] %v696
        %733 = vst [vmem:[#allocation3 + $0x10] sm:$0xf] %v697
        %734 = vst [vmem:[#allocation3 + $0x1c] sm:$0xf] %v698
        %735 = vst [vmem:[#allocation3 + $0x28] sm:$0xf] %v699
        %736 = vst [vmem:[#allocation3 + $0x34] sm:$0xf] %v700
        %737 = vst [vmem:[#allocation3 + $0x40] sm:$0xf] %v701
        %738 = vst [vmem:[#allocation3 + $0x4c] sm:$0xf] %v702
        %739 = vst [vmem:[#allocation3 + $0x58] sm:$0xf] %v703
        %740 = vst [vmem:[#allocation3 + $0x64] sm:$0xf] %v704
        %741 = vst [vmem:[#allocation3 + $0x70] sm:$0xf] %v705
        %742 = vst [vmem:[#allocation3 + $0x7c] sm:$0xf] %v706
        %743 = vst [vmem:[#allocation3 + $0x88] sm:$0xf] %v707
        %744 = vst [vmem:[#allocation3 + $0x94] sm:$0xf] %v708
        %745 = vst [vmem:[#allocation3 + $0xa0] sm:$0xf] %v709
        %746 = vst [vmem:[#allocation3 + $0xac] sm:$0xf] %v710
        %747 = vst [vmem:[#allocation3 + $0xb8] sm:$0xf] %v711
        %748 = vst [vmem:[#allocation3 + $0xc4] sm:$0xf] %v712
        %749 = vst [vmem:[#allocation3 + $0xd0] sm:$0xf] %v713
        %750 = vst [vmem:[#allocation3 + $0xdc] sm:$0xf] %v714
        %751 = vst [vmem:[#allocation3 + $0xe8] sm:$0xf] %v715
        %752 = vst [vmem:[#allocation3 + $0xf4] sm:$0xf] %v716
        %753 = vst [vmem:[#allocation3 + $0x100] sm:$0xf] %v717
        %754 = vst [vmem:[#allocation3 + $0x10c] sm:$0xf] %v718
        %755 = vst [vmem:[#allocation3 + $0x118] sm:$0xf] %v719
        %756 = vst [vmem:[#allocation3 + $0x124] sm:$0xf] %v720
        %757 = vst [vmem:[#allocation3 + $0x130] sm:$0xf] %v721
        %758 = vst [vmem:[#allocation3 + $0x13c] sm:$0xf] %v722
        %759 = vst [vmem:[#allocation3 + $0x148] sm:$0xf] %v723
        %760 = vst [vmem:[#allocation3 + $0x154] sm:$0xf] %v724
        %761 = vst [vmem:[#allocation3 + $0x160] sm:$0xf] %v725
        %762 = vst [vmem:[#allocation3 + $0x16c] sm:$0xf] %v726
        %763 = vst [vmem:[#allocation3 + $0x178] sm:$0xf] %v727
        %764 = vst [vmem:[#allocation3 + $0x184] sm:$0xf] %v728
        %765 = vst [vmem:[#allocation3 + $0x190] sm:$0xf] %v729
        %766 = vst [vmem:[#allocation3 + $0x19c] sm:$0xf] %v730
        %767 = vst [vmem:[#allocation3 + $0x1a8] sm:$0xf] %v731
        %v768 = vld [vmem:[#allocation2 + $0x2] sm:$0xff]
        %v769 = vld [vmem:[#allocation2 + $0xa] sm:$0xff]
        %v770 = vld [vmem:[#allocation2 + $0x1a] sm:$0xff]
        %v771 = vld [vmem:[#allocation2 + $0x22] sm:$0xff]
        %v772 = vld [vmem:[#allocation2 + $0x32] sm:$0xff]
        %v773 = vld [vmem:[#allocation2 + $0x3a] sm:$0xff]
        %v774 = vld [vmem:[#allocation2 + $0x4a] sm:$0xff]
        %v775 = vld [vmem:[#allocation2 + $0x52] sm:$0xff]
        %v776 = vld [vmem:[#allocation2 + $0x62] sm:$0xff]
        %v777 = vld [vmem:[#allocation2 + $0x6a] sm:$0xff]
        %v778 = vld [vmem:[#allocation2 + $0x7a] sm:$0xff]
        %v779 = vld [vmem:[#allocation2 + $0x82] sm:$0xff]
        %v780 = vld [vmem:[#allocation2 + $0x92] sm:$0xff]
        %v781 = vld [vmem:[#allocation2 + $0x9a] sm:$0xff]
        %v782 = vld [vmem:[#allocation2 + $0xaa] sm:$0xff]
        %v783 = vld [vmem:[#allocation2 + $0xb2] sm:$0xff]
        %v784 = vld [vmem:[#allocation2 + $0xc2] sm:$0xff]
        %v785 = vld [vmem:[#allocation2 + $0xca] sm:$0xff]
        %v786 = vld [vmem:[#allocation2 + $0xda] sm:$0xff]
        %v787 = vld [vmem:[#allocation2 + $0xe2] sm:$0xff]
        %v788 = vld [vmem:[#allocation2 + $0xf2] sm:$0xff]
        %v789 = vld [vmem:[#allocation2 + $0xfa] sm:$0xff]
        %v790 = vld [vmem:[#allocation2 + $0x10a] sm:$0xff]
        %v791 = vld [vmem:[#allocation2 + $0x112] sm:$0xff]
        %v792 = vld [vmem:[#allocation2 + $0x122] sm:$0xff]
        %v793 = vld [vmem:[#allocation2 + $0x12a] sm:$0xff]
        %v794 = vld [vmem:[#allocation2 + $0x13a] sm:$0xff]
        %v795 = vld [vmem:[#allocation2 + $0x142] sm:$0xff]
        %v796 = vld [vmem:[#allocation2 + $0x152] sm:$0xff]
        %v797 = vld [vmem:[#allocation2 + $0x15a] sm:$0xff]
        %v798 = vld [vmem:[#allocation2 + $0x16a] sm:$0xff]
        %v799 = vld [vmem:[#allocation2 + $0x172] sm:$0xff]
        %v800 = vld [vmem:[#allocation2 + $0x182] sm:$0xff]
        %v801 = vld [vmem:[#allocation2 + $0x18a] sm:$0xff]
        %v802 = vld [vmem:[#allocation2 + $0x19a] sm:$0xff]
        %v803 = vld [vmem:[#allocation2 + $0x1a2] sm:$0xff]
        %v804 = vpack.c.bf16 %v768, %v768
        %v805 = vpack.c.bf16 %v769, %v769
        %v806 = vpack.c.bf16 %v770, %v770
        %v807 = vpack.c.bf16 %v771, %v771
        %v808 = vpack.c.bf16 %v772, %v772
        %v809 = vpack.c.bf16 %v773, %v773
        %v810 = vpack.c.bf16 %v774, %v774
        %v811 = vpack.c.bf16 %v775, %v775
        %v812 = vpack.c.bf16 %v776, %v776
        %v813 = vpack.c.bf16 %v777, %v777
        %v814 = vpack.c.bf16 %v778, %v778
        %v815 = vpack.c.bf16 %v779, %v779
        %v816 = vpack.c.bf16 %v780, %v780
        %v817 = vpack.c.bf16 %v781, %v781
        %v818 = vpack.c.bf16 %v782, %v782
        %v819 = vpack.c.bf16 %v783, %v783
        %v820 = vpack.c.bf16 %v784, %v784
        %v821 = vpack.c.bf16 %v785, %v785
        %v822 = vpack.c.bf16 %v786, %v786
        %v823 = vpack.c.bf16 %v787, %v787
        %v824 = vpack.c.bf16 %v788, %v788
        %v825 = vpack.c.bf16 %v789, %v789
        %v826 = vpack.c.bf16 %v790, %v790
        %v827 = vpack.c.bf16 %v791, %v791
        %v828 = vpack.c.bf16 %v792, %v792
        %v829 = vpack.c.bf16 %v793, %v793
        %v830 = vpack.c.bf16 %v794, %v794
        %v831 = vpack.c.bf16 %v795, %v795
        %v832 = vpack.c.bf16 %v796, %v796
        %v833 = vpack.c.bf16 %v797, %v797
        %v834 = vpack.c.bf16 %v798, %v798
        %v835 = vpack.c.bf16 %v799, %v799
        %v836 = vpack.c.bf16 %v800, %v800
        %v837 = vpack.c.bf16 %v801, %v801
        %v838 = vpack.c.bf16 %v802, %v802
        %v839 = vpack.c.bf16 %v803, %v803
        %840 = vst [vmem:[#allocation3 + $0x8] sm:$0xf] %v804
        %841 = vst [vmem:[#allocation3 + $0x14] sm:$0xf] %v805
        %842 = vst [vmem:[#allocation3 + $0x20] sm:$0xf] %v806
        %843 = vst [vmem:[#allocation3 + $0x2c] sm:$0xf] %v807
        %844 = vst [vmem:[#allocation3 + $0x38] sm:$0xf] %v808
        %845 = vst [vmem:[#allocation3 + $0x44] sm:$0xf] %v809
        %846 = vst [vmem:[#allocation3 + $0x50] sm:$0xf] %v810
        %847 = vst [vmem:[#allocation3 + $0x5c] sm:$0xf] %v811
        %848 = vst [vmem:[#allocation3 + $0x68] sm:$0xf] %v812
        %849 = vst [vmem:[#allocation3 + $0x74] sm:$0xf] %v813
        %850 = vst [vmem:[#allocation3 + $0x80] sm:$0xf] %v814
        %851 = vst [vmem:[#allocation3 + $0x8c] sm:$0xf] %v815
        %852 = vst [vmem:[#allocation3 + $0x98] sm:$0xf] %v816
        %853 = vst [vmem:[#allocation3 + $0xa4] sm:$0xf] %v817
        %854 = vst [vmem:[#allocation3 + $0xb0] sm:$0xf] %v818
        %855 = vst [vmem:[#allocation3 + $0xbc] sm:$0xf] %v819
        %856 = vst [vmem:[#allocation3 + $0xc8] sm:$0xf] %v820
        %857 = vst [vmem:[#allocation3 + $0xd4] sm:$0xf] %v821
        %858 = vst [vmem:[#allocation3 + $0xe0] sm:$0xf] %v822
        %859 = vst [vmem:[#allocation3 + $0xec] sm:$0xf] %v823
        %860 = vst [vmem:[#allocation3 + $0xf8] sm:$0xf] %v824
        %861 = vst [vmem:[#allocation3 + $0x104] sm:$0xf] %v825
        %862 = vst [vmem:[#allocation3 + $0x110] sm:$0xf] %v826
        %863 = vst [vmem:[#allocation3 + $0x11c] sm:$0xf] %v827
        %864 = vst [vmem:[#allocation3 + $0x128] sm:$0xf] %v828
        %865 = vst [vmem:[#allocation3 + $0x134] sm:$0xf] %v829
        %866 = vst [vmem:[#allocation3 + $0x140] sm:$0xf] %v830
        %867 = vst [vmem:[#allocation3 + $0x14c] sm:$0xf] %v831
        %868 = vst [vmem:[#allocation3 + $0x158] sm:$0xf] %v832
        %869 = vst [vmem:[#allocation3 + $0x164] sm:$0xf] %v833
        %870 = vst [vmem:[#allocation3 + $0x170] sm:$0xf] %v834
        %871 = vst [vmem:[#allocation3 + $0x17c] sm:$0xf] %v835
        %872 = vst [vmem:[#allocation3 + $0x188] sm:$0xf] %v836
        %873 = vst [vmem:[#allocation3 + $0x194] sm:$0xf] %v837
        %874 = vst [vmem:[#allocation3 + $0x1a0] sm:$0xf] %v838
        %875 = vst [vmem:[#allocation3 + $0x1ac] sm:$0xf] %v839
        %v876 = vld [vmem:[#allocation3] sm:$0xff]
        %v877 = vld [vmem:[#allocation3 + $0x8] sm:$0xf]
        %v878 = vld [vmem:[#allocation3 + $0xc] sm:$0xff]
        %v879 = vld [vmem:[#allocation3 + $0x14] sm:$0xf]
        %v880 = vld [vmem:[#allocation3 + $0x18] sm:$0xff]
        %v881 = vld [vmem:[#allocation3 + $0x20] sm:$0xf]
        %v882 = vld [vmem:[#allocation3 + $0x24] sm:$0xff]
        %v883 = vld [vmem:[#allocation3 + $0x2c] sm:$0xf]
        %v884 = vld [vmem:[#allocation3 + $0x30] sm:$0xff]
        %v885 = vld [vmem:[#allocation3 + $0x38] sm:$0xf]
        %v886 = vld [vmem:[#allocation3 + $0x3c] sm:$0xff]
        %v887 = vld [vmem:[#allocation3 + $0x44] sm:$0xf]
        %v888 = vld [vmem:[#allocation3 + $0x48] sm:$0xff]
        %v889 = vld [vmem:[#allocation3 + $0x50] sm:$0xf]
        %v890 = vld [vmem:[#allocation3 + $0x54] sm:$0xff]
        %v891 = vld [vmem:[#allocation3 + $0x5c] sm:$0xf]
        %v892 = vld [vmem:[#allocation3 + $0x60] sm:$0xff]
        %v893 = vld [vmem:[#allocation3 + $0x68] sm:$0xf]
        %v894 = vld [vmem:[#allocation3 + $0x6c] sm:$0xff]
        %v895 = vld [vmem:[#allocation3 + $0x74] sm:$0xf]
        %v896 = vld [vmem:[#allocation3 + $0x78] sm:$0xff]
        %v897 = vld [vmem:[#allocation3 + $0x80] sm:$0xf]
        %v898 = vld [vmem:[#allocation3 + $0x84] sm:$0xff]
        %v899 = vld [vmem:[#allocation3 + $0x8c] sm:$0xf]
        %v900 = vld [vmem:[#allocation3 + $0x90] sm:$0xff]
        %v901 = vld [vmem:[#allocation3 + $0x98] sm:$0xf]
        %v902 = vld [vmem:[#allocation3 + $0x9c] sm:$0xff]
        %v903 = vld [vmem:[#allocation3 + $0xa4] sm:$0xf]
        %v904 = vld [vmem:[#allocation3 + $0xa8] sm:$0xff]
        %v905 = vld [vmem:[#allocation3 + $0xb0] sm:$0xf]
        %v906 = vld [vmem:[#allocation3 + $0xb4] sm:$0xff]
        %v907 = vld [vmem:[#allocation3 + $0xbc] sm:$0xf]
        %v908 = vld [vmem:[#allocation3 + $0xc0] sm:$0xff]
        %v909 = vld [vmem:[#allocation3 + $0xc8] sm:$0xf]
        %v910 = vld [vmem:[#allocation3 + $0xcc] sm:$0xff]
        %v911 = vld [vmem:[#allocation3 + $0xd4] sm:$0xf]
        %v912 = vld [vmem:[#allocation3 + $0xd8] sm:$0xff]
        %v913 = vld [vmem:[#allocation3 + $0xe0] sm:$0xf]
        %v914 = vld [vmem:[#allocation3 + $0xe4] sm:$0xff]
        %v915 = vld [vmem:[#allocation3 + $0xec] sm:$0xf]
        %v916 = vld [vmem:[#allocation3 + $0xf0] sm:$0xff]
        %v917 = vld [vmem:[#allocation3 + $0xf8] sm:$0xf]
        %v918 = vld [vmem:[#allocation3 + $0xfc] sm:$0xff]
        %v919 = vld [vmem:[#allocation3 + $0x104] sm:$0xf]
        %v920 = vld [vmem:[#allocation3 + $0x108] sm:$0xff]
        %v921 = vld [vmem:[#allocation3 + $0x110] sm:$0xf]
        %v922 = vld [vmem:[#allocation3 + $0x114] sm:$0xff]
        %v923 = vld [vmem:[#allocation3 + $0x11c] sm:$0xf]
        %v924 = vld [vmem:[#allocation3 + $0x120] sm:$0xff]
        %v925 = vld [vmem:[#allocation3 + $0x128] sm:$0xf]
        %v926 = vld [vmem:[#allocation3 + $0x12c] sm:$0xff]
        %v927 = vld [vmem:[#allocation3 + $0x134] sm:$0xf]
        %v928 = vld [vmem:[#allocation3 + $0x138] sm:$0xff]
        %v929 = vld [vmem:[#allocation3 + $0x140] sm:$0xf]
        %v930 = vld [vmem:[#allocation3 + $0x144] sm:$0xff]
        %v931 = vld [vmem:[#allocation3 + $0x14c] sm:$0xf]
        %v932 = vld [vmem:[#allocation3 + $0x150] sm:$0xff]
        %v933 = vld [vmem:[#allocation3 + $0x158] sm:$0xf]
        %v934 = vld [vmem:[#allocation3 + $0x15c] sm:$0xff]
        %v935 = vld [vmem:[#allocation3 + $0x164] sm:$0xf]
        %v936 = vld [vmem:[#allocation3 + $0x168] sm:$0xff]
        %v937 = vld [vmem:[#allocation3 + $0x170] sm:$0xf]
        %v938 = vld [vmem:[#allocation3 + $0x174] sm:$0xff]
        %v939 = vld [vmem:[#allocation3 + $0x17c] sm:$0xf]
        %v940 = vld [vmem:[#allocation8] sm:$0xf]
        %v941 = vld [vmem:[#allocation8 + $0x4] sm:$0xf]
        %v942 = vld [vmem:[#allocation8 + $0x8] sm:$0xf]
        %v943 = vld [vmem:[#allocation8 + $0xc] sm:$0xf]
        %v944 = vld [vmem:[#allocation8 + $0x10] sm:$0xf]
        %v945 = vld [vmem:[#allocation8 + $0x14] sm:$0xf]
        %v946 = vld [vmem:[#allocation8 + $0x18] sm:$0xf]
        %v947 = vld [vmem:[#allocation8 + $0x1c] sm:$0xf]
        %v948 = vld [vmem:[#allocation8 + $0x20] sm:$0xf]
        %v949 = vld [vmem:[#allocation8 + $0x24] sm:$0xf]
        %v950 = vld [vmem:[#allocation8 + $0x28] sm:$0xf]
        %v951 = vld [vmem:[#allocation8 + $0x2c] sm:$0xf]
        %v952 = vld [vmem:[#allocation8 + $0x30] sm:$0xf]
        %v953 = vld [vmem:[#allocation8 + $0x34] sm:$0xf]
        %v954 = vld [vmem:[#allocation8 + $0x38] sm:$0xf]
        %v955 = vld [vmem:[#allocation8 + $0x3c] sm:$0xf]
        %v956 = vld [vmem:[#allocation8 + $0x40] sm:$0xf]
        %v957 = vld [vmem:[#allocation8 + $0x44] sm:$0xf]
        %v958 = vld [vmem:[#allocation8 + $0x48] sm:$0xf]
        %v959 = vld [vmem:[#allocation8 + $0x4c] sm:$0xf]
        %v960 = vld [vmem:[#allocation8 + $0x50] sm:$0xf]
        %v961 = vld [vmem:[#allocation8 + $0x54] sm:$0xf]
        %v962 = vld [vmem:[#allocation8 + $0x58] sm:$0xf]
        %v963 = vld [vmem:[#allocation8 + $0x5c] sm:$0xf]
        %v964 = vld [vmem:[#allocation8 + $0x60] sm:$0xf]
        %v965 = vld [vmem:[#allocation8 + $0x64] sm:$0xf]
        %v966 = vld [vmem:[#allocation8 + $0x68] sm:$0xf]
        %v967 = vld [vmem:[#allocation8 + $0x6c] sm:$0xf]
        %v968 = vld [vmem:[#allocation8 + $0x70] sm:$0xf]
        %v969 = vld [vmem:[#allocation8 + $0x74] sm:$0xf]
        %v970 = vld [vmem:[#allocation8 + $0x78] sm:$0xf]
        %v971 = vld [vmem:[#allocation8 + $0x7c] sm:$0xf]
        %v972 = vld [vmem:[#allocation8 + $0x80] sm:$0xf]
        %v973 = vld [vmem:[#allocation8 + $0x84] sm:$0xf]
        %v974 = vld [vmem:[#allocation8 + $0x88] sm:$0xf]
        %v975 = vld [vmem:[#allocation8 + $0x8c] sm:$0xf]
        %v976 = vld [vmem:[#allocation8 + $0x90] sm:$0xf]
        %v977 = vld [vmem:[#allocation8 + $0x94] sm:$0xf]
        %v978 = vld [vmem:[#allocation8 + $0x98] sm:$0xf]
        %v979 = vld [vmem:[#allocation8 + $0x9c] sm:$0xf]
        %v980 = vld [vmem:[#allocation8 + $0xa0] sm:$0xf]
        %v981 = vld [vmem:[#allocation8 + $0xa4] sm:$0xf]
        %v982 = vld [vmem:[#allocation8 + $0xa8] sm:$0xf]
        %v983 = vld [vmem:[#allocation8 + $0xac] sm:$0xf]
        %v984 = vld [vmem:[#allocation8 + $0xb0] sm:$0xf]
        %v985 = vld [vmem:[#allocation8 + $0xb4] sm:$0xf]
        %v986 = vld [vmem:[#allocation8 + $0xb8] sm:$0xf]
        %v987 = vld [vmem:[#allocation8 + $0xbc] sm:$0xf]
        %v1052 = vunpack.c.l.b16 %v876
        %v1053 = vunpack.c.h.b16 %v876
        %v1054 = vunpack.c.l.b16 %v877
        %v1055 = vunpack.c.l.b16 %v878
        %v1056 = vunpack.c.h.b16 %v878
        %v1057 = vunpack.c.l.b16 %v879
        %v1058 = vunpack.c.l.b16 %v880
        %v1059 = vunpack.c.h.b16 %v880
        %v1060 = vunpack.c.l.b16 %v881
        %v1061 = vunpack.c.l.b16 %v882
        %v1062 = vunpack.c.h.b16 %v882
        %v1063 = vunpack.c.l.b16 %v883
        %v1064 = vunpack.c.l.b16 %v884
        %v1065 = vunpack.c.h.b16 %v884
        %v1066 = vunpack.c.l.b16 %v885
        %v1067 = vunpack.c.l.b16 %v886
        %v1068 = vunpack.c.h.b16 %v886
        %v1069 = vunpack.c.l.b16 %v887
        %v1070 = vunpack.c.l.b16 %v888
        %v1071 = vunpack.c.h.b16 %v888
        %v1072 = vunpack.c.l.b16 %v889
        %v1073 = vunpack.c.l.b16 %v890
        %v1074 = vunpack.c.h.b16 %v890
        %v1075 = vunpack.c.l.b16 %v891
        %v1076 = vunpack.c.l.b16 %v892
        %v1077 = vunpack.c.h.b16 %v892
        %v1078 = vunpack.c.l.b16 %v893
        %v1079 = vunpack.c.l.b16 %v894
        %v1080 = vunpack.c.h.b16 %v894
        %v1081 = vunpack.c.l.b16 %v895
        %v1082 = vunpack.c.l.b16 %v896
        %v1083 = vunpack.c.h.b16 %v896
        %v1084 = vunpack.c.l.b16 %v897
        %v1085 = vunpack.c.l.b16 %v898
        %v1086 = vunpack.c.h.b16 %v898
        %v1087 = vunpack.c.l.b16 %v899
        %v1088 = vunpack.c.l.b16 %v900
        %v1089 = vunpack.c.h.b16 %v900
        %v1090 = vunpack.c.l.b16 %v901
        %v1091 = vunpack.c.l.b16 %v902
        %v1092 = vunpack.c.h.b16 %v902
        %v1093 = vunpack.c.l.b16 %v903
        %v1094 = vunpack.c.l.b16 %v904
        %v1095 = vunpack.c.h.b16 %v904
        %v1096 = vunpack.c.l.b16 %v905
        %v1097 = vunpack.c.l.b16 %v906
        %v1098 = vunpack.c.h.b16 %v906
        %v1099 = vunpack.c.l.b16 %v907
        %v1100 = vunpack.c.l.b16 %v908
        %v1101 = vunpack.c.h.b16 %v908
        %v1102 = vunpack.c.l.b16 %v909
        %v1103 = vunpack.c.l.b16 %v910
        %v1104 = vunpack.c.h.b16 %v910
        %v1105 = vunpack.c.l.b16 %v911
        %v1106 = vunpack.c.l.b16 %v912
        %v1107 = vunpack.c.h.b16 %v912
        %v1108 = vunpack.c.l.b16 %v913
        %v1109 = vunpack.c.l.b16 %v914
        %v1110 = vunpack.c.h.b16 %v914
        %v1111 = vunpack.c.l.b16 %v915
        %v1112 = vunpack.c.l.b16 %v916
        %v1113 = vunpack.c.h.b16 %v916
        %v1114 = vunpack.c.l.b16 %v917
        %v1115 = vunpack.c.l.b16 %v918
        %v1116 = vunpack.c.h.b16 %v918
        %v1117 = vunpack.c.l.b16 %v919
        %v1118 = vunpack.c.l.b16 %v920
        %v1119 = vunpack.c.h.b16 %v920
        %v1120 = vunpack.c.l.b16 %v921
        %v1121 = vunpack.c.l.b16 %v922
        %v1122 = vunpack.c.h.b16 %v922
        %v1123 = vunpack.c.l.b16 %v923
        %v1124 = vunpack.c.l.b16 %v924
        %v1125 = vunpack.c.h.b16 %v924
        %v1126 = vunpack.c.l.b16 %v925
        %v1127 = vunpack.c.l.b16 %v926
        %v1128 = vunpack.c.h.b16 %v926
        %v1129 = vunpack.c.l.b16 %v927
        %v1130 = vunpack.c.l.b16 %v928
        %v1131 = vunpack.c.h.b16 %v928
        %v1132 = vunpack.c.l.b16 %v929
        %v1133 = vunpack.c.l.b16 %v930
        %v1134 = vunpack.c.h.b16 %v930
        %v1135 = vunpack.c.l.b16 %v931
        %v1136 = vunpack.c.l.b16 %v932
        %v1137 = vunpack.c.h.b16 %v932
        %v1138 = vunpack.c.l.b16 %v933
        %v1139 = vunpack.c.l.b16 %v934
        %v1140 = vunpack.c.h.b16 %v934
        %v1141 = vunpack.c.l.b16 %v935
        %v1142 = vunpack.c.l.b16 %v936
        %v1143 = vunpack.c.h.b16 %v936
        %v1144 = vunpack.c.l.b16 %v937
        %v1145 = vunpack.c.l.b16 %v938
        %v1146 = vunpack.c.h.b16 %v938
        %v1147 = vunpack.c.l.b16 %v939
        %v1148 = vpack.c.b16 %v1055, %v1052
        %v1149 = vpack.c.b16 %v1056, %v1053
        %v1150 = vpack.c.b16 %v1057, %v1054
        %v1151 = vpack.c.b16 %v1061, %v1058
        %v1152 = vpack.c.b16 %v1062, %v1059
        %v1153 = vpack.c.b16 %v1063, %v1060
        %v1154 = vpack.c.b16 %v1067, %v1064
        %v1155 = vpack.c.b16 %v1068, %v1065
        %v1156 = vpack.c.b16 %v1069, %v1066
        %v1157 = vpack.c.b16 %v1073, %v1070
        %v1158 = vpack.c.b16 %v1074, %v1071
        %v1159 = vpack.c.b16 %v1075, %v1072
        %v1160 = vpack.c.b16 %v1079, %v1076
        %v1161 = vpack.c.b16 %v1080, %v1077
        %v1162 = vpack.c.b16 %v1081, %v1078
        %v1163 = vpack.c.b16 %v1085, %v1082
        %v1164 = vpack.c.b16 %v1086, %v1083
        %v1165 = vpack.c.b16 %v1087, %v1084
        %v1166 = vpack.c.b16 %v1091, %v1088
        %v1167 = vpack.c.b16 %v1092, %v1089
        %v1168 = vpack.c.b16 %v1093, %v1090
        %v1169 = vpack.c.b16 %v1097, %v1094
        %v1170 = vpack.c.b16 %v1098, %v1095
        %v1171 = vpack.c.b16 %v1099, %v1096
        %v1172 = vpack.c.b16 %v1103, %v1100
        %v1173 = vpack.c.b16 %v1104, %v1101
        %v1174 = vpack.c.b16 %v1105, %v1102
        %v1175 = vpack.c.b16 %v1109, %v1106
        %v1176 = vpack.c.b16 %v1110, %v1107
        %v1177 = vpack.c.b16 %v1111, %v1108
        %v1178 = vpack.c.b16 %v1115, %v1112
        %v1179 = vpack.c.b16 %v1116, %v1113
        %v1180 = vpack.c.b16 %v1117, %v1114
        %v1181 = vpack.c.b16 %v1121, %v1118
        %v1182 = vpack.c.b16 %v1122, %v1119
        %v1183 = vpack.c.b16 %v1123, %v1120
        %v1184 = vpack.c.b16 %v1127, %v1124
        %v1185 = vpack.c.b16 %v1128, %v1125
        %v1186 = vpack.c.b16 %v1129, %v1126
        %v1187 = vpack.c.b16 %v1133, %v1130
        %v1188 = vpack.c.b16 %v1134, %v1131
        %v1189 = vpack.c.b16 %v1135, %v1132
        %v1190 = vpack.c.b16 %v1139, %v1136
        %v1191 = vpack.c.b16 %v1140, %v1137
        %v1192 = vpack.c.b16 %v1141, %v1138
        %v1193 = vpack.c.b16 %v1145, %v1142
        %v1194 = vpack.c.b16 %v1146, %v1143
        %v1195 = vpack.c.b16 %v1147, %v1144
        %v1292 = vunpack.c.l.b16 %v940
        %v1293 = vunpack.c.l.b16 %v941
        %v1294 = vunpack.c.l.b16 %v942
        %v1295 = vunpack.c.l.b16 %v943
        %v1296 = vunpack.c.l.b16 %v944
        %v1297 = vunpack.c.l.b16 %v945
        %v1298 = vunpack.c.l.b16 %v946
        %v1299 = vunpack.c.l.b16 %v947
        %v1300 = vunpack.c.l.b16 %v948
        %v1301 = vunpack.c.l.b16 %v949
        %v1302 = vunpack.c.l.b16 %v950
        %v1303 = vunpack.c.l.b16 %v951
        %v1304 = vunpack.c.l.b16 %v952
        %v1305 = vunpack.c.l.b16 %v953
        %v1306 = vunpack.c.l.b16 %v954
        %v1307 = vunpack.c.l.b16 %v955
        %v1308 = vunpack.c.l.b16 %v956
        %v1309 = vunpack.c.l.b16 %v957
        %v1310 = vunpack.c.l.b16 %v958
        %v1311 = vunpack.c.l.b16 %v959
        %v1312 = vunpack.c.l.b16 %v960
        %v1313 = vunpack.c.l.b16 %v961
        %v1314 = vunpack.c.l.b16 %v962
        %v1315 = vunpack.c.l.b16 %v963
        %v1316 = vunpack.c.l.b16 %v964
        %v1317 = vunpack.c.l.b16 %v965
        %v1318 = vunpack.c.l.b16 %v966
        %v1319 = vunpack.c.l.b16 %v967
        %v1320 = vunpack.c.l.b16 %v968
        %v1321 = vunpack.c.l.b16 %v969
        %v1322 = vunpack.c.l.b16 %v970
        %v1323 = vunpack.c.l.b16 %v971
        %v1324 = vunpack.c.l.b16 %v972
        %v1325 = vunpack.c.l.b16 %v973
        %v1326 = vunpack.c.l.b16 %v974
        %v1327 = vunpack.c.l.b16 %v975
        %v1328 = vunpack.c.l.b16 %v976
        %v1329 = vunpack.c.l.b16 %v977
        %v1330 = vunpack.c.l.b16 %v978
        %v1331 = vunpack.c.l.b16 %v979
        %v1332 = vunpack.c.l.b16 %v980
        %v1333 = vunpack.c.l.b16 %v981
        %v1334 = vunpack.c.l.b16 %v982
        %v1335 = vunpack.c.l.b16 %v983
        %v1336 = vunpack.c.l.b16 %v984
        %v1337 = vunpack.c.l.b16 %v985
        %v1338 = vunpack.c.l.b16 %v986
        %v1339 = vunpack.c.l.b16 %v987
        %v1340 = vpack.c.b16 %v1293, %v1292
        %v1341 = vpack.c.b16 %v1295, %v1294
        %v1342 = vpack.c.b16 %v1297, %v1296
        %v1343 = vpack.c.b16 %v1299, %v1298
        %v1344 = vpack.c.b16 %v1301, %v1300
        %v1345 = vpack.c.b16 %v1303, %v1302
        %v1346 = vpack.c.b16 %v1305, %v1304
        %v1347 = vpack.c.b16 %v1307, %v1306
        %v1348 = vpack.c.b16 %v1309, %v1308
        %v1349 = vpack.c.b16 %v1311, %v1310
        %v1350 = vpack.c.b16 %v1313, %v1312
        %v1351 = vpack.c.b16 %v1315, %v1314
        %v1352 = vpack.c.b16 %v1317, %v1316
        %v1353 = vpack.c.b16 %v1319, %v1318
        %v1354 = vpack.c.b16 %v1321, %v1320
        %v1355 = vpack.c.b16 %v1323, %v1322
        %v1356 = vpack.c.b16 %v1325, %v1324
        %v1357 = vpack.c.b16 %v1327, %v1326
        %v1358 = vpack.c.b16 %v1329, %v1328
        %v1359 = vpack.c.b16 %v1331, %v1330
        %v1360 = vpack.c.b16 %v1333, %v1332
        %v1361 = vpack.c.b16 %v1335, %v1334
        %v1362 = vpack.c.b16 %v1337, %v1336
        %v1363 = vpack.c.b16 %v1339, %v1338
        %1388 = vmatpush.bf16.msra.mxu0 %v1347
        %1389 = vmatpush.bf16.msra.mxu0 %v1346
        %1390 = vmatpush.bf16.msra.mxu0 %v1345
        %1391 = vmatpush.bf16.msra.mxu0 %v1344
        %1392 = vmatpush.bf16.msra.mxu0 %v1343
        %1393 = vmatpush.bf16.msra.mxu0 %v1342
        %1394 = vmatpush.bf16.msra.mxu0 %v1341
        %1395 = vmatpush.bf16.msra.mxu0 %v1340
        %1396 = vmatmul.bf16.gmra.mxu0 %v1148
        %v1397 = vpop.f32.mrf.mxu0
        %v1398 = vadd.f32 0.0, %v1397
        %v1399 = vpop.f32.mrf.mxu0
        %v1400 = vadd.f32 0.0, %v1399
        %1401 = vmatmul.bf16.gmra.mxu0 %v1151
        %v1402 = vpop.f32.mrf.mxu0
        %v1403 = vadd.f32 0.0, %v1402
        %v1404 = vpop.f32.mrf.mxu0
        %v1405 = vadd.f32 0.0, %v1404
        %1406 = vmatmul.bf16.gmra.mxu0 %v1154
        %v1407 = vpop.f32.mrf.mxu0
        %v1408 = vadd.f32 0.0, %v1407
        %v1409 = vpop.f32.mrf.mxu0
        %v1410 = vadd.f32 0.0, %v1409
        %1411 = vmatmul.bf16.gmra.mxu0 %v1157
        %v1412 = vpop.f32.mrf.mxu0
        %v1413 = vadd.f32 0.0, %v1412
        %v1414 = vpop.f32.mrf.mxu0
        %v1415 = vadd.f32 0.0, %v1414
        %1416 = vmatmul.bf16.gmra.mxu0 %v1160
        %v1417 = vpop.f32.mrf.mxu0
        %v1418 = vadd.f32 0.0, %v1417
        %v1419 = vpop.f32.mrf.mxu0
        %v1420 = vadd.f32 0.0, %v1419
        %1421 = vmatmul.bf16.gmra.mxu0 %v1163
        %v1422 = vpop.f32.mrf.mxu0
        %v1423 = vadd.f32 0.0, %v1422
        %v1424 = vpop.f32.mrf.mxu0
        %v1425 = vadd.f32 0.0, %v1424
        %1426 = vmatmul.bf16.gmra.mxu0 %v1166
        %v1427 = vpop.f32.mrf.mxu0
        %v1428 = vadd.f32 0.0, %v1427
        %v1429 = vpop.f32.mrf.mxu0
        %v1430 = vadd.f32 0.0, %v1429
        %1431 = vmatmul.bf16.gmra.mxu0 %v1169
        %v1432 = vpop.f32.mrf.mxu0
        %v1433 = vadd.f32 0.0, %v1432
        %v1434 = vpop.f32.mrf.mxu0
        %v1435 = vadd.f32 0.0, %v1434
        %1436 = vmatmul.bf16.gmra.mxu0 %v1172
        %v1437 = vpop.f32.mrf.mxu0
        %v1438 = vadd.f32 0.0, %v1437
        %v1439 = vpop.f32.mrf.mxu0
        %v1440 = vadd.f32 0.0, %v1439
        %1441 = vmatmul.bf16.gmra.mxu0 %v1175
        %v1442 = vpop.f32.mrf.mxu0
        %v1443 = vadd.f32 0.0, %v1442
        %v1444 = vpop.f32.mrf.mxu0
        %v1445 = vadd.f32 0.0, %v1444
        %1446 = vmatmul.bf16.gmra.mxu0 %v1178
        %v1447 = vpop.f32.mrf.mxu0
        %v1448 = vadd.f32 0.0, %v1447
        %v1449 = vpop.f32.mrf.mxu0
        %v1450 = vadd.f32 0.0, %v1449
        %1451 = vmatmul.bf16.gmra.mxu0 %v1181
        %v1452 = vpop.f32.mrf.mxu0
        %v1453 = vadd.f32 0.0, %v1452
        %v1454 = vpop.f32.mrf.mxu0
        %v1455 = vadd.f32 0.0, %v1454
        %1456 = vmatmul.bf16.gmra.mxu0 %v1184
        %v1457 = vpop.f32.mrf.mxu0
        %v1458 = vadd.f32 0.0, %v1457
        %v1459 = vpop.f32.mrf.mxu0
        %v1460 = vadd.f32 0.0, %v1459
        %1461 = vmatmul.bf16.gmra.mxu0 %v1187
        %v1462 = vpop.f32.mrf.mxu0
        %v1463 = vadd.f32 0.0, %v1462
        %v1464 = vpop.f32.mrf.mxu0
        %v1465 = vadd.f32 0.0, %v1464
        %1466 = vmatmul.bf16.gmra.mxu0 %v1190
        %v1467 = vpop.f32.mrf.mxu0
        %v1468 = vadd.f32 0.0, %v1467
        %v1469 = vpop.f32.mrf.mxu0
        %v1470 = vadd.f32 0.0, %v1469
        %1471 = vmatmul.bf16.gmra.mxu0 %v1193
        %v1472 = vpop.f32.mrf.mxu0
        %v1473 = vadd.f32 0.0, %v1472
        %v1474 = vpop.f32.mrf.mxu0
        %v1475 = vadd.f32 0.0, %v1474
        %1476 = vdwg.mxu0
        %1477 = vmatpush.bf16.msra.mxu0 %v1355
        %1478 = vmatpush.bf16.msra.mxu0 %v1354
        %1479 = vmatpush.bf16.msra.mxu0 %v1353
        %1480 = vmatpush.bf16.msra.mxu0 %v1352
        %1481 = vmatpush.bf16.msra.mxu0 %v1351
        %1482 = vmatpush.bf16.msra.mxu0 %v1350
        %1483 = vmatpush.bf16.msra.mxu0 %v1349
        %1484 = vmatpush.bf16.msra.mxu0 %v1348
        %1485 = vmatmul.bf16.gmra.mxu0 %v1149
        %v1486 = vpop.f32.mrf.mxu0
        %v1487 = vadd.f32 %v1398, %v1486
        %v1488 = vpop.f32.mrf.mxu0
        %v1489 = vadd.f32 %v1400, %v1488
        %1490 = vmatmul.bf16.gmra.mxu0 %v1152
        %v1491 = vpop.f32.mrf.mxu0
        %v1492 = vadd.f32 %v1403, %v1491
        %v1493 = vpop.f32.mrf.mxu0
        %v1494 = vadd.f32 %v1405, %v1493
        %1495 = vmatmul.bf16.gmra.mxu0 %v1155
        %v1496 = vpop.f32.mrf.mxu0
        %v1497 = vadd.f32 %v1408, %v1496
        %v1498 = vpop.f32.mrf.mxu0
        %v1499 = vadd.f32 %v1410, %v1498
        %1500 = vmatmul.bf16.gmra.mxu0 %v1158
        %v1501 = vpop.f32.mrf.mxu0
        %v1502 = vadd.f32 %v1413, %v1501
        %v1503 = vpop.f32.mrf.mxu0
        %v1504 = vadd.f32 %v1415, %v1503
        %1505 = vmatmul.bf16.gmra.mxu0 %v1161
        %v1506 = vpop.f32.mrf.mxu0
        %v1507 = vadd.f32 %v1418, %v1506
        %v1508 = vpop.f32.mrf.mxu0
        %v1509 = vadd.f32 %v1420, %v1508
        %1510 = vmatmul.bf16.gmra.mxu0 %v1164
        %v1511 = vpop.f32.mrf.mxu0
        %v1512 = vadd.f32 %v1423, %v1511
        %v1513 = vpop.f32.mrf.mxu0
        %v1514 = vadd.f32 %v1425, %v1513
        %1515 = vmatmul.bf16.gmra.mxu0 %v1167
        %v1516 = vpop.f32.mrf.mxu0
        %v1517 = vadd.f32 %v1428, %v1516
        %v1518 = vpop.f32.mrf.mxu0
        %v1519 = vadd.f32 %v1430, %v1518
        %1520 = vmatmul.bf16.gmra.mxu0 %v1170
        %v1521 = vpop.f32.mrf.mxu0
        %v1522 = vadd.f32 %v1433, %v1521
        %v1523 = vpop.f32.mrf.mxu0
        %v1524 = vadd.f32 %v1435, %v1523
        %1525 = vmatmul.bf16.gmra.mxu0 %v1173
        %v1526 = vpop.f32.mrf.mxu0
        %v1527 = vadd.f32 %v1438, %v1526
        %v1528 = vpop.f32.mrf.mxu0
        %v1529 = vadd.f32 %v1440, %v1528
        %1530 = vmatmul.bf16.gmra.mxu0 %v1176
        %v1531 = vpop.f32.mrf.mxu0
        %v1532 = vadd.f32 %v1443, %v1531
        %v1533 = vpop.f32.mrf.mxu0
        %v1534 = vadd.f32 %v1445, %v1533
        %1535 = vmatmul.bf16.gmra.mxu0 %v1179
        %v1536 = vpop.f32.mrf.mxu0
        %v1537 = vadd.f32 %v1448, %v1536
        %v1538 = vpop.f32.mrf.mxu0
        %v1539 = vadd.f32 %v1450, %v1538
        %1540 = vmatmul.bf16.gmra.mxu0 %v1182
        %v1541 = vpop.f32.mrf.mxu0
        %v1542 = vadd.f32 %v1453, %v1541
        %v1543 = vpop.f32.mrf.mxu0
        %v1544 = vadd.f32 %v1455, %v1543
        %1545 = vmatmul.bf16.gmra.mxu0 %v1185
        %v1546 = vpop.f32.mrf.mxu0
        %v1547 = vadd.f32 %v1458, %v1546
        %v1548 = vpop.f32.mrf.mxu0
        %v1549 = vadd.f32 %v1460, %v1548
        %1550 = vmatmul.bf16.gmra.mxu0 %v1188
        %v1551 = vpop.f32.mrf.mxu0
        %v1552 = vadd.f32 %v1463, %v1551
        %v1553 = vpop.f32.mrf.mxu0
        %v1554 = vadd.f32 %v1465, %v1553
        %1555 = vmatmul.bf16.gmra.mxu0 %v1191
        %v1556 = vpop.f32.mrf.mxu0
        %v1557 = vadd.f32 %v1468, %v1556
        %v1558 = vpop.f32.mrf.mxu0
        %v1559 = vadd.f32 %v1470, %v1558
        %1560 = vmatmul.bf16.gmra.mxu0 %v1194
        %v1561 = vpop.f32.mrf.mxu0
        %v1562 = vadd.f32 %v1473, %v1561
        %v1563 = vpop.f32.mrf.mxu0
        %v1564 = vadd.f32 %v1475, %v1563
        %1565 = vdwg.mxu0
        %1566 = vmatpush.bf16.msra.mxu0 %v1363
        %1567 = vmatpush.bf16.msra.mxu0 %v1362
        %1568 = vmatpush.bf16.msra.mxu0 %v1361
        %1569 = vmatpush.bf16.msra.mxu0 %v1360
        %1570 = vmatpush.bf16.msra.mxu0 %v1359
        %1571 = vmatpush.bf16.msra.mxu0 %v1358
        %1572 = vmatpush.bf16.msra.mxu0 %v1357
        %1573 = vmatpush.bf16.msra.mxu0 %v1356
        %1574 = vmatmul.bf16.gmra.mxu0 %v1150
        %v1575 = vpop.f32.mrf.mxu0
        %v1576 = vadd.f32 %v1487, %v1575
        %v1577 = vpop.f32.mrf.mxu0
        %v1578 = vadd.f32 %v1489, %v1577
        %1579 = vmatmul.bf16.gmra.mxu0 %v1153
        %v1580 = vpop.f32.mrf.mxu0
        %v1581 = vadd.f32 %v1492, %v1580
        %v1582 = vpop.f32.mrf.mxu0
        %v1583 = vadd.f32 %v1494, %v1582
        %1584 = vmatmul.bf16.gmra.mxu0 %v1156
        %v1585 = vpop.f32.mrf.mxu0
        %v1586 = vadd.f32 %v1497, %v1585
        %v1587 = vpop.f32.mrf.mxu0
        %v1588 = vadd.f32 %v1499, %v1587
        %1589 = vmatmul.bf16.gmra.mxu0 %v1159
        %v1590 = vpop.f32.mrf.mxu0
        %v1591 = vadd.f32 %v1502, %v1590
        %v1592 = vpop.f32.mrf.mxu0
        %v1593 = vadd.f32 %v1504, %v1592
        %1594 = vmatmul.bf16.gmra.mxu0 %v1162
        %v1595 = vpop.f32.mrf.mxu0
        %v1596 = vadd.f32 %v1507, %v1595
        %v1597 = vpop.f32.mrf.mxu0
        %v1598 = vadd.f32 %v1509, %v1597
        %1599 = vmatmul.bf16.gmra.mxu0 %v1165
        %v1600 = vpop.f32.mrf.mxu0
        %v1601 = vadd.f32 %v1512, %v1600
        %v1602 = vpop.f32.mrf.mxu0
        %v1603 = vadd.f32 %v1514, %v1602
        %1604 = vmatmul.bf16.gmra.mxu0 %v1168
        %v1605 = vpop.f32.mrf.mxu0
        %v1606 = vadd.f32 %v1517, %v1605
        %v1607 = vpop.f32.mrf.mxu0
        %v1608 = vadd.f32 %v1519, %v1607
        %1609 = vmatmul.bf16.gmra.mxu0 %v1171
        %v1610 = vpop.f32.mrf.mxu0
        %v1611 = vadd.f32 %v1522, %v1610
        %v1612 = vpop.f32.mrf.mxu0
        %v1613 = vadd.f32 %v1524, %v1612
        %1614 = vmatmul.bf16.gmra.mxu0 %v1174
        %v1615 = vpop.f32.mrf.mxu0
        %v1616 = vadd.f32 %v1527, %v1615
        %v1617 = vpop.f32.mrf.mxu0
        %v1618 = vadd.f32 %v1529, %v1617
        %1619 = vmatmul.bf16.gmra.mxu0 %v1177
        %v1620 = vpop.f32.mrf.mxu0
        %v1621 = vadd.f32 %v1532, %v1620
        %v1622 = vpop.f32.mrf.mxu0
        %v1623 = vadd.f32 %v1534, %v1622
        %1624 = vmatmul.bf16.gmra.mxu0 %v1180
        %v1625 = vpop.f32.mrf.mxu0
        %v1626 = vadd.f32 %v1537, %v1625
        %v1627 = vpop.f32.mrf.mxu0
        %v1628 = vadd.f32 %v1539, %v1627
        %1629 = vmatmul.bf16.gmra.mxu0 %v1183
        %v1630 = vpop.f32.mrf.mxu0
        %v1631 = vadd.f32 %v1542, %v1630
        %v1632 = vpop.f32.mrf.mxu0
        %v1633 = vadd.f32 %v1544, %v1632
        %1634 = vmatmul.bf16.gmra.mxu0 %v1186
        %v1635 = vpop.f32.mrf.mxu0
        %v1636 = vadd.f32 %v1547, %v1635
        %v1637 = vpop.f32.mrf.mxu0
        %v1638 = vadd.f32 %v1549, %v1637
        %1639 = vmatmul.bf16.gmra.mxu0 %v1189
        %v1640 = vpop.f32.mrf.mxu0
        %v1641 = vadd.f32 %v1552, %v1640
        %v1642 = vpop.f32.mrf.mxu0
        %v1643 = vadd.f32 %v1554, %v1642
        %1644 = vmatmul.bf16.gmra.mxu0 %v1192
        %v1645 = vpop.f32.mrf.mxu0
        %v1646 = vadd.f32 %v1557, %v1645
        %v1647 = vpop.f32.mrf.mxu0
        %v1648 = vadd.f32 %v1559, %v1647
        %1649 = vmatmul.bf16.gmra.mxu0 %v1195
        %v1650 = vpop.f32.mrf.mxu0
        %v1651 = vadd.f32 %v1562, %v1650
        %v1652 = vpop.f32.mrf.mxu0
        %v1653 = vadd.f32 %v1564, %v1652
        %1654 = vdwg.mxu0
        %1655 = vst [vmem:[#allocation4] sm:$0xff] %v1576
        %1656 = vst [vmem:[#allocation4 + $0x8] sm:$0xff] %v1578
        %1657 = vst [vmem:[#allocation4 + $0x10] sm:$0xff] %v1581
        %1658 = vst [vmem:[#allocation4 + $0x18] sm:$0xff] %v1583
        %1659 = vst [vmem:[#allocation4 + $0x20] sm:$0xff] %v1586
        %1660 = vst [vmem:[#allocation4 + $0x28] sm:$0xff] %v1588
        %1661 = vst [vmem:[#allocation4 + $0x30] sm:$0xff] %v1591
        %1662 = vst [vmem:[#allocation4 + $0x38] sm:$0xff] %v1593
        %1663 = vst [vmem:[#allocation4 + $0x40] sm:$0xff] %v1596
        %1664 = vst [vmem:[#allocation4 + $0x48] sm:$0xff] %v1598
        %1665 = vst [vmem:[#allocation4 + $0x50] sm:$0xff] %v1601
        %1666 = vst [vmem:[#allocation4 + $0x58] sm:$0xff] %v1603
        %1667 = vst [vmem:[#allocation4 + $0x60] sm:$0xff] %v1606
        %1668 = vst [vmem:[#allocation4 + $0x68] sm:$0xff] %v1608
        %1669 = vst [vmem:[#allocation4 + $0x70] sm:$0xff] %v1611
        %1670 = vst [vmem:[#allocation4 + $0x78] sm:$0xff] %v1613
        %1671 = vst [vmem:[#allocation4 + $0x80] sm:$0xff] %v1616
        %1672 = vst [vmem:[#allocation4 + $0x88] sm:$0xff] %v1618
        %1673 = vst [vmem:[#allocation4 + $0x90] sm:$0xff] %v1621
        %1674 = vst [vmem:[#allocation4 + $0x98] sm:$0xff] %v1623
        %1675 = vst [vmem:[#allocation4 + $0xa0] sm:$0xff] %v1626
        %1676 = vst [vmem:[#allocation4 + $0xa8] sm:$0xff] %v1628
        %1677 = vst [vmem:[#allocation4 + $0xb0] sm:$0xff] %v1631
        %1678 = vst [vmem:[#allocation4 + $0xb8] sm:$0xff] %v1633
        %1679 = vst [vmem:[#allocation4 + $0xc0] sm:$0xff] %v1636
        %1680 = vst [vmem:[#allocation4 + $0xc8] sm:$0xff] %v1638
        %1681 = vst [vmem:[#allocation4 + $0xd0] sm:$0xff] %v1641
        %1682 = vst [vmem:[#allocation4 + $0xd8] sm:$0xff] %v1643
        %1683 = vst [vmem:[#allocation4 + $0xe0] sm:$0xff] %v1646
        %1684 = vst [vmem:[#allocation4 + $0xe8] sm:$0xff] %v1648
        %1685 = vst [vmem:[#allocation4 + $0xf0] sm:$0xff] %v1651
        %1686 = vst [vmem:[#allocation4 + $0xf8] sm:$0xff] %v1653
        %s1687 = scalar_lea.vmem [#allocation3], 24
        %v1688 = vld [vmem:[%s1687] sm:$0xff]
        %v1689 = vld [vmem:[%s1687 + $0x8] sm:$0xf]
        %v1690 = vld [vmem:[%s1687 + $0xc] sm:$0xff]
        %v1691 = vld [vmem:[%s1687 + $0x14] sm:$0xf]
        %v1692 = vld [vmem:[%s1687 + $0x18] sm:$0xff]
        %v1693 = vld [vmem:[%s1687 + $0x20] sm:$0xf]
        %v1694 = vld [vmem:[%s1687 + $0x24] sm:$0xff]
        %v1695 = vld [vmem:[%s1687 + $0x2c] sm:$0xf]
        %v1696 = vld [vmem:[%s1687 + $0x30] sm:$0xff]
        %v1697 = vld [vmem:[%s1687 + $0x38] sm:$0xf]
        %v1698 = vld [vmem:[%s1687 + $0x3c] sm:$0xff]
        %v1699 = vld [vmem:[%s1687 + $0x44] sm:$0xf]
        %v1700 = vld [vmem:[%s1687 + $0x48] sm:$0xff]
        %v1701 = vld [vmem:[%s1687 + $0x50] sm:$0xf]
        %v1702 = vld [vmem:[%s1687 + $0x54] sm:$0xff]
        %v1703 = vld [vmem:[%s1687 + $0x5c] sm:$0xf]
        %v1704 = vld [vmem:[%s1687 + $0x60] sm:$0xff]
        %v1705 = vld [vmem:[%s1687 + $0x68] sm:$0xf]
        %v1706 = vld [vmem:[%s1687 + $0x6c] sm:$0xff]
        %v1707 = vld [vmem:[%s1687 + $0x74] sm:$0xf]
        %v1708 = vld [vmem:[%s1687 + $0x78] sm:$0xff]
        %v1709 = vld [vmem:[%s1687 + $0x80] sm:$0xf]
        %v1710 = vld [vmem:[%s1687 + $0x84] sm:$0xff]
        %v1711 = vld [vmem:[%s1687 + $0x8c] sm:$0xf]
        %v1712 = vld [vmem:[%s1687 + $0x90] sm:$0xff]
        %v1713 = vld [vmem:[%s1687 + $0x98] sm:$0xf]
        %v1714 = vld [vmem:[%s1687 + $0x9c] sm:$0xff]
        %v1715 = vld [vmem:[%s1687 + $0xa4] sm:$0xf]
        %v1716 = vld [vmem:[%s1687 + $0xa8] sm:$0xff]
        %v1717 = vld [vmem:[%s1687 + $0xb0] sm:$0xf]
        %v1718 = vld [vmem:[%s1687 + $0xb4] sm:$0xff]
        %v1719 = vld [vmem:[%s1687 + $0xbc] sm:$0xf]
        %v1720 = vld [vmem:[%s1687 + $0xc0] sm:$0xff]
        %v1721 = vld [vmem:[%s1687 + $0xc8] sm:$0xf]
        %v1722 = vld [vmem:[%s1687 + $0xcc] sm:$0xff]
        %v1723 = vld [vmem:[%s1687 + $0xd4] sm:$0xf]
        %v1724 = vld [vmem:[%s1687 + $0xd8] sm:$0xff]
        %v1725 = vld [vmem:[%s1687 + $0xe0] sm:$0xf]
        %v1726 = vld [vmem:[%s1687 + $0xe4] sm:$0xff]
        %v1727 = vld [vmem:[%s1687 + $0xec] sm:$0xf]
        %v1728 = vld [vmem:[%s1687 + $0xf0] sm:$0xff]
        %v1729 = vld [vmem:[%s1687 + $0xf8] sm:$0xf]
        %v1730 = vld [vmem:[%s1687 + $0xfc] sm:$0xff]
        %v1731 = vld [vmem:[%s1687 + $0x104] sm:$0xf]
        %v1732 = vld [vmem:[%s1687 + $0x108] sm:$0xff]
        %v1733 = vld [vmem:[%s1687 + $0x110] sm:$0xf]
        %v1734 = vld [vmem:[%s1687 + $0x114] sm:$0xff]
        %v1735 = vld [vmem:[%s1687 + $0x11c] sm:$0xf]
        %v1736 = vld [vmem:[%s1687 + $0x120] sm:$0xff]
        %v1737 = vld [vmem:[%s1687 + $0x128] sm:$0xf]
        %v1738 = vld [vmem:[%s1687 + $0x12c] sm:$0xff]
        %v1739 = vld [vmem:[%s1687 + $0x134] sm:$0xf]
        %v1740 = vld [vmem:[%s1687 + $0x138] sm:$0xff]
        %v1741 = vld [vmem:[%s1687 + $0x140] sm:$0xf]
        %v1742 = vld [vmem:[%s1687 + $0x144] sm:$0xff]
        %v1743 = vld [vmem:[%s1687 + $0x14c] sm:$0xf]
        %v1744 = vld [vmem:[%s1687 + $0x150] sm:$0xff]
        %v1745 = vld [vmem:[%s1687 + $0x158] sm:$0xf]
        %v1746 = vld [vmem:[%s1687 + $0x15c] sm:$0xff]
        %v1747 = vld [vmem:[%s1687 + $0x164] sm:$0xf]
        %v1748 = vld [vmem:[%s1687 + $0x168] sm:$0xff]
        %v1749 = vld [vmem:[%s1687 + $0x170] sm:$0xf]
        %v1750 = vld [vmem:[%s1687 + $0x174] sm:$0xff]
        %v1751 = vld [vmem:[%s1687 + $0x17c] sm:$0xf]
        %s1752 = scalar_lea.vmem [#allocation8], 192
        %v1753 = vld [vmem:[%s1752] sm:$0xf]
        %v1754 = vld [vmem:[%s1752 + $0x4] sm:$0xf]
        %v1755 = vld [vmem:[%s1752 + $0x8] sm:$0xf]
        %v1756 = vld [vmem:[%s1752 + $0xc] sm:$0xf]
        %v1757 = vld [vmem:[%s1752 + $0x10] sm:$0xf]
        %v1758 = vld [vmem:[%s1752 + $0x14] sm:$0xf]
        %v1759 = vld [vmem:[%s1752 + $0x18] sm:$0xf]
        %v1760 = vld [vmem:[%s1752 + $0x1c] sm:$0xf]
        %v1761 = vld [vmem:[%s1752 + $0x20] sm:$0xf]
        %v1762 = vld [vmem:[%s1752 + $0x24] sm:$0xf]
        %v1763 = vld [vmem:[%s1752 + $0x28] sm:$0xf]
        %v1764 = vld [vmem:[%s1752 + $0x2c] sm:$0xf]
        %v1765 = vld [vmem:[%s1752 + $0x30] sm:$0xf]
        %v1766 = vld [vmem:[%s1752 + $0x34] sm:$0xf]
        %v1767 = vld [vmem:[%s1752 + $0x38] sm:$0xf]
        %v1768 = vld [vmem:[%s1752 + $0x3c] sm:$0xf]
        %v1769 = vld [vmem:[%s1752 + $0x40] sm:$0xf]
        %v1770 = vld [vmem:[%s1752 + $0x44] sm:$0xf]
        %v1771 = vld [vmem:[%s1752 + $0x48] sm:$0xf]
        %v1772 = vld [vmem:[%s1752 + $0x4c] sm:$0xf]
        %v1773 = vld [vmem:[%s1752 + $0x50] sm:$0xf]
        %v1774 = vld [vmem:[%s1752 + $0x54] sm:$0xf]
        %v1775 = vld [vmem:[%s1752 + $0x58] sm:$0xf]
        %v1776 = vld [vmem:[%s1752 + $0x5c] sm:$0xf]
        %v1777 = vld [vmem:[%s1752 + $0x60] sm:$0xf]
        %v1778 = vld [vmem:[%s1752 + $0x64] sm:$0xf]
        %v1779 = vld [vmem:[%s1752 + $0x68] sm:$0xf]
        %v1780 = vld [vmem:[%s1752 + $0x6c] sm:$0xf]
        %v1781 = vld [vmem:[%s1752 + $0x70] sm:$0xf]
        %v1782 = vld [vmem:[%s1752 + $0x74] sm:$0xf]
        %v1783 = vld [vmem:[%s1752 + $0x78] sm:$0xf]
        %v1784 = vld [vmem:[%s1752 + $0x7c] sm:$0xf]
        %v1785 = vld [vmem:[%s1752 + $0x80] sm:$0xf]
        %v1786 = vld [vmem:[%s1752 + $0x84] sm:$0xf]
        %v1787 = vld [vmem:[%s1752 + $0x88] sm:$0xf]
        %v1788 = vld [vmem:[%s1752 + $0x8c] sm:$0xf]
        %v1789 = vld [vmem:[%s1752 + $0x90] sm:$0xf]
        %v1790 = vld [vmem:[%s1752 + $0x94] sm:$0xf]
        %v1791 = vld [vmem:[%s1752 + $0x98] sm:$0xf]
        %v1792 = vld [vmem:[%s1752 + $0x9c] sm:$0xf]
        %v1793 = vld [vmem:[%s1752 + $0xa0] sm:$0xf]
        %v1794 = vld [vmem:[%s1752 + $0xa4] sm:$0xf]
        %v1795 = vld [vmem:[%s1752 + $0xa8] sm:$0xf]
        %v1796 = vld [vmem:[%s1752 + $0xac] sm:$0xf]
        %v1797 = vld [vmem:[%s1752 + $0xb0] sm:$0xf]
        %v1798 = vld [vmem:[%s1752 + $0xb4] sm:$0xf]
        %v1799 = vld [vmem:[%s1752 + $0xb8] sm:$0xf]
        %v1800 = vld [vmem:[%s1752 + $0xbc] sm:$0xf]
        %v1865 = vunpack.c.l.b16 %v1688
        %v1866 = vunpack.c.h.b16 %v1688
        %v1867 = vunpack.c.l.b16 %v1689
        %v1868 = vunpack.c.l.b16 %v1690
        %v1869 = vunpack.c.h.b16 %v1690
        %v1870 = vunpack.c.l.b16 %v1691
        %v1871 = vunpack.c.l.b16 %v1692
        %v1872 = vunpack.c.h.b16 %v1692
        %v1873 = vunpack.c.l.b16 %v1693
        %v1874 = vunpack.c.l.b16 %v1694
        %v1875 = vunpack.c.h.b16 %v1694
        %v1876 = vunpack.c.l.b16 %v1695
        %v1877 = vunpack.c.l.b16 %v1696
        %v1878 = vunpack.c.h.b16 %v1696
        %v1879 = vunpack.c.l.b16 %v1697
        %v1880 = vunpack.c.l.b16 %v1698
        %v1881 = vunpack.c.h.b16 %v1698
        %v1882 = vunpack.c.l.b16 %v1699
        %v1883 = vunpack.c.l.b16 %v1700
        %v1884 = vunpack.c.h.b16 %v1700
        %v1885 = vunpack.c.l.b16 %v1701
        %v1886 = vunpack.c.l.b16 %v1702
        %v1887 = vunpack.c.h.b16 %v1702
        %v1888 = vunpack.c.l.b16 %v1703
        %v1889 = vunpack.c.l.b16 %v1704
        %v1890 = vunpack.c.h.b16 %v1704
        %v1891 = vunpack.c.l.b16 %v1705
        %v1892 = vunpack.c.l.b16 %v1706
        %v1893 = vunpack.c.h.b16 %v1706
        %v1894 = vunpack.c.l.b16 %v1707
        %v1895 = vunpack.c.l.b16 %v1708
        %v1896 = vunpack.c.h.b16 %v1708
        %v1897 = vunpack.c.l.b16 %v1709
        %v1898 = vunpack.c.l.b16 %v1710
        %v1899 = vunpack.c.h.b16 %v1710
        %v1900 = vunpack.c.l.b16 %v1711
        %v1901 = vunpack.c.l.b16 %v1712
        %v1902 = vunpack.c.h.b16 %v1712
        %v1903 = vunpack.c.l.b16 %v1713
        %v1904 = vunpack.c.l.b16 %v1714
        %v1905 = vunpack.c.h.b16 %v1714
        %v1906 = vunpack.c.l.b16 %v1715
        %v1907 = vunpack.c.l.b16 %v1716
        %v1908 = vunpack.c.h.b16 %v1716
        %v1909 = vunpack.c.l.b16 %v1717
        %v1910 = vunpack.c.l.b16 %v1718
        %v1911 = vunpack.c.h.b16 %v1718
        %v1912 = vunpack.c.l.b16 %v1719
        %v1913 = vunpack.c.l.b16 %v1720
        %v1914 = vunpack.c.h.b16 %v1720
        %v1915 = vunpack.c.l.b16 %v1721
        %v1916 = vunpack.c.l.b16 %v1722
        %v1917 = vunpack.c.h.b16 %v1722
        %v1918 = vunpack.c.l.b16 %v1723
        %v1919 = vunpack.c.l.b16 %v1724
        %v1920 = vunpack.c.h.b16 %v1724
        %v1921 = vunpack.c.l.b16 %v1725
        %v1922 = vunpack.c.l.b16 %v1726
        %v1923 = vunpack.c.h.b16 %v1726
        %v1924 = vunpack.c.l.b16 %v1727
        %v1925 = vunpack.c.l.b16 %v1728
        %v1926 = vunpack.c.h.b16 %v1728
        %v1927 = vunpack.c.l.b16 %v1729
        %v1928 = vunpack.c.l.b16 %v1730
        %v1929 = vunpack.c.h.b16 %v1730
        %v1930 = vunpack.c.l.b16 %v1731
        %v1931 = vunpack.c.l.b16 %v1732
        %v1932 = vunpack.c.h.b16 %v1732
        %v1933 = vunpack.c.l.b16 %v1733
        %v1934 = vunpack.c.l.b16 %v1734
        %v1935 = vunpack.c.h.b16 %v1734
        %v1936 = vunpack.c.l.b16 %v1735
        %v1937 = vunpack.c.l.b16 %v1736
        %v1938 = vunpack.c.h.b16 %v1736
        %v1939 = vunpack.c.l.b16 %v1737
        %v1940 = vunpack.c.l.b16 %v1738
        %v1941 = vunpack.c.h.b16 %v1738
        %v1942 = vunpack.c.l.b16 %v1739
        %v1943 = vunpack.c.l.b16 %v1740
        %v1944 = vunpack.c.h.b16 %v1740
        %v1945 = vunpack.c.l.b16 %v1741
        %v1946 = vunpack.c.l.b16 %v1742
        %v1947 = vunpack.c.h.b16 %v1742
        %v1948 = vunpack.c.l.b16 %v1743
        %v1949 = vunpack.c.l.b16 %v1744
        %v1950 = vunpack.c.h.b16 %v1744
        %v1951 = vunpack.c.l.b16 %v1745
        %v1952 = vunpack.c.l.b16 %v1746
        %v1953 = vunpack.c.h.b16 %v1746
        %v1954 = vunpack.c.l.b16 %v1747
        %v1955 = vunpack.c.l.b16 %v1748
        %v1956 = vunpack.c.h.b16 %v1748
        %v1957 = vunpack.c.l.b16 %v1749
        %v1958 = vunpack.c.l.b16 %v1750
        %v1959 = vunpack.c.h.b16 %v1750
        %v1960 = vunpack.c.l.b16 %v1751
        %v1961 = vpack.c.b16 %v1868, %v1865
        %v1962 = vpack.c.b16 %v1869, %v1866
        %v1963 = vpack.c.b16 %v1870, %v1867
        %v1964 = vpack.c.b16 %v1874, %v1871
        %v1965 = vpack.c.b16 %v1875, %v1872
        %v1966 = vpack.c.b16 %v1876, %v1873
        %v1967 = vpack.c.b16 %v1880, %v1877
        %v1968 = vpack.c.b16 %v1881, %v1878
        %v1969 = vpack.c.b16 %v1882, %v1879
        %v1970 = vpack.c.b16 %v1886, %v1883
        %v1971 = vpack.c.b16 %v1887, %v1884
        %v1972 = vpack.c.b16 %v1888, %v1885
        %v1973 = vpack.c.b16 %v1892, %v1889
        %v1974 = vpack.c.b16 %v1893, %v1890
        %v1975 = vpack.c.b16 %v1894, %v1891
        %v1976 = vpack.c.b16 %v1898, %v1895
        %v1977 = vpack.c.b16 %v1899, %v1896
        %v1978 = vpack.c.b16 %v1900, %v1897
        %v1979 = vpack.c.b16 %v1904, %v1901
        %v1980 = vpack.c.b16 %v1905, %v1902
        %v1981 = vpack.c.b16 %v1906, %v1903
        %v1982 = vpack.c.b16 %v1910, %v1907
        %v1983 = vpack.c.b16 %v1911, %v1908
        %v1984 = vpack.c.b16 %v1912, %v1909
        %v1985 = vpack.c.b16 %v1916, %v1913
        %v1986 = vpack.c.b16 %v1917, %v1914
        %v1987 = vpack.c.b16 %v1918, %v1915
        %v1988 = vpack.c.b16 %v1922, %v1919
        %v1989 = vpack.c.b16 %v1923, %v1920
        %v1990 = vpack.c.b16 %v1924, %v1921
        %v1991 = vpack.c.b16 %v1928, %v1925
        %v1992 = vpack.c.b16 %v1929, %v1926
        %v1993 = vpack.c.b16 %v1930, %v1927
        %v1994 = vpack.c.b16 %v1934, %v1931
        %v1995 = vpack.c.b16 %v1935, %v1932
        %v1996 = vpack.c.b16 %v1936, %v1933
        %v1997 = vpack.c.b16 %v1940, %v1937
        %v1998 = vpack.c.b16 %v1941, %v1938
        %v1999 = vpack.c.b16 %v1942, %v1939
        %v2000 = vpack.c.b16 %v1946, %v1943
        %v2001 = vpack.c.b16 %v1947, %v1944
        %v2002 = vpack.c.b16 %v1948, %v1945
        %v2003 = vpack.c.b16 %v1952, %v1949
        %v2004 = vpack.c.b16 %v1953, %v1950
        %v2005 = vpack.c.b16 %v1954, %v1951
        %v2006 = vpack.c.b16 %v1958, %v1955
        %v2007 = vpack.c.b16 %v1959, %v1956
        %v2008 = vpack.c.b16 %v1960, %v1957
        %v2105 = vunpack.c.l.b16 %v1753
        %v2106 = vunpack.c.l.b16 %v1754
        %v2107 = vunpack.c.l.b16 %v1755
        %v2108 = vunpack.c.l.b16 %v1756
        %v2109 = vunpack.c.l.b16 %v1757
        %v2110 = vunpack.c.l.b16 %v1758
        %v2111 = vunpack.c.l.b16 %v1759
        %v2112 = vunpack.c.l.b16 %v1760
        %v2113 = vunpack.c.l.b16 %v1761
        %v2114 = vunpack.c.l.b16 %v1762
        %v2115 = vunpack.c.l.b16 %v1763
        %v2116 = vunpack.c.l.b16 %v1764
        %v2117 = vunpack.c.l.b16 %v1765
        %v2118 = vunpack.c.l.b16 %v1766
        %v2119 = vunpack.c.l.b16 %v1767
        %v2120 = vunpack.c.l.b16 %v1768
        %v2121 = vunpack.c.l.b16 %v1769
        %v2122 = vunpack.c.l.b16 %v1770
        %v2123 = vunpack.c.l.b16 %v1771
        %v2124 = vunpack.c.l.b16 %v1772
        %v2125 = vunpack.c.l.b16 %v1773
        %v2126 = vunpack.c.l.b16 %v1774
        %v2127 = vunpack.c.l.b16 %v1775
        %v2128 = vunpack.c.l.b16 %v1776
        %v2129 = vunpack.c.l.b16 %v1777
        %v2130 = vunpack.c.l.b16 %v1778
        %v2131 = vunpack.c.l.b16 %v1779
        %v2132 = vunpack.c.l.b16 %v1780
        %v2133 = vunpack.c.l.b16 %v1781
        %v2134 = vunpack.c.l.b16 %v1782
        %v2135 = vunpack.c.l.b16 %v1783
        %v2136 = vunpack.c.l.b16 %v1784
        %v2137 = vunpack.c.l.b16 %v1785
        %v2138 = vunpack.c.l.b16 %v1786
        %v2139 = vunpack.c.l.b16 %v1787
        %v2140 = vunpack.c.l.b16 %v1788
        %v2141 = vunpack.c.l.b16 %v1789
        %v2142 = vunpack.c.l.b16 %v1790
        %v2143 = vunpack.c.l.b16 %v1791
        %v2144 = vunpack.c.l.b16 %v1792
        %v2145 = vunpack.c.l.b16 %v1793
        %v2146 = vunpack.c.l.b16 %v1794
        %v2147 = vunpack.c.l.b16 %v1795
        %v2148 = vunpack.c.l.b16 %v1796
        %v2149 = vunpack.c.l.b16 %v1797
        %v2150 = vunpack.c.l.b16 %v1798
        %v2151 = vunpack.c.l.b16 %v1799
        %v2152 = vunpack.c.l.b16 %v1800
        %v2153 = vpack.c.b16 %v2106, %v2105
        %v2154 = vpack.c.b16 %v2108, %v2107
        %v2155 = vpack.c.b16 %v2110, %v2109
        %v2156 = vpack.c.b16 %v2112, %v2111
        %v2157 = vpack.c.b16 %v2114, %v2113
        %v2158 = vpack.c.b16 %v2116, %v2115
        %v2159 = vpack.c.b16 %v2118, %v2117
        %v2160 = vpack.c.b16 %v2120, %v2119
        %v2161 = vpack.c.b16 %v2122, %v2121
        %v2162 = vpack.c.b16 %v2124, %v2123
        %v2163 = vpack.c.b16 %v2126, %v2125
        %v2164 = vpack.c.b16 %v2128, %v2127
        %v2165 = vpack.c.b16 %v2130, %v2129
        %v2166 = vpack.c.b16 %v2132, %v2131
        %v2167 = vpack.c.b16 %v2134, %v2133
        %v2168 = vpack.c.b16 %v2136, %v2135
        %v2169 = vpack.c.b16 %v2138, %v2137
        %v2170 = vpack.c.b16 %v2140, %v2139
        %v2171 = vpack.c.b16 %v2142, %v2141
        %v2172 = vpack.c.b16 %v2144, %v2143
        %v2173 = vpack.c.b16 %v2146, %v2145
        %v2174 = vpack.c.b16 %v2148, %v2147
        %v2175 = vpack.c.b16 %v2150, %v2149
        %v2176 = vpack.c.b16 %v2152, %v2151
        %2201 = vmatpush.bf16.msra.mxu0 %v2160
        %2202 = vmatpush.bf16.msra.mxu0 %v2159
        %2203 = vmatpush.bf16.msra.mxu0 %v2158
        %2204 = vmatpush.bf16.msra.mxu0 %v2157
        %2205 = vmatpush.bf16.msra.mxu0 %v2156
        %2206 = vmatpush.bf16.msra.mxu0 %v2155
        %2207 = vmatpush.bf16.msra.mxu0 %v2154
        %2208 = vmatpush.bf16.msra.mxu0 %v2153
        %2209 = vmatmul.bf16.gmra.mxu0 %v1961
        %v2210 = vpop.f32.mrf.mxu0
        %v2211 = vadd.f32 0.0, %v2210
        %v2212 = vpop.f32.mrf.mxu0
        %v2213 = vadd.f32 0.0, %v2212
        %2214 = vmatmul.bf16.gmra.mxu0 %v1964
        %v2215 = vpop.f32.mrf.mxu0
        %v2216 = vadd.f32 0.0, %v2215
        %v2217 = vpop.f32.mrf.mxu0
        %v2218 = vadd.f32 0.0, %v2217
        %2219 = vmatmul.bf16.gmra.mxu0 %v1967
        %v2220 = vpop.f32.mrf.mxu0
        %v2221 = vadd.f32 0.0, %v2220
        %v2222 = vpop.f32.mrf.mxu0
        %v2223 = vadd.f32 0.0, %v2222
        %2224 = vmatmul.bf16.gmra.mxu0 %v1970
        %v2225 = vpop.f32.mrf.mxu0
        %v2226 = vadd.f32 0.0, %v2225
        %v2227 = vpop.f32.mrf.mxu0
        %v2228 = vadd.f32 0.0, %v2227
        %2229 = vmatmul.bf16.gmra.mxu0 %v1973
        %v2230 = vpop.f32.mrf.mxu0
        %v2231 = vadd.f32 0.0, %v2230
        %v2232 = vpop.f32.mrf.mxu0
        %v2233 = vadd.f32 0.0, %v2232
        %2234 = vmatmul.bf16.gmra.mxu0 %v1976
        %v2235 = vpop.f32.mrf.mxu0
        %v2236 = vadd.f32 0.0, %v2235
        %v2237 = vpop.f32.mrf.mxu0
        %v2238 = vadd.f32 0.0, %v2237
        %2239 = vmatmul.bf16.gmra.mxu0 %v1979
        %v2240 = vpop.f32.mrf.mxu0
        %v2241 = vadd.f32 0.0, %v2240
        %v2242 = vpop.f32.mrf.mxu0
        %v2243 = vadd.f32 0.0, %v2242
        %2244 = vmatmul.bf16.gmra.mxu0 %v1982
        %v2245 = vpop.f32.mrf.mxu0
        %v2246 = vadd.f32 0.0, %v2245
        %v2247 = vpop.f32.mrf.mxu0
        %v2248 = vadd.f32 0.0, %v2247
        %2249 = vmatmul.bf16.gmra.mxu0 %v1985
        %v2250 = vpop.f32.mrf.mxu0
        %v2251 = vadd.f32 0.0, %v2250
        %v2252 = vpop.f32.mrf.mxu0
        %v2253 = vadd.f32 0.0, %v2252
        %2254 = vmatmul.bf16.gmra.mxu0 %v1988
        %v2255 = vpop.f32.mrf.mxu0
        %v2256 = vadd.f32 0.0, %v2255
        %v2257 = vpop.f32.mrf.mxu0
        %v2258 = vadd.f32 0.0, %v2257
        %2259 = vmatmul.bf16.gmra.mxu0 %v1991
        %v2260 = vpop.f32.mrf.mxu0
        %v2261 = vadd.f32 0.0, %v2260
        %v2262 = vpop.f32.mrf.mxu0
        %v2263 = vadd.f32 0.0, %v2262
        %2264 = vmatmul.bf16.gmra.mxu0 %v1994
        %v2265 = vpop.f32.mrf.mxu0
        %v2266 = vadd.f32 0.0, %v2265
        %v2267 = vpop.f32.mrf.mxu0
        %v2268 = vadd.f32 0.0, %v2267
        %2269 = vmatmul.bf16.gmra.mxu0 %v1997
        %v2270 = vpop.f32.mrf.mxu0
        %v2271 = vadd.f32 0.0, %v2270
        %v2272 = vpop.f32.mrf.mxu0
        %v2273 = vadd.f32 0.0, %v2272
        %2274 = vmatmul.bf16.gmra.mxu0 %v2000
        %v2275 = vpop.f32.mrf.mxu0
        %v2276 = vadd.f32 0.0, %v2275
        %v2277 = vpop.f32.mrf.mxu0
        %v2278 = vadd.f32 0.0, %v2277
        %2279 = vmatmul.bf16.gmra.mxu0 %v2003
        %v2280 = vpop.f32.mrf.mxu0
        %v2281 = vadd.f32 0.0, %v2280
        %v2282 = vpop.f32.mrf.mxu0
        %v2283 = vadd.f32 0.0, %v2282
        %2284 = vmatmul.bf16.gmra.mxu0 %v2006
        %v2285 = vpop.f32.mrf.mxu0
        %v2286 = vadd.f32 0.0, %v2285
        %v2287 = vpop.f32.mrf.mxu0
        %v2288 = vadd.f32 0.0, %v2287
        %2289 = vdwg.mxu0
        %2290 = vmatpush.bf16.msra.mxu0 %v2168
        %2291 = vmatpush.bf16.msra.mxu0 %v2167
        %2292 = vmatpush.bf16.msra.mxu0 %v2166
        %2293 = vmatpush.bf16.msra.mxu0 %v2165
        %2294 = vmatpush.bf16.msra.mxu0 %v2164
        %2295 = vmatpush.bf16.msra.mxu0 %v2163
        %2296 = vmatpush.bf16.msra.mxu0 %v2162
        %2297 = vmatpush.bf16.msra.mxu0 %v2161
        %2298 = vmatmul.bf16.gmra.mxu0 %v1962
        %v2299 = vpop.f32.mrf.mxu0
        %v2300 = vadd.f32 %v2211, %v2299
        %v2301 = vpop.f32.mrf.mxu0
        %v2302 = vadd.f32 %v2213, %v2301
        %2303 = vmatmul.bf16.gmra.mxu0 %v1965
        %v2304 = vpop.f32.mrf.mxu0
        %v2305 = vadd.f32 %v2216, %v2304
        %v2306 = vpop.f32.mrf.mxu0
        %v2307 = vadd.f32 %v2218, %v2306
        %2308 = vmatmul.bf16.gmra.mxu0 %v1968
        %v2309 = vpop.f32.mrf.mxu0
        %v2310 = vadd.f32 %v2221, %v2309
        %v2311 = vpop.f32.mrf.mxu0
        %v2312 = vadd.f32 %v2223, %v2311
        %2313 = vmatmul.bf16.gmra.mxu0 %v1971
        %v2314 = vpop.f32.mrf.mxu0
        %v2315 = vadd.f32 %v2226, %v2314
        %v2316 = vpop.f32.mrf.mxu0
        %v2317 = vadd.f32 %v2228, %v2316
        %2318 = vmatmul.bf16.gmra.mxu0 %v1974
        %v2319 = vpop.f32.mrf.mxu0
        %v2320 = vadd.f32 %v2231, %v2319
        %v2321 = vpop.f32.mrf.mxu0
        %v2322 = vadd.f32 %v2233, %v2321
        %2323 = vmatmul.bf16.gmra.mxu0 %v1977
        %v2324 = vpop.f32.mrf.mxu0
        %v2325 = vadd.f32 %v2236, %v2324
        %v2326 = vpop.f32.mrf.mxu0
        %v2327 = vadd.f32 %v2238, %v2326
        %2328 = vmatmul.bf16.gmra.mxu0 %v1980
        %v2329 = vpop.f32.mrf.mxu0
        %v2330 = vadd.f32 %v2241, %v2329
        %v2331 = vpop.f32.mrf.mxu0
        %v2332 = vadd.f32 %v2243, %v2331
        %2333 = vmatmul.bf16.gmra.mxu0 %v1983
        %v2334 = vpop.f32.mrf.mxu0
        %v2335 = vadd.f32 %v2246, %v2334
        %v2336 = vpop.f32.mrf.mxu0
        %v2337 = vadd.f32 %v2248, %v2336
        %2338 = vmatmul.bf16.gmra.mxu0 %v1986
        %v2339 = vpop.f32.mrf.mxu0
        %v2340 = vadd.f32 %v2251, %v2339
        %v2341 = vpop.f32.mrf.mxu0
        %v2342 = vadd.f32 %v2253, %v2341
        %2343 = vmatmul.bf16.gmra.mxu0 %v1989
        %v2344 = vpop.f32.mrf.mxu0
        %v2345 = vadd.f32 %v2256, %v2344
        %v2346 = vpop.f32.mrf.mxu0
        %v2347 = vadd.f32 %v2258, %v2346
        %2348 = vmatmul.bf16.gmra.mxu0 %v1992
        %v2349 = vpop.f32.mrf.mxu0
        %v2350 = vadd.f32 %v2261, %v2349
        %v2351 = vpop.f32.mrf.mxu0
        %v2352 = vadd.f32 %v2263, %v2351
        %2353 = vmatmul.bf16.gmra.mxu0 %v1995
        %v2354 = vpop.f32.mrf.mxu0
        %v2355 = vadd.f32 %v2266, %v2354
        %v2356 = vpop.f32.mrf.mxu0
        %v2357 = vadd.f32 %v2268, %v2356
        %2358 = vmatmul.bf16.gmra.mxu0 %v1998
        %v2359 = vpop.f32.mrf.mxu0
        %v2360 = vadd.f32 %v2271, %v2359
        %v2361 = vpop.f32.mrf.mxu0
        %v2362 = vadd.f32 %v2273, %v2361
        %2363 = vmatmul.bf16.gmra.mxu0 %v2001
        %v2364 = vpop.f32.mrf.mxu0
        %v2365 = vadd.f32 %v2276, %v2364
        %v2366 = vpop.f32.mrf.mxu0
        %v2367 = vadd.f32 %v2278, %v2366
        %2368 = vmatmul.bf16.gmra.mxu0 %v2004
        %v2369 = vpop.f32.mrf.mxu0
        %v2370 = vadd.f32 %v2281, %v2369
        %v2371 = vpop.f32.mrf.mxu0
        %v2372 = vadd.f32 %v2283, %v2371
        %2373 = vmatmul.bf16.gmra.mxu0 %v2007
        %v2374 = vpop.f32.mrf.mxu0
        %v2375 = vadd.f32 %v2286, %v2374
        %v2376 = vpop.f32.mrf.mxu0
        %v2377 = vadd.f32 %v2288, %v2376
        %2378 = vdwg.mxu0
        %2379 = vmatpush.bf16.msra.mxu0 %v2176
        %2380 = vmatpush.bf16.msra.mxu0 %v2175
        %2381 = vmatpush.bf16.msra.mxu0 %v2174
        %2382 = vmatpush.bf16.msra.mxu0 %v2173
        %2383 = vmatpush.bf16.msra.mxu0 %v2172
        %2384 = vmatpush.bf16.msra.mxu0 %v2171
        %2385 = vmatpush.bf16.msra.mxu0 %v2170
        %2386 = vmatpush.bf16.msra.mxu0 %v2169
        %2387 = vmatmul.bf16.gmra.mxu0 %v1963
        %v2388 = vpop.f32.mrf.mxu0
        %v2389 = vadd.f32 %v2300, %v2388
        %v2390 = vpop.f32.mrf.mxu0
        %v2391 = vadd.f32 %v2302, %v2390
        %2392 = vmatmul.bf16.gmra.mxu0 %v1966
        %v2393 = vpop.f32.mrf.mxu0
        %v2394 = vadd.f32 %v2305, %v2393
        %v2395 = vpop.f32.mrf.mxu0
        %v2396 = vadd.f32 %v2307, %v2395
        %2397 = vmatmul.bf16.gmra.mxu0 %v1969
        %v2398 = vpop.f32.mrf.mxu0
        %v2399 = vadd.f32 %v2310, %v2398
        %v2400 = vpop.f32.mrf.mxu0
        %v2401 = vadd.f32 %v2312, %v2400
        %2402 = vmatmul.bf16.gmra.mxu0 %v1972
        %v2403 = vpop.f32.mrf.mxu0
        %v2404 = vadd.f32 %v2315, %v2403
        %v2405 = vpop.f32.mrf.mxu0
        %v2406 = vadd.f32 %v2317, %v2405
        %2407 = vmatmul.bf16.gmra.mxu0 %v1975
        %v2408 = vpop.f32.mrf.mxu0
        %v2409 = vadd.f32 %v2320, %v2408
        %v2410 = vpop.f32.mrf.mxu0
        %v2411 = vadd.f32 %v2322, %v2410
        %2412 = vmatmul.bf16.gmra.mxu0 %v1978
        %v2413 = vpop.f32.mrf.mxu0
        %v2414 = vadd.f32 %v2325, %v2413
        %v2415 = vpop.f32.mrf.mxu0
        %v2416 = vadd.f32 %v2327, %v2415
        %2417 = vmatmul.bf16.gmra.mxu0 %v1981
        %v2418 = vpop.f32.mrf.mxu0
        %v2419 = vadd.f32 %v2330, %v2418
        %v2420 = vpop.f32.mrf.mxu0
        %v2421 = vadd.f32 %v2332, %v2420
        %2422 = vmatmul.bf16.gmra.mxu0 %v1984
        %v2423 = vpop.f32.mrf.mxu0
        %v2424 = vadd.f32 %v2335, %v2423
        %v2425 = vpop.f32.mrf.mxu0
        %v2426 = vadd.f32 %v2337, %v2425
        %2427 = vmatmul.bf16.gmra.mxu0 %v1987
        %v2428 = vpop.f32.mrf.mxu0
        %v2429 = vadd.f32 %v2340, %v2428
        %v2430 = vpop.f32.mrf.mxu0
        %v2431 = vadd.f32 %v2342, %v2430
        %2432 = vmatmul.bf16.gmra.mxu0 %v1990
        %v2433 = vpop.f32.mrf.mxu0
        %v2434 = vadd.f32 %v2345, %v2433
        %v2435 = vpop.f32.mrf.mxu0
        %v2436 = vadd.f32 %v2347, %v2435
        %2437 = vmatmul.bf16.gmra.mxu0 %v1993
        %v2438 = vpop.f32.mrf.mxu0
        %v2439 = vadd.f32 %v2350, %v2438
        %v2440 = vpop.f32.mrf.mxu0
        %v2441 = vadd.f32 %v2352, %v2440
        %2442 = vmatmul.bf16.gmra.mxu0 %v1996
        %v2443 = vpop.f32.mrf.mxu0
        %v2444 = vadd.f32 %v2355, %v2443
        %v2445 = vpop.f32.mrf.mxu0
        %v2446 = vadd.f32 %v2357, %v2445
        %2447 = vmatmul.bf16.gmra.mxu0 %v1999
        %v2448 = vpop.f32.mrf.mxu0
        %v2449 = vadd.f32 %v2360, %v2448
        %v2450 = vpop.f32.mrf.mxu0
        %v2451 = vadd.f32 %v2362, %v2450
        %2452 = vmatmul.bf16.gmra.mxu0 %v2002
        %v2453 = vpop.f32.mrf.mxu0
        %v2454 = vadd.f32 %v2365, %v2453
        %v2455 = vpop.f32.mrf.mxu0
        %v2456 = vadd.f32 %v2367, %v2455
        %2457 = vmatmul.bf16.gmra.mxu0 %v2005
        %v2458 = vpop.f32.mrf.mxu0
        %v2459 = vadd.f32 %v2370, %v2458
        %v2460 = vpop.f32.mrf.mxu0
        %v2461 = vadd.f32 %v2372, %v2460
        %2462 = vmatmul.bf16.gmra.mxu0 %v2008
        %v2463 = vpop.f32.mrf.mxu0
        %v2464 = vadd.f32 %v2375, %v2463
        %v2465 = vpop.f32.mrf.mxu0
        %v2466 = vadd.f32 %v2377, %v2465
        %2467 = vdwg.mxu0
        %v2468 = vld [vmem:[#allocation4] sm:$0xff]
        %v2469 = vld [vmem:[#allocation4 + $0x8] sm:$0xff]
        %v2470 = vld [vmem:[#allocation4 + $0x10] sm:$0xff]
        %v2471 = vld [vmem:[#allocation4 + $0x18] sm:$0xff]
        %v2472 = vld [vmem:[#allocation4 + $0x20] sm:$0xff]
        %v2473 = vld [vmem:[#allocation4 + $0x28] sm:$0xff]
        %v2474 = vld [vmem:[#allocation4 + $0x30] sm:$0xff]
        %v2475 = vld [vmem:[#allocation4 + $0x38] sm:$0xff]
        %v2476 = vld [vmem:[#allocation4 + $0x40] sm:$0xff]
        %v2477 = vld [vmem:[#allocation4 + $0x48] sm:$0xff]
        %v2478 = vld [vmem:[#allocation4 + $0x50] sm:$0xff]
        %v2479 = vld [vmem:[#allocation4 + $0x58] sm:$0xff]
        %v2480 = vld [vmem:[#allocation4 + $0x60] sm:$0xff]
        %v2481 = vld [vmem:[#allocation4 + $0x68] sm:$0xff]
        %v2482 = vld [vmem:[#allocation4 + $0x70] sm:$0xff]
        %v2483 = vld [vmem:[#allocation4 + $0x78] sm:$0xff]
        %v2484 = vld [vmem:[#allocation4 + $0x80] sm:$0xff]
        %v2485 = vld [vmem:[#allocation4 + $0x88] sm:$0xff]
        %v2486 = vld [vmem:[#allocation4 + $0x90] sm:$0xff]
        %v2487 = vld [vmem:[#allocation4 + $0x98] sm:$0xff]
        %v2488 = vld [vmem:[#allocation4 + $0xa0] sm:$0xff]
        %v2489 = vld [vmem:[#allocation4 + $0xa8] sm:$0xff]
        %v2490 = vld [vmem:[#allocation4 + $0xb0] sm:$0xff]
        %v2491 = vld [vmem:[#allocation4 + $0xb8] sm:$0xff]
        %v2492 = vld [vmem:[#allocation4 + $0xc0] sm:$0xff]
        %v2493 = vld [vmem:[#allocation4 + $0xc8] sm:$0xff]
        %v2494 = vld [vmem:[#allocation4 + $0xd0] sm:$0xff]
        %v2495 = vld [vmem:[#allocation4 + $0xd8] sm:$0xff]
        %v2496 = vld [vmem:[#allocation4 + $0xe0] sm:$0xff]
        %v2497 = vld [vmem:[#allocation4 + $0xe8] sm:$0xff]
        %v2498 = vld [vmem:[#allocation4 + $0xf0] sm:$0xff]
        %v2499 = vld [vmem:[#allocation4 + $0xf8] sm:$0xff]
        %v2500 = vadd.f32 %v2468, %v2389
        %v2501 = vadd.f32 %v2469, %v2391
        %v2502 = vadd.f32 %v2470, %v2394
        %v2503 = vadd.f32 %v2471, %v2396
        %v2504 = vadd.f32 %v2472, %v2399
        %v2505 = vadd.f32 %v2473, %v2401
        %v2506 = vadd.f32 %v2474, %v2404
        %v2507 = vadd.f32 %v2475, %v2406
        %v2508 = vadd.f32 %v2476, %v2409
        %v2509 = vadd.f32 %v2477, %v2411
        %v2510 = vadd.f32 %v2478, %v2414
        %v2511 = vadd.f32 %v2479, %v2416
        %v2512 = vadd.f32 %v2480, %v2419
        %v2513 = vadd.f32 %v2481, %v2421
        %v2514 = vadd.f32 %v2482, %v2424
        %v2515 = vadd.f32 %v2483, %v2426
        %v2516 = vadd.f32 %v2484, %v2429
        %v2517 = vadd.f32 %v2485, %v2431
        %v2518 = vadd.f32 %v2486, %v2434
        %v2519 = vadd.f32 %v2487, %v2436
        %v2520 = vadd.f32 %v2488, %v2439
        %v2521 = vadd.f32 %v2489, %v2441
        %v2522 = vadd.f32 %v2490, %v2444
        %v2523 = vadd.f32 %v2491, %v2446
        %v2524 = vadd.f32 %v2492, %v2449
        %v2525 = vadd.f32 %v2493, %v2451
        %v2526 = vadd.f32 %v2494, %v2454
        %v2527 = vadd.f32 %v2495, %v2456
        %v2528 = vadd.f32 %v2496, %v2459
        %v2529 = vadd.f32 %v2497, %v2461
        %v2530 = vadd.f32 %v2498, %v2464
        %v2531 = vadd.f32 %v2499, %v2466
        %2532 = vst [vmem:[#allocation4] sm:$0xff] %v2500
        %2533 = vst [vmem:[#allocation4 + $0x8] sm:$0xff] %v2501
        %2534 = vst [vmem:[#allocation4 + $0x10] sm:$0xff] %v2502
        %2535 = vst [vmem:[#allocation4 + $0x18] sm:$0xff] %v2503
        %2536 = vst [vmem:[#allocation4 + $0x20] sm:$0xff] %v2504
        %2537 = vst [vmem:[#allocation4 + $0x28] sm:$0xff] %v2505
        %2538 = vst [vmem:[#allocation4 + $0x30] sm:$0xff] %v2506
        %2539 = vst [vmem:[#allocation4 + $0x38] sm:$0xff] %v2507
        %2540 = vst [vmem:[#allocation4 + $0x40] sm:$0xff] %v2508
        %2541 = vst [vmem:[#allocation4 + $0x48] sm:$0xff] %v2509
        %2542 = vst [vmem:[#allocation4 + $0x50] sm:$0xff] %v2510
        %2543 = vst [vmem:[#allocation4 + $0x58] sm:$0xff] %v2511
        %2544 = vst [vmem:[#allocation4 + $0x60] sm:$0xff] %v2512
        %2545 = vst [vmem:[#allocation4 + $0x68] sm:$0xff] %v2513
        %2546 = vst [vmem:[#allocation4 + $0x70] sm:$0xff] %v2514
        %2547 = vst [vmem:[#allocation4 + $0x78] sm:$0xff] %v2515
        %2548 = vst [vmem:[#allocation4 + $0x80] sm:$0xff] %v2516
        %2549 = vst [vmem:[#allocation4 + $0x88] sm:$0xff] %v2517
        %2550 = vst [vmem:[#allocation4 + $0x90] sm:$0xff] %v2518
        %2551 = vst [vmem:[#allocation4 + $0x98] sm:$0xff] %v2519
        %2552 = vst [vmem:[#allocation4 + $0xa0] sm:$0xff] %v2520
        %2553 = vst [vmem:[#allocation4 + $0xa8] sm:$0xff] %v2521
        %2554 = vst [vmem:[#allocation4 + $0xb0] sm:$0xff] %v2522
        %2555 = vst [vmem:[#allocation4 + $0xb8] sm:$0xff] %v2523
        %2556 = vst [vmem:[#allocation4 + $0xc0] sm:$0xff] %v2524
        %2557 = vst [vmem:[#allocation4 + $0xc8] sm:$0xff] %v2525
        %2558 = vst [vmem:[#allocation4 + $0xd0] sm:$0xff] %v2526
        %2559 = vst [vmem:[#allocation4 + $0xd8] sm:$0xff] %v2527
        %2560 = vst [vmem:[#allocation4 + $0xe0] sm:$0xff] %v2528
        %2561 = vst [vmem:[#allocation4 + $0xe8] sm:$0xff] %v2529
        %2562 = vst [vmem:[#allocation4 + $0xf0] sm:$0xff] %v2530
        %2563 = vst [vmem:[#allocation4 + $0xf8] sm:$0xff] %v2531
        %s2564 = scalar_lea.vmem [#allocation3], 48
        %v2565 = vld [vmem:[%s2564] sm:$0xff]
        %v2566 = vld [vmem:[%s2564 + $0x8] sm:$0xf]
        %v2567 = vld [vmem:[%s2564 + $0xc] sm:$0xff]
        %v2568 = vld [vmem:[%s2564 + $0x14] sm:$0xf]
        %v2569 = vld [vmem:[%s2564 + $0x18] sm:$0xff]
        %v2570 = vld [vmem:[%s2564 + $0x20] sm:$0xf]
        %v2571 = vld [vmem:[%s2564 + $0x24] sm:$0xff]
        %v2572 = vld [vmem:[%s2564 + $0x2c] sm:$0xf]
        %v2573 = vld [vmem:[%s2564 + $0x30] sm:$0xff]
        %v2574 = vld [vmem:[%s2564 + $0x38] sm:$0xf]
        %v2575 = vld [vmem:[%s2564 + $0x3c] sm:$0xff]
        %v2576 = vld [vmem:[%s2564 + $0x44] sm:$0xf]
        %v2577 = vld [vmem:[%s2564 + $0x48] sm:$0xff]
        %v2578 = vld [vmem:[%s2564 + $0x50] sm:$0xf]
        %v2579 = vld [vmem:[%s2564 + $0x54] sm:$0xff]
        %v2580 = vld [vmem:[%s2564 + $0x5c] sm:$0xf]
        %v2581 = vld [vmem:[%s2564 + $0x60] sm:$0xff]
        %v2582 = vld [vmem:[%s2564 + $0x68] sm:$0xf]
        %v2583 = vld [vmem:[%s2564 + $0x6c] sm:$0xff]
        %v2584 = vld [vmem:[%s2564 + $0x74] sm:$0xf]
        %v2585 = vld [vmem:[%s2564 + $0x78] sm:$0xff]
        %v2586 = vld [vmem:[%s2564 + $0x80] sm:$0xf]
        %v2587 = vld [vmem:[%s2564 + $0x84] sm:$0xff]
        %v2588 = vld [vmem:[%s2564 + $0x8c] sm:$0xf]
        %v2589 = vld [vmem:[%s2564 + $0x90] sm:$0xff]
        %v2590 = vld [vmem:[%s2564 + $0x98] sm:$0xf]
        %v2591 = vld [vmem:[%s2564 + $0x9c] sm:$0xff]
        %v2592 = vld [vmem:[%s2564 + $0xa4] sm:$0xf]
        %v2593 = vld [vmem:[%s2564 + $0xa8] sm:$0xff]
        %v2594 = vld [vmem:[%s2564 + $0xb0] sm:$0xf]
        %v2595 = vld [vmem:[%s2564 + $0xb4] sm:$0xff]
        %v2596 = vld [vmem:[%s2564 + $0xbc] sm:$0xf]
        %v2597 = vld [vmem:[%s2564 + $0xc0] sm:$0xff]
        %v2598 = vld [vmem:[%s2564 + $0xc8] sm:$0xf]
        %v2599 = vld [vmem:[%s2564 + $0xcc] sm:$0xff]
        %v2600 = vld [vmem:[%s2564 + $0xd4] sm:$0xf]
        %v2601 = vld [vmem:[%s2564 + $0xd8] sm:$0xff]
        %v2602 = vld [vmem:[%s2564 + $0xe0] sm:$0xf]
        %v2603 = vld [vmem:[%s2564 + $0xe4] sm:$0xff]
        %v2604 = vld [vmem:[%s2564 + $0xec] sm:$0xf]
        %v2605 = vld [vmem:[%s2564 + $0xf0] sm:$0xff]
        %v2606 = vld [vmem:[%s2564 + $0xf8] sm:$0xf]
        %v2607 = vld [vmem:[%s2564 + $0xfc] sm:$0xff]
        %v2608 = vld [vmem:[%s2564 + $0x104] sm:$0xf]
        %v2609 = vld [vmem:[%s2564 + $0x108] sm:$0xff]
        %v2610 = vld [vmem:[%s2564 + $0x110] sm:$0xf]
        %v2611 = vld [vmem:[%s2564 + $0x114] sm:$0xff]
        %v2612 = vld [vmem:[%s2564 + $0x11c] sm:$0xf]
        %v2613 = vld [vmem:[%s2564 + $0x120] sm:$0xff]
        %v2614 = vld [vmem:[%s2564 + $0x128] sm:$0xf]
        %v2615 = vld [vmem:[%s2564 + $0x12c] sm:$0xff]
        %v2616 = vld [vmem:[%s2564 + $0x134] sm:$0xf]
        %v2617 = vld [vmem:[%s2564 + $0x138] sm:$0xff]
        %v2618 = vld [vmem:[%s2564 + $0x140] sm:$0xf]
        %v2619 = vld [vmem:[%s2564 + $0x144] sm:$0xff]
        %v2620 = vld [vmem:[%s2564 + $0x14c] sm:$0xf]
        %v2621 = vld [vmem:[%s2564 + $0x150] sm:$0xff]
        %v2622 = vld [vmem:[%s2564 + $0x158] sm:$0xf]
        %v2623 = vld [vmem:[%s2564 + $0x15c] sm:$0xff]
        %v2624 = vld [vmem:[%s2564 + $0x164] sm:$0xf]
        %v2625 = vld [vmem:[%s2564 + $0x168] sm:$0xff]
        %v2626 = vld [vmem:[%s2564 + $0x170] sm:$0xf]
        %v2627 = vld [vmem:[%s2564 + $0x174] sm:$0xff]
        %v2628 = vld [vmem:[%s2564 + $0x17c] sm:$0xf]
        %s2629 = scalar_lea.vmem [#allocation8], 384
        %v2630 = vld [vmem:[%s2629] sm:$0xf]
        %v2631 = vld [vmem:[%s2629 + $0x4] sm:$0xf]
        %v2632 = vld [vmem:[%s2629 + $0x8] sm:$0xf]
        %v2633 = vld [vmem:[%s2629 + $0xc] sm:$0xf]
        %v2634 = vld [vmem:[%s2629 + $0x10] sm:$0xf]
        %v2635 = vld [vmem:[%s2629 + $0x14] sm:$0xf]
        %v2636 = vld [vmem:[%s2629 + $0x18] sm:$0xf]
        %v2637 = vld [vmem:[%s2629 + $0x1c] sm:$0xf]
        %v2638 = vld [vmem:[%s2629 + $0x20] sm:$0xf]
        %v2639 = vld [vmem:[%s2629 + $0x24] sm:$0xf]
        %v2640 = vld [vmem:[%s2629 + $0x28] sm:$0xf]
        %v2641 = vld [vmem:[%s2629 + $0x2c] sm:$0xf]
        %v2642 = vld [vmem:[%s2629 + $0x30] sm:$0xf]
        %v2643 = vld [vmem:[%s2629 + $0x34] sm:$0xf]
        %v2644 = vld [vmem:[%s2629 + $0x38] sm:$0xf]
        %v2645 = vld [vmem:[%s2629 + $0x3c] sm:$0xf]
        %v2646 = vld [vmem:[%s2629 + $0x40] sm:$0xf]
        %v2647 = vld [vmem:[%s2629 + $0x44] sm:$0xf]
        %v2648 = vld [vmem:[%s2629 + $0x48] sm:$0xf]
        %v2649 = vld [vmem:[%s2629 + $0x4c] sm:$0xf]
        %v2650 = vld [vmem:[%s2629 + $0x50] sm:$0xf]
        %v2651 = vld [vmem:[%s2629 + $0x54] sm:$0xf]
        %v2652 = vld [vmem:[%s2629 + $0x58] sm:$0xf]
        %v2653 = vld [vmem:[%s2629 + $0x5c] sm:$0xf]
        %v2654 = vld [vmem:[%s2629 + $0x60] sm:$0xf]
        %v2655 = vld [vmem:[%s2629 + $0x64] sm:$0xf]
        %v2656 = vld [vmem:[%s2629 + $0x68] sm:$0xf]
        %v2657 = vld [vmem:[%s2629 + $0x6c] sm:$0xf]
        %v2658 = vld [vmem:[%s2629 + $0x70] sm:$0xf]
        %v2659 = vld [vmem:[%s2629 + $0x74] sm:$0xf]
        %v2660 = vld [vmem:[%s2629 + $0x78] sm:$0xf]
        %v2661 = vld [vmem:[%s2629 + $0x7c] sm:$0xf]
        %v2662 = vld [vmem:[%s2629 + $0x80] sm:$0xf]
        %v2663 = vld [vmem:[%s2629 + $0x84] sm:$0xf]
        %v2664 = vld [vmem:[%s2629 + $0x88] sm:$0xf]
        %v2665 = vld [vmem:[%s2629 + $0x8c] sm:$0xf]
        %v2666 = vld [vmem:[%s2629 + $0x90] sm:$0xf]
        %v2667 = vld [vmem:[%s2629 + $0x94] sm:$0xf]
        %v2668 = vld [vmem:[%s2629 + $0x98] sm:$0xf]
        %v2669 = vld [vmem:[%s2629 + $0x9c] sm:$0xf]
        %v2670 = vld [vmem:[%s2629 + $0xa0] sm:$0xf]
        %v2671 = vld [vmem:[%s2629 + $0xa4] sm:$0xf]
        %v2672 = vld [vmem:[%s2629 + $0xa8] sm:$0xf]
        %v2673 = vld [vmem:[%s2629 + $0xac] sm:$0xf]
        %v2674 = vld [vmem:[%s2629 + $0xb0] sm:$0xf]
        %v2675 = vld [vmem:[%s2629 + $0xb4] sm:$0xf]
        %v2676 = vld [vmem:[%s2629 + $0xb8] sm:$0xf]
        %v2677 = vld [vmem:[%s2629 + $0xbc] sm:$0xf]
        %v2742 = vunpack.c.l.b16 %v2565
        %v2743 = vunpack.c.h.b16 %v2565
        %v2744 = vunpack.c.l.b16 %v2566
        %v2745 = vunpack.c.l.b16 %v2567
        %v2746 = vunpack.c.h.b16 %v2567
        %v2747 = vunpack.c.l.b16 %v2568
        %v2748 = vunpack.c.l.b16 %v2569
        %v2749 = vunpack.c.h.b16 %v2569
        %v2750 = vunpack.c.l.b16 %v2570
        %v2751 = vunpack.c.l.b16 %v2571
        %v2752 = vunpack.c.h.b16 %v2571
        %v2753 = vunpack.c.l.b16 %v2572
        %v2754 = vunpack.c.l.b16 %v2573
        %v2755 = vunpack.c.h.b16 %v2573
        %v2756 = vunpack.c.l.b16 %v2574
        %v2757 = vunpack.c.l.b16 %v2575
        %v2758 = vunpack.c.h.b16 %v2575
        %v2759 = vunpack.c.l.b16 %v2576
        %v2760 = vunpack.c.l.b16 %v2577
        %v2761 = vunpack.c.h.b16 %v2577
        %v2762 = vunpack.c.l.b16 %v2578
        %v2763 = vunpack.c.l.b16 %v2579
        %v2764 = vunpack.c.h.b16 %v2579
        %v2765 = vunpack.c.l.b16 %v2580
        %v2766 = vunpack.c.l.b16 %v2581
        %v2767 = vunpack.c.h.b16 %v2581
        %v2768 = vunpack.c.l.b16 %v2582
        %v2769 = vunpack.c.l.b16 %v2583
        %v2770 = vunpack.c.h.b16 %v2583
        %v2771 = vunpack.c.l.b16 %v2584
        %v2772 = vunpack.c.l.b16 %v2585
        %v2773 = vunpack.c.h.b16 %v2585
        %v2774 = vunpack.c.l.b16 %v2586
        %v2775 = vunpack.c.l.b16 %v2587
        %v2776 = vunpack.c.h.b16 %v2587
        %v2777 = vunpack.c.l.b16 %v2588
        %v2778 = vunpack.c.l.b16 %v2589
        %v2779 = vunpack.c.h.b16 %v2589
        %v2780 = vunpack.c.l.b16 %v2590
        %v2781 = vunpack.c.l.b16 %v2591
        %v2782 = vunpack.c.h.b16 %v2591
        %v2783 = vunpack.c.l.b16 %v2592
        %v2784 = vunpack.c.l.b16 %v2593
        %v2785 = vunpack.c.h.b16 %v2593
        %v2786 = vunpack.c.l.b16 %v2594
        %v2787 = vunpack.c.l.b16 %v2595
        %v2788 = vunpack.c.h.b16 %v2595
        %v2789 = vunpack.c.l.b16 %v2596
        %v2790 = vunpack.c.l.b16 %v2597
        %v2791 = vunpack.c.h.b16 %v2597
        %v2792 = vunpack.c.l.b16 %v2598
        %v2793 = vunpack.c.l.b16 %v2599
        %v2794 = vunpack.c.h.b16 %v2599
        %v2795 = vunpack.c.l.b16 %v2600
        %v2796 = vunpack.c.l.b16 %v2601
        %v2797 = vunpack.c.h.b16 %v2601
        %v2798 = vunpack.c.l.b16 %v2602
        %v2799 = vunpack.c.l.b16 %v2603
        %v2800 = vunpack.c.h.b16 %v2603
        %v2801 = vunpack.c.l.b16 %v2604
        %v2802 = vunpack.c.l.b16 %v2605
        %v2803 = vunpack.c.h.b16 %v2605
        %v2804 = vunpack.c.l.b16 %v2606
        %v2805 = vunpack.c.l.b16 %v2607
        %v2806 = vunpack.c.h.b16 %v2607
        %v2807 = vunpack.c.l.b16 %v2608
        %v2808 = vunpack.c.l.b16 %v2609
        %v2809 = vunpack.c.h.b16 %v2609
        %v2810 = vunpack.c.l.b16 %v2610
        %v2811 = vunpack.c.l.b16 %v2611
        %v2812 = vunpack.c.h.b16 %v2611
        %v2813 = vunpack.c.l.b16 %v2612
        %v2814 = vunpack.c.l.b16 %v2613
        %v2815 = vunpack.c.h.b16 %v2613
        %v2816 = vunpack.c.l.b16 %v2614
        %v2817 = vunpack.c.l.b16 %v2615
        %v2818 = vunpack.c.h.b16 %v2615
        %v2819 = vunpack.c.l.b16 %v2616
        %v2820 = vunpack.c.l.b16 %v2617
        %v2821 = vunpack.c.h.b16 %v2617
        %v2822 = vunpack.c.l.b16 %v2618
        %v2823 = vunpack.c.l.b16 %v2619
        %v2824 = vunpack.c.h.b16 %v2619
        %v2825 = vunpack.c.l.b16 %v2620
        %v2826 = vunpack.c.l.b16 %v2621
        %v2827 = vunpack.c.h.b16 %v2621
        %v2828 = vunpack.c.l.b16 %v2622
        %v2829 = vunpack.c.l.b16 %v2623
        %v2830 = vunpack.c.h.b16 %v2623
        %v2831 = vunpack.c.l.b16 %v2624
        %v2832 = vunpack.c.l.b16 %v2625
        %v2833 = vunpack.c.h.b16 %v2625
        %v2834 = vunpack.c.l.b16 %v2626
        %v2835 = vunpack.c.l.b16 %v2627
        %v2836 = vunpack.c.h.b16 %v2627
        %v2837 = vunpack.c.l.b16 %v2628
        %v2838 = vpack.c.b16 %v2745, %v2742
        %v2839 = vpack.c.b16 %v2746, %v2743
        %v2840 = vpack.c.b16 %v2747, %v2744
        %v2841 = vpack.c.b16 %v2751, %v2748
        %v2842 = vpack.c.b16 %v2752, %v2749
        %v2843 = vpack.c.b16 %v2753, %v2750
        %v2844 = vpack.c.b16 %v2757, %v2754
        %v2845 = vpack.c.b16 %v2758, %v2755
        %v2846 = vpack.c.b16 %v2759, %v2756
        %v2847 = vpack.c.b16 %v2763, %v2760
        %v2848 = vpack.c.b16 %v2764, %v2761
        %v2849 = vpack.c.b16 %v2765, %v2762
        %v2850 = vpack.c.b16 %v2769, %v2766
        %v2851 = vpack.c.b16 %v2770, %v2767
        %v2852 = vpack.c.b16 %v2771, %v2768
        %v2853 = vpack.c.b16 %v2775, %v2772
        %v2854 = vpack.c.b16 %v2776, %v2773
        %v2855 = vpack.c.b16 %v2777, %v2774
        %v2856 = vpack.c.b16 %v2781, %v2778
        %v2857 = vpack.c.b16 %v2782, %v2779
        %v2858 = vpack.c.b16 %v2783, %v2780
        %v2859 = vpack.c.b16 %v2787, %v2784
        %v2860 = vpack.c.b16 %v2788, %v2785
        %v2861 = vpack.c.b16 %v2789, %v2786
        %v2862 = vpack.c.b16 %v2793, %v2790
        %v2863 = vpack.c.b16 %v2794, %v2791
        %v2864 = vpack.c.b16 %v2795, %v2792
        %v2865 = vpack.c.b16 %v2799, %v2796
        %v2866 = vpack.c.b16 %v2800, %v2797
        %v2867 = vpack.c.b16 %v2801, %v2798
        %v2868 = vpack.c.b16 %v2805, %v2802
        %v2869 = vpack.c.b16 %v2806, %v2803
        %v2870 = vpack.c.b16 %v2807, %v2804
        %v2871 = vpack.c.b16 %v2811, %v2808
        %v2872 = vpack.c.b16 %v2812, %v2809
        %v2873 = vpack.c.b16 %v2813, %v2810
        %v2874 = vpack.c.b16 %v2817, %v2814
        %v2875 = vpack.c.b16 %v2818, %v2815
        %v2876 = vpack.c.b16 %v2819, %v2816
        %v2877 = vpack.c.b16 %v2823, %v2820
        %v2878 = vpack.c.b16 %v2824, %v2821
        %v2879 = vpack.c.b16 %v2825, %v2822
        %v2880 = vpack.c.b16 %v2829, %v2826
        %v2881 = vpack.c.b16 %v2830, %v2827
        %v2882 = vpack.c.b16 %v2831, %v2828
        %v2883 = vpack.c.b16 %v2835, %v2832
        %v2884 = vpack.c.b16 %v2836, %v2833
        %v2885 = vpack.c.b16 %v2837, %v2834
        %v2982 = vunpack.c.l.b16 %v2630
        %v2983 = vunpack.c.l.b16 %v2631
        %v2984 = vunpack.c.l.b16 %v2632
        %v2985 = vunpack.c.l.b16 %v2633
        %v2986 = vunpack.c.l.b16 %v2634
        %v2987 = vunpack.c.l.b16 %v2635
        %v2988 = vunpack.c.l.b16 %v2636
        %v2989 = vunpack.c.l.b16 %v2637
        %v2990 = vunpack.c.l.b16 %v2638
        %v2991 = vunpack.c.l.b16 %v2639
        %v2992 = vunpack.c.l.b16 %v2640
        %v2993 = vunpack.c.l.b16 %v2641
        %v2994 = vunpack.c.l.b16 %v2642
        %v2995 = vunpack.c.l.b16 %v2643
        %v2996 = vunpack.c.l.b16 %v2644
        %v2997 = vunpack.c.l.b16 %v2645
        %v2998 = vunpack.c.l.b16 %v2646
        %v2999 = vunpack.c.l.b16 %v2647
        %v3000 = vunpack.c.l.b16 %v2648
        %v3001 = vunpack.c.l.b16 %v2649
        %v3002 = vunpack.c.l.b16 %v2650
        %v3003 = vunpack.c.l.b16 %v2651
        %v3004 = vunpack.c.l.b16 %v2652
        %v3005 = vunpack.c.l.b16 %v2653
        %v3006 = vunpack.c.l.b16 %v2654
        %v3007 = vunpack.c.l.b16 %v2655
        %v3008 = vunpack.c.l.b16 %v2656
        %v3009 = vunpack.c.l.b16 %v2657
        %v3010 = vunpack.c.l.b16 %v2658
        %v3011 = vunpack.c.l.b16 %v2659
        %v3012 = vunpack.c.l.b16 %v2660
        %v3013 = vunpack.c.l.b16 %v2661
        %v3014 = vunpack.c.l.b16 %v2662
        %v3015 = vunpack.c.l.b16 %v2663
        %v3016 = vunpack.c.l.b16 %v2664
        %v3017 = vunpack.c.l.b16 %v2665
        %v3018 = vunpack.c.l.b16 %v2666
        %v3019 = vunpack.c.l.b16 %v2667
        %v3020 = vunpack.c.l.b16 %v2668
        %v3021 = vunpack.c.l.b16 %v2669
        %v3022 = vunpack.c.l.b16 %v2670
        %v3023 = vunpack.c.l.b16 %v2671
        %v3024 = vunpack.c.l.b16 %v2672
        %v3025 = vunpack.c.l.b16 %v2673
        %v3026 = vunpack.c.l.b16 %v2674
        %v3027 = vunpack.c.l.b16 %v2675
        %v3028 = vunpack.c.l.b16 %v2676
        %v3029 = vunpack.c.l.b16 %v2677
        %v3030 = vpack.c.b16 %v2983, %v2982
        %v3031 = vpack.c.b16 %v2985, %v2984
        %v3032 = vpack.c.b16 %v2987, %v2986
        %v3033 = vpack.c.b16 %v2989, %v2988
        %v3034 = vpack.c.b16 %v2991, %v2990
        %v3035 = vpack.c.b16 %v2993, %v2992
        %v3036 = vpack.c.b16 %v2995, %v2994
        %v3037 = vpack.c.b16 %v2997, %v2996
        %v3038 = vpack.c.b16 %v2999, %v2998
        %v3039 = vpack.c.b16 %v3001, %v3000
        %v3040 = vpack.c.b16 %v3003, %v3002
        %v3041 = vpack.c.b16 %v3005, %v3004
        %v3042 = vpack.c.b16 %v3007, %v3006
        %v3043 = vpack.c.b16 %v3009, %v3008
        %v3044 = vpack.c.b16 %v3011, %v3010
        %v3045 = vpack.c.b16 %v3013, %v3012
        %v3046 = vpack.c.b16 %v3015, %v3014
        %v3047 = vpack.c.b16 %v3017, %v3016
        %v3048 = vpack.c.b16 %v3019, %v3018
        %v3049 = vpack.c.b16 %v3021, %v3020
        %v3050 = vpack.c.b16 %v3023, %v3022
        %v3051 = vpack.c.b16 %v3025, %v3024
        %v3052 = vpack.c.b16 %v3027, %v3026
        %v3053 = vpack.c.b16 %v3029, %v3028
        %3078 = vmatpush.bf16.msra.mxu0 %v3037
        %3079 = vmatpush.bf16.msra.mxu0 %v3036
        %3080 = vmatpush.bf16.msra.mxu0 %v3035
        %3081 = vmatpush.bf16.msra.mxu0 %v3034
        %3082 = vmatpush.bf16.msra.mxu0 %v3033
        %3083 = vmatpush.bf16.msra.mxu0 %v3032
        %3084 = vmatpush.bf16.msra.mxu0 %v3031
        %3085 = vmatpush.bf16.msra.mxu0 %v3030
        %3086 = vmatmul.bf16.gmra.mxu0 %v2838
        %v3087 = vpop.f32.mrf.mxu0
        %v3088 = vadd.f32 0.0, %v3087
        %v3089 = vpop.f32.mrf.mxu0
        %v3090 = vadd.f32 0.0, %v3089
        %3091 = vmatmul.bf16.gmra.mxu0 %v2841
        %v3092 = vpop.f32.mrf.mxu0
        %v3093 = vadd.f32 0.0, %v3092
        %v3094 = vpop.f32.mrf.mxu0
        %v3095 = vadd.f32 0.0, %v3094
        %3096 = vmatmul.bf16.gmra.mxu0 %v2844
        %v3097 = vpop.f32.mrf.mxu0
        %v3098 = vadd.f32 0.0, %v3097
        %v3099 = vpop.f32.mrf.mxu0
        %v3100 = vadd.f32 0.0, %v3099
        %3101 = vmatmul.bf16.gmra.mxu0 %v2847
        %v3102 = vpop.f32.mrf.mxu0
        %v3103 = vadd.f32 0.0, %v3102
        %v3104 = vpop.f32.mrf.mxu0
        %v3105 = vadd.f32 0.0, %v3104
        %3106 = vmatmul.bf16.gmra.mxu0 %v2850
        %v3107 = vpop.f32.mrf.mxu0
        %v3108 = vadd.f32 0.0, %v3107
        %v3109 = vpop.f32.mrf.mxu0
        %v3110 = vadd.f32 0.0, %v3109
        %3111 = vmatmul.bf16.gmra.mxu0 %v2853
        %v3112 = vpop.f32.mrf.mxu0
        %v3113 = vadd.f32 0.0, %v3112
        %v3114 = vpop.f32.mrf.mxu0
        %v3115 = vadd.f32 0.0, %v3114
        %3116 = vmatmul.bf16.gmra.mxu0 %v2856
        %v3117 = vpop.f32.mrf.mxu0
        %v3118 = vadd.f32 0.0, %v3117
        %v3119 = vpop.f32.mrf.mxu0
        %v3120 = vadd.f32 0.0, %v3119
        %3121 = vmatmul.bf16.gmra.mxu0 %v2859
        %v3122 = vpop.f32.mrf.mxu0
        %v3123 = vadd.f32 0.0, %v3122
        %v3124 = vpop.f32.mrf.mxu0
        %v3125 = vadd.f32 0.0, %v3124
        %3126 = vmatmul.bf16.gmra.mxu0 %v2862
        %v3127 = vpop.f32.mrf.mxu0
        %v3128 = vadd.f32 0.0, %v3127
        %v3129 = vpop.f32.mrf.mxu0
        %v3130 = vadd.f32 0.0, %v3129
        %3131 = vmatmul.bf16.gmra.mxu0 %v2865
        %v3132 = vpop.f32.mrf.mxu0
        %v3133 = vadd.f32 0.0, %v3132
        %v3134 = vpop.f32.mrf.mxu0
        %v3135 = vadd.f32 0.0, %v3134
        %3136 = vmatmul.bf16.gmra.mxu0 %v2868
        %v3137 = vpop.f32.mrf.mxu0
        %v3138 = vadd.f32 0.0, %v3137
        %v3139 = vpop.f32.mrf.mxu0
        %v3140 = vadd.f32 0.0, %v3139
        %3141 = vmatmul.bf16.gmra.mxu0 %v2871
        %v3142 = vpop.f32.mrf.mxu0
        %v3143 = vadd.f32 0.0, %v3142
        %v3144 = vpop.f32.mrf.mxu0
        %v3145 = vadd.f32 0.0, %v3144
        %3146 = vmatmul.bf16.gmra.mxu0 %v2874
        %v3147 = vpop.f32.mrf.mxu0
        %v3148 = vadd.f32 0.0, %v3147
        %v3149 = vpop.f32.mrf.mxu0
        %v3150 = vadd.f32 0.0, %v3149
        %3151 = vmatmul.bf16.gmra.mxu0 %v2877
        %v3152 = vpop.f32.mrf.mxu0
        %v3153 = vadd.f32 0.0, %v3152
        %v3154 = vpop.f32.mrf.mxu0
        %v3155 = vadd.f32 0.0, %v3154
        %3156 = vmatmul.bf16.gmra.mxu0 %v2880
        %v3157 = vpop.f32.mrf.mxu0
        %v3158 = vadd.f32 0.0, %v3157
        %v3159 = vpop.f32.mrf.mxu0
        %v3160 = vadd.f32 0.0, %v3159
        %3161 = vmatmul.bf16.gmra.mxu0 %v2883
        %v3162 = vpop.f32.mrf.mxu0
        %v3163 = vadd.f32 0.0, %v3162
        %v3164 = vpop.f32.mrf.mxu0
        %v3165 = vadd.f32 0.0, %v3164
        %3166 = vdwg.mxu0
        %3167 = vmatpush.bf16.msra.mxu0 %v3045
        %3168 = vmatpush.bf16.msra.mxu0 %v3044
        %3169 = vmatpush.bf16.msra.mxu0 %v3043
        %3170 = vmatpush.bf16.msra.mxu0 %v3042
        %3171 = vmatpush.bf16.msra.mxu0 %v3041
        %3172 = vmatpush.bf16.msra.mxu0 %v3040
        %3173 = vmatpush.bf16.msra.mxu0 %v3039
        %3174 = vmatpush.bf16.msra.mxu0 %v3038
        %3175 = vmatmul.bf16.gmra.mxu0 %v2839
        %v3176 = vpop.f32.mrf.mxu0
        %v3177 = vadd.f32 %v3088, %v3176
        %v3178 = vpop.f32.mrf.mxu0
        %v3179 = vadd.f32 %v3090, %v3178
        %3180 = vmatmul.bf16.gmra.mxu0 %v2842
        %v3181 = vpop.f32.mrf.mxu0
        %v3182 = vadd.f32 %v3093, %v3181
        %v3183 = vpop.f32.mrf.mxu0
        %v3184 = vadd.f32 %v3095, %v3183
        %3185 = vmatmul.bf16.gmra.mxu0 %v2845
        %v3186 = vpop.f32.mrf.mxu0
        %v3187 = vadd.f32 %v3098, %v3186
        %v3188 = vpop.f32.mrf.mxu0
        %v3189 = vadd.f32 %v3100, %v3188
        %3190 = vmatmul.bf16.gmra.mxu0 %v2848
        %v3191 = vpop.f32.mrf.mxu0
        %v3192 = vadd.f32 %v3103, %v3191
        %v3193 = vpop.f32.mrf.mxu0
        %v3194 = vadd.f32 %v3105, %v3193
        %3195 = vmatmul.bf16.gmra.mxu0 %v2851
        %v3196 = vpop.f32.mrf.mxu0
        %v3197 = vadd.f32 %v3108, %v3196
        %v3198 = vpop.f32.mrf.mxu0
        %v3199 = vadd.f32 %v3110, %v3198
        %3200 = vmatmul.bf16.gmra.mxu0 %v2854
        %v3201 = vpop.f32.mrf.mxu0
        %v3202 = vadd.f32 %v3113, %v3201
        %v3203 = vpop.f32.mrf.mxu0
        %v3204 = vadd.f32 %v3115, %v3203
        %3205 = vmatmul.bf16.gmra.mxu0 %v2857
        %v3206 = vpop.f32.mrf.mxu0
        %v3207 = vadd.f32 %v3118, %v3206
        %v3208 = vpop.f32.mrf.mxu0
        %v3209 = vadd.f32 %v3120, %v3208
        %3210 = vmatmul.bf16.gmra.mxu0 %v2860
        %v3211 = vpop.f32.mrf.mxu0
        %v3212 = vadd.f32 %v3123, %v3211
        %v3213 = vpop.f32.mrf.mxu0
        %v3214 = vadd.f32 %v3125, %v3213
        %3215 = vmatmul.bf16.gmra.mxu0 %v2863
        %v3216 = vpop.f32.mrf.mxu0
        %v3217 = vadd.f32 %v3128, %v3216
        %v3218 = vpop.f32.mrf.mxu0
        %v3219 = vadd.f32 %v3130, %v3218
        %3220 = vmatmul.bf16.gmra.mxu0 %v2866
        %v3221 = vpop.f32.mrf.mxu0
        %v3222 = vadd.f32 %v3133, %v3221
        %v3223 = vpop.f32.mrf.mxu0
        %v3224 = vadd.f32 %v3135, %v3223
        %3225 = vmatmul.bf16.gmra.mxu0 %v2869
        %v3226 = vpop.f32.mrf.mxu0
        %v3227 = vadd.f32 %v3138, %v3226
        %v3228 = vpop.f32.mrf.mxu0
        %v3229 = vadd.f32 %v3140, %v3228
        %3230 = vmatmul.bf16.gmra.mxu0 %v2872
        %v3231 = vpop.f32.mrf.mxu0
        %v3232 = vadd.f32 %v3143, %v3231
        %v3233 = vpop.f32.mrf.mxu0
        %v3234 = vadd.f32 %v3145, %v3233
        %3235 = vmatmul.bf16.gmra.mxu0 %v2875
        %v3236 = vpop.f32.mrf.mxu0
        %v3237 = vadd.f32 %v3148, %v3236
        %v3238 = vpop.f32.mrf.mxu0
        %v3239 = vadd.f32 %v3150, %v3238
        %3240 = vmatmul.bf16.gmra.mxu0 %v2878
        %v3241 = vpop.f32.mrf.mxu0
        %v3242 = vadd.f32 %v3153, %v3241
        %v3243 = vpop.f32.mrf.mxu0
        %v3244 = vadd.f32 %v3155, %v3243
        %3245 = vmatmul.bf16.gmra.mxu0 %v2881
        %v3246 = vpop.f32.mrf.mxu0
        %v3247 = vadd.f32 %v3158, %v3246
        %v3248 = vpop.f32.mrf.mxu0
        %v3249 = vadd.f32 %v3160, %v3248
        %3250 = vmatmul.bf16.gmra.mxu0 %v2884
        %v3251 = vpop.f32.mrf.mxu0
        %v3252 = vadd.f32 %v3163, %v3251
        %v3253 = vpop.f32.mrf.mxu0
        %v3254 = vadd.f32 %v3165, %v3253
        %3255 = vdwg.mxu0
        %3256 = vmatpush.bf16.msra.mxu0 %v3053
        %3257 = vmatpush.bf16.msra.mxu0 %v3052
        %3258 = vmatpush.bf16.msra.mxu0 %v3051
        %3259 = vmatpush.bf16.msra.mxu0 %v3050
        %3260 = vmatpush.bf16.msra.mxu0 %v3049
        %3261 = vmatpush.bf16.msra.mxu0 %v3048
        %3262 = vmatpush.bf16.msra.mxu0 %v3047
        %3263 = vmatpush.bf16.msra.mxu0 %v3046
        %3264 = vmatmul.bf16.gmra.mxu0 %v2840
        %v3265 = vpop.f32.mrf.mxu0
        %v3266 = vadd.f32 %v3177, %v3265
        %v3267 = vpop.f32.mrf.mxu0
        %v3268 = vadd.f32 %v3179, %v3267
        %3269 = vmatmul.bf16.gmra.mxu0 %v2843
        %v3270 = vpop.f32.mrf.mxu0
        %v3271 = vadd.f32 %v3182, %v3270
        %v3272 = vpop.f32.mrf.mxu0
        %v3273 = vadd.f32 %v3184, %v3272
        %3274 = vmatmul.bf16.gmra.mxu0 %v2846
        %v3275 = vpop.f32.mrf.mxu0
        %v3276 = vadd.f32 %v3187, %v3275
        %v3277 = vpop.f32.mrf.mxu0
        %v3278 = vadd.f32 %v3189, %v3277
        %3279 = vmatmul.bf16.gmra.mxu0 %v2849
        %v3280 = vpop.f32.mrf.mxu0
        %v3281 = vadd.f32 %v3192, %v3280
        %v3282 = vpop.f32.mrf.mxu0
        %v3283 = vadd.f32 %v3194, %v3282
        %3284 = vmatmul.bf16.gmra.mxu0 %v2852
        %v3285 = vpop.f32.mrf.mxu0
        %v3286 = vadd.f32 %v3197, %v3285
        %v3287 = vpop.f32.mrf.mxu0
        %v3288 = vadd.f32 %v3199, %v3287
        %3289 = vmatmul.bf16.gmra.mxu0 %v2855
        %v3290 = vpop.f32.mrf.mxu0
        %v3291 = vadd.f32 %v3202, %v3290
        %v3292 = vpop.f32.mrf.mxu0
        %v3293 = vadd.f32 %v3204, %v3292
        %3294 = vmatmul.bf16.gmra.mxu0 %v2858
        %v3295 = vpop.f32.mrf.mxu0
        %v3296 = vadd.f32 %v3207, %v3295
        %v3297 = vpop.f32.mrf.mxu0
        %v3298 = vadd.f32 %v3209, %v3297
        %3299 = vmatmul.bf16.gmra.mxu0 %v2861
        %v3300 = vpop.f32.mrf.mxu0
        %v3301 = vadd.f32 %v3212, %v3300
        %v3302 = vpop.f32.mrf.mxu0
        %v3303 = vadd.f32 %v3214, %v3302
        %3304 = vmatmul.bf16.gmra.mxu0 %v2864
        %v3305 = vpop.f32.mrf.mxu0
        %v3306 = vadd.f32 %v3217, %v3305
        %v3307 = vpop.f32.mrf.mxu0
        %v3308 = vadd.f32 %v3219, %v3307
        %3309 = vmatmul.bf16.gmra.mxu0 %v2867
        %v3310 = vpop.f32.mrf.mxu0
        %v3311 = vadd.f32 %v3222, %v3310
        %v3312 = vpop.f32.mrf.mxu0
        %v3313 = vadd.f32 %v3224, %v3312
        %3314 = vmatmul.bf16.gmra.mxu0 %v2870
        %v3315 = vpop.f32.mrf.mxu0
        %v3316 = vadd.f32 %v3227, %v3315
        %v3317 = vpop.f32.mrf.mxu0
        %v3318 = vadd.f32 %v3229, %v3317
        %3319 = vmatmul.bf16.gmra.mxu0 %v2873
        %v3320 = vpop.f32.mrf.mxu0
        %v3321 = vadd.f32 %v3232, %v3320
        %v3322 = vpop.f32.mrf.mxu0
        %v3323 = vadd.f32 %v3234, %v3322
        %3324 = vmatmul.bf16.gmra.mxu0 %v2876
        %v3325 = vpop.f32.mrf.mxu0
        %v3326 = vadd.f32 %v3237, %v3325
        %v3327 = vpop.f32.mrf.mxu0
        %v3328 = vadd.f32 %v3239, %v3327
        %3329 = vmatmul.bf16.gmra.mxu0 %v2879
        %v3330 = vpop.f32.mrf.mxu0
        %v3331 = vadd.f32 %v3242, %v3330
        %v3332 = vpop.f32.mrf.mxu0
        %v3333 = vadd.f32 %v3244, %v3332
        %3334 = vmatmul.bf16.gmra.mxu0 %v2882
        %v3335 = vpop.f32.mrf.mxu0
        %v3336 = vadd.f32 %v3247, %v3335
        %v3337 = vpop.f32.mrf.mxu0
        %v3338 = vadd.f32 %v3249, %v3337
        %3339 = vmatmul.bf16.gmra.mxu0 %v2885
        %v3340 = vpop.f32.mrf.mxu0
        %v3341 = vadd.f32 %v3252, %v3340
        %v3342 = vpop.f32.mrf.mxu0
        %v3343 = vadd.f32 %v3254, %v3342
        %3344 = vdwg.mxu0
        %v3345 = vld [vmem:[#allocation4] sm:$0xff]
        %v3346 = vld [vmem:[#allocation4 + $0x8] sm:$0xff]
        %v3347 = vld [vmem:[#allocation4 + $0x10] sm:$0xff]
        %v3348 = vld [vmem:[#allocation4 + $0x18] sm:$0xff]
        %v3349 = vld [vmem:[#allocation4 + $0x20] sm:$0xff]
        %v3350 = vld [vmem:[#allocation4 + $0x28] sm:$0xff]
        %v3351 = vld [vmem:[#allocation4 + $0x30] sm:$0xff]
        %v3352 = vld [vmem:[#allocation4 + $0x38] sm:$0xff]
        %v3353 = vld [vmem:[#allocation4 + $0x40] sm:$0xff]
        %v3354 = vld [vmem:[#allocation4 + $0x48] sm:$0xff]
        %v3355 = vld [vmem:[#allocation4 + $0x50] sm:$0xff]
        %v3356 = vld [vmem:[#allocation4 + $0x58] sm:$0xff]
        %v3357 = vld [vmem:[#allocation4 + $0x60] sm:$0xff]
        %v3358 = vld [vmem:[#allocation4 + $0x68] sm:$0xff]
        %v3359 = vld [vmem:[#allocation4 + $0x70] sm:$0xff]
        %v3360 = vld [vmem:[#allocation4 + $0x78] sm:$0xff]
        %v3361 = vld [vmem:[#allocation4 + $0x80] sm:$0xff]
        %v3362 = vld [vmem:[#allocation4 + $0x88] sm:$0xff]
        %v3363 = vld [vmem:[#allocation4 + $0x90] sm:$0xff]
        %v3364 = vld [vmem:[#allocation4 + $0x98] sm:$0xff]
        %v3365 = vld [vmem:[#allocation4 + $0xa0] sm:$0xff]
        %v3366 = vld [vmem:[#allocation4 + $0xa8] sm:$0xff]
        %v3367 = vld [vmem:[#allocation4 + $0xb0] sm:$0xff]
        %v3368 = vld [vmem:[#allocation4 + $0xb8] sm:$0xff]
        %v3369 = vld [vmem:[#allocation4 + $0xc0] sm:$0xff]
        %v3370 = vld [vmem:[#allocation4 + $0xc8] sm:$0xff]
        %v3371 = vld [vmem:[#allocation4 + $0xd0] sm:$0xff]
        %v3372 = vld [vmem:[#allocation4 + $0xd8] sm:$0xff]
        %v3373 = vld [vmem:[#allocation4 + $0xe0] sm:$0xff]
        %v3374 = vld [vmem:[#allocation4 + $0xe8] sm:$0xff]
        %v3375 = vld [vmem:[#allocation4 + $0xf0] sm:$0xff]
        %v3376 = vld [vmem:[#allocation4 + $0xf8] sm:$0xff]
        %v3377 = vadd.f32 %v3345, %v3266
        %v3378 = vadd.f32 %v3346, %v3268
        %v3379 = vadd.f32 %v3347, %v3271
        %v3380 = vadd.f32 %v3348, %v3273
        %v3381 = vadd.f32 %v3349, %v3276
        %v3382 = vadd.f32 %v3350, %v3278
        %v3383 = vadd.f32 %v3351, %v3281
        %v3384 = vadd.f32 %v3352, %v3283
        %v3385 = vadd.f32 %v3353, %v3286
        %v3386 = vadd.f32 %v3354, %v3288
        %v3387 = vadd.f32 %v3355, %v3291
        %v3388 = vadd.f32 %v3356, %v3293
        %v3389 = vadd.f32 %v3357, %v3296
        %v3390 = vadd.f32 %v3358, %v3298
        %v3391 = vadd.f32 %v3359, %v3301
        %v3392 = vadd.f32 %v3360, %v3303
        %v3393 = vadd.f32 %v3361, %v3306
        %v3394 = vadd.f32 %v3362, %v3308
        %v3395 = vadd.f32 %v3363, %v3311
        %v3396 = vadd.f32 %v3364, %v3313
        %v3397 = vadd.f32 %v3365, %v3316
        %v3398 = vadd.f32 %v3366, %v3318
        %v3399 = vadd.f32 %v3367, %v3321
        %v3400 = vadd.f32 %v3368, %v3323
        %v3401 = vadd.f32 %v3369, %v3326
        %v3402 = vadd.f32 %v3370, %v3328
        %v3403 = vadd.f32 %v3371, %v3331
        %v3404 = vadd.f32 %v3372, %v3333
        %v3405 = vadd.f32 %v3373, %v3336
        %v3406 = vadd.f32 %v3374, %v3338
        %v3407 = vadd.f32 %v3375, %v3341
        %v3408 = vadd.f32 %v3376, %v3343
        %3409 = vst [vmem:[#allocation4] sm:$0xff] %v3377
        %3410 = vst [vmem:[#allocation4 + $0x8] sm:$0xff] %v3378
        %3411 = vst [vmem:[#allocation4 + $0x10] sm:$0xff] %v3379
        %3412 = vst [vmem:[#allocation4 + $0x18] sm:$0xff] %v3380
        %3413 = vst [vmem:[#allocation4 + $0x20] sm:$0xff] %v3381
        %3414 = vst [vmem:[#allocation4 + $0x28] sm:$0xff] %v3382
        %3415 = vst [vmem:[#allocation4 + $0x30] sm:$0xff] %v3383
        %3416 = vst [vmem:[#allocation4 + $0x38] sm:$0xff] %v3384
        %3417 = vst [vmem:[#allocation4 + $0x40] sm:$0xff] %v3385
        %3418 = vst [vmem:[#allocation4 + $0x48] sm:$0xff] %v3386
        %3419 = vst [vmem:[#allocation4 + $0x50] sm:$0xff] %v3387
        %3420 = vst [vmem:[#allocation4 + $0x58] sm:$0xff] %v3388
        %3421 = vst [vmem:[#allocation4 + $0x60] sm:$0xff] %v3389
        %3422 = vst [vmem:[#allocation4 + $0x68] sm:$0xff] %v3390
        %3423 = vst [vmem:[#allocation4 + $0x70] sm:$0xff] %v3391
        %3424 = vst [vmem:[#allocation4 + $0x78] sm:$0xff] %v3392
        %3425 = vst [vmem:[#allocation4 + $0x80] sm:$0xff] %v3393
        %3426 = vst [vmem:[#allocation4 + $0x88] sm:$0xff] %v3394
        %3427 = vst [vmem:[#allocation4 + $0x90] sm:$0xff] %v3395
        %3428 = vst [vmem:[#allocation4 + $0x98] sm:$0xff] %v3396
        %3429 = vst [vmem:[#allocation4 + $0xa0] sm:$0xff] %v3397
        %3430 = vst [vmem:[#allocation4 + $0xa8] sm:$0xff] %v3398
        %3431 = vst [vmem:[#allocation4 + $0xb0] sm:$0xff] %v3399
        %3432 = vst [vmem:[#allocation4 + $0xb8] sm:$0xff] %v3400
        %3433 = vst [vmem:[#allocation4 + $0xc0] sm:$0xff] %v3401
        %3434 = vst [vmem:[#allocation4 + $0xc8] sm:$0xff] %v3402
        %3435 = vst [vmem:[#allocation4 + $0xd0] sm:$0xff] %v3403
        %3436 = vst [vmem:[#allocation4 + $0xd8] sm:$0xff] %v3404
        %3437 = vst [vmem:[#allocation4 + $0xe0] sm:$0xff] %v3405
        %3438 = vst [vmem:[#allocation4 + $0xe8] sm:$0xff] %v3406
        %3439 = vst [vmem:[#allocation4 + $0xf0] sm:$0xff] %v3407
        %3440 = vst [vmem:[#allocation4 + $0xf8] sm:$0xff] %v3408
        %v3441 = vld [vmem:[#allocation4] sm:$0xff]
        %v3442 = vld [vmem:[#allocation4 + $0x8] sm:$0xff]
        %v3443 = vld [vmem:[#allocation4 + $0x10] sm:$0xff]
        %v3444 = vld [vmem:[#allocation4 + $0x18] sm:$0xff]
        %v3445 = vld [vmem:[#allocation4 + $0x20] sm:$0xff]
        %v3446 = vld [vmem:[#allocation4 + $0x28] sm:$0xff]
        %v3447 = vld [vmem:[#allocation4 + $0x30] sm:$0xff]
        %v3448 = vld [vmem:[#allocation4 + $0x38] sm:$0xff]
        %v3449 = vld [vmem:[#allocation4 + $0x40] sm:$0xff]
        %v3450 = vld [vmem:[#allocation4 + $0x48] sm:$0xff]
        %v3451 = vld [vmem:[#allocation4 + $0x50] sm:$0xff]
        %v3452 = vld [vmem:[#allocation4 + $0x58] sm:$0xff]
        %v3453 = vld [vmem:[#allocation4 + $0x60] sm:$0xff]
        %v3454 = vld [vmem:[#allocation4 + $0x68] sm:$0xff]
        %v3455 = vld [vmem:[#allocation4 + $0x70] sm:$0xff]
        %v3456 = vld [vmem:[#allocation4 + $0x78] sm:$0xff]
        %v3457 = vld [vmem:[#allocation4 + $0x80] sm:$0xff]
        %v3458 = vld [vmem:[#allocation4 + $0x88] sm:$0xff]
        %v3459 = vld [vmem:[#allocation4 + $0x90] sm:$0xff]
        %v3460 = vld [vmem:[#allocation4 + $0x98] sm:$0xff]
        %v3461 = vld [vmem:[#allocation4 + $0xa0] sm:$0xff]
        %v3462 = vld [vmem:[#allocation4 + $0xa8] sm:$0xff]
        %v3463 = vld [vmem:[#allocation4 + $0xb0] sm:$0xff]
        %v3464 = vld [vmem:[#allocation4 + $0xb8] sm:$0xff]
        %v3465 = vld [vmem:[#allocation4 + $0xc0] sm:$0xff]
        %v3466 = vld [vmem:[#allocation4 + $0xc8] sm:$0xff]
        %v3467 = vld [vmem:[#allocation4 + $0xd0] sm:$0xff]
        %v3468 = vld [vmem:[#allocation4 + $0xd8] sm:$0xff]
        %v3469 = vld [vmem:[#allocation4 + $0xe0] sm:$0xff]
        %v3470 = vld [vmem:[#allocation4 + $0xe8] sm:$0xff]
        %v3471 = vld [vmem:[#allocation4 + $0xf0] sm:$0xff]
        %v3472 = vld [vmem:[#allocation4 + $0xf8] sm:$0xff]
        %vm3473 = vcmp.gt.f32.partialorder %v3441, 0.0
        %vm3474 = vcmp.gt.f32.partialorder %v3442, 0.0
        %vm3475 = vcmp.gt.f32.partialorder %v3443, 0.0
        %vm3476 = vcmp.gt.f32.partialorder %v3444, 0.0
        %vm3477 = vcmp.gt.f32.partialorder %v3445, 0.0
        %vm3478 = vcmp.gt.f32.partialorder %v3446, 0.0
        %vm3479 = vcmp.gt.f32.partialorder %v3447, 0.0
        %vm3480 = vcmp.gt.f32.partialorder %v3448, 0.0
        %vm3481 = vcmp.gt.f32.partialorder %v3449, 0.0
        %vm3482 = vcmp.gt.f32.partialorder %v3450, 0.0
        %vm3483 = vcmp.gt.f32.partialorder %v3451, 0.0
        %vm3484 = vcmp.gt.f32.partialorder %v3452, 0.0
        %vm3485 = vcmp.gt.f32.partialorder %v3453, 0.0
        %vm3486 = vcmp.gt.f32.partialorder %v3454, 0.0
        %vm3487 = vcmp.gt.f32.partialorder %v3455, 0.0
        %vm3488 = vcmp.gt.f32.partialorder %v3456, 0.0
        %vm3489 = vcmp.gt.f32.partialorder %v3457, 0.0
        %vm3490 = vcmp.gt.f32.partialorder %v3458, 0.0
        %vm3491 = vcmp.gt.f32.partialorder %v3459, 0.0
        %vm3492 = vcmp.gt.f32.partialorder %v3460, 0.0
        %vm3493 = vcmp.gt.f32.partialorder %v3461, 0.0
        %vm3494 = vcmp.gt.f32.partialorder %v3462, 0.0
        %vm3495 = vcmp.gt.f32.partialorder %v3463, 0.0
        %vm3496 = vcmp.gt.f32.partialorder %v3464, 0.0
        %vm3497 = vcmp.gt.f32.partialorder %v3465, 0.0
        %vm3498 = vcmp.gt.f32.partialorder %v3466, 0.0
        %vm3499 = vcmp.gt.f32.partialorder %v3467, 0.0
        %vm3500 = vcmp.gt.f32.partialorder %v3468, 0.0
        %vm3501 = vcmp.gt.f32.partialorder %v3469, 0.0
        %vm3502 = vcmp.gt.f32.partialorder %v3470, 0.0
        %vm3503 = vcmp.gt.f32.partialorder %v3471, 0.0
        %vm3504 = vcmp.gt.f32.partialorder %v3472, 0.0
        %v3505 = vmul.f32 %v3441, 1.442695
        %v3506 = vpow.pop %v3505
        %v3507 = vmul.f32 %v3442, 1.442695
        %v3508 = vpow.pop %v3507
        %v3509 = vmul.f32 %v3443, 1.442695
        %v3510 = vpow.pop %v3509
        %v3511 = vmul.f32 %v3444, 1.442695
        %v3512 = vpow.pop %v3511
        %v3513 = vmul.f32 %v3445, 1.442695
        %v3514 = vpow.pop %v3513
        %v3515 = vmul.f32 %v3446, 1.442695
        %v3516 = vpow.pop %v3515
        %v3517 = vmul.f32 %v3447, 1.442695
        %v3518 = vpow.pop %v3517
        %v3519 = vmul.f32 %v3448, 1.442695
        %v3520 = vpow.pop %v3519
        %v3521 = vmul.f32 %v3449, 1.442695
        %v3522 = vpow.pop %v3521
        %v3523 = vmul.f32 %v3450, 1.442695
        %v3524 = vpow.pop %v3523
        %v3525 = vmul.f32 %v3451, 1.442695
        %v3526 = vpow.pop %v3525
        %v3527 = vmul.f32 %v3452, 1.442695
        %v3528 = vpow.pop %v3527
        %v3529 = vmul.f32 %v3453, 1.442695
        %v3530 = vpow.pop %v3529
        %v3531 = vmul.f32 %v3454, 1.442695
        %v3532 = vpow.pop %v3531
        %v3533 = vmul.f32 %v3455, 1.442695
        %v3534 = vpow.pop %v3533
        %v3535 = vmul.f32 %v3456, 1.442695
        %v3536 = vpow.pop %v3535
        %v3537 = vmul.f32 %v3457, 1.442695
        %v3538 = vpow.pop %v3537
        %v3539 = vmul.f32 %v3458, 1.442695
        %v3540 = vpow.pop %v3539
        %v3541 = vmul.f32 %v3459, 1.442695
        %v3542 = vpow.pop %v3541
        %v3543 = vmul.f32 %v3460, 1.442695
        %v3544 = vpow.pop %v3543
        %v3545 = vmul.f32 %v3461, 1.442695
        %v3546 = vpow.pop %v3545
        %v3547 = vmul.f32 %v3462, 1.442695
        %v3548 = vpow.pop %v3547
        %v3549 = vmul.f32 %v3463, 1.442695
        %v3550 = vpow.pop %v3549
        %v3551 = vmul.f32 %v3464, 1.442695
        %v3552 = vpow.pop %v3551
        %v3553 = vmul.f32 %v3465, 1.442695
        %v3554 = vpow.pop %v3553
        %v3555 = vmul.f32 %v3466, 1.442695
        %v3556 = vpow.pop %v3555
        %v3557 = vmul.f32 %v3467, 1.442695
        %v3558 = vpow.pop %v3557
        %v3559 = vmul.f32 %v3468, 1.442695
        %v3560 = vpow.pop %v3559
        %v3561 = vmul.f32 %v3469, 1.442695
        %v3562 = vpow.pop %v3561
        %v3563 = vmul.f32 %v3470, 1.442695
        %v3564 = vpow.pop %v3563
        %v3565 = vmul.f32 %v3471, 1.442695
        %v3566 = vpow.pop %v3565
        %v3567 = vmul.f32 %v3472, 1.442695
        %v3568 = vpow.pop %v3567
        %v3569 = vsub.f32 %v3506, 1.0
        %v3570 = vsub.f32 %v3508, 1.0
        %v3571 = vsub.f32 %v3510, 1.0
        %v3572 = vsub.f32 %v3512, 1.0
        %v3573 = vsub.f32 %v3514, 1.0
        %v3574 = vsub.f32 %v3516, 1.0
        %v3575 = vsub.f32 %v3518, 1.0
        %v3576 = vsub.f32 %v3520, 1.0
        %v3577 = vsub.f32 %v3522, 1.0
        %v3578 = vsub.f32 %v3524, 1.0
        %v3579 = vsub.f32 %v3526, 1.0
        %v3580 = vsub.f32 %v3528, 1.0
        %v3581 = vsub.f32 %v3530, 1.0
        %v3582 = vsub.f32 %v3532, 1.0
        %v3583 = vsub.f32 %v3534, 1.0
        %v3584 = vsub.f32 %v3536, 1.0
        %v3585 = vsub.f32 %v3538, 1.0
        %v3586 = vsub.f32 %v3540, 1.0
        %v3587 = vsub.f32 %v3542, 1.0
        %v3588 = vsub.f32 %v3544, 1.0
        %v3589 = vsub.f32 %v3546, 1.0
        %v3590 = vsub.f32 %v3548, 1.0
        %v3591 = vsub.f32 %v3550, 1.0
        %v3592 = vsub.f32 %v3552, 1.0
        %v3593 = vsub.f32 %v3554, 1.0
        %v3594 = vsub.f32 %v3556, 1.0
        %v3595 = vsub.f32 %v3558, 1.0
        %v3596 = vsub.f32 %v3560, 1.0
        %v3597 = vsub.f32 %v3562, 1.0
        %v3598 = vsub.f32 %v3564, 1.0
        %v3599 = vsub.f32 %v3566, 1.0
        %v3600 = vsub.f32 %v3568, 1.0
        %v3601 = vmul.f32 %v3569, 1.6732632
        %v3602 = vmul.f32 %v3570, 1.6732632
        %v3603 = vmul.f32 %v3571, 1.6732632
        %v3604 = vmul.f32 %v3572, 1.6732632
        %v3605 = vmul.f32 %v3573, 1.6732632
        %v3606 = vmul.f32 %v3574, 1.6732632
        %v3607 = vmul.f32 %v3575, 1.6732632
        %v3608 = vmul.f32 %v3576, 1.6732632
        %v3609 = vmul.f32 %v3577, 1.6732632
        %v3610 = vmul.f32 %v3578, 1.6732632
        %v3611 = vmul.f32 %v3579, 1.6732632
        %v3612 = vmul.f32 %v3580, 1.6732632
        %v3613 = vmul.f32 %v3581, 1.6732632
        %v3614 = vmul.f32 %v3582, 1.6732632
        %v3615 = vmul.f32 %v3583, 1.6732632
        %v3616 = vmul.f32 %v3584, 1.6732632
        %v3617 = vmul.f32 %v3585, 1.6732632
        %v3618 = vmul.f32 %v3586, 1.6732632
        %v3619 = vmul.f32 %v3587, 1.6732632
        %v3620 = vmul.f32 %v3588, 1.6732632
        %v3621 = vmul.f32 %v3589, 1.6732632
        %v3622 = vmul.f32 %v3590, 1.6732632
        %v3623 = vmul.f32 %v3591, 1.6732632
        %v3624 = vmul.f32 %v3592, 1.6732632
        %v3625 = vmul.f32 %v3593, 1.6732632
        %v3626 = vmul.f32 %v3594, 1.6732632
        %v3627 = vmul.f32 %v3595, 1.6732632
        %v3628 = vmul.f32 %v3596, 1.6732632
        %v3629 = vmul.f32 %v3597, 1.6732632
        %v3630 = vmul.f32 %v3598, 1.6732632
        %v3631 = vmul.f32 %v3599, 1.6732632
        %v3632 = vmul.f32 %v3600, 1.6732632
        %v3633 = vsel %vm3473, %v3441, %v3601
        %v3634 = vsel %vm3474, %v3442, %v3602
        %v3635 = vsel %vm3475, %v3443, %v3603
        %v3636 = vsel %vm3476, %v3444, %v3604
        %v3637 = vsel %vm3477, %v3445, %v3605
        %v3638 = vsel %vm3478, %v3446, %v3606
        %v3639 = vsel %vm3479, %v3447, %v3607
        %v3640 = vsel %vm3480, %v3448, %v3608
        %v3641 = vsel %vm3481, %v3449, %v3609
        %v3642 = vsel %vm3482, %v3450, %v3610
        %v3643 = vsel %vm3483, %v3451, %v3611
        %v3644 = vsel %vm3484, %v3452, %v3612
        %v3645 = vsel %vm3485, %v3453, %v3613
        %v3646 = vsel %vm3486, %v3454, %v3614
        %v3647 = vsel %vm3487, %v3455, %v3615
        %v3648 = vsel %vm3488, %v3456, %v3616
        %v3649 = vsel %vm3489, %v3457, %v3617
        %v3650 = vsel %vm3490, %v3458, %v3618
        %v3651 = vsel %vm3491, %v3459, %v3619
        %v3652 = vsel %vm3492, %v3460, %v3620
        %v3653 = vsel %vm3493, %v3461, %v3621
        %v3654 = vsel %vm3494, %v3462, %v3622
        %v3655 = vsel %vm3495, %v3463, %v3623
        %v3656 = vsel %vm3496, %v3464, %v3624
        %v3657 = vsel %vm3497, %v3465, %v3625
        %v3658 = vsel %vm3498, %v3466, %v3626
        %v3659 = vsel %vm3499, %v3467, %v3627
        %v3660 = vsel %vm3500, %v3468, %v3628
        %v3661 = vsel %vm3501, %v3469, %v3629
        %v3662 = vsel %vm3502, %v3470, %v3630
        %v3663 = vsel %vm3503, %v3471, %v3631
        %v3664 = vsel %vm3504, %v3472, %v3632
        %v3665 = vmul.f32 %v3633, 1.050701
        %v3666 = vmul.f32 %v3634, 1.050701
        %v3667 = vmul.f32 %v3635, 1.050701
        %v3668 = vmul.f32 %v3636, 1.050701
        %v3669 = vmul.f32 %v3637, 1.050701
        %v3670 = vmul.f32 %v3638, 1.050701
        %v3671 = vmul.f32 %v3639, 1.050701
        %v3672 = vmul.f32 %v3640, 1.050701
        %v3673 = vmul.f32 %v3641, 1.050701
        %v3674 = vmul.f32 %v3642, 1.050701
        %v3675 = vmul.f32 %v3643, 1.050701
        %v3676 = vmul.f32 %v3644, 1.050701
        %v3677 = vmul.f32 %v3645, 1.050701
        %v3678 = vmul.f32 %v3646, 1.050701
        %v3679 = vmul.f32 %v3647, 1.050701
        %v3680 = vmul.f32 %v3648, 1.050701
        %v3681 = vmul.f32 %v3649, 1.050701
        %v3682 = vmul.f32 %v3650, 1.050701
        %v3683 = vmul.f32 %v3651, 1.050701
        %v3684 = vmul.f32 %v3652, 1.050701
        %v3685 = vmul.f32 %v3653, 1.050701
        %v3686 = vmul.f32 %v3654, 1.050701
        %v3687 = vmul.f32 %v3655, 1.050701
        %v3688 = vmul.f32 %v3656, 1.050701
        %v3689 = vmul.f32 %v3657, 1.050701
        %v3690 = vmul.f32 %v3658, 1.050701
        %v3691 = vmul.f32 %v3659, 1.050701
        %v3692 = vmul.f32 %v3660, 1.050701
        %v3693 = vmul.f32 %v3661, 1.050701
        %v3694 = vmul.f32 %v3662, 1.050701
        %v3695 = vmul.f32 %v3663, 1.050701
        %v3696 = vmul.f32 %v3664, 1.050701
        %3697 = vst [vmem:[%s231 + $0x1] sm:$0xff] %v3665
        %3698 = vst [vmem:[%s231 + $0x9] sm:$0xff] %v3666
        %3699 = vst [vmem:[%s231 + $0x19] sm:$0xff] %v3667
        %3700 = vst [vmem:[%s231 + $0x21] sm:$0xff] %v3668
        %3701 = vst [vmem:[%s231 + $0x31] sm:$0xff] %v3669
        %3702 = vst [vmem:[%s231 + $0x39] sm:$0xff] %v3670
        %3703 = vst [vmem:[%s231 + $0x49] sm:$0xff] %v3671
        %3704 = vst [vmem:[%s231 + $0x51] sm:$0xff] %v3672
        %3705 = vst [vmem:[%s231 + $0x61] sm:$0xff] %v3673
        %3706 = vst [vmem:[%s231 + $0x69] sm:$0xff] %v3674
        %3707 = vst [vmem:[%s231 + $0x79] sm:$0xff] %v3675
        %3708 = vst [vmem:[%s231 + $0x81] sm:$0xff] %v3676
        %3709 = vst [vmem:[%s231 + $0x91] sm:$0xff] %v3677
        %3710 = vst [vmem:[%s231 + $0x99] sm:$0xff] %v3678
        %3711 = vst [vmem:[%s231 + $0xa9] sm:$0xff] %v3679
        %3712 = vst [vmem:[%s231 + $0xb1] sm:$0xff] %v3680
        %3713 = vst [vmem:[%s231 + $0xc1] sm:$0xff] %v3681
        %3714 = vst [vmem:[%s231 + $0xc9] sm:$0xff] %v3682
        %3715 = vst [vmem:[%s231 + $0xd9] sm:$0xff] %v3683
        %3716 = vst [vmem:[%s231 + $0xe1] sm:$0xff] %v3684
        %3717 = vst [vmem:[%s231 + $0xf1] sm:$0xff] %v3685
        %3718 = vst [vmem:[%s231 + $0xf9] sm:$0xff] %v3686
        %3719 = vst [vmem:[%s231 + $0x109] sm:$0xff] %v3687
        %3720 = vst [vmem:[%s231 + $0x111] sm:$0xff] %v3688
        %3721 = vst [vmem:[%s231 + $0x121] sm:$0xff] %v3689
        %3722 = vst [vmem:[%s231 + $0x129] sm:$0xff] %v3690
        %3723 = vst [vmem:[%s231 + $0x139] sm:$0xff] %v3691
        %3724 = vst [vmem:[%s231 + $0x141] sm:$0xff] %v3692
        %3725 = vst [vmem:[%s231 + $0x151] sm:$0xff] %v3693
        %3726 = vst [vmem:[%s231 + $0x159] sm:$0xff] %v3694
        %3727 = vst [vmem:[%s231 + $0x169] sm:$0xff] %v3695
        %3728 = vst [vmem:[%s231 + $0x171] sm:$0xff] %v3696
        %v3729 = vld [vmem:[#allocation2] sm:$0xff]
        %v3730 = vld [vmem:[#allocation2 + $0x8] sm:$0xff]
        %v3731 = vld [vmem:[#allocation2 + $0x18] sm:$0xff]
        %v3732 = vld [vmem:[#allocation2 + $0x20] sm:$0xff]
        %v3733 = vld [vmem:[#allocation2 + $0x30] sm:$0xff]
        %v3734 = vld [vmem:[#allocation2 + $0x38] sm:$0xff]
        %v3735 = vld [vmem:[#allocation2 + $0x48] sm:$0xff]
        %v3736 = vld [vmem:[#allocation2 + $0x50] sm:$0xff]
        %v3737 = vld [vmem:[#allocation2 + $0x60] sm:$0xff]
        %v3738 = vld [vmem:[#allocation2 + $0x68] sm:$0xff]
        %v3739 = vld [vmem:[#allocation2 + $0x78] sm:$0xff]
        %v3740 = vld [vmem:[#allocation2 + $0x80] sm:$0xff]
        %v3741 = vld [vmem:[#allocation2 + $0x90] sm:$0xff]
        %v3742 = vld [vmem:[#allocation2 + $0x98] sm:$0xff]
        %v3743 = vld [vmem:[#allocation2 + $0xa8] sm:$0xff]
        %v3744 = vld [vmem:[#allocation2 + $0xb0] sm:$0xff]
        %v3745 = vld [vmem:[#allocation2 + $0xc0] sm:$0xff]
        %v3746 = vld [vmem:[#allocation2 + $0xc8] sm:$0xff]
        %v3747 = vld [vmem:[#allocation2 + $0xd8] sm:$0xff]
        %v3748 = vld [vmem:[#allocation2 + $0xe0] sm:$0xff]
        %v3749 = vld [vmem:[#allocation2 + $0xf0] sm:$0xff]
        %v3750 = vld [vmem:[#allocation2 + $0xf8] sm:$0xff]
        %v3751 = vld [vmem:[#allocation2 + $0x108] sm:$0xff]
        %v3752 = vld [vmem:[#allocation2 + $0x110] sm:$0xff]
        %v3753 = vld [vmem:[#allocation2 + $0x120] sm:$0xff]
        %v3754 = vld [vmem:[#allocation2 + $0x128] sm:$0xff]
        %v3755 = vld [vmem:[#allocation2 + $0x138] sm:$0xff]
        %v3756 = vld [vmem:[#allocation2 + $0x140] sm:$0xff]
        %v3757 = vld [vmem:[#allocation2 + $0x150] sm:$0xff]
        %v3758 = vld [vmem:[#allocation2 + $0x158] sm:$0xff]
        %v3759 = vld [vmem:[#allocation2 + $0x168] sm:$0xff]
        %v3760 = vld [vmem:[#allocation2 + $0x170] sm:$0xff]
        %v3761 = vld [vmem:[#allocation2 + $0x180] sm:$0xff]
        %v3762 = vld [vmem:[#allocation2 + $0x188] sm:$0xff]
        %v3763 = vld [vmem:[#allocation2 + $0x198] sm:$0xff]
        %v3764 = vld [vmem:[#allocation2 + $0x1a0] sm:$0xff]
        %v3765 = vpack.c.bf16 %v3729, %v3729
        %v3766 = vpack.c.bf16 %v3730, %v3730
        %v3767 = vpack.c.bf16 %v3731, %v3731
        %v3768 = vpack.c.bf16 %v3732, %v3732
        %v3769 = vpack.c.bf16 %v3733, %v3733
        %v3770 = vpack.c.bf16 %v3734, %v3734
        %v3771 = vpack.c.bf16 %v3735, %v3735
        %v3772 = vpack.c.bf16 %v3736, %v3736
        %v3773 = vpack.c.bf16 %v3737, %v3737
        %v3774 = vpack.c.bf16 %v3738, %v3738
        %v3775 = vpack.c.bf16 %v3739, %v3739
        %v3776 = vpack.c.bf16 %v3740, %v3740
        %v3777 = vpack.c.bf16 %v3741, %v3741
        %v3778 = vpack.c.bf16 %v3742, %v3742
        %v3779 = vpack.c.bf16 %v3743, %v3743
        %v3780 = vpack.c.bf16 %v3744, %v3744
        %v3781 = vpack.c.bf16 %v3745, %v3745
        %v3782 = vpack.c.bf16 %v3746, %v3746
        %v3783 = vpack.c.bf16 %v3747, %v3747
        %v3784 = vpack.c.bf16 %v3748, %v3748
        %v3785 = vpack.c.bf16 %v3749, %v3749
        %v3786 = vpack.c.bf16 %v3750, %v3750
        %v3787 = vpack.c.bf16 %v3751, %v3751
        %v3788 = vpack.c.bf16 %v3752, %v3752
        %v3789 = vpack.c.bf16 %v3753, %v3753
        %v3790 = vpack.c.bf16 %v3754, %v3754
        %v3791 = vpack.c.bf16 %v3755, %v3755
        %v3792 = vpack.c.bf16 %v3756, %v3756
        %v3793 = vpack.c.bf16 %v3757, %v3757
        %v3794 = vpack.c.bf16 %v3758, %v3758
        %v3795 = vpack.c.bf16 %v3759, %v3759
        %v3796 = vpack.c.bf16 %v3760, %v3760
        %v3797 = vpack.c.bf16 %v3761, %v3761
        %v3798 = vpack.c.bf16 %v3762, %v3762
        %v3799 = vpack.c.bf16 %v3763, %v3763
        %v3800 = vpack.c.bf16 %v3764, %v3764
        %3801 = vst [vmem:[#allocation3] sm:$0xf] %v3765
        %3802 = vst [vmem:[#allocation3 + $0xc] sm:$0xf] %v3766
        %3803 = vst [vmem:[#allocation3 + $0x18] sm:$0xf] %v3767
        %3804 = vst [vmem:[#allocation3 + $0x24] sm:$0xf] %v3768
        %3805 = vst [vmem:[#allocation3 + $0x30] sm:$0xf] %v3769
        %3806 = vst [vmem:[#allocation3 + $0x3c] sm:$0xf] %v3770
        %3807 = vst [vmem:[#allocation3 + $0x48] sm:$0xf] %v3771
        %3808 = vst [vmem:[#allocation3 + $0x54] sm:$0xf] %v3772
        %3809 = vst [vmem:[#allocation3 + $0x60] sm:$0xf] %v3773
        %3810 = vst [vmem:[#allocation3 + $0x6c] sm:$0xf] %v3774
        %3811 = vst [vmem:[#allocation3 + $0x78] sm:$0xf] %v3775
        %3812 = vst [vmem:[#allocation3 + $0x84] sm:$0xf] %v3776
        %3813 = vst [vmem:[#allocation3 + $0x90] sm:$0xf] %v3777
        %3814 = vst [vmem:[#allocation3 + $0x9c] sm:$0xf] %v3778
        %3815 = vst [vmem:[#allocation3 + $0xa8] sm:$0xf] %v3779
        %3816 = vst [vmem:[#allocation3 + $0xb4] sm:$0xf] %v3780
        %3817 = vst [vmem:[#allocation3 + $0xc0] sm:$0xf] %v3781
        %3818 = vst [vmem:[#allocation3 + $0xcc] sm:$0xf] %v3782
        %3819 = vst [vmem:[#allocation3 + $0xd8] sm:$0xf] %v3783
        %3820 = vst [vmem:[#allocation3 + $0xe4] sm:$0xf] %v3784
        %3821 = vst [vmem:[#allocation3 + $0xf0] sm:$0xf] %v3785
        %3822 = vst [vmem:[#allocation3 + $0xfc] sm:$0xf] %v3786
        %3823 = vst [vmem:[#allocation3 + $0x108] sm:$0xf] %v3787
        %3824 = vst [vmem:[#allocation3 + $0x114] sm:$0xf] %v3788
        %3825 = vst [vmem:[#allocation3 + $0x120] sm:$0xf] %v3789
        %3826 = vst [vmem:[#allocation3 + $0x12c] sm:$0xf] %v3790
        %3827 = vst [vmem:[#allocation3 + $0x138] sm:$0xf] %v3791
        %3828 = vst [vmem:[#allocation3 + $0x144] sm:$0xf] %v3792
        %3829 = vst [vmem:[#allocation3 + $0x150] sm:$0xf] %v3793
        %3830 = vst [vmem:[#allocation3 + $0x15c] sm:$0xf] %v3794
        %3831 = vst [vmem:[#allocation3 + $0x168] sm:$0xf] %v3795
        %3832 = vst [vmem:[#allocation3 + $0x174] sm:$0xf] %v3796
        %3833 = vst [vmem:[#allocation3 + $0x180] sm:$0xf] %v3797
        %3834 = vst [vmem:[#allocation3 + $0x18c] sm:$0xf] %v3798
        %3835 = vst [vmem:[#allocation3 + $0x198] sm:$0xf] %v3799
        %3836 = vst [vmem:[#allocation3 + $0x1a4] sm:$0xf] %v3800
        %v3837 = vld [vmem:[#allocation2 + $0x1] sm:$0xff]
        %v3838 = vld [vmem:[#allocation2 + $0x9] sm:$0xff]
        %v3839 = vld [vmem:[#allocation2 + $0x19] sm:$0xff]
        %v3840 = vld [vmem:[#allocation2 + $0x21] sm:$0xff]
        %v3841 = vld [vmem:[#allocation2 + $0x31] sm:$0xff]
        %v3842 = vld [vmem:[#allocation2 + $0x39] sm:$0xff]
        %v3843 = vld [vmem:[#allocation2 + $0x49] sm:$0xff]
        %v3844 = vld [vmem:[#allocation2 + $0x51] sm:$0xff]
        %v3845 = vld [vmem:[#allocation2 + $0x61] sm:$0xff]
        %v3846 = vld [vmem:[#allocation2 + $0x69] sm:$0xff]
        %v3847 = vld [vmem:[#allocation2 + $0x79] sm:$0xff]
        %v3848 = vld [vmem:[#allocation2 + $0x81] sm:$0xff]
        %v3849 = vld [vmem:[#allocation2 + $0x91] sm:$0xff]
        %v3850 = vld [vmem:[#allocation2 + $0x99] sm:$0xff]
        %v3851 = vld [vmem:[#allocation2 + $0xa9] sm:$0xff]
        %v3852 = vld [vmem:[#allocation2 + $0xb1] sm:$0xff]
        %v3853 = vld [vmem:[#allocation2 + $0xc1] sm:$0xff]
        %v3854 = vld [vmem:[#allocation2 + $0xc9] sm:$0xff]
        %v3855 = vld [vmem:[#allocation2 + $0xd9] sm:$0xff]
        %v3856 = vld [vmem:[#allocation2 + $0xe1] sm:$0xff]
        %v3857 = vld [vmem:[#allocation2 + $0xf1] sm:$0xff]
        %v3858 = vld [vmem:[#allocation2 + $0xf9] sm:$0xff]
        %v3859 = vld [vmem:[#allocation2 + $0x109] sm:$0xff]
        %v3860 = vld [vmem:[#allocation2 + $0x111] sm:$0xff]
        %v3861 = vld [vmem:[#allocation2 + $0x121] sm:$0xff]
        %v3862 = vld [vmem:[#allocation2 + $0x129] sm:$0xff]
        %v3863 = vld [vmem:[#allocation2 + $0x139] sm:$0xff]
        %v3864 = vld [vmem:[#allocation2 + $0x141] sm:$0xff]
        %v3865 = vld [vmem:[#allocation2 + $0x151] sm:$0xff]
        %v3866 = vld [vmem:[#allocation2 + $0x159] sm:$0xff]
        %v3867 = vld [vmem:[#allocation2 + $0x169] sm:$0xff]
        %v3868 = vld [vmem:[#allocation2 + $0x171] sm:$0xff]
        %v3869 = vld [vmem:[#allocation2 + $0x181] sm:$0xff]
        %v3870 = vld [vmem:[#allocation2 + $0x189] sm:$0xff]
        %v3871 = vld [vmem:[#allocation2 + $0x199] sm:$0xff]
        %v3872 = vld [vmem:[#allocation2 + $0x1a1] sm:$0xff]
        %v3873 = vpack.c.bf16 %v3837, %v3837
        %v3874 = vpack.c.bf16 %v3838, %v3838
        %v3875 = vpack.c.bf16 %v3839, %v3839
        %v3876 = vpack.c.bf16 %v3840, %v3840
        %v3877 = vpack.c.bf16 %v3841, %v3841
        %v3878 = vpack.c.bf16 %v3842, %v3842
        %v3879 = vpack.c.bf16 %v3843, %v3843
        %v3880 = vpack.c.bf16 %v3844, %v3844
        %v3881 = vpack.c.bf16 %v3845, %v3845
        %v3882 = vpack.c.bf16 %v3846, %v3846
        %v3883 = vpack.c.bf16 %v3847, %v3847
        %v3884 = vpack.c.bf16 %v3848, %v3848
        %v3885 = vpack.c.bf16 %v3849, %v3849
        %v3886 = vpack.c.bf16 %v3850, %v3850
        %v3887 = vpack.c.bf16 %v3851, %v3851
        %v3888 = vpack.c.bf16 %v3852, %v3852
        %v3889 = vpack.c.bf16 %v3853, %v3853
        %v3890 = vpack.c.bf16 %v3854, %v3854
        %v3891 = vpack.c.bf16 %v3855, %v3855
        %v3892 = vpack.c.bf16 %v3856, %v3856
        %v3893 = vpack.c.bf16 %v3857, %v3857
        %v3894 = vpack.c.bf16 %v3858, %v3858
        %v3895 = vpack.c.bf16 %v3859, %v3859
        %v3896 = vpack.c.bf16 %v3860, %v3860
        %v3897 = vpack.c.bf16 %v3861, %v3861
        %v3898 = vpack.c.bf16 %v3862, %v3862
        %v3899 = vpack.c.bf16 %v3863, %v3863
        %v3900 = vpack.c.bf16 %v3864, %v3864
        %v3901 = vpack.c.bf16 %v3865, %v3865
        %v3902 = vpack.c.bf16 %v3866, %v3866
        %v3903 = vpack.c.bf16 %v3867, %v3867
        %v3904 = vpack.c.bf16 %v3868, %v3868
        %v3905 = vpack.c.bf16 %v3869, %v3869
        %v3906 = vpack.c.bf16 %v3870, %v3870
        %v3907 = vpack.c.bf16 %v3871, %v3871
        %v3908 = vpack.c.bf16 %v3872, %v3872
        %3909 = vst [vmem:[#allocation3 + $0x4] sm:$0xf] %v3873
        %3910 = vst [vmem:[#allocation3 + $0x10] sm:$0xf] %v3874
        %3911 = vst [vmem:[#allocation3 + $0x1c] sm:$0xf] %v3875
        %3912 = vst [vmem:[#allocation3 + $0x28] sm:$0xf] %v3876
        %3913 = vst [vmem:[#allocation3 + $0x34] sm:$0xf] %v3877
        %3914 = vst [vmem:[#allocation3 + $0x40] sm:$0xf] %v3878
        %3915 = vst [vmem:[#allocation3 + $0x4c] sm:$0xf] %v3879
        %3916 = vst [vmem:[#allocation3 + $0x58] sm:$0xf] %v3880
        %3917 = vst [vmem:[#allocation3 + $0x64] sm:$0xf] %v3881
        %3918 = vst [vmem:[#allocation3 + $0x70] sm:$0xf] %v3882
        %3919 = vst [vmem:[#allocation3 + $0x7c] sm:$0xf] %v3883
        %3920 = vst [vmem:[#allocation3 + $0x88] sm:$0xf] %v3884
        %3921 = vst [vmem:[#allocation3 + $0x94] sm:$0xf] %v3885
        %3922 = vst [vmem:[#allocation3 + $0xa0] sm:$0xf] %v3886
        %3923 = vst [vmem:[#allocation3 + $0xac] sm:$0xf] %v3887
        %3924 = vst [vmem:[#allocation3 + $0xb8] sm:$0xf] %v3888
        %3925 = vst [vmem:[#allocation3 + $0xc4] sm:$0xf] %v3889
        %3926 = vst [vmem:[#allocation3 + $0xd0] sm:$0xf] %v3890
        %3927 = vst [vmem:[#allocation3 + $0xdc] sm:$0xf] %v3891
        %3928 = vst [vmem:[#allocation3 + $0xe8] sm:$0xf] %v3892
        %3929 = vst [vmem:[#allocation3 + $0xf4] sm:$0xf] %v3893
        %3930 = vst [vmem:[#allocation3 + $0x100] sm:$0xf] %v3894
        %3931 = vst [vmem:[#allocation3 + $0x10c] sm:$0xf] %v3895
        %3932 = vst [vmem:[#allocation3 + $0x118] sm:$0xf] %v3896
        %3933 = vst [vmem:[#allocation3 + $0x124] sm:$0xf] %v3897
        %3934 = vst [vmem:[#allocation3 + $0x130] sm:$0xf] %v3898
        %3935 = vst [vmem:[#allocation3 + $0x13c] sm:$0xf] %v3899
        %3936 = vst [vmem:[#allocation3 + $0x148] sm:$0xf] %v3900
        %3937 = vst [vmem:[#allocation3 + $0x154] sm:$0xf] %v3901
        %3938 = vst [vmem:[#allocation3 + $0x160] sm:$0xf] %v3902
        %3939 = vst [vmem:[#allocation3 + $0x16c] sm:$0xf] %v3903
        %3940 = vst [vmem:[#allocation3 + $0x178] sm:$0xf] %v3904
        %3941 = vst [vmem:[#allocation3 + $0x184] sm:$0xf] %v3905
        %3942 = vst [vmem:[#allocation3 + $0x190] sm:$0xf] %v3906
        %3943 = vst [vmem:[#allocation3 + $0x19c] sm:$0xf] %v3907
        %3944 = vst [vmem:[#allocation3 + $0x1a8] sm:$0xf] %v3908
        %v3945 = vld [vmem:[#allocation2 + $0x2] sm:$0xff]
        %v3946 = vld [vmem:[#allocation2 + $0xa] sm:$0xff]
        %v3947 = vld [vmem:[#allocation2 + $0x1a] sm:$0xff]
        %v3948 = vld [vmem:[#allocation2 + $0x22] sm:$0xff]
        %v3949 = vld [vmem:[#allocation2 + $0x32] sm:$0xff]
        %v3950 = vld [vmem:[#allocation2 + $0x3a] sm:$0xff]
        %v3951 = vld [vmem:[#allocation2 + $0x4a] sm:$0xff]
        %v3952 = vld [vmem:[#allocation2 + $0x52] sm:$0xff]
        %v3953 = vld [vmem:[#allocation2 + $0x62] sm:$0xff]
        %v3954 = vld [vmem:[#allocation2 + $0x6a] sm:$0xff]
        %v3955 = vld [vmem:[#allocation2 + $0x7a] sm:$0xff]
        %v3956 = vld [vmem:[#allocation2 + $0x82] sm:$0xff]
        %v3957 = vld [vmem:[#allocation2 + $0x92] sm:$0xff]
        %v3958 = vld [vmem:[#allocation2 + $0x9a] sm:$0xff]
        %v3959 = vld [vmem:[#allocation2 + $0xaa] sm:$0xff]
        %v3960 = vld [vmem:[#allocation2 + $0xb2] sm:$0xff]
        %v3961 = vld [vmem:[#allocation2 + $0xc2] sm:$0xff]
        %v3962 = vld [vmem:[#allocation2 + $0xca] sm:$0xff]
        %v3963 = vld [vmem:[#allocation2 + $0xda] sm:$0xff]
        %v3964 = vld [vmem:[#allocation2 + $0xe2] sm:$0xff]
        %v3965 = vld [vmem:[#allocation2 + $0xf2] sm:$0xff]
        %v3966 = vld [vmem:[#allocation2 + $0xfa] sm:$0xff]
        %v3967 = vld [vmem:[#allocation2 + $0x10a] sm:$0xff]
        %v3968 = vld [vmem:[#allocation2 + $0x112] sm:$0xff]
        %v3969 = vld [vmem:[#allocation2 + $0x122] sm:$0xff]
        %v3970 = vld [vmem:[#allocation2 + $0x12a] sm:$0xff]
        %v3971 = vld [vmem:[#allocation2 + $0x13a] sm:$0xff]
        %v3972 = vld [vmem:[#allocation2 + $0x142] sm:$0xff]
        %v3973 = vld [vmem:[#allocation2 + $0x152] sm:$0xff]
        %v3974 = vld [vmem:[#allocation2 + $0x15a] sm:$0xff]
        %v3975 = vld [vmem:[#allocation2 + $0x16a] sm:$0xff]
        %v3976 = vld [vmem:[#allocation2 + $0x172] sm:$0xff]
        %v3977 = vld [vmem:[#allocation2 + $0x182] sm:$0xff]
        %v3978 = vld [vmem:[#allocation2 + $0x18a] sm:$0xff]
        %v3979 = vld [vmem:[#allocation2 + $0x19a] sm:$0xff]
        %v3980 = vld [vmem:[#allocation2 + $0x1a2] sm:$0xff]
        %v3981 = vpack.c.bf16 %v3945, %v3945
        %v3982 = vpack.c.bf16 %v3946, %v3946
        %v3983 = vpack.c.bf16 %v3947, %v3947
        %v3984 = vpack.c.bf16 %v3948, %v3948
        %v3985 = vpack.c.bf16 %v3949, %v3949
        %v3986 = vpack.c.bf16 %v3950, %v3950
        %v3987 = vpack.c.bf16 %v3951, %v3951
        %v3988 = vpack.c.bf16 %v3952, %v3952
        %v3989 = vpack.c.bf16 %v3953, %v3953
        %v3990 = vpack.c.bf16 %v3954, %v3954
        %v3991 = vpack.c.bf16 %v3955, %v3955
        %v3992 = vpack.c.bf16 %v3956, %v3956
        %v3993 = vpack.c.bf16 %v3957, %v3957
        %v3994 = vpack.c.bf16 %v3958, %v3958
        %v3995 = vpack.c.bf16 %v3959, %v3959
        %v3996 = vpack.c.bf16 %v3960, %v3960
        %v3997 = vpack.c.bf16 %v3961, %v3961
        %v3998 = vpack.c.bf16 %v3962, %v3962
        %v3999 = vpack.c.bf16 %v3963, %v3963
        %v4000 = vpack.c.bf16 %v3964, %v3964
        %v4001 = vpack.c.bf16 %v3965, %v3965
        %v4002 = vpack.c.bf16 %v3966, %v3966
        %v4003 = vpack.c.bf16 %v3967, %v3967
        %v4004 = vpack.c.bf16 %v3968, %v3968
        %v4005 = vpack.c.bf16 %v3969, %v3969
        %v4006 = vpack.c.bf16 %v3970, %v3970
        %v4007 = vpack.c.bf16 %v3971, %v3971
        %v4008 = vpack.c.bf16 %v3972, %v3972
        %v4009 = vpack.c.bf16 %v3973, %v3973
        %v4010 = vpack.c.bf16 %v3974, %v3974
        %v4011 = vpack.c.bf16 %v3975, %v3975
        %v4012 = vpack.c.bf16 %v3976, %v3976
        %v4013 = vpack.c.bf16 %v3977, %v3977
        %v4014 = vpack.c.bf16 %v3978, %v3978
        %v4015 = vpack.c.bf16 %v3979, %v3979
        %v4016 = vpack.c.bf16 %v3980, %v3980
        %4017 = vst [vmem:[#allocation3 + $0x8] sm:$0xf] %v3981
        %4018 = vst [vmem:[#allocation3 + $0x14] sm:$0xf] %v3982
        %4019 = vst [vmem:[#allocation3 + $0x20] sm:$0xf] %v3983
        %4020 = vst [vmem:[#allocation3 + $0x2c] sm:$0xf] %v3984
        %4021 = vst [vmem:[#allocation3 + $0x38] sm:$0xf] %v3985
        %4022 = vst [vmem:[#allocation3 + $0x44] sm:$0xf] %v3986
        %4023 = vst [vmem:[#allocation3 + $0x50] sm:$0xf] %v3987
        %4024 = vst [vmem:[#allocation3 + $0x5c] sm:$0xf] %v3988
        %4025 = vst [vmem:[#allocation3 + $0x68] sm:$0xf] %v3989
        %4026 = vst [vmem:[#allocation3 + $0x74] sm:$0xf] %v3990
        %4027 = vst [vmem:[#allocation3 + $0x80] sm:$0xf] %v3991
        %4028 = vst [vmem:[#allocation3 + $0x8c] sm:$0xf] %v3992
        %4029 = vst [vmem:[#allocation3 + $0x98] sm:$0xf] %v3993
        %4030 = vst [vmem:[#allocation3 + $0xa4] sm:$0xf] %v3994
        %4031 = vst [vmem:[#allocation3 + $0xb0] sm:$0xf] %v3995
        %4032 = vst [vmem:[#allocation3 + $0xbc] sm:$0xf] %v3996
        %4033 = vst [vmem:[#allocation3 + $0xc8] sm:$0xf] %v3997
        %4034 = vst [vmem:[#allocation3 + $0xd4] sm:$0xf] %v3998
        %4035 = vst [vmem:[#allocation3 + $0xe0] sm:$0xf] %v3999
        %4036 = vst [vmem:[#allocation3 + $0xec] sm:$0xf] %v4000
        %4037 = vst [vmem:[#allocation3 + $0xf8] sm:$0xf] %v4001
        %4038 = vst [vmem:[#allocation3 + $0x104] sm:$0xf] %v4002
        %4039 = vst [vmem:[#allocation3 + $0x110] sm:$0xf] %v4003
        %4040 = vst [vmem:[#allocation3 + $0x11c] sm:$0xf] %v4004
        %4041 = vst [vmem:[#allocation3 + $0x128] sm:$0xf] %v4005
        %4042 = vst [vmem:[#allocation3 + $0x134] sm:$0xf] %v4006
        %4043 = vst [vmem:[#allocation3 + $0x140] sm:$0xf] %v4007
        %4044 = vst [vmem:[#allocation3 + $0x14c] sm:$0xf] %v4008
        %4045 = vst [vmem:[#allocation3 + $0x158] sm:$0xf] %v4009
        %4046 = vst [vmem:[#allocation3 + $0x164] sm:$0xf] %v4010
        %4047 = vst [vmem:[#allocation3 + $0x170] sm:$0xf] %v4011
        %4048 = vst [vmem:[#allocation3 + $0x17c] sm:$0xf] %v4012
        %4049 = vst [vmem:[#allocation3 + $0x188] sm:$0xf] %v4013
        %4050 = vst [vmem:[#allocation3 + $0x194] sm:$0xf] %v4014
        %4051 = vst [vmem:[#allocation3 + $0x1a0] sm:$0xf] %v4015
        %4052 = vst [vmem:[#allocation3 + $0x1ac] sm:$0xf] %v4016
        %v4053 = vld [vmem:[#allocation3] sm:$0xff]
        %v4054 = vld [vmem:[#allocation3 + $0x8] sm:$0xf]
        %v4055 = vld [vmem:[#allocation3 + $0xc] sm:$0xff]
        %v4056 = vld [vmem:[#allocation3 + $0x14] sm:$0xf]
        %v4057 = vld [vmem:[#allocation3 + $0x18] sm:$0xff]
        %v4058 = vld [vmem:[#allocation3 + $0x20] sm:$0xf]
        %v4059 = vld [vmem:[#allocation3 + $0x24] sm:$0xff]
        %v4060 = vld [vmem:[#allocation3 + $0x2c] sm:$0xf]
        %v4061 = vld [vmem:[#allocation3 + $0x30] sm:$0xff]
        %v4062 = vld [vmem:[#allocation3 + $0x38] sm:$0xf]
        %v4063 = vld [vmem:[#allocation3 + $0x3c] sm:$0xff]
        %v4064 = vld [vmem:[#allocation3 + $0x44] sm:$0xf]
        %v4065 = vld [vmem:[#allocation3 + $0x48] sm:$0xff]
        %v4066 = vld [vmem:[#allocation3 + $0x50] sm:$0xf]
        %v4067 = vld [vmem:[#allocation3 + $0x54] sm:$0xff]
        %v4068 = vld [vmem:[#allocation3 + $0x5c] sm:$0xf]
        %v4069 = vld [vmem:[#allocation3 + $0x60] sm:$0xff]
        %v4070 = vld [vmem:[#allocation3 + $0x68] sm:$0xf]
        %v4071 = vld [vmem:[#allocation3 + $0x6c] sm:$0xff]
        %v4072 = vld [vmem:[#allocation3 + $0x74] sm:$0xf]
        %v4073 = vld [vmem:[#allocation3 + $0x78] sm:$0xff]
        %v4074 = vld [vmem:[#allocation3 + $0x80] sm:$0xf]
        %v4075 = vld [vmem:[#allocation3 + $0x84] sm:$0xff]
        %v4076 = vld [vmem:[#allocation3 + $0x8c] sm:$0xf]
        %v4077 = vld [vmem:[#allocation3 + $0x90] sm:$0xff]
        %v4078 = vld [vmem:[#allocation3 + $0x98] sm:$0xf]
        %v4079 = vld [vmem:[#allocation3 + $0x9c] sm:$0xff]
        %v4080 = vld [vmem:[#allocation3 + $0xa4] sm:$0xf]
        %v4081 = vld [vmem:[#allocation3 + $0xa8] sm:$0xff]
        %v4082 = vld [vmem:[#allocation3 + $0xb0] sm:$0xf]
        %v4083 = vld [vmem:[#allocation3 + $0xb4] sm:$0xff]
        %v4084 = vld [vmem:[#allocation3 + $0xbc] sm:$0xf]
        %v4085 = vld [vmem:[#allocation3 + $0xc0] sm:$0xff]
        %v4086 = vld [vmem:[#allocation3 + $0xc8] sm:$0xf]
        %v4087 = vld [vmem:[#allocation3 + $0xcc] sm:$0xff]
        %v4088 = vld [vmem:[#allocation3 + $0xd4] sm:$0xf]
        %v4089 = vld [vmem:[#allocation3 + $0xd8] sm:$0xff]
        %v4090 = vld [vmem:[#allocation3 + $0xe0] sm:$0xf]
        %v4091 = vld [vmem:[#allocation3 + $0xe4] sm:$0xff]
        %v4092 = vld [vmem:[#allocation3 + $0xec] sm:$0xf]
        %v4093 = vld [vmem:[#allocation3 + $0xf0] sm:$0xff]
        %v4094 = vld [vmem:[#allocation3 + $0xf8] sm:$0xf]
        %v4095 = vld [vmem:[#allocation3 + $0xfc] sm:$0xff]
        %v4096 = vld [vmem:[#allocation3 + $0x104] sm:$0xf]
        %v4097 = vld [vmem:[#allocation3 + $0x108] sm:$0xff]
        %v4098 = vld [vmem:[#allocation3 + $0x110] sm:$0xf]
        %v4099 = vld [vmem:[#allocation3 + $0x114] sm:$0xff]
        %v4100 = vld [vmem:[#allocation3 + $0x11c] sm:$0xf]
        %v4101 = vld [vmem:[#allocation3 + $0x120] sm:$0xff]
        %v4102 = vld [vmem:[#allocation3 + $0x128] sm:$0xf]
        %v4103 = vld [vmem:[#allocation3 + $0x12c] sm:$0xff]
        %v4104 = vld [vmem:[#allocation3 + $0x134] sm:$0xf]
        %v4105 = vld [vmem:[#allocation3 + $0x138] sm:$0xff]
        %v4106 = vld [vmem:[#allocation3 + $0x140] sm:$0xf]
        %v4107 = vld [vmem:[#allocation3 + $0x144] sm:$0xff]
        %v4108 = vld [vmem:[#allocation3 + $0x14c] sm:$0xf]
        %v4109 = vld [vmem:[#allocation3 + $0x150] sm:$0xff]
        %v4110 = vld [vmem:[#allocation3 + $0x158] sm:$0xf]
        %v4111 = vld [vmem:[#allocation3 + $0x15c] sm:$0xff]
        %v4112 = vld [vmem:[#allocation3 + $0x164] sm:$0xf]
        %v4113 = vld [vmem:[#allocation3 + $0x168] sm:$0xff]
        %v4114 = vld [vmem:[#allocation3 + $0x170] sm:$0xf]
        %v4115 = vld [vmem:[#allocation3 + $0x174] sm:$0xff]
        %v4116 = vld [vmem:[#allocation3 + $0x17c] sm:$0xf]
        %v4117 = vld [vmem:[#allocation10] sm:$0xf]
        %v4118 = vld [vmem:[#allocation10 + $0x4] sm:$0xf]
        %v4119 = vld [vmem:[#allocation10 + $0x8] sm:$0xf]
        %v4120 = vld [vmem:[#allocation10 + $0xc] sm:$0xf]
        %v4121 = vld [vmem:[#allocation10 + $0x10] sm:$0xf]
        %v4122 = vld [vmem:[#allocation10 + $0x14] sm:$0xf]
        %v4123 = vld [vmem:[#allocation10 + $0x18] sm:$0xf]
        %v4124 = vld [vmem:[#allocation10 + $0x1c] sm:$0xf]
        %v4125 = vld [vmem:[#allocation10 + $0x20] sm:$0xf]
        %v4126 = vld [vmem:[#allocation10 + $0x24] sm:$0xf]
        %v4127 = vld [vmem:[#allocation10 + $0x28] sm:$0xf]
        %v4128 = vld [vmem:[#allocation10 + $0x2c] sm:$0xf]
        %v4129 = vld [vmem:[#allocation10 + $0x30] sm:$0xf]
        %v4130 = vld [vmem:[#allocation10 + $0x34] sm:$0xf]
        %v4131 = vld [vmem:[#allocation10 + $0x38] sm:$0xf]
        %v4132 = vld [vmem:[#allocation10 + $0x3c] sm:$0xf]
        %v4133 = vld [vmem:[#allocation10 + $0x40] sm:$0xf]
        %v4134 = vld [vmem:[#allocation10 + $0x44] sm:$0xf]
        %v4135 = vld [vmem:[#allocation10 + $0x48] sm:$0xf]
        %v4136 = vld [vmem:[#allocation10 + $0x4c] sm:$0xf]
        %v4137 = vld [vmem:[#allocation10 + $0x50] sm:$0xf]
        %v4138 = vld [vmem:[#allocation10 + $0x54] sm:$0xf]
        %v4139 = vld [vmem:[#allocation10 + $0x58] sm:$0xf]
        %v4140 = vld [vmem:[#allocation10 + $0x5c] sm:$0xf]
        %v4141 = vld [vmem:[#allocation10 + $0x60] sm:$0xf]
        %v4142 = vld [vmem:[#allocation10 + $0x64] sm:$0xf]
        %v4143 = vld [vmem:[#allocation10 + $0x68] sm:$0xf]
        %v4144 = vld [vmem:[#allocation10 + $0x6c] sm:$0xf]
        %v4145 = vld [vmem:[#allocation10 + $0x70] sm:$0xf]
        %v4146 = vld [vmem:[#allocation10 + $0x74] sm:$0xf]
        %v4147 = vld [vmem:[#allocation10 + $0x78] sm:$0xf]
        %v4148 = vld [vmem:[#allocation10 + $0x7c] sm:$0xf]
        %v4149 = vld [vmem:[#allocation10 + $0x80] sm:$0xf]
        %v4150 = vld [vmem:[#allocation10 + $0x84] sm:$0xf]
        %v4151 = vld [vmem:[#allocation10 + $0x88] sm:$0xf]
        %v4152 = vld [vmem:[#allocation10 + $0x8c] sm:$0xf]
        %v4153 = vld [vmem:[#allocation10 + $0x90] sm:$0xf]
        %v4154 = vld [vmem:[#allocation10 + $0x94] sm:$0xf]
        %v4155 = vld [vmem:[#allocation10 + $0x98] sm:$0xf]
        %v4156 = vld [vmem:[#allocation10 + $0x9c] sm:$0xf]
        %v4157 = vld [vmem:[#allocation10 + $0xa0] sm:$0xf]
        %v4158 = vld [vmem:[#allocation10 + $0xa4] sm:$0xf]
        %v4159 = vld [vmem:[#allocation10 + $0xa8] sm:$0xf]
        %v4160 = vld [vmem:[#allocation10 + $0xac] sm:$0xf]
        %v4161 = vld [vmem:[#allocation10 + $0xb0] sm:$0xf]
        %v4162 = vld [vmem:[#allocation10 + $0xb4] sm:$0xf]
        %v4163 = vld [vmem:[#allocation10 + $0xb8] sm:$0xf]
        %v4164 = vld [vmem:[#allocation10 + $0xbc] sm:$0xf]
        %v4229 = vunpack.c.l.b16 %v4053
        %v4230 = vunpack.c.h.b16 %v4053
        %v4231 = vunpack.c.l.b16 %v4054
        %v4232 = vunpack.c.l.b16 %v4055
        %v4233 = vunpack.c.h.b16 %v4055
        %v4234 = vunpack.c.l.b16 %v4056
        %v4235 = vunpack.c.l.b16 %v4057
        %v4236 = vunpack.c.h.b16 %v4057
        %v4237 = vunpack.c.l.b16 %v4058
        %v4238 = vunpack.c.l.b16 %v4059
        %v4239 = vunpack.c.h.b16 %v4059
        %v4240 = vunpack.c.l.b16 %v4060
        %v4241 = vunpack.c.l.b16 %v4061
        %v4242 = vunpack.c.h.b16 %v4061
        %v4243 = vunpack.c.l.b16 %v4062
        %v4244 = vunpack.c.l.b16 %v4063
        %v4245 = vunpack.c.h.b16 %v4063
        %v4246 = vunpack.c.l.b16 %v4064
        %v4247 = vunpack.c.l.b16 %v4065
        %v4248 = vunpack.c.h.b16 %v4065
        %v4249 = vunpack.c.l.b16 %v4066
        %v4250 = vunpack.c.l.b16 %v4067
        %v4251 = vunpack.c.h.b16 %v4067
        %v4252 = vunpack.c.l.b16 %v4068
        %v4253 = vunpack.c.l.b16 %v4069
        %v4254 = vunpack.c.h.b16 %v4069
        %v4255 = vunpack.c.l.b16 %v4070
        %v4256 = vunpack.c.l.b16 %v4071
        %v4257 = vunpack.c.h.b16 %v4071
        %v4258 = vunpack.c.l.b16 %v4072
        %v4259 = vunpack.c.l.b16 %v4073
        %v4260 = vunpack.c.h.b16 %v4073
        %v4261 = vunpack.c.l.b16 %v4074
        %v4262 = vunpack.c.l.b16 %v4075
        %v4263 = vunpack.c.h.b16 %v4075
        %v4264 = vunpack.c.l.b16 %v4076
        %v4265 = vunpack.c.l.b16 %v4077
        %v4266 = vunpack.c.h.b16 %v4077
        %v4267 = vunpack.c.l.b16 %v4078
        %v4268 = vunpack.c.l.b16 %v4079
        %v4269 = vunpack.c.h.b16 %v4079
        %v4270 = vunpack.c.l.b16 %v4080
        %v4271 = vunpack.c.l.b16 %v4081
        %v4272 = vunpack.c.h.b16 %v4081
        %v4273 = vunpack.c.l.b16 %v4082
        %v4274 = vunpack.c.l.b16 %v4083
        %v4275 = vunpack.c.h.b16 %v4083
        %v4276 = vunpack.c.l.b16 %v4084
        %v4277 = vunpack.c.l.b16 %v4085
        %v4278 = vunpack.c.h.b16 %v4085
        %v4279 = vunpack.c.l.b16 %v4086
        %v4280 = vunpack.c.l.b16 %v4087
        %v4281 = vunpack.c.h.b16 %v4087
        %v4282 = vunpack.c.l.b16 %v4088
        %v4283 = vunpack.c.l.b16 %v4089
        %v4284 = vunpack.c.h.b16 %v4089
        %v4285 = vunpack.c.l.b16 %v4090
        %v4286 = vunpack.c.l.b16 %v4091
        %v4287 = vunpack.c.h.b16 %v4091
        %v4288 = vunpack.c.l.b16 %v4092
        %v4289 = vunpack.c.l.b16 %v4093
        %v4290 = vunpack.c.h.b16 %v4093
        %v4291 = vunpack.c.l.b16 %v4094
        %v4292 = vunpack.c.l.b16 %v4095
        %v4293 = vunpack.c.h.b16 %v4095
        %v4294 = vunpack.c.l.b16 %v4096
        %v4295 = vunpack.c.l.b16 %v4097
        %v4296 = vunpack.c.h.b16 %v4097
        %v4297 = vunpack.c.l.b16 %v4098
        %v4298 = vunpack.c.l.b16 %v4099
        %v4299 = vunpack.c.h.b16 %v4099
        %v4300 = vunpack.c.l.b16 %v4100
        %v4301 = vunpack.c.l.b16 %v4101
        %v4302 = vunpack.c.h.b16 %v4101
        %v4303 = vunpack.c.l.b16 %v4102
        %v4304 = vunpack.c.l.b16 %v4103
        %v4305 = vunpack.c.h.b16 %v4103
        %v4306 = vunpack.c.l.b16 %v4104
        %v4307 = vunpack.c.l.b16 %v4105
        %v4308 = vunpack.c.h.b16 %v4105
        %v4309 = vunpack.c.l.b16 %v4106
        %v4310 = vunpack.c.l.b16 %v4107
        %v4311 = vunpack.c.h.b16 %v4107
        %v4312 = vunpack.c.l.b16 %v4108
        %v4313 = vunpack.c.l.b16 %v4109
        %v4314 = vunpack.c.h.b16 %v4109
        %v4315 = vunpack.c.l.b16 %v4110
        %v4316 = vunpack.c.l.b16 %v4111
        %v4317 = vunpack.c.h.b16 %v4111
        %v4318 = vunpack.c.l.b16 %v4112
        %v4319 = vunpack.c.l.b16 %v4113
        %v4320 = vunpack.c.h.b16 %v4113
        %v4321 = vunpack.c.l.b16 %v4114
        %v4322 = vunpack.c.l.b16 %v4115
        %v4323 = vunpack.c.h.b16 %v4115
        %v4324 = vunpack.c.l.b16 %v4116
        %v4325 = vpack.c.b16 %v4232, %v4229
        %v4326 = vpack.c.b16 %v4233, %v4230
        %v4327 = vpack.c.b16 %v4234, %v4231
        %v4328 = vpack.c.b16 %v4238, %v4235
        %v4329 = vpack.c.b16 %v4239, %v4236
        %v4330 = vpack.c.b16 %v4240, %v4237
        %v4331 = vpack.c.b16 %v4244, %v4241
        %v4332 = vpack.c.b16 %v4245, %v4242
        %v4333 = vpack.c.b16 %v4246, %v4243
        %v4334 = vpack.c.b16 %v4250, %v4247
        %v4335 = vpack.c.b16 %v4251, %v4248
        %v4336 = vpack.c.b16 %v4252, %v4249
        %v4337 = vpack.c.b16 %v4256, %v4253
        %v4338 = vpack.c.b16 %v4257, %v4254
        %v4339 = vpack.c.b16 %v4258, %v4255
        %v4340 = vpack.c.b16 %v4262, %v4259
        %v4341 = vpack.c.b16 %v4263, %v4260
        %v4342 = vpack.c.b16 %v4264, %v4261
        %v4343 = vpack.c.b16 %v4268, %v4265
        %v4344 = vpack.c.b16 %v4269, %v4266
        %v4345 = vpack.c.b16 %v4270, %v4267
        %v4346 = vpack.c.b16 %v4274, %v4271
        %v4347 = vpack.c.b16 %v4275, %v4272
        %v4348 = vpack.c.b16 %v4276, %v4273
        %v4349 = vpack.c.b16 %v4280, %v4277
        %v4350 = vpack.c.b16 %v4281, %v4278
        %v4351 = vpack.c.b16 %v4282, %v4279
        %v4352 = vpack.c.b16 %v4286, %v4283
        %v4353 = vpack.c.b16 %v4287, %v4284
        %v4354 = vpack.c.b16 %v4288, %v4285
        %v4355 = vpack.c.b16 %v4292, %v4289
        %v4356 = vpack.c.b16 %v4293, %v4290
        %v4357 = vpack.c.b16 %v4294, %v4291
        %v4358 = vpack.c.b16 %v4298, %v4295
        %v4359 = vpack.c.b16 %v4299, %v4296
        %v4360 = vpack.c.b16 %v4300, %v4297
        %v4361 = vpack.c.b16 %v4304, %v4301
        %v4362 = vpack.c.b16 %v4305, %v4302
        %v4363 = vpack.c.b16 %v4306, %v4303
        %v4364 = vpack.c.b16 %v4310, %v4307
        %v4365 = vpack.c.b16 %v4311, %v4308
        %v4366 = vpack.c.b16 %v4312, %v4309
        %v4367 = vpack.c.b16 %v4316, %v4313
        %v4368 = vpack.c.b16 %v4317, %v4314
        %v4369 = vpack.c.b16 %v4318, %v4315
        %v4370 = vpack.c.b16 %v4322, %v4319
        %v4371 = vpack.c.b16 %v4323, %v4320
        %v4372 = vpack.c.b16 %v4324, %v4321
        %v4469 = vunpack.c.l.b16 %v4117
        %v4470 = vunpack.c.l.b16 %v4118
        %v4471 = vunpack.c.l.b16 %v4119
        %v4472 = vunpack.c.l.b16 %v4120
        %v4473 = vunpack.c.l.b16 %v4121
        %v4474 = vunpack.c.l.b16 %v4122
        %v4475 = vunpack.c.l.b16 %v4123
        %v4476 = vunpack.c.l.b16 %v4124
        %v4477 = vunpack.c.l.b16 %v4125
        %v4478 = vunpack.c.l.b16 %v4126
        %v4479 = vunpack.c.l.b16 %v4127
        %v4480 = vunpack.c.l.b16 %v4128
        %v4481 = vunpack.c.l.b16 %v4129
        %v4482 = vunpack.c.l.b16 %v4130
        %v4483 = vunpack.c.l.b16 %v4131
        %v4484 = vunpack.c.l.b16 %v4132
        %v4485 = vunpack.c.l.b16 %v4133
        %v4486 = vunpack.c.l.b16 %v4134
        %v4487 = vunpack.c.l.b16 %v4135
        %v4488 = vunpack.c.l.b16 %v4136
        %v4489 = vunpack.c.l.b16 %v4137
        %v4490 = vunpack.c.l.b16 %v4138
        %v4491 = vunpack.c.l.b16 %v4139
        %v4492 = vunpack.c.l.b16 %v4140
        %v4493 = vunpack.c.l.b16 %v4141
        %v4494 = vunpack.c.l.b16 %v4142
        %v4495 = vunpack.c.l.b16 %v4143
        %v4496 = vunpack.c.l.b16 %v4144
        %v4497 = vunpack.c.l.b16 %v4145
        %v4498 = vunpack.c.l.b16 %v4146
        %v4499 = vunpack.c.l.b16 %v4147
        %v4500 = vunpack.c.l.b16 %v4148
        %v4501 = vunpack.c.l.b16 %v4149
        %v4502 = vunpack.c.l.b16 %v4150
        %v4503 = vunpack.c.l.b16 %v4151
        %v4504 = vunpack.c.l.b16 %v4152
        %v4505 = vunpack.c.l.b16 %v4153
        %v4506 = vunpack.c.l.b16 %v4154
        %v4507 = vunpack.c.l.b16 %v4155
        %v4508 = vunpack.c.l.b16 %v4156
        %v4509 = vunpack.c.l.b16 %v4157
        %v4510 = vunpack.c.l.b16 %v4158
        %v4511 = vunpack.c.l.b16 %v4159
        %v4512 = vunpack.c.l.b16 %v4160
        %v4513 = vunpack.c.l.b16 %v4161
        %v4514 = vunpack.c.l.b16 %v4162
        %v4515 = vunpack.c.l.b16 %v4163
        %v4516 = vunpack.c.l.b16 %v4164
        %v4517 = vpack.c.b16 %v4470, %v4469
        %v4518 = vpack.c.b16 %v4472, %v4471
        %v4519 = vpack.c.b16 %v4474, %v4473
        %v4520 = vpack.c.b16 %v4476, %v4475
        %v4521 = vpack.c.b16 %v4478, %v4477
        %v4522 = vpack.c.b16 %v4480, %v4479
        %v4523 = vpack.c.b16 %v4482, %v4481
        %v4524 = vpack.c.b16 %v4484, %v4483
        %v4525 = vpack.c.b16 %v4486, %v4485
        %v4526 = vpack.c.b16 %v4488, %v4487
        %v4527 = vpack.c.b16 %v4490, %v4489
        %v4528 = vpack.c.b16 %v4492, %v4491
        %v4529 = vpack.c.b16 %v4494, %v4493
        %v4530 = vpack.c.b16 %v4496, %v4495
        %v4531 = vpack.c.b16 %v4498, %v4497
        %v4532 = vpack.c.b16 %v4500, %v4499
        %v4533 = vpack.c.b16 %v4502, %v4501
        %v4534 = vpack.c.b16 %v4504, %v4503
        %v4535 = vpack.c.b16 %v4506, %v4505
        %v4536 = vpack.c.b16 %v4508, %v4507
        %v4537 = vpack.c.b16 %v4510, %v4509
        %v4538 = vpack.c.b16 %v4512, %v4511
        %v4539 = vpack.c.b16 %v4514, %v4513
        %v4540 = vpack.c.b16 %v4516, %v4515
        %4565 = vmatpush.bf16.msra.mxu0 %v4524
        %4566 = vmatpush.bf16.msra.mxu0 %v4523
        %4567 = vmatpush.bf16.msra.mxu0 %v4522
        %4568 = vmatpush.bf16.msra.mxu0 %v4521
        %4569 = vmatpush.bf16.msra.mxu0 %v4520
        %4570 = vmatpush.bf16.msra.mxu0 %v4519
        %4571 = vmatpush.bf16.msra.mxu0 %v4518
        %4572 = vmatpush.bf16.msra.mxu0 %v4517
        %4573 = vmatmul.bf16.gmra.mxu0 %v4325
        %v4574 = vpop.f32.mrf.mxu0
        %v4575 = vadd.f32 0.0, %v4574
        %v4576 = vpop.f32.mrf.mxu0
        %v4577 = vadd.f32 0.0, %v4576
        %4578 = vmatmul.bf16.gmra.mxu0 %v4328
        %v4579 = vpop.f32.mrf.mxu0
        %v4580 = vadd.f32 0.0, %v4579
        %v4581 = vpop.f32.mrf.mxu0
        %v4582 = vadd.f32 0.0, %v4581
        %4583 = vmatmul.bf16.gmra.mxu0 %v4331
        %v4584 = vpop.f32.mrf.mxu0
        %v4585 = vadd.f32 0.0, %v4584
        %v4586 = vpop.f32.mrf.mxu0
        %v4587 = vadd.f32 0.0, %v4586
        %4588 = vmatmul.bf16.gmra.mxu0 %v4334
        %v4589 = vpop.f32.mrf.mxu0
        %v4590 = vadd.f32 0.0, %v4589
        %v4591 = vpop.f32.mrf.mxu0
        %v4592 = vadd.f32 0.0, %v4591
        %4593 = vmatmul.bf16.gmra.mxu0 %v4337
        %v4594 = vpop.f32.mrf.mxu0
        %v4595 = vadd.f32 0.0, %v4594
        %v4596 = vpop.f32.mrf.mxu0
        %v4597 = vadd.f32 0.0, %v4596
        %4598 = vmatmul.bf16.gmra.mxu0 %v4340
        %v4599 = vpop.f32.mrf.mxu0
        %v4600 = vadd.f32 0.0, %v4599
        %v4601 = vpop.f32.mrf.mxu0
        %v4602 = vadd.f32 0.0, %v4601
        %4603 = vmatmul.bf16.gmra.mxu0 %v4343
        %v4604 = vpop.f32.mrf.mxu0
        %v4605 = vadd.f32 0.0, %v4604
        %v4606 = vpop.f32.mrf.mxu0
        %v4607 = vadd.f32 0.0, %v4606
        %4608 = vmatmul.bf16.gmra.mxu0 %v4346
        %v4609 = vpop.f32.mrf.mxu0
        %v4610 = vadd.f32 0.0, %v4609
        %v4611 = vpop.f32.mrf.mxu0
        %v4612 = vadd.f32 0.0, %v4611
        %4613 = vmatmul.bf16.gmra.mxu0 %v4349
        %v4614 = vpop.f32.mrf.mxu0
        %v4615 = vadd.f32 0.0, %v4614
        %v4616 = vpop.f32.mrf.mxu0
        %v4617 = vadd.f32 0.0, %v4616
        %4618 = vmatmul.bf16.gmra.mxu0 %v4352
        %v4619 = vpop.f32.mrf.mxu0
        %v4620 = vadd.f32 0.0, %v4619
        %v4621 = vpop.f32.mrf.mxu0
        %v4622 = vadd.f32 0.0, %v4621
        %4623 = vmatmul.bf16.gmra.mxu0 %v4355
        %v4624 = vpop.f32.mrf.mxu0
        %v4625 = vadd.f32 0.0, %v4624
        %v4626 = vpop.f32.mrf.mxu0
        %v4627 = vadd.f32 0.0, %v4626
        %4628 = vmatmul.bf16.gmra.mxu0 %v4358
        %v4629 = vpop.f32.mrf.mxu0
        %v4630 = vadd.f32 0.0, %v4629
        %v4631 = vpop.f32.mrf.mxu0
        %v4632 = vadd.f32 0.0, %v4631
        %4633 = vmatmul.bf16.gmra.mxu0 %v4361
        %v4634 = vpop.f32.mrf.mxu0
        %v4635 = vadd.f32 0.0, %v4634
        %v4636 = vpop.f32.mrf.mxu0
        %v4637 = vadd.f32 0.0, %v4636
        %4638 = vmatmul.bf16.gmra.mxu0 %v4364
        %v4639 = vpop.f32.mrf.mxu0
        %v4640 = vadd.f32 0.0, %v4639
        %v4641 = vpop.f32.mrf.mxu0
        %v4642 = vadd.f32 0.0, %v4641
        %4643 = vmatmul.bf16.gmra.mxu0 %v4367
        %v4644 = vpop.f32.mrf.mxu0
        %v4645 = vadd.f32 0.0, %v4644
        %v4646 = vpop.f32.mrf.mxu0
        %v4647 = vadd.f32 0.0, %v4646
        %4648 = vmatmul.bf16.gmra.mxu0 %v4370
        %v4649 = vpop.f32.mrf.mxu0
        %v4650 = vadd.f32 0.0, %v4649
        %v4651 = vpop.f32.mrf.mxu0
        %v4652 = vadd.f32 0.0, %v4651
        %4653 = vdwg.mxu0
        %4654 = vmatpush.bf16.msra.mxu0 %v4532
        %4655 = vmatpush.bf16.msra.mxu0 %v4531
        %4656 = vmatpush.bf16.msra.mxu0 %v4530
        %4657 = vmatpush.bf16.msra.mxu0 %v4529
        %4658 = vmatpush.bf16.msra.mxu0 %v4528
        %4659 = vmatpush.bf16.msra.mxu0 %v4527
        %4660 = vmatpush.bf16.msra.mxu0 %v4526
        %4661 = vmatpush.bf16.msra.mxu0 %v4525
        %4662 = vmatmul.bf16.gmra.mxu0 %v4326
        %v4663 = vpop.f32.mrf.mxu0
        %v4664 = vadd.f32 %v4575, %v4663
        %v4665 = vpop.f32.mrf.mxu0
        %v4666 = vadd.f32 %v4577, %v4665
        %4667 = vmatmul.bf16.gmra.mxu0 %v4329
        %v4668 = vpop.f32.mrf.mxu0
        %v4669 = vadd.f32 %v4580, %v4668
        %v4670 = vpop.f32.mrf.mxu0
        %v4671 = vadd.f32 %v4582, %v4670
        %4672 = vmatmul.bf16.gmra.mxu0 %v4332
        %v4673 = vpop.f32.mrf.mxu0
        %v4674 = vadd.f32 %v4585, %v4673
        %v4675 = vpop.f32.mrf.mxu0
        %v4676 = vadd.f32 %v4587, %v4675
        %4677 = vmatmul.bf16.gmra.mxu0 %v4335
        %v4678 = vpop.f32.mrf.mxu0
        %v4679 = vadd.f32 %v4590, %v4678
        %v4680 = vpop.f32.mrf.mxu0
        %v4681 = vadd.f32 %v4592, %v4680
        %4682 = vmatmul.bf16.gmra.mxu0 %v4338
        %v4683 = vpop.f32.mrf.mxu0
        %v4684 = vadd.f32 %v4595, %v4683
        %v4685 = vpop.f32.mrf.mxu0
        %v4686 = vadd.f32 %v4597, %v4685
        %4687 = vmatmul.bf16.gmra.mxu0 %v4341
        %v4688 = vpop.f32.mrf.mxu0
        %v4689 = vadd.f32 %v4600, %v4688
        %v4690 = vpop.f32.mrf.mxu0
        %v4691 = vadd.f32 %v4602, %v4690
        %4692 = vmatmul.bf16.gmra.mxu0 %v4344
        %v4693 = vpop.f32.mrf.mxu0
        %v4694 = vadd.f32 %v4605, %v4693
        %v4695 = vpop.f32.mrf.mxu0
        %v4696 = vadd.f32 %v4607, %v4695
        %4697 = vmatmul.bf16.gmra.mxu0 %v4347
        %v4698 = vpop.f32.mrf.mxu0
        %v4699 = vadd.f32 %v4610, %v4698
        %v4700 = vpop.f32.mrf.mxu0
        %v4701 = vadd.f32 %v4612, %v4700
        %4702 = vmatmul.bf16.gmra.mxu0 %v4350
        %v4703 = vpop.f32.mrf.mxu0
        %v4704 = vadd.f32 %v4615, %v4703
        %v4705 = vpop.f32.mrf.mxu0
        %v4706 = vadd.f32 %v4617, %v4705
        %4707 = vmatmul.bf16.gmra.mxu0 %v4353
        %v4708 = vpop.f32.mrf.mxu0
        %v4709 = vadd.f32 %v4620, %v4708
        %v4710 = vpop.f32.mrf.mxu0
        %v4711 = vadd.f32 %v4622, %v4710
        %4712 = vmatmul.bf16.gmra.mxu0 %v4356
        %v4713 = vpop.f32.mrf.mxu0
        %v4714 = vadd.f32 %v4625, %v4713
        %v4715 = vpop.f32.mrf.mxu0
        %v4716 = vadd.f32 %v4627, %v4715
        %4717 = vmatmul.bf16.gmra.mxu0 %v4359
        %v4718 = vpop.f32.mrf.mxu0
        %v4719 = vadd.f32 %v4630, %v4718
        %v4720 = vpop.f32.mrf.mxu0
        %v4721 = vadd.f32 %v4632, %v4720
        %4722 = vmatmul.bf16.gmra.mxu0 %v4362
        %v4723 = vpop.f32.mrf.mxu0
        %v4724 = vadd.f32 %v4635, %v4723
        %v4725 = vpop.f32.mrf.mxu0
        %v4726 = vadd.f32 %v4637, %v4725
        %4727 = vmatmul.bf16.gmra.mxu0 %v4365
        %v4728 = vpop.f32.mrf.mxu0
        %v4729 = vadd.f32 %v4640, %v4728
        %v4730 = vpop.f32.mrf.mxu0
        %v4731 = vadd.f32 %v4642, %v4730
        %4732 = vmatmul.bf16.gmra.mxu0 %v4368
        %v4733 = vpop.f32.mrf.mxu0
        %v4734 = vadd.f32 %v4645, %v4733
        %v4735 = vpop.f32.mrf.mxu0
        %v4736 = vadd.f32 %v4647, %v4735
        %4737 = vmatmul.bf16.gmra.mxu0 %v4371
        %v4738 = vpop.f32.mrf.mxu0
        %v4739 = vadd.f32 %v4650, %v4738
        %v4740 = vpop.f32.mrf.mxu0
        %v4741 = vadd.f32 %v4652, %v4740
        %4742 = vdwg.mxu0
        %4743 = vmatpush.bf16.msra.mxu0 %v4540
        %4744 = vmatpush.bf16.msra.mxu0 %v4539
        %4745 = vmatpush.bf16.msra.mxu0 %v4538
        %4746 = vmatpush.bf16.msra.mxu0 %v4537
        %4747 = vmatpush.bf16.msra.mxu0 %v4536
        %4748 = vmatpush.bf16.msra.mxu0 %v4535
        %4749 = vmatpush.bf16.msra.mxu0 %v4534
        %4750 = vmatpush.bf16.msra.mxu0 %v4533
        %4751 = vmatmul.bf16.gmra.mxu0 %v4327
        %v4752 = vpop.f32.mrf.mxu0
        %v4753 = vadd.f32 %v4664, %v4752
        %v4754 = vpop.f32.mrf.mxu0
        %v4755 = vadd.f32 %v4666, %v4754
        %4756 = vmatmul.bf16.gmra.mxu0 %v4330
        %v4757 = vpop.f32.mrf.mxu0
        %v4758 = vadd.f32 %v4669, %v4757
        %v4759 = vpop.f32.mrf.mxu0
        %v4760 = vadd.f32 %v4671, %v4759
        %4761 = vmatmul.bf16.gmra.mxu0 %v4333
        %v4762 = vpop.f32.mrf.mxu0
        %v4763 = vadd.f32 %v4674, %v4762
        %v4764 = vpop.f32.mrf.mxu0
        %v4765 = vadd.f32 %v4676, %v4764
        %4766 = vmatmul.bf16.gmra.mxu0 %v4336
        %v4767 = vpop.f32.mrf.mxu0
        %v4768 = vadd.f32 %v4679, %v4767
        %v4769 = vpop.f32.mrf.mxu0
        %v4770 = vadd.f32 %v4681, %v4769
        %4771 = vmatmul.bf16.gmra.mxu0 %v4339
        %v4772 = vpop.f32.mrf.mxu0
        %v4773 = vadd.f32 %v4684, %v4772
        %v4774 = vpop.f32.mrf.mxu0
        %v4775 = vadd.f32 %v4686, %v4774
        %4776 = vmatmul.bf16.gmra.mxu0 %v4342
        %v4777 = vpop.f32.mrf.mxu0
        %v4778 = vadd.f32 %v4689, %v4777
        %v4779 = vpop.f32.mrf.mxu0
        %v4780 = vadd.f32 %v4691, %v4779
        %4781 = vmatmul.bf16.gmra.mxu0 %v4345
        %v4782 = vpop.f32.mrf.mxu0
        %v4783 = vadd.f32 %v4694, %v4782
        %v4784 = vpop.f32.mrf.mxu0
        %v4785 = vadd.f32 %v4696, %v4784
        %4786 = vmatmul.bf16.gmra.mxu0 %v4348
        %v4787 = vpop.f32.mrf.mxu0
        %v4788 = vadd.f32 %v4699, %v4787
        %v4789 = vpop.f32.mrf.mxu0
        %v4790 = vadd.f32 %v4701, %v4789
        %4791 = vmatmul.bf16.gmra.mxu0 %v4351
        %v4792 = vpop.f32.mrf.mxu0
        %v4793 = vadd.f32 %v4704, %v4792
        %v4794 = vpop.f32.mrf.mxu0
        %v4795 = vadd.f32 %v4706, %v4794
        %4796 = vmatmul.bf16.gmra.mxu0 %v4354
        %v4797 = vpop.f32.mrf.mxu0
        %v4798 = vadd.f32 %v4709, %v4797
        %v4799 = vpop.f32.mrf.mxu0
        %v4800 = vadd.f32 %v4711, %v4799
        %4801 = vmatmul.bf16.gmra.mxu0 %v4357
        %v4802 = vpop.f32.mrf.mxu0
        %v4803 = vadd.f32 %v4714, %v4802
        %v4804 = vpop.f32.mrf.mxu0
        %v4805 = vadd.f32 %v4716, %v4804
        %4806 = vmatmul.bf16.gmra.mxu0 %v4360
        %v4807 = vpop.f32.mrf.mxu0
        %v4808 = vadd.f32 %v4719, %v4807
        %v4809 = vpop.f32.mrf.mxu0
        %v4810 = vadd.f32 %v4721, %v4809
        %4811 = vmatmul.bf16.gmra.mxu0 %v4363
        %v4812 = vpop.f32.mrf.mxu0
        %v4813 = vadd.f32 %v4724, %v4812
        %v4814 = vpop.f32.mrf.mxu0
        %v4815 = vadd.f32 %v4726, %v4814
        %4816 = vmatmul.bf16.gmra.mxu0 %v4366
        %v4817 = vpop.f32.mrf.mxu0
        %v4818 = vadd.f32 %v4729, %v4817
        %v4819 = vpop.f32.mrf.mxu0
        %v4820 = vadd.f32 %v4731, %v4819
        %4821 = vmatmul.bf16.gmra.mxu0 %v4369
        %v4822 = vpop.f32.mrf.mxu0
        %v4823 = vadd.f32 %v4734, %v4822
        %v4824 = vpop.f32.mrf.mxu0
        %v4825 = vadd.f32 %v4736, %v4824
        %4826 = vmatmul.bf16.gmra.mxu0 %v4372
        %v4827 = vpop.f32.mrf.mxu0
        %v4828 = vadd.f32 %v4739, %v4827
        %v4829 = vpop.f32.mrf.mxu0
        %v4830 = vadd.f32 %v4741, %v4829
        %4831 = vdwg.mxu0
        %4832 = vst [vmem:[#allocation4] sm:$0xff] %v4753
        %4833 = vst [vmem:[#allocation4 + $0x8] sm:$0xff] %v4755
        %4834 = vst [vmem:[#allocation4 + $0x10] sm:$0xff] %v4758
        %4835 = vst [vmem:[#allocation4 + $0x18] sm:$0xff] %v4760
        %4836 = vst [vmem:[#allocation4 + $0x20] sm:$0xff] %v4763
        %4837 = vst [vmem:[#allocation4 + $0x28] sm:$0xff] %v4765
        %4838 = vst [vmem:[#allocation4 + $0x30] sm:$0xff] %v4768
        %4839 = vst [vmem:[#allocation4 + $0x38] sm:$0xff] %v4770
        %4840 = vst [vmem:[#allocation4 + $0x40] sm:$0xff] %v4773
        %4841 = vst [vmem:[#allocation4 + $0x48] sm:$0xff] %v4775
        %4842 = vst [vmem:[#allocation4 + $0x50] sm:$0xff] %v4778
        %4843 = vst [vmem:[#allocation4 + $0x58] sm:$0xff] %v4780
        %4844 = vst [vmem:[#allocation4 + $0x60] sm:$0xff] %v4783
        %4845 = vst [vmem:[#allocation4 + $0x68] sm:$0xff] %v4785
        %4846 = vst [vmem:[#allocation4 + $0x70] sm:$0xff] %v4788
        %4847 = vst [vmem:[#allocation4 + $0x78] sm:$0xff] %v4790
        %4848 = vst [vmem:[#allocation4 + $0x80] sm:$0xff] %v4793
        %4849 = vst [vmem:[#allocation4 + $0x88] sm:$0xff] %v4795
        %4850 = vst [vmem:[#allocation4 + $0x90] sm:$0xff] %v4798
        %4851 = vst [vmem:[#allocation4 + $0x98] sm:$0xff] %v4800
        %4852 = vst [vmem:[#allocation4 + $0xa0] sm:$0xff] %v4803
        %4853 = vst [vmem:[#allocation4 + $0xa8] sm:$0xff] %v4805
        %4854 = vst [vmem:[#allocation4 + $0xb0] sm:$0xff] %v4808
        %4855 = vst [vmem:[#allocation4 + $0xb8] sm:$0xff] %v4810
        %4856 = vst [vmem:[#allocation4 + $0xc0] sm:$0xff] %v4813
        %4857 = vst [vmem:[#allocation4 + $0xc8] sm:$0xff] %v4815
        %4858 = vst [vmem:[#allocation4 + $0xd0] sm:$0xff] %v4818
        %4859 = vst [vmem:[#allocation4 + $0xd8] sm:$0xff] %v4820
        %4860 = vst [vmem:[#allocation4 + $0xe0] sm:$0xff] %v4823
        %4861 = vst [vmem:[#allocation4 + $0xe8] sm:$0xff] %v4825
        %4862 = vst [vmem:[#allocation4 + $0xf0] sm:$0xff] %v4828
        %4863 = vst [vmem:[#allocation4 + $0xf8] sm:$0xff] %v4830
        %v4864 = vld [vmem:[%s1687] sm:$0xff]
        %v4865 = vld [vmem:[%s1687 + $0x8] sm:$0xf]
        %v4866 = vld [vmem:[%s1687 + $0xc] sm:$0xff]
        %v4867 = vld [vmem:[%s1687 + $0x14] sm:$0xf]
        %v4868 = vld [vmem:[%s1687 + $0x18] sm:$0xff]
        %v4869 = vld [vmem:[%s1687 + $0x20] sm:$0xf]
        %v4870 = vld [vmem:[%s1687 + $0x24] sm:$0xff]
        %v4871 = vld [vmem:[%s1687 + $0x2c] sm:$0xf]
        %v4872 = vld [vmem:[%s1687 + $0x30] sm:$0xff]
        %v4873 = vld [vmem:[%s1687 + $0x38] sm:$0xf]
        %v4874 = vld [vmem:[%s1687 + $0x3c] sm:$0xff]
        %v4875 = vld [vmem:[%s1687 + $0x44] sm:$0xf]
        %v4876 = vld [vmem:[%s1687 + $0x48] sm:$0xff]
        %v4877 = vld [vmem:[%s1687 + $0x50] sm:$0xf]
        %v4878 = vld [vmem:[%s1687 + $0x54] sm:$0xff]
        %v4879 = vld [vmem:[%s1687 + $0x5c] sm:$0xf]
        %v4880 = vld [vmem:[%s1687 + $0x60] sm:$0xff]
        %v4881 = vld [vmem:[%s1687 + $0x68] sm:$0xf]
        %v4882 = vld [vmem:[%s1687 + $0x6c] sm:$0xff]
        %v4883 = vld [vmem:[%s1687 + $0x74] sm:$0xf]
        %v4884 = vld [vmem:[%s1687 + $0x78] sm:$0xff]
        %v4885 = vld [vmem:[%s1687 + $0x80] sm:$0xf]
        %v4886 = vld [vmem:[%s1687 + $0x84] sm:$0xff]
        %v4887 = vld [vmem:[%s1687 + $0x8c] sm:$0xf]
        %v4888 = vld [vmem:[%s1687 + $0x90] sm:$0xff]
        %v4889 = vld [vmem:[%s1687 + $0x98] sm:$0xf]
        %v4890 = vld [vmem:[%s1687 + $0x9c] sm:$0xff]
        %v4891 = vld [vmem:[%s1687 + $0xa4] sm:$0xf]
        %v4892 = vld [vmem:[%s1687 + $0xa8] sm:$0xff]
        %v4893 = vld [vmem:[%s1687 + $0xb0] sm:$0xf]
        %v4894 = vld [vmem:[%s1687 + $0xb4] sm:$0xff]
        %v4895 = vld [vmem:[%s1687 + $0xbc] sm:$0xf]
        %v4896 = vld [vmem:[%s1687 + $0xc0] sm:$0xff]
        %v4897 = vld [vmem:[%s1687 + $0xc8] sm:$0xf]
        %v4898 = vld [vmem:[%s1687 + $0xcc] sm:$0xff]
        %v4899 = vld [vmem:[%s1687 + $0xd4] sm:$0xf]
        %v4900 = vld [vmem:[%s1687 + $0xd8] sm:$0xff]
        %v4901 = vld [vmem:[%s1687 + $0xe0] sm:$0xf]
        %v4902 = vld [vmem:[%s1687 + $0xe4] sm:$0xff]
        %v4903 = vld [vmem:[%s1687 + $0xec] sm:$0xf]
        %v4904 = vld [vmem:[%s1687 + $0xf0] sm:$0xff]
        %v4905 = vld [vmem:[%s1687 + $0xf8] sm:$0xf]
        %v4906 = vld [vmem:[%s1687 + $0xfc] sm:$0xff]
        %v4907 = vld [vmem:[%s1687 + $0x104] sm:$0xf]
        %v4908 = vld [vmem:[%s1687 + $0x108] sm:$0xff]
        %v4909 = vld [vmem:[%s1687 + $0x110] sm:$0xf]
        %v4910 = vld [vmem:[%s1687 + $0x114] sm:$0xff]
        %v4911 = vld [vmem:[%s1687 + $0x11c] sm:$0xf]
        %v4912 = vld [vmem:[%s1687 + $0x120] sm:$0xff]
        %v4913 = vld [vmem:[%s1687 + $0x128] sm:$0xf]
        %v4914 = vld [vmem:[%s1687 + $0x12c] sm:$0xff]
        %v4915 = vld [vmem:[%s1687 + $0x134] sm:$0xf]
        %v4916 = vld [vmem:[%s1687 + $0x138] sm:$0xff]
        %v4917 = vld [vmem:[%s1687 + $0x140] sm:$0xf]
        %v4918 = vld [vmem:[%s1687 + $0x144] sm:$0xff]
        %v4919 = vld [vmem:[%s1687 + $0x14c] sm:$0xf]
        %v4920 = vld [vmem:[%s1687 + $0x150] sm:$0xff]
        %v4921 = vld [vmem:[%s1687 + $0x158] sm:$0xf]
        %v4922 = vld [vmem:[%s1687 + $0x15c] sm:$0xff]
        %v4923 = vld [vmem:[%s1687 + $0x164] sm:$0xf]
        %v4924 = vld [vmem:[%s1687 + $0x168] sm:$0xff]
        %v4925 = vld [vmem:[%s1687 + $0x170] sm:$0xf]
        %v4926 = vld [vmem:[%s1687 + $0x174] sm:$0xff]
        %v4927 = vld [vmem:[%s1687 + $0x17c] sm:$0xf]
        %s4928 = scalar_lea.vmem [#allocation10], 192
        %v4929 = vld [vmem:[%s4928] sm:$0xf]
        %v4930 = vld [vmem:[%s4928 + $0x4] sm:$0xf]
        %v4931 = vld [vmem:[%s4928 + $0x8] sm:$0xf]
        %v4932 = vld [vmem:[%s4928 + $0xc] sm:$0xf]
        %v4933 = vld [vmem:[%s4928 + $0x10] sm:$0xf]
        %v4934 = vld [vmem:[%s4928 + $0x14] sm:$0xf]
        %v4935 = vld [vmem:[%s4928 + $0x18] sm:$0xf]
        %v4936 = vld [vmem:[%s4928 + $0x1c] sm:$0xf]
        %v4937 = vld [vmem:[%s4928 + $0x20] sm:$0xf]
        %v4938 = vld [vmem:[%s4928 + $0x24] sm:$0xf]
        %v4939 = vld [vmem:[%s4928 + $0x28] sm:$0xf]
        %v4940 = vld [vmem:[%s4928 + $0x2c] sm:$0xf]
        %v4941 = vld [vmem:[%s4928 + $0x30] sm:$0xf]
        %v4942 = vld [vmem:[%s4928 + $0x34] sm:$0xf]
        %v4943 = vld [vmem:[%s4928 + $0x38] sm:$0xf]
        %v4944 = vld [vmem:[%s4928 + $0x3c] sm:$0xf]
        %v4945 = vld [vmem:[%s4928 + $0x40] sm:$0xf]
        %v4946 = vld [vmem:[%s4928 + $0x44] sm:$0xf]
        %v4947 = vld [vmem:[%s4928 + $0x48] sm:$0xf]
        %v4948 = vld [vmem:[%s4928 + $0x4c] sm:$0xf]
        %v4949 = vld [vmem:[%s4928 + $0x50] sm:$0xf]
        %v4950 = vld [vmem:[%s4928 + $0x54] sm:$0xf]
        %v4951 = vld [vmem:[%s4928 + $0x58] sm:$0xf]
        %v4952 = vld [vmem:[%s4928 + $0x5c] sm:$0xf]
        %v4953 = vld [vmem:[%s4928 + $0x60] sm:$0xf]
        %v4954 = vld [vmem:[%s4928 + $0x64] sm:$0xf]
        %v4955 = vld [vmem:[%s4928 + $0x68] sm:$0xf]
        %v4956 = vld [vmem:[%s4928 + $0x6c] sm:$0xf]
        %v4957 = vld [vmem:[%s4928 + $0x70] sm:$0xf]
        %v4958 = vld [vmem:[%s4928 + $0x74] sm:$0xf]
        %v4959 = vld [vmem:[%s4928 + $0x78] sm:$0xf]
        %v4960 = vld [vmem:[%s4928 + $0x7c] sm:$0xf]
        %v4961 = vld [vmem:[%s4928 + $0x80] sm:$0xf]
        %v4962 = vld [vmem:[%s4928 + $0x84] sm:$0xf]
        %v4963 = vld [vmem:[%s4928 + $0x88] sm:$0xf]
        %v4964 = vld [vmem:[%s4928 + $0x8c] sm:$0xf]
        %v4965 = vld [vmem:[%s4928 + $0x90] sm:$0xf]
        %v4966 = vld [vmem:[%s4928 + $0x94] sm:$0xf]
        %v4967 = vld [vmem:[%s4928 + $0x98] sm:$0xf]
        %v4968 = vld [vmem:[%s4928 + $0x9c] sm:$0xf]
        %v4969 = vld [vmem:[%s4928 + $0xa0] sm:$0xf]
        %v4970 = vld [vmem:[%s4928 + $0xa4] sm:$0xf]
        %v4971 = vld [vmem:[%s4928 + $0xa8] sm:$0xf]
        %v4972 = vld [vmem:[%s4928 + $0xac] sm:$0xf]
        %v4973 = vld [vmem:[%s4928 + $0xb0] sm:$0xf]
        %v4974 = vld [vmem:[%s4928 + $0xb4] sm:$0xf]
        %v4975 = vld [vmem:[%s4928 + $0xb8] sm:$0xf]
        %v4976 = vld [vmem:[%s4928 + $0xbc] sm:$0xf]
        %v5041 = vunpack.c.l.b16 %v4864
        %v5042 = vunpack.c.h.b16 %v4864
        %v5043 = vunpack.c.l.b16 %v4865
        %v5044 = vunpack.c.l.b16 %v4866
        %v5045 = vunpack.c.h.b16 %v4866
        %v5046 = vunpack.c.l.b16 %v4867
        %v5047 = vunpack.c.l.b16 %v4868
        %v5048 = vunpack.c.h.b16 %v4868
        %v5049 = vunpack.c.l.b16 %v4869
        %v5050 = vunpack.c.l.b16 %v4870
        %v5051 = vunpack.c.h.b16 %v4870
        %v5052 = vunpack.c.l.b16 %v4871
        %v5053 = vunpack.c.l.b16 %v4872
        %v5054 = vunpack.c.h.b16 %v4872
        %v5055 = vunpack.c.l.b16 %v4873
        %v5056 = vunpack.c.l.b16 %v4874
        %v5057 = vunpack.c.h.b16 %v4874
        %v5058 = vunpack.c.l.b16 %v4875
        %v5059 = vunpack.c.l.b16 %v4876
        %v5060 = vunpack.c.h.b16 %v4876
        %v5061 = vunpack.c.l.b16 %v4877
        %v5062 = vunpack.c.l.b16 %v4878
        %v5063 = vunpack.c.h.b16 %v4878
        %v5064 = vunpack.c.l.b16 %v4879
        %v5065 = vunpack.c.l.b16 %v4880
        %v5066 = vunpack.c.h.b16 %v4880
        %v5067 = vunpack.c.l.b16 %v4881
        %v5068 = vunpack.c.l.b16 %v4882
        %v5069 = vunpack.c.h.b16 %v4882
        %v5070 = vunpack.c.l.b16 %v4883
        %v5071 = vunpack.c.l.b16 %v4884
        %v5072 = vunpack.c.h.b16 %v4884
        %v5073 = vunpack.c.l.b16 %v4885
        %v5074 = vunpack.c.l.b16 %v4886
        %v5075 = vunpack.c.h.b16 %v4886
        %v5076 = vunpack.c.l.b16 %v4887
        %v5077 = vunpack.c.l.b16 %v4888
        %v5078 = vunpack.c.h.b16 %v4888
        %v5079 = vunpack.c.l.b16 %v4889
        %v5080 = vunpack.c.l.b16 %v4890
        %v5081 = vunpack.c.h.b16 %v4890
        %v5082 = vunpack.c.l.b16 %v4891
        %v5083 = vunpack.c.l.b16 %v4892
        %v5084 = vunpack.c.h.b16 %v4892
        %v5085 = vunpack.c.l.b16 %v4893
        %v5086 = vunpack.c.l.b16 %v4894
        %v5087 = vunpack.c.h.b16 %v4894
        %v5088 = vunpack.c.l.b16 %v4895
        %v5089 = vunpack.c.l.b16 %v4896
        %v5090 = vunpack.c.h.b16 %v4896
        %v5091 = vunpack.c.l.b16 %v4897
        %v5092 = vunpack.c.l.b16 %v4898
        %v5093 = vunpack.c.h.b16 %v4898
        %v5094 = vunpack.c.l.b16 %v4899
        %v5095 = vunpack.c.l.b16 %v4900
        %v5096 = vunpack.c.h.b16 %v4900
        %v5097 = vunpack.c.l.b16 %v4901
        %v5098 = vunpack.c.l.b16 %v4902
        %v5099 = vunpack.c.h.b16 %v4902
        %v5100 = vunpack.c.l.b16 %v4903
        %v5101 = vunpack.c.l.b16 %v4904
        %v5102 = vunpack.c.h.b16 %v4904
        %v5103 = vunpack.c.l.b16 %v4905
        %v5104 = vunpack.c.l.b16 %v4906
        %v5105 = vunpack.c.h.b16 %v4906
        %v5106 = vunpack.c.l.b16 %v4907
        %v5107 = vunpack.c.l.b16 %v4908
        %v5108 = vunpack.c.h.b16 %v4908
        %v5109 = vunpack.c.l.b16 %v4909
        %v5110 = vunpack.c.l.b16 %v4910
        %v5111 = vunpack.c.h.b16 %v4910
        %v5112 = vunpack.c.l.b16 %v4911
        %v5113 = vunpack.c.l.b16 %v4912
        %v5114 = vunpack.c.h.b16 %v4912
        %v5115 = vunpack.c.l.b16 %v4913
        %v5116 = vunpack.c.l.b16 %v4914
        %v5117 = vunpack.c.h.b16 %v4914
        %v5118 = vunpack.c.l.b16 %v4915
        %v5119 = vunpack.c.l.b16 %v4916
        %v5120 = vunpack.c.h.b16 %v4916
        %v5121 = vunpack.c.l.b16 %v4917
        %v5122 = vunpack.c.l.b16 %v4918
        %v5123 = vunpack.c.h.b16 %v4918
        %v5124 = vunpack.c.l.b16 %v4919
        %v5125 = vunpack.c.l.b16 %v4920
        %v5126 = vunpack.c.h.b16 %v4920
        %v5127 = vunpack.c.l.b16 %v4921
        %v5128 = vunpack.c.l.b16 %v4922
        %v5129 = vunpack.c.h.b16 %v4922
        %v5130 = vunpack.c.l.b16 %v4923
        %v5131 = vunpack.c.l.b16 %v4924
        %v5132 = vunpack.c.h.b16 %v4924
        %v5133 = vunpack.c.l.b16 %v4925
        %v5134 = vunpack.c.l.b16 %v4926
        %v5135 = vunpack.c.h.b16 %v4926
        %v5136 = vunpack.c.l.b16 %v4927
        %v5137 = vpack.c.b16 %v5044, %v5041
        %v5138 = vpack.c.b16 %v5045, %v5042
        %v5139 = vpack.c.b16 %v5046, %v5043
        %v5140 = vpack.c.b16 %v5050, %v5047
        %v5141 = vpack.c.b16 %v5051, %v5048
        %v5142 = vpack.c.b16 %v5052, %v5049
        %v5143 = vpack.c.b16 %v5056, %v5053
        %v5144 = vpack.c.b16 %v5057, %v5054
        %v5145 = vpack.c.b16 %v5058, %v5055
        %v5146 = vpack.c.b16 %v5062, %v5059
        %v5147 = vpack.c.b16 %v5063, %v5060
        %v5148 = vpack.c.b16 %v5064, %v5061
        %v5149 = vpack.c.b16 %v5068, %v5065
        %v5150 = vpack.c.b16 %v5069, %v5066
        %v5151 = vpack.c.b16 %v5070, %v5067
        %v5152 = vpack.c.b16 %v5074, %v5071
        %v5153 = vpack.c.b16 %v5075, %v5072
        %v5154 = vpack.c.b16 %v5076, %v5073
        %v5155 = vpack.c.b16 %v5080, %v5077
        %v5156 = vpack.c.b16 %v5081, %v5078
        %v5157 = vpack.c.b16 %v5082, %v5079
        %v5158 = vpack.c.b16 %v5086, %v5083
        %v5159 = vpack.c.b16 %v5087, %v5084
        %v5160 = vpack.c.b16 %v5088, %v5085
        %v5161 = vpack.c.b16 %v5092, %v5089
        %v5162 = vpack.c.b16 %v5093, %v5090
        %v5163 = vpack.c.b16 %v5094, %v5091
        %v5164 = vpack.c.b16 %v5098, %v5095
        %v5165 = vpack.c.b16 %v5099, %v5096
        %v5166 = vpack.c.b16 %v5100, %v5097
        %v5167 = vpack.c.b16 %v5104, %v5101
        %v5168 = vpack.c.b16 %v5105, %v5102
        %v5169 = vpack.c.b16 %v5106, %v5103
        %v5170 = vpack.c.b16 %v5110, %v5107
        %v5171 = vpack.c.b16 %v5111, %v5108
        %v5172 = vpack.c.b16 %v5112, %v5109
        %v5173 = vpack.c.b16 %v5116, %v5113
        %v5174 = vpack.c.b16 %v5117, %v5114
        %v5175 = vpack.c.b16 %v5118, %v5115
        %v5176 = vpack.c.b16 %v5122, %v5119
        %v5177 = vpack.c.b16 %v5123, %v5120
        %v5178 = vpack.c.b16 %v5124, %v5121
        %v5179 = vpack.c.b16 %v5128, %v5125
        %v5180 = vpack.c.b16 %v5129, %v5126
        %v5181 = vpack.c.b16 %v5130, %v5127
        %v5182 = vpack.c.b16 %v5134, %v5131
        %v5183 = vpack.c.b16 %v5135, %v5132
        %v5184 = vpack.c.b16 %v5136, %v5133
        %v5281 = vunpack.c.l.b16 %v4929
        %v5282 = vunpack.c.l.b16 %v4930
        %v5283 = vunpack.c.l.b16 %v4931
        %v5284 = vunpack.c.l.b16 %v4932
        %v5285 = vunpack.c.l.b16 %v4933
        %v5286 = vunpack.c.l.b16 %v4934
        %v5287 = vunpack.c.l.b16 %v4935
        %v5288 = vunpack.c.l.b16 %v4936
        %v5289 = vunpack.c.l.b16 %v4937
        %v5290 = vunpack.c.l.b16 %v4938
        %v5291 = vunpack.c.l.b16 %v4939
        %v5292 = vunpack.c.l.b16 %v4940
        %v5293 = vunpack.c.l.b16 %v4941
        %v5294 = vunpack.c.l.b16 %v4942
        %v5295 = vunpack.c.l.b16 %v4943
        %v5296 = vunpack.c.l.b16 %v4944
        %v5297 = vunpack.c.l.b16 %v4945
        %v5298 = vunpack.c.l.b16 %v4946
        %v5299 = vunpack.c.l.b16 %v4947
        %v5300 = vunpack.c.l.b16 %v4948
        %v5301 = vunpack.c.l.b16 %v4949
        %v5302 = vunpack.c.l.b16 %v4950
        %v5303 = vunpack.c.l.b16 %v4951
        %v5304 = vunpack.c.l.b16 %v4952
        %v5305 = vunpack.c.l.b16 %v4953
        %v5306 = vunpack.c.l.b16 %v4954
        %v5307 = vunpack.c.l.b16 %v4955
        %v5308 = vunpack.c.l.b16 %v4956
        %v5309 = vunpack.c.l.b16 %v4957
        %v5310 = vunpack.c.l.b16 %v4958
        %v5311 = vunpack.c.l.b16 %v4959
        %v5312 = vunpack.c.l.b16 %v4960
        %v5313 = vunpack.c.l.b16 %v4961
        %v5314 = vunpack.c.l.b16 %v4962
        %v5315 = vunpack.c.l.b16 %v4963
        %v5316 = vunpack.c.l.b16 %v4964
        %v5317 = vunpack.c.l.b16 %v4965
        %v5318 = vunpack.c.l.b16 %v4966
        %v5319 = vunpack.c.l.b16 %v4967
        %v5320 = vunpack.c.l.b16 %v4968
        %v5321 = vunpack.c.l.b16 %v4969
        %v5322 = vunpack.c.l.b16 %v4970
        %v5323 = vunpack.c.l.b16 %v4971
        %v5324 = vunpack.c.l.b16 %v4972
        %v5325 = vunpack.c.l.b16 %v4973
        %v5326 = vunpack.c.l.b16 %v4974
        %v5327 = vunpack.c.l.b16 %v4975
        %v5328 = vunpack.c.l.b16 %v4976
        %v5329 = vpack.c.b16 %v5282, %v5281
        %v5330 = vpack.c.b16 %v5284, %v5283
        %v5331 = vpack.c.b16 %v5286, %v5285
        %v5332 = vpack.c.b16 %v5288, %v5287
        %v5333 = vpack.c.b16 %v5290, %v5289
        %v5334 = vpack.c.b16 %v5292, %v5291
        %v5335 = vpack.c.b16 %v5294, %v5293
        %v5336 = vpack.c.b16 %v5296, %v5295
        %v5337 = vpack.c.b16 %v5298, %v5297
        %v5338 = vpack.c.b16 %v5300, %v5299
        %v5339 = vpack.c.b16 %v5302, %v5301
        %v5340 = vpack.c.b16 %v5304, %v5303
        %v5341 = vpack.c.b16 %v5306, %v5305
        %v5342 = vpack.c.b16 %v5308, %v5307
        %v5343 = vpack.c.b16 %v5310, %v5309
        %v5344 = vpack.c.b16 %v5312, %v5311
        %v5345 = vpack.c.b16 %v5314, %v5313
        %v5346 = vpack.c.b16 %v5316, %v5315
        %v5347 = vpack.c.b16 %v5318, %v5317
        %v5348 = vpack.c.b16 %v5320, %v5319
        %v5349 = vpack.c.b16 %v5322, %v5321
        %v5350 = vpack.c.b16 %v5324, %v5323
        %v5351 = vpack.c.b16 %v5326, %v5325
        %v5352 = vpack.c.b16 %v5328, %v5327
        %5377 = vmatpush.bf16.msra.mxu0 %v5336
        %5378 = vmatpush.bf16.msra.mxu0 %v5335
        %5379 = vmatpush.bf16.msra.mxu0 %v5334
        %5380 = vmatpush.bf16.msra.mxu0 %v5333
        %5381 = vmatpush.bf16.msra.mxu0 %v5332
        %5382 = vmatpush.bf16.msra.mxu0 %v5331
        %5383 = vmatpush.bf16.msra.mxu0 %v5330
        %5384 = vmatpush.bf16.msra.mxu0 %v5329
        %5385 = vmatmul.bf16.gmra.mxu0 %v5137
        %v5386 = vpop.f32.mrf.mxu0
        %v5387 = vadd.f32 0.0, %v5386
        %v5388 = vpop.f32.mrf.mxu0
        %v5389 = vadd.f32 0.0, %v5388
        %5390 = vmatmul.bf16.gmra.mxu0 %v5140
        %v5391 = vpop.f32.mrf.mxu0
        %v5392 = vadd.f32 0.0, %v5391
        %v5393 = vpop.f32.mrf.mxu0
        %v5394 = vadd.f32 0.0, %v5393
        %5395 = vmatmul.bf16.gmra.mxu0 %v5143
        %v5396 = vpop.f32.mrf.mxu0
        %v5397 = vadd.f32 0.0, %v5396
        %v5398 = vpop.f32.mrf.mxu0
        %v5399 = vadd.f32 0.0, %v5398
        %5400 = vmatmul.bf16.gmra.mxu0 %v5146
        %v5401 = vpop.f32.mrf.mxu0
        %v5402 = vadd.f32 0.0, %v5401
        %v5403 = vpop.f32.mrf.mxu0
        %v5404 = vadd.f32 0.0, %v5403
        %5405 = vmatmul.bf16.gmra.mxu0 %v5149
        %v5406 = vpop.f32.mrf.mxu0
        %v5407 = vadd.f32 0.0, %v5406
        %v5408 = vpop.f32.mrf.mxu0
        %v5409 = vadd.f32 0.0, %v5408
        %5410 = vmatmul.bf16.gmra.mxu0 %v5152
        %v5411 = vpop.f32.mrf.mxu0
        %v5412 = vadd.f32 0.0, %v5411
        %v5413 = vpop.f32.mrf.mxu0
        %v5414 = vadd.f32 0.0, %v5413
        %5415 = vmatmul.bf16.gmra.mxu0 %v5155
        %v5416 = vpop.f32.mrf.mxu0
        %v5417 = vadd.f32 0.0, %v5416
        %v5418 = vpop.f32.mrf.mxu0
        %v5419 = vadd.f32 0.0, %v5418
        %5420 = vmatmul.bf16.gmra.mxu0 %v5158
        %v5421 = vpop.f32.mrf.mxu0
        %v5422 = vadd.f32 0.0, %v5421
        %v5423 = vpop.f32.mrf.mxu0
        %v5424 = vadd.f32 0.0, %v5423
        %5425 = vmatmul.bf16.gmra.mxu0 %v5161
        %v5426 = vpop.f32.mrf.mxu0
        %v5427 = vadd.f32 0.0, %v5426
        %v5428 = vpop.f32.mrf.mxu0
        %v5429 = vadd.f32 0.0, %v5428
        %5430 = vmatmul.bf16.gmra.mxu0 %v5164
        %v5431 = vpop.f32.mrf.mxu0
        %v5432 = vadd.f32 0.0, %v5431
        %v5433 = vpop.f32.mrf.mxu0
        %v5434 = vadd.f32 0.0, %v5433
        %5435 = vmatmul.bf16.gmra.mxu0 %v5167
        %v5436 = vpop.f32.mrf.mxu0
        %v5437 = vadd.f32 0.0, %v5436
        %v5438 = vpop.f32.mrf.mxu0
        %v5439 = vadd.f32 0.0, %v5438
        %5440 = vmatmul.bf16.gmra.mxu0 %v5170
        %v5441 = vpop.f32.mrf.mxu0
        %v5442 = vadd.f32 0.0, %v5441
        %v5443 = vpop.f32.mrf.mxu0
        %v5444 = vadd.f32 0.0, %v5443
        %5445 = vmatmul.bf16.gmra.mxu0 %v5173
        %v5446 = vpop.f32.mrf.mxu0
        %v5447 = vadd.f32 0.0, %v5446
        %v5448 = vpop.f32.mrf.mxu0
        %v5449 = vadd.f32 0.0, %v5448
        %5450 = vmatmul.bf16.gmra.mxu0 %v5176
        %v5451 = vpop.f32.mrf.mxu0
        %v5452 = vadd.f32 0.0, %v5451
        %v5453 = vpop.f32.mrf.mxu0
        %v5454 = vadd.f32 0.0, %v5453
        %5455 = vmatmul.bf16.gmra.mxu0 %v5179
        %v5456 = vpop.f32.mrf.mxu0
        %v5457 = vadd.f32 0.0, %v5456
        %v5458 = vpop.f32.mrf.mxu0
        %v5459 = vadd.f32 0.0, %v5458
        %5460 = vmatmul.bf16.gmra.mxu0 %v5182
        %v5461 = vpop.f32.mrf.mxu0
        %v5462 = vadd.f32 0.0, %v5461
        %v5463 = vpop.f32.mrf.mxu0
        %v5464 = vadd.f32 0.0, %v5463
        %5465 = vdwg.mxu0
        %5466 = vmatpush.bf16.msra.mxu0 %v5344
        %5467 = vmatpush.bf16.msra.mxu0 %v5343
        %5468 = vmatpush.bf16.msra.mxu0 %v5342
        %5469 = vmatpush.bf16.msra.mxu0 %v5341
        %5470 = vmatpush.bf16.msra.mxu0 %v5340
        %5471 = vmatpush.bf16.msra.mxu0 %v5339
        %5472 = vmatpush.bf16.msra.mxu0 %v5338
        %5473 = vmatpush.bf16.msra.mxu0 %v5337
        %5474 = vmatmul.bf16.gmra.mxu0 %v5138
        %v5475 = vpop.f32.mrf.mxu0
        %v5476 = vadd.f32 %v5387, %v5475
        %v5477 = vpop.f32.mrf.mxu0
        %v5478 = vadd.f32 %v5389, %v5477
        %5479 = vmatmul.bf16.gmra.mxu0 %v5141
        %v5480 = vpop.f32.mrf.mxu0
        %v5481 = vadd.f32 %v5392, %v5480
        %v5482 = vpop.f32.mrf.mxu0
        %v5483 = vadd.f32 %v5394, %v5482
        %5484 = vmatmul.bf16.gmra.mxu0 %v5144
        %v5485 = vpop.f32.mrf.mxu0
        %v5486 = vadd.f32 %v5397, %v5485
        %v5487 = vpop.f32.mrf.mxu0
        %v5488 = vadd.f32 %v5399, %v5487
        %5489 = vmatmul.bf16.gmra.mxu0 %v5147
        %v5490 = vpop.f32.mrf.mxu0
        %v5491 = vadd.f32 %v5402, %v5490
        %v5492 = vpop.f32.mrf.mxu0
        %v5493 = vadd.f32 %v5404, %v5492
        %5494 = vmatmul.bf16.gmra.mxu0 %v5150
        %v5495 = vpop.f32.mrf.mxu0
        %v5496 = vadd.f32 %v5407, %v5495
        %v5497 = vpop.f32.mrf.mxu0
        %v5498 = vadd.f32 %v5409, %v5497
        %5499 = vmatmul.bf16.gmra.mxu0 %v5153
        %v5500 = vpop.f32.mrf.mxu0
        %v5501 = vadd.f32 %v5412, %v5500
        %v5502 = vpop.f32.mrf.mxu0
        %v5503 = vadd.f32 %v5414, %v5502
        %5504 = vmatmul.bf16.gmra.mxu0 %v5156
        %v5505 = vpop.f32.mrf.mxu0
        %v5506 = vadd.f32 %v5417, %v5505
        %v5507 = vpop.f32.mrf.mxu0
        %v5508 = vadd.f32 %v5419, %v5507
        %5509 = vmatmul.bf16.gmra.mxu0 %v5159
        %v5510 = vpop.f32.mrf.mxu0
        %v5511 = vadd.f32 %v5422, %v5510
        %v5512 = vpop.f32.mrf.mxu0
        %v5513 = vadd.f32 %v5424, %v5512
        %5514 = vmatmul.bf16.gmra.mxu0 %v5162
        %v5515 = vpop.f32.mrf.mxu0
        %v5516 = vadd.f32 %v5427, %v5515
        %v5517 = vpop.f32.mrf.mxu0
        %v5518 = vadd.f32 %v5429, %v5517
        %5519 = vmatmul.bf16.gmra.mxu0 %v5165
        %v5520 = vpop.f32.mrf.mxu0
        %v5521 = vadd.f32 %v5432, %v5520
        %v5522 = vpop.f32.mrf.mxu0
        %v5523 = vadd.f32 %v5434, %v5522
        %5524 = vmatmul.bf16.gmra.mxu0 %v5168
        %v5525 = vpop.f32.mrf.mxu0
        %v5526 = vadd.f32 %v5437, %v5525
        %v5527 = vpop.f32.mrf.mxu0
        %v5528 = vadd.f32 %v5439, %v5527
        %5529 = vmatmul.bf16.gmra.mxu0 %v5171
        %v5530 = vpop.f32.mrf.mxu0
        %v5531 = vadd.f32 %v5442, %v5530
        %v5532 = vpop.f32.mrf.mxu0
        %v5533 = vadd.f32 %v5444, %v5532
        %5534 = vmatmul.bf16.gmra.mxu0 %v5174
        %v5535 = vpop.f32.mrf.mxu0
        %v5536 = vadd.f32 %v5447, %v5535
        %v5537 = vpop.f32.mrf.mxu0
        %v5538 = vadd.f32 %v5449, %v5537
        %5539 = vmatmul.bf16.gmra.mxu0 %v5177
        %v5540 = vpop.f32.mrf.mxu0
        %v5541 = vadd.f32 %v5452, %v5540
        %v5542 = vpop.f32.mrf.mxu0
        %v5543 = vadd.f32 %v5454, %v5542
        %5544 = vmatmul.bf16.gmra.mxu0 %v5180
        %v5545 = vpop.f32.mrf.mxu0
        %v5546 = vadd.f32 %v5457, %v5545
        %v5547 = vpop.f32.mrf.mxu0
        %v5548 = vadd.f32 %v5459, %v5547
        %5549 = vmatmul.bf16.gmra.mxu0 %v5183
        %v5550 = vpop.f32.mrf.mxu0
        %v5551 = vadd.f32 %v5462, %v5550
        %v5552 = vpop.f32.mrf.mxu0
        %v5553 = vadd.f32 %v5464, %v5552
        %5554 = vdwg.mxu0
        %5555 = vmatpush.bf16.msra.mxu0 %v5352
        %5556 = vmatpush.bf16.msra.mxu0 %v5351
        %5557 = vmatpush.bf16.msra.mxu0 %v5350
        %5558 = vmatpush.bf16.msra.mxu0 %v5349
        %5559 = vmatpush.bf16.msra.mxu0 %v5348
        %5560 = vmatpush.bf16.msra.mxu0 %v5347
        %5561 = vmatpush.bf16.msra.mxu0 %v5346
        %5562 = vmatpush.bf16.msra.mxu0 %v5345
        %5563 = vmatmul.bf16.gmra.mxu0 %v5139
        %v5564 = vpop.f32.mrf.mxu0
        %v5565 = vadd.f32 %v5476, %v5564
        %v5566 = vpop.f32.mrf.mxu0
        %v5567 = vadd.f32 %v5478, %v5566
        %5568 = vmatmul.bf16.gmra.mxu0 %v5142
        %v5569 = vpop.f32.mrf.mxu0
        %v5570 = vadd.f32 %v5481, %v5569
        %v5571 = vpop.f32.mrf.mxu0
        %v5572 = vadd.f32 %v5483, %v5571
        %5573 = vmatmul.bf16.gmra.mxu0 %v5145
        %v5574 = vpop.f32.mrf.mxu0
        %v5575 = vadd.f32 %v5486, %v5574
        %v5576 = vpop.f32.mrf.mxu0
        %v5577 = vadd.f32 %v5488, %v5576
        %5578 = vmatmul.bf16.gmra.mxu0 %v5148
        %v5579 = vpop.f32.mrf.mxu0
        %v5580 = vadd.f32 %v5491, %v5579
        %v5581 = vpop.f32.mrf.mxu0
        %v5582 = vadd.f32 %v5493, %v5581
        %5583 = vmatmul.bf16.gmra.mxu0 %v5151
        %v5584 = vpop.f32.mrf.mxu0
        %v5585 = vadd.f32 %v5496, %v5584
        %v5586 = vpop.f32.mrf.mxu0
        %v5587 = vadd.f32 %v5498, %v5586
        %5588 = vmatmul.bf16.gmra.mxu0 %v5154
        %v5589 = vpop.f32.mrf.mxu0
        %v5590 = vadd.f32 %v5501, %v5589
        %v5591 = vpop.f32.mrf.mxu0
        %v5592 = vadd.f32 %v5503, %v5591
        %5593 = vmatmul.bf16.gmra.mxu0 %v5157
        %v5594 = vpop.f32.mrf.mxu0
        %v5595 = vadd.f32 %v5506, %v5594
        %v5596 = vpop.f32.mrf.mxu0
        %v5597 = vadd.f32 %v5508, %v5596
        %5598 = vmatmul.bf16.gmra.mxu0 %v5160
        %v5599 = vpop.f32.mrf.mxu0
        %v5600 = vadd.f32 %v5511, %v5599
        %v5601 = vpop.f32.mrf.mxu0
        %v5602 = vadd.f32 %v5513, %v5601
        %5603 = vmatmul.bf16.gmra.mxu0 %v5163
        %v5604 = vpop.f32.mrf.mxu0
        %v5605 = vadd.f32 %v5516, %v5604
        %v5606 = vpop.f32.mrf.mxu0
        %v5607 = vadd.f32 %v5518, %v5606
        %5608 = vmatmul.bf16.gmra.mxu0 %v5166
        %v5609 = vpop.f32.mrf.mxu0
        %v5610 = vadd.f32 %v5521, %v5609
        %v5611 = vpop.f32.mrf.mxu0
        %v5612 = vadd.f32 %v5523, %v5611
        %5613 = vmatmul.bf16.gmra.mxu0 %v5169
        %v5614 = vpop.f32.mrf.mxu0
        %v5615 = vadd.f32 %v5526, %v5614
        %v5616 = vpop.f32.mrf.mxu0
        %v5617 = vadd.f32 %v5528, %v5616
        %5618 = vmatmul.bf16.gmra.mxu0 %v5172
        %v5619 = vpop.f32.mrf.mxu0
        %v5620 = vadd.f32 %v5531, %v5619
        %v5621 = vpop.f32.mrf.mxu0
        %v5622 = vadd.f32 %v5533, %v5621
        %5623 = vmatmul.bf16.gmra.mxu0 %v5175
        %v5624 = vpop.f32.mrf.mxu0
        %v5625 = vadd.f32 %v5536, %v5624
        %v5626 = vpop.f32.mrf.mxu0
        %v5627 = vadd.f32 %v5538, %v5626
        %5628 = vmatmul.bf16.gmra.mxu0 %v5178
        %v5629 = vpop.f32.mrf.mxu0
        %v5630 = vadd.f32 %v5541, %v5629
        %v5631 = vpop.f32.mrf.mxu0
        %v5632 = vadd.f32 %v5543, %v5631
        %5633 = vmatmul.bf16.gmra.mxu0 %v5181
        %v5634 = vpop.f32.mrf.mxu0
        %v5635 = vadd.f32 %v5546, %v5634
        %v5636 = vpop.f32.mrf.mxu0
        %v5637 = vadd.f32 %v5548, %v5636
        %5638 = vmatmul.bf16.gmra.mxu0 %v5184
        %v5639 = vpop.f32.mrf.mxu0
        %v5640 = vadd.f32 %v5551, %v5639
        %v5641 = vpop.f32.mrf.mxu0
        %v5642 = vadd.f32 %v5553, %v5641
        %5643 = vdwg.mxu0
        %v5644 = vld [vmem:[#allocation4] sm:$0xff]
        %v5645 = vld [vmem:[#allocation4 + $0x8] sm:$0xff]
        %v5646 = vld [vmem:[#allocation4 + $0x10] sm:$0xff]
        %v5647 = vld [vmem:[#allocation4 + $0x18] sm:$0xff]
        %v5648 = vld [vmem:[#allocation4 + $0x20] sm:$0xff]
        %v5649 = vld [vmem:[#allocation4 + $0x28] sm:$0xff]
        %v5650 = vld [vmem:[#allocation4 + $0x30] sm:$0xff]
        %v5651 = vld [vmem:[#allocation4 + $0x38] sm:$0xff]
        %v5652 = vld [vmem:[#allocation4 + $0x40] sm:$0xff]
        %v5653 = vld [vmem:[#allocation4 + $0x48] sm:$0xff]
        %v5654 = vld [vmem:[#allocation4 + $0x50] sm:$0xff]
        %v5655 = vld [vmem:[#allocation4 + $0x58] sm:$0xff]
        %v5656 = vld [vmem:[#allocation4 + $0x60] sm:$0xff]
        %v5657 = vld [vmem:[#allocation4 + $0x68] sm:$0xff]
        %v5658 = vld [vmem:[#allocation4 + $0x70] sm:$0xff]
        %v5659 = vld [vmem:[#allocation4 + $0x78] sm:$0xff]
        %v5660 = vld [vmem:[#allocation4 + $0x80] sm:$0xff]
        %v5661 = vld [vmem:[#allocation4 + $0x88] sm:$0xff]
        %v5662 = vld [vmem:[#allocation4 + $0x90] sm:$0xff]
        %v5663 = vld [vmem:[#allocation4 + $0x98] sm:$0xff]
        %v5664 = vld [vmem:[#allocation4 + $0xa0] sm:$0xff]
        %v5665 = vld [vmem:[#allocation4 + $0xa8] sm:$0xff]
        %v5666 = vld [vmem:[#allocation4 + $0xb0] sm:$0xff]
        %v5667 = vld [vmem:[#allocation4 + $0xb8] sm:$0xff]
        %v5668 = vld [vmem:[#allocation4 + $0xc0] sm:$0xff]
        %v5669 = vld [vmem:[#allocation4 + $0xc8] sm:$0xff]
        %v5670 = vld [vmem:[#allocation4 + $0xd0] sm:$0xff]
        %v5671 = vld [vmem:[#allocation4 + $0xd8] sm:$0xff]
        %v5672 = vld [vmem:[#allocation4 + $0xe0] sm:$0xff]
        %v5673 = vld [vmem:[#allocation4 + $0xe8] sm:$0xff]
        %v5674 = vld [vmem:[#allocation4 + $0xf0] sm:$0xff]
        %v5675 = vld [vmem:[#allocation4 + $0xf8] sm:$0xff]
        %v5676 = vadd.f32 %v5644, %v5565
        %v5677 = vadd.f32 %v5645, %v5567
        %v5678 = vadd.f32 %v5646, %v5570
        %v5679 = vadd.f32 %v5647, %v5572
        %v5680 = vadd.f32 %v5648, %v5575
        %v5681 = vadd.f32 %v5649, %v5577
        %v5682 = vadd.f32 %v5650, %v5580
        %v5683 = vadd.f32 %v5651, %v5582
        %v5684 = vadd.f32 %v5652, %v5585
        %v5685 = vadd.f32 %v5653, %v5587
        %v5686 = vadd.f32 %v5654, %v5590
        %v5687 = vadd.f32 %v5655, %v5592
        %v5688 = vadd.f32 %v5656, %v5595
        %v5689 = vadd.f32 %v5657, %v5597
        %v5690 = vadd.f32 %v5658, %v5600
        %v5691 = vadd.f32 %v5659, %v5602
        %v5692 = vadd.f32 %v5660, %v5605
        %v5693 = vadd.f32 %v5661, %v5607
        %v5694 = vadd.f32 %v5662, %v5610
        %v5695 = vadd.f32 %v5663, %v5612
        %v5696 = vadd.f32 %v5664, %v5615
        %v5697 = vadd.f32 %v5665, %v5617
        %v5698 = vadd.f32 %v5666, %v5620
        %v5699 = vadd.f32 %v5667, %v5622
        %v5700 = vadd.f32 %v5668, %v5625
        %v5701 = vadd.f32 %v5669, %v5627
        %v5702 = vadd.f32 %v5670, %v5630
        %v5703 = vadd.f32 %v5671, %v5632
        %v5704 = vadd.f32 %v5672, %v5635
        %v5705 = vadd.f32 %v5673, %v5637
        %v5706 = vadd.f32 %v5674, %v5640
        %v5707 = vadd.f32 %v5675, %v5642
        %5708 = vst [vmem:[#allocation4] sm:$0xff] %v5676
        %5709 = vst [vmem:[#allocation4 + $0x8] sm:$0xff] %v5677
        %5710 = vst [vmem:[#allocation4 + $0x10] sm:$0xff] %v5678
        %5711 = vst [vmem:[#allocation4 + $0x18] sm:$0xff] %v5679
        %5712 = vst [vmem:[#allocation4 + $0x20] sm:$0xff] %v5680
        %5713 = vst [vmem:[#allocation4 + $0x28] sm:$0xff] %v5681
        %5714 = vst [vmem:[#allocation4 + $0x30] sm:$0xff] %v5682
        %5715 = vst [vmem:[#allocation4 + $0x38] sm:$0xff] %v5683
        %5716 = vst [vmem:[#allocation4 + $0x40] sm:$0xff] %v5684
        %5717 = vst [vmem:[#allocation4 + $0x48] sm:$0xff] %v5685
        %5718 = vst [vmem:[#allocation4 + $0x50] sm:$0xff] %v5686
        %5719 = vst [vmem:[#allocation4 + $0x58] sm:$0xff] %v5687
        %5720 = vst [vmem:[#allocation4 + $0x60] sm:$0xff] %v5688
        %5721 = vst [vmem:[#allocation4 + $0x68] sm:$0xff] %v5689
        %5722 = vst [vmem:[#allocation4 + $0x70] sm:$0xff] %v5690
        %5723 = vst [vmem:[#allocation4 + $0x78] sm:$0xff] %v5691
        %5724 = vst [vmem:[#allocation4 + $0x80] sm:$0xff] %v5692
        %5725 = vst [vmem:[#allocation4 + $0x88] sm:$0xff] %v5693
        %5726 = vst [vmem:[#allocation4 + $0x90] sm:$0xff] %v5694
        %5727 = vst [vmem:[#allocation4 + $0x98] sm:$0xff] %v5695
        %5728 = vst [vmem:[#allocation4 + $0xa0] sm:$0xff] %v5696
        %5729 = vst [vmem:[#allocation4 + $0xa8] sm:$0xff] %v5697
        %5730 = vst [vmem:[#allocation4 + $0xb0] sm:$0xff] %v5698
        %5731 = vst [vmem:[#allocation4 + $0xb8] sm:$0xff] %v5699
        %5732 = vst [vmem:[#allocation4 + $0xc0] sm:$0xff] %v5700
        %5733 = vst [vmem:[#allocation4 + $0xc8] sm:$0xff] %v5701
        %5734 = vst [vmem:[#allocation4 + $0xd0] sm:$0xff] %v5702
        %5735 = vst [vmem:[#allocation4 + $0xd8] sm:$0xff] %v5703
        %5736 = vst [vmem:[#allocation4 + $0xe0] sm:$0xff] %v5704
        %5737 = vst [vmem:[#allocation4 + $0xe8] sm:$0xff] %v5705
        %5738 = vst [vmem:[#allocation4 + $0xf0] sm:$0xff] %v5706
        %5739 = vst [vmem:[#allocation4 + $0xf8] sm:$0xff] %v5707
        %v5740 = vld [vmem:[%s2564] sm:$0xff]
        %v5741 = vld [vmem:[%s2564 + $0x8] sm:$0xf]
        %v5742 = vld [vmem:[%s2564 + $0xc] sm:$0xff]
        %v5743 = vld [vmem:[%s2564 + $0x14] sm:$0xf]
        %v5744 = vld [vmem:[%s2564 + $0x18] sm:$0xff]
        %v5745 = vld [vmem:[%s2564 + $0x20] sm:$0xf]
        %v5746 = vld [vmem:[%s2564 + $0x24] sm:$0xff]
        %v5747 = vld [vmem:[%s2564 + $0x2c] sm:$0xf]
        %v5748 = vld [vmem:[%s2564 + $0x30] sm:$0xff]
        %v5749 = vld [vmem:[%s2564 + $0x38] sm:$0xf]
        %v5750 = vld [vmem:[%s2564 + $0x3c] sm:$0xff]
        %v5751 = vld [vmem:[%s2564 + $0x44] sm:$0xf]
        %v5752 = vld [vmem:[%s2564 + $0x48] sm:$0xff]
        %v5753 = vld [vmem:[%s2564 + $0x50] sm:$0xf]
        %v5754 = vld [vmem:[%s2564 + $0x54] sm:$0xff]
        %v5755 = vld [vmem:[%s2564 + $0x5c] sm:$0xf]
        %v5756 = vld [vmem:[%s2564 + $0x60] sm:$0xff]
        %v5757 = vld [vmem:[%s2564 + $0x68] sm:$0xf]
        %v5758 = vld [vmem:[%s2564 + $0x6c] sm:$0xff]
        %v5759 = vld [vmem:[%s2564 + $0x74] sm:$0xf]
        %v5760 = vld [vmem:[%s2564 + $0x78] sm:$0xff]
        %v5761 = vld [vmem:[%s2564 + $0x80] sm:$0xf]
        %v5762 = vld [vmem:[%s2564 + $0x84] sm:$0xff]
        %v5763 = vld [vmem:[%s2564 + $0x8c] sm:$0xf]
        %v5764 = vld [vmem:[%s2564 + $0x90] sm:$0xff]
        %v5765 = vld [vmem:[%s2564 + $0x98] sm:$0xf]
        %v5766 = vld [vmem:[%s2564 + $0x9c] sm:$0xff]
        %v5767 = vld [vmem:[%s2564 + $0xa4] sm:$0xf]
        %v5768 = vld [vmem:[%s2564 + $0xa8] sm:$0xff]
        %v5769 = vld [vmem:[%s2564 + $0xb0] sm:$0xf]
        %v5770 = vld [vmem:[%s2564 + $0xb4] sm:$0xff]
        %v5771 = vld [vmem:[%s2564 + $0xbc] sm:$0xf]
        %v5772 = vld [vmem:[%s2564 + $0xc0] sm:$0xff]
        %v5773 = vld [vmem:[%s2564 + $0xc8] sm:$0xf]
        %v5774 = vld [vmem:[%s2564 + $0xcc] sm:$0xff]
        %v5775 = vld [vmem:[%s2564 + $0xd4] sm:$0xf]
        %v5776 = vld [vmem:[%s2564 + $0xd8] sm:$0xff]
        %v5777 = vld [vmem:[%s2564 + $0xe0] sm:$0xf]
        %v5778 = vld [vmem:[%s2564 + $0xe4] sm:$0xff]
        %v5779 = vld [vmem:[%s2564 + $0xec] sm:$0xf]
        %v5780 = vld [vmem:[%s2564 + $0xf0] sm:$0xff]
        %v5781 = vld [vmem:[%s2564 + $0xf8] sm:$0xf]
        %v5782 = vld [vmem:[%s2564 + $0xfc] sm:$0xff]
        %v5783 = vld [vmem:[%s2564 + $0x104] sm:$0xf]
        %v5784 = vld [vmem:[%s2564 + $0x108] sm:$0xff]
        %v5785 = vld [vmem:[%s2564 + $0x110] sm:$0xf]
        %v5786 = vld [vmem:[%s2564 + $0x114] sm:$0xff]
        %v5787 = vld [vmem:[%s2564 + $0x11c] sm:$0xf]
        %v5788 = vld [vmem:[%s2564 + $0x120] sm:$0xff]
        %v5789 = vld [vmem:[%s2564 + $0x128] sm:$0xf]
        %v5790 = vld [vmem:[%s2564 + $0x12c] sm:$0xff]
        %v5791 = vld [vmem:[%s2564 + $0x134] sm:$0xf]
        %v5792 = vld [vmem:[%s2564 + $0x138] sm:$0xff]
        %v5793 = vld [vmem:[%s2564 + $0x140] sm:$0xf]
        %v5794 = vld [vmem:[%s2564 + $0x144] sm:$0xff]
        %v5795 = vld [vmem:[%s2564 + $0x14c] sm:$0xf]
        %v5796 = vld [vmem:[%s2564 + $0x150] sm:$0xff]
        %v5797 = vld [vmem:[%s2564 + $0x158] sm:$0xf]
        %v5798 = vld [vmem:[%s2564 + $0x15c] sm:$0xff]
        %v5799 = vld [vmem:[%s2564 + $0x164] sm:$0xf]
        %v5800 = vld [vmem:[%s2564 + $0x168] sm:$0xff]
        %v5801 = vld [vmem:[%s2564 + $0x170] sm:$0xf]
        %v5802 = vld [vmem:[%s2564 + $0x174] sm:$0xff]
        %v5803 = vld [vmem:[%s2564 + $0x17c] sm:$0xf]
        %s5804 = scalar_lea.vmem [#allocation10], 384
        %v5805 = vld [vmem:[%s5804] sm:$0xf]
        %v5806 = vld [vmem:[%s5804 + $0x4] sm:$0xf]
        %v5807 = vld [vmem:[%s5804 + $0x8] sm:$0xf]
        %v5808 = vld [vmem:[%s5804 + $0xc] sm:$0xf]
        %v5809 = vld [vmem:[%s5804 + $0x10] sm:$0xf]
        %v5810 = vld [vmem:[%s5804 + $0x14] sm:$0xf]
        %v5811 = vld [vmem:[%s5804 + $0x18] sm:$0xf]
        %v5812 = vld [vmem:[%s5804 + $0x1c] sm:$0xf]
        %v5813 = vld [vmem:[%s5804 + $0x20] sm:$0xf]
        %v5814 = vld [vmem:[%s5804 + $0x24] sm:$0xf]
        %v5815 = vld [vmem:[%s5804 + $0x28] sm:$0xf]
        %v5816 = vld [vmem:[%s5804 + $0x2c] sm:$0xf]
        %v5817 = vld [vmem:[%s5804 + $0x30] sm:$0xf]
        %v5818 = vld [vmem:[%s5804 + $0x34] sm:$0xf]
        %v5819 = vld [vmem:[%s5804 + $0x38] sm:$0xf]
        %v5820 = vld [vmem:[%s5804 + $0x3c] sm:$0xf]
        %v5821 = vld [vmem:[%s5804 + $0x40] sm:$0xf]
        %v5822 = vld [vmem:[%s5804 + $0x44] sm:$0xf]
        %v5823 = vld [vmem:[%s5804 + $0x48] sm:$0xf]
        %v5824 = vld [vmem:[%s5804 + $0x4c] sm:$0xf]
        %v5825 = vld [vmem:[%s5804 + $0x50] sm:$0xf]
        %v5826 = vld [vmem:[%s5804 + $0x54] sm:$0xf]
        %v5827 = vld [vmem:[%s5804 + $0x58] sm:$0xf]
        %v5828 = vld [vmem:[%s5804 + $0x5c] sm:$0xf]
        %v5829 = vld [vmem:[%s5804 + $0x60] sm:$0xf]
        %v5830 = vld [vmem:[%s5804 + $0x64] sm:$0xf]
        %v5831 = vld [vmem:[%s5804 + $0x68] sm:$0xf]
        %v5832 = vld [vmem:[%s5804 + $0x6c] sm:$0xf]
        %v5833 = vld [vmem:[%s5804 + $0x70] sm:$0xf]
        %v5834 = vld [vmem:[%s5804 + $0x74] sm:$0xf]
        %v5835 = vld [vmem:[%s5804 + $0x78] sm:$0xf]
        %v5836 = vld [vmem:[%s5804 + $0x7c] sm:$0xf]
        %v5837 = vld [vmem:[%s5804 + $0x80] sm:$0xf]
        %v5838 = vld [vmem:[%s5804 + $0x84] sm:$0xf]
        %v5839 = vld [vmem:[%s5804 + $0x88] sm:$0xf]
        %v5840 = vld [vmem:[%s5804 + $0x8c] sm:$0xf]
        %v5841 = vld [vmem:[%s5804 + $0x90] sm:$0xf]
        %v5842 = vld [vmem:[%s5804 + $0x94] sm:$0xf]
        %v5843 = vld [vmem:[%s5804 + $0x98] sm:$0xf]
        %v5844 = vld [vmem:[%s5804 + $0x9c] sm:$0xf]
        %v5845 = vld [vmem:[%s5804 + $0xa0] sm:$0xf]
        %v5846 = vld [vmem:[%s5804 + $0xa4] sm:$0xf]
        %v5847 = vld [vmem:[%s5804 + $0xa8] sm:$0xf]
        %v5848 = vld [vmem:[%s5804 + $0xac] sm:$0xf]
        %v5849 = vld [vmem:[%s5804 + $0xb0] sm:$0xf]
        %v5850 = vld [vmem:[%s5804 + $0xb4] sm:$0xf]
        %v5851 = vld [vmem:[%s5804 + $0xb8] sm:$0xf]
        %v5852 = vld [vmem:[%s5804 + $0xbc] sm:$0xf]
        %v5917 = vunpack.c.l.b16 %v5740
        %v5918 = vunpack.c.h.b16 %v5740
        %v5919 = vunpack.c.l.b16 %v5741
        %v5920 = vunpack.c.l.b16 %v5742
        %v5921 = vunpack.c.h.b16 %v5742
        %v5922 = vunpack.c.l.b16 %v5743
        %v5923 = vunpack.c.l.b16 %v5744
        %v5924 = vunpack.c.h.b16 %v5744
        %v5925 = vunpack.c.l.b16 %v5745
        %v5926 = vunpack.c.l.b16 %v5746
        %v5927 = vunpack.c.h.b16 %v5746
        %v5928 = vunpack.c.l.b16 %v5747
        %v5929 = vunpack.c.l.b16 %v5748
        %v5930 = vunpack.c.h.b16 %v5748
        %v5931 = vunpack.c.l.b16 %v5749
        %v5932 = vunpack.c.l.b16 %v5750
        %v5933 = vunpack.c.h.b16 %v5750
        %v5934 = vunpack.c.l.b16 %v5751
        %v5935 = vunpack.c.l.b16 %v5752
        %v5936 = vunpack.c.h.b16 %v5752
        %v5937 = vunpack.c.l.b16 %v5753
        %v5938 = vunpack.c.l.b16 %v5754
        %v5939 = vunpack.c.h.b16 %v5754
        %v5940 = vunpack.c.l.b16 %v5755
        %v5941 = vunpack.c.l.b16 %v5756
        %v5942 = vunpack.c.h.b16 %v5756
        %v5943 = vunpack.c.l.b16 %v5757
        %v5944 = vunpack.c.l.b16 %v5758
        %v5945 = vunpack.c.h.b16 %v5758
        %v5946 = vunpack.c.l.b16 %v5759
        %v5947 = vunpack.c.l.b16 %v5760
        %v5948 = vunpack.c.h.b16 %v5760
        %v5949 = vunpack.c.l.b16 %v5761
        %v5950 = vunpack.c.l.b16 %v5762
        %v5951 = vunpack.c.h.b16 %v5762
        %v5952 = vunpack.c.l.b16 %v5763
        %v5953 = vunpack.c.l.b16 %v5764
        %v5954 = vunpack.c.h.b16 %v5764
        %v5955 = vunpack.c.l.b16 %v5765
        %v5956 = vunpack.c.l.b16 %v5766
        %v5957 = vunpack.c.h.b16 %v5766
        %v5958 = vunpack.c.l.b16 %v5767
        %v5959 = vunpack.c.l.b16 %v5768
        %v5960 = vunpack.c.h.b16 %v5768
        %v5961 = vunpack.c.l.b16 %v5769
        %v5962 = vunpack.c.l.b16 %v5770
        %v5963 = vunpack.c.h.b16 %v5770
        %v5964 = vunpack.c.l.b16 %v5771
        %v5965 = vunpack.c.l.b16 %v5772
        %v5966 = vunpack.c.h.b16 %v5772
        %v5967 = vunpack.c.l.b16 %v5773
        %v5968 = vunpack.c.l.b16 %v5774
        %v5969 = vunpack.c.h.b16 %v5774
        %v5970 = vunpack.c.l.b16 %v5775
        %v5971 = vunpack.c.l.b16 %v5776
        %v5972 = vunpack.c.h.b16 %v5776
        %v5973 = vunpack.c.l.b16 %v5777
        %v5974 = vunpack.c.l.b16 %v5778
        %v5975 = vunpack.c.h.b16 %v5778
        %v5976 = vunpack.c.l.b16 %v5779
        %v5977 = vunpack.c.l.b16 %v5780
        %v5978 = vunpack.c.h.b16 %v5780
        %v5979 = vunpack.c.l.b16 %v5781
        %v5980 = vunpack.c.l.b16 %v5782
        %v5981 = vunpack.c.h.b16 %v5782
        %v5982 = vunpack.c.l.b16 %v5783
        %v5983 = vunpack.c.l.b16 %v5784
        %v5984 = vunpack.c.h.b16 %v5784
        %v5985 = vunpack.c.l.b16 %v5785
        %v5986 = vunpack.c.l.b16 %v5786
        %v5987 = vunpack.c.h.b16 %v5786
        %v5988 = vunpack.c.l.b16 %v5787
        %v5989 = vunpack.c.l.b16 %v5788
        %v5990 = vunpack.c.h.b16 %v5788
        %v5991 = vunpack.c.l.b16 %v5789
        %v5992 = vunpack.c.l.b16 %v5790
        %v5993 = vunpack.c.h.b16 %v5790
        %v5994 = vunpack.c.l.b16 %v5791
        %v5995 = vunpack.c.l.b16 %v5792
        %v5996 = vunpack.c.h.b16 %v5792
        %v5997 = vunpack.c.l.b16 %v5793
        %v5998 = vunpack.c.l.b16 %v5794
        %v5999 = vunpack.c.h.b16 %v5794
        %v6000 = vunpack.c.l.b16 %v5795
        %v6001 = vunpack.c.l.b16 %v5796
        %v6002 = vunpack.c.h.b16 %v5796
        %v6003 = vunpack.c.l.b16 %v5797
        %v6004 = vunpack.c.l.b16 %v5798
        %v6005 = vunpack.c.h.b16 %v5798
        %v6006 = vunpack.c.l.b16 %v5799
        %v6007 = vunpack.c.l.b16 %v5800
        %v6008 = vunpack.c.h.b16 %v5800
        %v6009 = vunpack.c.l.b16 %v5801
        %v6010 = vunpack.c.l.b16 %v5802
        %v6011 = vunpack.c.h.b16 %v5802
        %v6012 = vunpack.c.l.b16 %v5803
        %v6013 = vpack.c.b16 %v5920, %v5917
        %v6014 = vpack.c.b16 %v5921, %v5918
        %v6015 = vpack.c.b16 %v5922, %v5919
        %v6016 = vpack.c.b16 %v5926, %v5923
        %v6017 = vpack.c.b16 %v5927, %v5924
        %v6018 = vpack.c.b16 %v5928, %v5925
        %v6019 = vpack.c.b16 %v5932, %v5929
        %v6020 = vpack.c.b16 %v5933, %v5930
        %v6021 = vpack.c.b16 %v5934, %v5931
        %v6022 = vpack.c.b16 %v5938, %v5935
        %v6023 = vpack.c.b16 %v5939, %v5936
        %v6024 = vpack.c.b16 %v5940, %v5937
        %v6025 = vpack.c.b16 %v5944, %v5941
        %v6026 = vpack.c.b16 %v5945, %v5942
        %v6027 = vpack.c.b16 %v5946, %v5943
        %v6028 = vpack.c.b16 %v5950, %v5947
        %v6029 = vpack.c.b16 %v5951, %v5948
        %v6030 = vpack.c.b16 %v5952, %v5949
        %v6031 = vpack.c.b16 %v5956, %v5953
        %v6032 = vpack.c.b16 %v5957, %v5954
        %v6033 = vpack.c.b16 %v5958, %v5955
        %v6034 = vpack.c.b16 %v5962, %v5959
        %v6035 = vpack.c.b16 %v5963, %v5960
        %v6036 = vpack.c.b16 %v5964, %v5961
        %v6037 = vpack.c.b16 %v5968, %v5965
        %v6038 = vpack.c.b16 %v5969, %v5966
        %v6039 = vpack.c.b16 %v5970, %v5967
        %v6040 = vpack.c.b16 %v5974, %v5971
        %v6041 = vpack.c.b16 %v5975, %v5972
        %v6042 = vpack.c.b16 %v5976, %v5973
        %v6043 = vpack.c.b16 %v5980, %v5977
        %v6044 = vpack.c.b16 %v5981, %v5978
        %v6045 = vpack.c.b16 %v5982, %v5979
        %v6046 = vpack.c.b16 %v5986, %v5983
        %v6047 = vpack.c.b16 %v5987, %v5984
        %v6048 = vpack.c.b16 %v5988, %v5985
        %v6049 = vpack.c.b16 %v5992, %v5989
        %v6050 = vpack.c.b16 %v5993, %v5990
        %v6051 = vpack.c.b16 %v5994, %v5991
        %v6052 = vpack.c.b16 %v5998, %v5995
        %v6053 = vpack.c.b16 %v5999, %v5996
        %v6054 = vpack.c.b16 %v6000, %v5997
        %v6055 = vpack.c.b16 %v6004, %v6001
        %v6056 = vpack.c.b16 %v6005, %v6002
        %v6057 = vpack.c.b16 %v6006, %v6003
        %v6058 = vpack.c.b16 %v6010, %v6007
        %v6059 = vpack.c.b16 %v6011, %v6008
        %v6060 = vpack.c.b16 %v6012, %v6009
        %v6157 = vunpack.c.l.b16 %v5805
        %v6158 = vunpack.c.l.b16 %v5806
        %v6159 = vunpack.c.l.b16 %v5807
        %v6160 = vunpack.c.l.b16 %v5808
        %v6161 = vunpack.c.l.b16 %v5809
        %v6162 = vunpack.c.l.b16 %v5810
        %v6163 = vunpack.c.l.b16 %v5811
        %v6164 = vunpack.c.l.b16 %v5812
        %v6165 = vunpack.c.l.b16 %v5813
        %v6166 = vunpack.c.l.b16 %v5814
        %v6167 = vunpack.c.l.b16 %v5815
        %v6168 = vunpack.c.l.b16 %v5816
        %v6169 = vunpack.c.l.b16 %v5817
        %v6170 = vunpack.c.l.b16 %v5818
        %v6171 = vunpack.c.l.b16 %v5819
        %v6172 = vunpack.c.l.b16 %v5820
        %v6173 = vunpack.c.l.b16 %v5821
        %v6174 = vunpack.c.l.b16 %v5822
        %v6175 = vunpack.c.l.b16 %v5823
        %v6176 = vunpack.c.l.b16 %v5824
        %v6177 = vunpack.c.l.b16 %v5825
        %v6178 = vunpack.c.l.b16 %v5826
        %v6179 = vunpack.c.l.b16 %v5827
        %v6180 = vunpack.c.l.b16 %v5828
        %v6181 = vunpack.c.l.b16 %v5829
        %v6182 = vunpack.c.l.b16 %v5830
        %v6183 = vunpack.c.l.b16 %v5831
        %v6184 = vunpack.c.l.b16 %v5832
        %v6185 = vunpack.c.l.b16 %v5833
        %v6186 = vunpack.c.l.b16 %v5834
        %v6187 = vunpack.c.l.b16 %v5835
        %v6188 = vunpack.c.l.b16 %v5836
        %v6189 = vunpack.c.l.b16 %v5837
        %v6190 = vunpack.c.l.b16 %v5838
        %v6191 = vunpack.c.l.b16 %v5839
        %v6192 = vunpack.c.l.b16 %v5840
        %v6193 = vunpack.c.l.b16 %v5841
        %v6194 = vunpack.c.l.b16 %v5842
        %v6195 = vunpack.c.l.b16 %v5843
        %v6196 = vunpack.c.l.b16 %v5844
        %v6197 = vunpack.c.l.b16 %v5845
        %v6198 = vunpack.c.l.b16 %v5846
        %v6199 = vunpack.c.l.b16 %v5847
        %v6200 = vunpack.c.l.b16 %v5848
        %v6201 = vunpack.c.l.b16 %v5849
        %v6202 = vunpack.c.l.b16 %v5850
        %v6203 = vunpack.c.l.b16 %v5851
        %v6204 = vunpack.c.l.b16 %v5852
        %v6205 = vpack.c.b16 %v6158, %v6157
        %v6206 = vpack.c.b16 %v6160, %v6159
        %v6207 = vpack.c.b16 %v6162, %v6161
        %v6208 = vpack.c.b16 %v6164, %v6163
        %v6209 = vpack.c.b16 %v6166, %v6165
        %v6210 = vpack.c.b16 %v6168, %v6167
        %v6211 = vpack.c.b16 %v6170, %v6169
        %v6212 = vpack.c.b16 %v6172, %v6171
        %v6213 = vpack.c.b16 %v6174, %v6173
        %v6214 = vpack.c.b16 %v6176, %v6175
        %v6215 = vpack.c.b16 %v6178, %v6177
        %v6216 = vpack.c.b16 %v6180, %v6179
        %v6217 = vpack.c.b16 %v6182, %v6181
        %v6218 = vpack.c.b16 %v6184, %v6183
        %v6219 = vpack.c.b16 %v6186, %v6185
        %v6220 = vpack.c.b16 %v6188, %v6187
        %v6221 = vpack.c.b16 %v6190, %v6189
        %v6222 = vpack.c.b16 %v6192, %v6191
        %v6223 = vpack.c.b16 %v6194, %v6193
        %v6224 = vpack.c.b16 %v6196, %v6195
        %v6225 = vpack.c.b16 %v6198, %v6197
        %v6226 = vpack.c.b16 %v6200, %v6199
        %v6227 = vpack.c.b16 %v6202, %v6201
        %v6228 = vpack.c.b16 %v6204, %v6203
        %6253 = vmatpush.bf16.msra.mxu0 %v6212
        %6254 = vmatpush.bf16.msra.mxu0 %v6211
        %6255 = vmatpush.bf16.msra.mxu0 %v6210
        %6256 = vmatpush.bf16.msra.mxu0 %v6209
        %6257 = vmatpush.bf16.msra.mxu0 %v6208
        %6258 = vmatpush.bf16.msra.mxu0 %v6207
        %6259 = vmatpush.bf16.msra.mxu0 %v6206
        %6260 = vmatpush.bf16.msra.mxu0 %v6205
        %6261 = vmatmul.bf16.gmra.mxu0 %v6013
        %v6262 = vpop.f32.mrf.mxu0
        %v6263 = vadd.f32 0.0, %v6262
        %v6264 = vpop.f32.mrf.mxu0
        %v6265 = vadd.f32 0.0, %v6264
        %6266 = vmatmul.bf16.gmra.mxu0 %v6016
        %v6267 = vpop.f32.mrf.mxu0
        %v6268 = vadd.f32 0.0, %v6267
        %v6269 = vpop.f32.mrf.mxu0
        %v6270 = vadd.f32 0.0, %v6269
        %6271 = vmatmul.bf16.gmra.mxu0 %v6019
        %v6272 = vpop.f32.mrf.mxu0
        %v6273 = vadd.f32 0.0, %v6272
        %v6274 = vpop.f32.mrf.mxu0
        %v6275 = vadd.f32 0.0, %v6274
        %6276 = vmatmul.bf16.gmra.mxu0 %v6022
        %v6277 = vpop.f32.mrf.mxu0
        %v6278 = vadd.f32 0.0, %v6277
        %v6279 = vpop.f32.mrf.mxu0
        %v6280 = vadd.f32 0.0, %v6279
        %6281 = vmatmul.bf16.gmra.mxu0 %v6025
        %v6282 = vpop.f32.mrf.mxu0
        %v6283 = vadd.f32 0.0, %v6282
        %v6284 = vpop.f32.mrf.mxu0
        %v6285 = vadd.f32 0.0, %v6284
        %6286 = vmatmul.bf16.gmra.mxu0 %v6028
        %v6287 = vpop.f32.mrf.mxu0
        %v6288 = vadd.f32 0.0, %v6287
        %v6289 = vpop.f32.mrf.mxu0
        %v6290 = vadd.f32 0.0, %v6289
        %6291 = vmatmul.bf16.gmra.mxu0 %v6031
        %v6292 = vpop.f32.mrf.mxu0
        %v6293 = vadd.f32 0.0, %v6292
        %v6294 = vpop.f32.mrf.mxu0
        %v6295 = vadd.f32 0.0, %v6294
        %6296 = vmatmul.bf16.gmra.mxu0 %v6034
        %v6297 = vpop.f32.mrf.mxu0
        %v6298 = vadd.f32 0.0, %v6297
        %v6299 = vpop.f32.mrf.mxu0
        %v6300 = vadd.f32 0.0, %v6299
        %6301 = vmatmul.bf16.gmra.mxu0 %v6037
        %v6302 = vpop.f32.mrf.mxu0
        %v6303 = vadd.f32 0.0, %v6302
        %v6304 = vpop.f32.mrf.mxu0
        %v6305 = vadd.f32 0.0, %v6304
        %6306 = vmatmul.bf16.gmra.mxu0 %v6040
        %v6307 = vpop.f32.mrf.mxu0
        %v6308 = vadd.f32 0.0, %v6307
        %v6309 = vpop.f32.mrf.mxu0
        %v6310 = vadd.f32 0.0, %v6309
        %6311 = vmatmul.bf16.gmra.mxu0 %v6043
        %v6312 = vpop.f32.mrf.mxu0
        %v6313 = vadd.f32 0.0, %v6312
        %v6314 = vpop.f32.mrf.mxu0
        %v6315 = vadd.f32 0.0, %v6314
        %6316 = vmatmul.bf16.gmra.mxu0 %v6046
        %v6317 = vpop.f32.mrf.mxu0
        %v6318 = vadd.f32 0.0, %v6317
        %v6319 = vpop.f32.mrf.mxu0
        %v6320 = vadd.f32 0.0, %v6319
        %6321 = vmatmul.bf16.gmra.mxu0 %v6049
        %v6322 = vpop.f32.mrf.mxu0
        %v6323 = vadd.f32 0.0, %v6322
        %v6324 = vpop.f32.mrf.mxu0
        %v6325 = vadd.f32 0.0, %v6324
        %6326 = vmatmul.bf16.gmra.mxu0 %v6052
        %v6327 = vpop.f32.mrf.mxu0
        %v6328 = vadd.f32 0.0, %v6327
        %v6329 = vpop.f32.mrf.mxu0
        %v6330 = vadd.f32 0.0, %v6329
        %6331 = vmatmul.bf16.gmra.mxu0 %v6055
        %v6332 = vpop.f32.mrf.mxu0
        %v6333 = vadd.f32 0.0, %v6332
        %v6334 = vpop.f32.mrf.mxu0
        %v6335 = vadd.f32 0.0, %v6334
        %6336 = vmatmul.bf16.gmra.mxu0 %v6058
        %v6337 = vpop.f32.mrf.mxu0
        %v6338 = vadd.f32 0.0, %v6337
        %v6339 = vpop.f32.mrf.mxu0
        %v6340 = vadd.f32 0.0, %v6339
        %6341 = vdwg.mxu0
        %6342 = vmatpush.bf16.msra.mxu0 %v6220
        %6343 = vmatpush.bf16.msra.mxu0 %v6219
        %6344 = vmatpush.bf16.msra.mxu0 %v6218
        %6345 = vmatpush.bf16.msra.mxu0 %v6217
        %6346 = vmatpush.bf16.msra.mxu0 %v6216
        %6347 = vmatpush.bf16.msra.mxu0 %v6215
        %6348 = vmatpush.bf16.msra.mxu0 %v6214
        %6349 = vmatpush.bf16.msra.mxu0 %v6213
        %6350 = vmatmul.bf16.gmra.mxu0 %v6014
        %v6351 = vpop.f32.mrf.mxu0
        %v6352 = vadd.f32 %v6263, %v6351
        %v6353 = vpop.f32.mrf.mxu0
        %v6354 = vadd.f32 %v6265, %v6353
        %6355 = vmatmul.bf16.gmra.mxu0 %v6017
        %v6356 = vpop.f32.mrf.mxu0
        %v6357 = vadd.f32 %v6268, %v6356
        %v6358 = vpop.f32.mrf.mxu0
        %v6359 = vadd.f32 %v6270, %v6358
        %6360 = vmatmul.bf16.gmra.mxu0 %v6020
        %v6361 = vpop.f32.mrf.mxu0
        %v6362 = vadd.f32 %v6273, %v6361
        %v6363 = vpop.f32.mrf.mxu0
        %v6364 = vadd.f32 %v6275, %v6363
        %6365 = vmatmul.bf16.gmra.mxu0 %v6023
        %v6366 = vpop.f32.mrf.mxu0
        %v6367 = vadd.f32 %v6278, %v6366
        %v6368 = vpop.f32.mrf.mxu0
        %v6369 = vadd.f32 %v6280, %v6368
        %6370 = vmatmul.bf16.gmra.mxu0 %v6026
        %v6371 = vpop.f32.mrf.mxu0
        %v6372 = vadd.f32 %v6283, %v6371
        %v6373 = vpop.f32.mrf.mxu0
        %v6374 = vadd.f32 %v6285, %v6373
        %6375 = vmatmul.bf16.gmra.mxu0 %v6029
        %v6376 = vpop.f32.mrf.mxu0
        %v6377 = vadd.f32 %v6288, %v6376
        %v6378 = vpop.f32.mrf.mxu0
        %v6379 = vadd.f32 %v6290, %v6378
        %6380 = vmatmul.bf16.gmra.mxu0 %v6032
        %v6381 = vpop.f32.mrf.mxu0
        %v6382 = vadd.f32 %v6293, %v6381
        %v6383 = vpop.f32.mrf.mxu0
        %v6384 = vadd.f32 %v6295, %v6383
        %6385 = vmatmul.bf16.gmra.mxu0 %v6035
        %v6386 = vpop.f32.mrf.mxu0
        %v6387 = vadd.f32 %v6298, %v6386
        %v6388 = vpop.f32.mrf.mxu0
        %v6389 = vadd.f32 %v6300, %v6388
        %6390 = vmatmul.bf16.gmra.mxu0 %v6038
        %v6391 = vpop.f32.mrf.mxu0
        %v6392 = vadd.f32 %v6303, %v6391
        %v6393 = vpop.f32.mrf.mxu0
        %v6394 = vadd.f32 %v6305, %v6393
        %6395 = vmatmul.bf16.gmra.mxu0 %v6041
        %v6396 = vpop.f32.mrf.mxu0
        %v6397 = vadd.f32 %v6308, %v6396
        %v6398 = vpop.f32.mrf.mxu0
        %v6399 = vadd.f32 %v6310, %v6398
        %6400 = vmatmul.bf16.gmra.mxu0 %v6044
        %v6401 = vpop.f32.mrf.mxu0
        %v6402 = vadd.f32 %v6313, %v6401
        %v6403 = vpop.f32.mrf.mxu0
        %v6404 = vadd.f32 %v6315, %v6403
        %6405 = vmatmul.bf16.gmra.mxu0 %v6047
        %v6406 = vpop.f32.mrf.mxu0
        %v6407 = vadd.f32 %v6318, %v6406
        %v6408 = vpop.f32.mrf.mxu0
        %v6409 = vadd.f32 %v6320, %v6408
        %6410 = vmatmul.bf16.gmra.mxu0 %v6050
        %v6411 = vpop.f32.mrf.mxu0
        %v6412 = vadd.f32 %v6323, %v6411
        %v6413 = vpop.f32.mrf.mxu0
        %v6414 = vadd.f32 %v6325, %v6413
        %6415 = vmatmul.bf16.gmra.mxu0 %v6053
        %v6416 = vpop.f32.mrf.mxu0
        %v6417 = vadd.f32 %v6328, %v6416
        %v6418 = vpop.f32.mrf.mxu0
        %v6419 = vadd.f32 %v6330, %v6418
        %6420 = vmatmul.bf16.gmra.mxu0 %v6056
        %v6421 = vpop.f32.mrf.mxu0
        %v6422 = vadd.f32 %v6333, %v6421
        %v6423 = vpop.f32.mrf.mxu0
        %v6424 = vadd.f32 %v6335, %v6423
        %6425 = vmatmul.bf16.gmra.mxu0 %v6059
        %v6426 = vpop.f32.mrf.mxu0
        %v6427 = vadd.f32 %v6338, %v6426
        %v6428 = vpop.f32.mrf.mxu0
        %v6429 = vadd.f32 %v6340, %v6428
        %6430 = vdwg.mxu0
        %6431 = vmatpush.bf16.msra.mxu0 %v6228
        %6432 = vmatpush.bf16.msra.mxu0 %v6227
        %6433 = vmatpush.bf16.msra.mxu0 %v6226
        %6434 = vmatpush.bf16.msra.mxu0 %v6225
        %6435 = vmatpush.bf16.msra.mxu0 %v6224
        %6436 = vmatpush.bf16.msra.mxu0 %v6223
        %6437 = vmatpush.bf16.msra.mxu0 %v6222
        %6438 = vmatpush.bf16.msra.mxu0 %v6221
        %6439 = vmatmul.bf16.gmra.mxu0 %v6015
        %v6440 = vpop.f32.mrf.mxu0
        %v6441 = vadd.f32 %v6352, %v6440
        %v6442 = vpop.f32.mrf.mxu0
        %v6443 = vadd.f32 %v6354, %v6442
        %6444 = vmatmul.bf16.gmra.mxu0 %v6018
        %v6445 = vpop.f32.mrf.mxu0
        %v6446 = vadd.f32 %v6357, %v6445
        %v6447 = vpop.f32.mrf.mxu0
        %v6448 = vadd.f32 %v6359, %v6447
        %6449 = vmatmul.bf16.gmra.mxu0 %v6021
        %v6450 = vpop.f32.mrf.mxu0
        %v6451 = vadd.f32 %v6362, %v6450
        %v6452 = vpop.f32.mrf.mxu0
        %v6453 = vadd.f32 %v6364, %v6452
        %6454 = vmatmul.bf16.gmra.mxu0 %v6024
        %v6455 = vpop.f32.mrf.mxu0
        %v6456 = vadd.f32 %v6367, %v6455
        %v6457 = vpop.f32.mrf.mxu0
        %v6458 = vadd.f32 %v6369, %v6457
        %6459 = vmatmul.bf16.gmra.mxu0 %v6027
        %v6460 = vpop.f32.mrf.mxu0
        %v6461 = vadd.f32 %v6372, %v6460
        %v6462 = vpop.f32.mrf.mxu0
        %v6463 = vadd.f32 %v6374, %v6462
        %6464 = vmatmul.bf16.gmra.mxu0 %v6030
        %v6465 = vpop.f32.mrf.mxu0
        %v6466 = vadd.f32 %v6377, %v6465
        %v6467 = vpop.f32.mrf.mxu0
        %v6468 = vadd.f32 %v6379, %v6467
        %6469 = vmatmul.bf16.gmra.mxu0 %v6033
        %v6470 = vpop.f32.mrf.mxu0
        %v6471 = vadd.f32 %v6382, %v6470
        %v6472 = vpop.f32.mrf.mxu0
        %v6473 = vadd.f32 %v6384, %v6472
        %6474 = vmatmul.bf16.gmra.mxu0 %v6036
        %v6475 = vpop.f32.mrf.mxu0
        %v6476 = vadd.f32 %v6387, %v6475
        %v6477 = vpop.f32.mrf.mxu0
        %v6478 = vadd.f32 %v6389, %v6477
        %6479 = vmatmul.bf16.gmra.mxu0 %v6039
        %v6480 = vpop.f32.mrf.mxu0
        %v6481 = vadd.f32 %v6392, %v6480
        %v6482 = vpop.f32.mrf.mxu0
        %v6483 = vadd.f32 %v6394, %v6482
        %6484 = vmatmul.bf16.gmra.mxu0 %v6042
        %v6485 = vpop.f32.mrf.mxu0
        %v6486 = vadd.f32 %v6397, %v6485
        %v6487 = vpop.f32.mrf.mxu0
        %v6488 = vadd.f32 %v6399, %v6487
        %6489 = vmatmul.bf16.gmra.mxu0 %v6045
        %v6490 = vpop.f32.mrf.mxu0
        %v6491 = vadd.f32 %v6402, %v6490
        %v6492 = vpop.f32.mrf.mxu0
        %v6493 = vadd.f32 %v6404, %v6492
        %6494 = vmatmul.bf16.gmra.mxu0 %v6048
        %v6495 = vpop.f32.mrf.mxu0
        %v6496 = vadd.f32 %v6407, %v6495
        %v6497 = vpop.f32.mrf.mxu0
        %v6498 = vadd.f32 %v6409, %v6497
        %6499 = vmatmul.bf16.gmra.mxu0 %v6051
        %v6500 = vpop.f32.mrf.mxu0
        %v6501 = vadd.f32 %v6412, %v6500
        %v6502 = vpop.f32.mrf.mxu0
        %v6503 = vadd.f32 %v6414, %v6502
        %6504 = vmatmul.bf16.gmra.mxu0 %v6054
        %v6505 = vpop.f32.mrf.mxu0
        %v6506 = vadd.f32 %v6417, %v6505
        %v6507 = vpop.f32.mrf.mxu0
        %v6508 = vadd.f32 %v6419, %v6507
        %6509 = vmatmul.bf16.gmra.mxu0 %v6057
        %v6510 = vpop.f32.mrf.mxu0
        %v6511 = vadd.f32 %v6422, %v6510
        %v6512 = vpop.f32.mrf.mxu0
        %v6513 = vadd.f32 %v6424, %v6512
        %6514 = vmatmul.bf16.gmra.mxu0 %v6060
        %v6515 = vpop.f32.mrf.mxu0
        %v6516 = vadd.f32 %v6427, %v6515
        %v6517 = vpop.f32.mrf.mxu0
        %v6518 = vadd.f32 %v6429, %v6517
        %6519 = vdwg.mxu0
        %v6520 = vld [vmem:[#allocation4] sm:$0xff]
        %v6521 = vld [vmem:[#allocation4 + $0x8] sm:$0xff]
        %v6522 = vld [vmem:[#allocation4 + $0x10] sm:$0xff]
        %v6523 = vld [vmem:[#allocation4 + $0x18] sm:$0xff]
        %v6524 = vld [vmem:[#allocation4 + $0x20] sm:$0xff]
        %v6525 = vld [vmem:[#allocation4 + $0x28] sm:$0xff]
        %v6526 = vld [vmem:[#allocation4 + $0x30] sm:$0xff]
        %v6527 = vld [vmem:[#allocation4 + $0x38] sm:$0xff]
        %v6528 = vld [vmem:[#allocation4 + $0x40] sm:$0xff]
        %v6529 = vld [vmem:[#allocation4 + $0x48] sm:$0xff]
        %v6530 = vld [vmem:[#allocation4 + $0x50] sm:$0xff]
        %v6531 = vld [vmem:[#allocation4 + $0x58] sm:$0xff]
        %v6532 = vld [vmem:[#allocation4 + $0x60] sm:$0xff]
        %v6533 = vld [vmem:[#allocation4 + $0x68] sm:$0xff]
        %v6534 = vld [vmem:[#allocation4 + $0x70] sm:$0xff]
        %v6535 = vld [vmem:[#allocation4 + $0x78] sm:$0xff]
        %v6536 = vld [vmem:[#allocation4 + $0x80] sm:$0xff]
        %v6537 = vld [vmem:[#allocation4 + $0x88] sm:$0xff]
        %v6538 = vld [vmem:[#allocation4 + $0x90] sm:$0xff]
        %v6539 = vld [vmem:[#allocation4 + $0x98] sm:$0xff]
        %v6540 = vld [vmem:[#allocation4 + $0xa0] sm:$0xff]
        %v6541 = vld [vmem:[#allocation4 + $0xa8] sm:$0xff]
        %v6542 = vld [vmem:[#allocation4 + $0xb0] sm:$0xff]
        %v6543 = vld [vmem:[#allocation4 + $0xb8] sm:$0xff]
        %v6544 = vld [vmem:[#allocation4 + $0xc0] sm:$0xff]
        %v6545 = vld [vmem:[#allocation4 + $0xc8] sm:$0xff]
        %v6546 = vld [vmem:[#allocation4 + $0xd0] sm:$0xff]
        %v6547 = vld [vmem:[#allocation4 + $0xd8] sm:$0xff]
        %v6548 = vld [vmem:[#allocation4 + $0xe0] sm:$0xff]
        %v6549 = vld [vmem:[#allocation4 + $0xe8] sm:$0xff]
        %v6550 = vld [vmem:[#allocation4 + $0xf0] sm:$0xff]
        %v6551 = vld [vmem:[#allocation4 + $0xf8] sm:$0xff]
        %v6552 = vadd.f32 %v6520, %v6441
        %v6553 = vadd.f32 %v6521, %v6443
        %v6554 = vadd.f32 %v6522, %v6446
        %v6555 = vadd.f32 %v6523, %v6448
        %v6556 = vadd.f32 %v6524, %v6451
        %v6557 = vadd.f32 %v6525, %v6453
        %v6558 = vadd.f32 %v6526, %v6456
        %v6559 = vadd.f32 %v6527, %v6458
        %v6560 = vadd.f32 %v6528, %v6461
        %v6561 = vadd.f32 %v6529, %v6463
        %v6562 = vadd.f32 %v6530, %v6466
        %v6563 = vadd.f32 %v6531, %v6468
        %v6564 = vadd.f32 %v6532, %v6471
        %v6565 = vadd.f32 %v6533, %v6473
        %v6566 = vadd.f32 %v6534, %v6476
        %v6567 = vadd.f32 %v6535, %v6478
        %v6568 = vadd.f32 %v6536, %v6481
        %v6569 = vadd.f32 %v6537, %v6483
        %v6570 = vadd.f32 %v6538, %v6486
        %v6571 = vadd.f32 %v6539, %v6488
        %v6572 = vadd.f32 %v6540, %v6491
        %v6573 = vadd.f32 %v6541, %v6493
        %v6574 = vadd.f32 %v6542, %v6496
        %v6575 = vadd.f32 %v6543, %v6498
        %v6576 = vadd.f32 %v6544, %v6501
        %v6577 = vadd.f32 %v6545, %v6503
        %v6578 = vadd.f32 %v6546, %v6506
        %v6579 = vadd.f32 %v6547, %v6508
        %v6580 = vadd.f32 %v6548, %v6511
        %v6581 = vadd.f32 %v6549, %v6513
        %v6582 = vadd.f32 %v6550, %v6516
        %v6583 = vadd.f32 %v6551, %v6518
        %6584 = vst [vmem:[#allocation4] sm:$0xff] %v6552
        %6585 = vst [vmem:[#allocation4 + $0x8] sm:$0xff] %v6553
        %6586 = vst [vmem:[#allocation4 + $0x10] sm:$0xff] %v6554
        %6587 = vst [vmem:[#allocation4 + $0x18] sm:$0xff] %v6555
        %6588 = vst [vmem:[#allocation4 + $0x20] sm:$0xff] %v6556
        %6589 = vst [vmem:[#allocation4 + $0x28] sm:$0xff] %v6557
        %6590 = vst [vmem:[#allocation4 + $0x30] sm:$0xff] %v6558
        %6591 = vst [vmem:[#allocation4 + $0x38] sm:$0xff] %v6559
        %6592 = vst [vmem:[#allocation4 + $0x40] sm:$0xff] %v6560
        %6593 = vst [vmem:[#allocation4 + $0x48] sm:$0xff] %v6561
        %6594 = vst [vmem:[#allocation4 + $0x50] sm:$0xff] %v6562
        %6595 = vst [vmem:[#allocation4 + $0x58] sm:$0xff] %v6563
        %6596 = vst [vmem:[#allocation4 + $0x60] sm:$0xff] %v6564
        %6597 = vst [vmem:[#allocation4 + $0x68] sm:$0xff] %v6565
        %6598 = vst [vmem:[#allocation4 + $0x70] sm:$0xff] %v6566
        %6599 = vst [vmem:[#allocation4 + $0x78] sm:$0xff] %v6567
        %6600 = vst [vmem:[#allocation4 + $0x80] sm:$0xff] %v6568
        %6601 = vst [vmem:[#allocation4 + $0x88] sm:$0xff] %v6569
        %6602 = vst [vmem:[#allocation4 + $0x90] sm:$0xff] %v6570
        %6603 = vst [vmem:[#allocation4 + $0x98] sm:$0xff] %v6571
        %6604 = vst [vmem:[#allocation4 + $0xa0] sm:$0xff] %v6572
        %6605 = vst [vmem:[#allocation4 + $0xa8] sm:$0xff] %v6573
        %6606 = vst [vmem:[#allocation4 + $0xb0] sm:$0xff] %v6574
        %6607 = vst [vmem:[#allocation4 + $0xb8] sm:$0xff] %v6575
        %6608 = vst [vmem:[#allocation4 + $0xc0] sm:$0xff] %v6576
        %6609 = vst [vmem:[#allocation4 + $0xc8] sm:$0xff] %v6577
        %6610 = vst [vmem:[#allocation4 + $0xd0] sm:$0xff] %v6578
        %6611 = vst [vmem:[#allocation4 + $0xd8] sm:$0xff] %v6579
        %6612 = vst [vmem:[#allocation4 + $0xe0] sm:$0xff] %v6580
        %6613 = vst [vmem:[#allocation4 + $0xe8] sm:$0xff] %v6581
        %6614 = vst [vmem:[#allocation4 + $0xf0] sm:$0xff] %v6582
        %6615 = vst [vmem:[#allocation4 + $0xf8] sm:$0xff] %v6583
        %v6616 = vld [vmem:[#allocation4] sm:$0xff]
        %v6617 = vld [vmem:[#allocation4 + $0x8] sm:$0xff]
        %v6618 = vld [vmem:[#allocation4 + $0x10] sm:$0xff]
        %v6619 = vld [vmem:[#allocation4 + $0x18] sm:$0xff]
        %v6620 = vld [vmem:[#allocation4 + $0x20] sm:$0xff]
        %v6621 = vld [vmem:[#allocation4 + $0x28] sm:$0xff]
        %v6622 = vld [vmem:[#allocation4 + $0x30] sm:$0xff]
        %v6623 = vld [vmem:[#allocation4 + $0x38] sm:$0xff]
        %v6624 = vld [vmem:[#allocation4 + $0x40] sm:$0xff]
        %v6625 = vld [vmem:[#allocation4 + $0x48] sm:$0xff]
        %v6626 = vld [vmem:[#allocation4 + $0x50] sm:$0xff]
        %v6627 = vld [vmem:[#allocation4 + $0x58] sm:$0xff]
        %v6628 = vld [vmem:[#allocation4 + $0x60] sm:$0xff]
        %v6629 = vld [vmem:[#allocation4 + $0x68] sm:$0xff]
        %v6630 = vld [vmem:[#allocation4 + $0x70] sm:$0xff]
        %v6631 = vld [vmem:[#allocation4 + $0x78] sm:$0xff]
        %v6632 = vld [vmem:[#allocation4 + $0x80] sm:$0xff]
        %v6633 = vld [vmem:[#allocation4 + $0x88] sm:$0xff]
        %v6634 = vld [vmem:[#allocation4 + $0x90] sm:$0xff]
        %v6635 = vld [vmem:[#allocation4 + $0x98] sm:$0xff]
        %v6636 = vld [vmem:[#allocation4 + $0xa0] sm:$0xff]
        %v6637 = vld [vmem:[#allocation4 + $0xa8] sm:$0xff]
        %v6638 = vld [vmem:[#allocation4 + $0xb0] sm:$0xff]
        %v6639 = vld [vmem:[#allocation4 + $0xb8] sm:$0xff]
        %v6640 = vld [vmem:[#allocation4 + $0xc0] sm:$0xff]
        %v6641 = vld [vmem:[#allocation4 + $0xc8] sm:$0xff]
        %v6642 = vld [vmem:[#allocation4 + $0xd0] sm:$0xff]
        %v6643 = vld [vmem:[#allocation4 + $0xd8] sm:$0xff]
        %v6644 = vld [vmem:[#allocation4 + $0xe0] sm:$0xff]
        %v6645 = vld [vmem:[#allocation4 + $0xe8] sm:$0xff]
        %v6646 = vld [vmem:[#allocation4 + $0xf0] sm:$0xff]
        %v6647 = vld [vmem:[#allocation4 + $0xf8] sm:$0xff]
        %v6648 = vld [vmem:[%s190] sm:$0xff]
        %v6649 = vld [vmem:[%s190 + $0x8] sm:$0xff]
        %v6650 = vld [vmem:[%s190 + $0x10] sm:$0xff]
        %v6651 = vld [vmem:[%s190 + $0x18] sm:$0xff]
        %v6652 = vld [vmem:[%s190 + $0x20] sm:$0xff]
        %v6653 = vld [vmem:[%s190 + $0x28] sm:$0xff]
        %v6654 = vld [vmem:[%s190 + $0x30] sm:$0xff]
        %v6655 = vld [vmem:[%s190 + $0x38] sm:$0xff]
        %v6656 = vld [vmem:[%s190 + $0x40] sm:$0xff]
        %v6657 = vld [vmem:[%s190 + $0x48] sm:$0xff]
        %v6658 = vld [vmem:[%s190 + $0x50] sm:$0xff]
        %v6659 = vld [vmem:[%s190 + $0x58] sm:$0xff]
        %v6660 = vld [vmem:[%s190 + $0x60] sm:$0xff]
        %v6661 = vld [vmem:[%s190 + $0x68] sm:$0xff]
        %v6662 = vld [vmem:[%s190 + $0x70] sm:$0xff]
        %v6663 = vld [vmem:[%s190 + $0x78] sm:$0xff]
        %v6664 = vld [vmem:[%s190 + $0x80] sm:$0xff]
        %v6665 = vld [vmem:[%s190 + $0x88] sm:$0xff]
        %v6666 = vld [vmem:[%s190 + $0x90] sm:$0xff]
        %v6667 = vld [vmem:[%s190 + $0x98] sm:$0xff]
        %v6668 = vld [vmem:[%s190 + $0xa0] sm:$0xff]
        %v6669 = vld [vmem:[%s190 + $0xa8] sm:$0xff]
        %v6670 = vld [vmem:[%s190 + $0xb0] sm:$0xff]
        %v6671 = vld [vmem:[%s190 + $0xb8] sm:$0xff]
        %v6672 = vld [vmem:[%s190 + $0xc0] sm:$0xff]
        %v6673 = vld [vmem:[%s190 + $0xc8] sm:$0xff]
        %v6674 = vld [vmem:[%s190 + $0xd0] sm:$0xff]
        %v6675 = vld [vmem:[%s190 + $0xd8] sm:$0xff]
        %v6676 = vld [vmem:[%s190 + $0xe0] sm:$0xff]
        %v6677 = vld [vmem:[%s190 + $0xe8] sm:$0xff]
        %v6678 = vld [vmem:[%s190 + $0xf0] sm:$0xff]
        %v6679 = vld [vmem:[%s190 + $0xf8] sm:$0xff]
        %v6680 = vadd.f32 %v6616, %v6648
        %v6681 = vadd.f32 %v6617, %v6649
        %v6682 = vadd.f32 %v6618, %v6650
        %v6683 = vadd.f32 %v6619, %v6651
        %v6684 = vadd.f32 %v6620, %v6652
        %v6685 = vadd.f32 %v6621, %v6653
        %v6686 = vadd.f32 %v6622, %v6654
        %v6687 = vadd.f32 %v6623, %v6655
        %v6688 = vadd.f32 %v6624, %v6656
        %v6689 = vadd.f32 %v6625, %v6657
        %v6690 = vadd.f32 %v6626, %v6658
        %v6691 = vadd.f32 %v6627, %v6659
        %v6692 = vadd.f32 %v6628, %v6660
        %v6693 = vadd.f32 %v6629, %v6661
        %v6694 = vadd.f32 %v6630, %v6662
        %v6695 = vadd.f32 %v6631, %v6663
        %v6696 = vadd.f32 %v6632, %v6664
        %v6697 = vadd.f32 %v6633, %v6665
        %v6698 = vadd.f32 %v6634, %v6666
        %v6699 = vadd.f32 %v6635, %v6667
        %v6700 = vadd.f32 %v6636, %v6668
        %v6701 = vadd.f32 %v6637, %v6669
        %v6702 = vadd.f32 %v6638, %v6670
        %v6703 = vadd.f32 %v6639, %v6671
        %v6704 = vadd.f32 %v6640, %v6672
        %v6705 = vadd.f32 %v6641, %v6673
        %v6706 = vadd.f32 %v6642, %v6674
        %v6707 = vadd.f32 %v6643, %v6675
        %v6708 = vadd.f32 %v6644, %v6676
        %v6709 = vadd.f32 %v6645, %v6677
        %v6710 = vadd.f32 %v6646, %v6678
        %v6711 = vadd.f32 %v6647, %v6679
        %6712 = vst [vmem:[%s223] sm:$0xff] %v6680
        %6713 = vst [vmem:[%s223 + $0x8] sm:$0xff] %v6681
        %6714 = vst [vmem:[%s223 + $0x10] sm:$0xff] %v6682
        %6715 = vst [vmem:[%s223 + $0x18] sm:$0xff] %v6683
        %6716 = vst [vmem:[%s223 + $0x20] sm:$0xff] %v6684
        %6717 = vst [vmem:[%s223 + $0x28] sm:$0xff] %v6685
        %6718 = vst [vmem:[%s223 + $0x30] sm:$0xff] %v6686
        %6719 = vst [vmem:[%s223 + $0x38] sm:$0xff] %v6687
        %6720 = vst [vmem:[%s223 + $0x40] sm:$0xff] %v6688
        %6721 = vst [vmem:[%s223 + $0x48] sm:$0xff] %v6689
        %6722 = vst [vmem:[%s223 + $0x50] sm:$0xff] %v6690
        %6723 = vst [vmem:[%s223 + $0x58] sm:$0xff] %v6691
        %6724 = vst [vmem:[%s223 + $0x60] sm:$0xff] %v6692
        %6725 = vst [vmem:[%s223 + $0x68] sm:$0xff] %v6693
        %6726 = vst [vmem:[%s223 + $0x70] sm:$0xff] %v6694
        %6727 = vst [vmem:[%s223 + $0x78] sm:$0xff] %v6695
        %6728 = vst [vmem:[%s223 + $0x80] sm:$0xff] %v6696
        %6729 = vst [vmem:[%s223 + $0x88] sm:$0xff] %v6697
        %6730 = vst [vmem:[%s223 + $0x90] sm:$0xff] %v6698
        %6731 = vst [vmem:[%s223 + $0x98] sm:$0xff] %v6699
        %6732 = vst [vmem:[%s223 + $0xa0] sm:$0xff] %v6700
        %6733 = vst [vmem:[%s223 + $0xa8] sm:$0xff] %v6701
        %6734 = vst [vmem:[%s223 + $0xb0] sm:$0xff] %v6702
        %6735 = vst [vmem:[%s223 + $0xb8] sm:$0xff] %v6703
        %6736 = vst [vmem:[%s223 + $0xc0] sm:$0xff] %v6704
        %6737 = vst [vmem:[%s223 + $0xc8] sm:$0xff] %v6705
        %6738 = vst [vmem:[%s223 + $0xd0] sm:$0xff] %v6706
        %6739 = vst [vmem:[%s223 + $0xd8] sm:$0xff] %v6707
        %6740 = vst [vmem:[%s223 + $0xe0] sm:$0xff] %v6708
        %6741 = vst [vmem:[%s223 + $0xe8] sm:$0xff] %v6709
        %6742 = vst [vmem:[%s223 + $0xf0] sm:$0xff] %v6710
        %6743 = vst [vmem:[%s223 + $0xf8] sm:$0xff] %v6711
        %s6744 = sand.u32 %s97, 1
        %s6745 = scalar_lea.sflag [#allocation7], %s6744
        %s6746 = sand.u32 %s97, 1
        %s6747 = smul.addr %s6746, 256
        %s6748 = scalar_lea.vmem [#allocation11], %s6747
        // Predicated region
        $region45: #{tpu_custom_call.1} parent=31 // pred_check
          %p6749 = pneg %p107
        $region46: #{tpu_custom_call.1} parent=31 // pred_check_branch
          %6751 = sbr.rel (%p6749) target = $region48
        $region47: #{tpu_custom_call.1} parent=31 // pred_region
          %6753 = vsyncadd %s6745, 0
          %s6754 = smul.addr %s21, 32
          %s6755 = smul.addr %s6754, 8
          %s6756 = scalar_lea.hbm %s3, %s6755
          %s6757 = sshll.u32 %s6748, 4
          %s6758 = int_to_ptr.vmem [resolvable:$true] %s6757
          %s6759 = sshll.u32 %s6756, 4
          %s6760 = int_to_ptr.hbm [resolvable:$true] %s6759
          %6765 = dma.vmem_to_hbm [thread:$0]  %s6758, 4096, %s6760, %s6745, 128, 128, 8
        $region48: #{tpu_custom_call.1} parent=31 // pred_fallthru
          _
      $region32: #{tpu_custom_call.1} parent=5 // pred_fallthru
        _
      %p6766 = scmp.le.s32.totalorder 2, %s16
      // Predicated region
      $region49: #{tpu_custom_call.1} parent=5 // pred_check
        %p6767 = pneg %p6766
      $region50: #{tpu_custom_call.1} parent=5 // pred_check_branch
        %6769 = sbr.rel (%p6767) target = $region52
      $region51: #{tpu_custom_call.1} parent=5 // pred_region
        %s6770 = ssub.s32 %s16, 2
        // Predicated region
        $region53: #{tpu_custom_call.1} parent=51 // pred_check
          %p6771 = pneg %p113
        $region54: #{tpu_custom_call.1} parent=51 // pred_check_branch
          %6773 = sbr.rel (%p6771) target = $region56
        $region55: #{tpu_custom_call.1} parent=51 // pred_region
          %s6774 = sand.u32 %s98, 1
          %s6775 = scalar_lea.sflag [#allocation7], %s6774
          %s6776 = sand.u32 %s98, 1
          %s6777 = smul.addr %s6776, 256
          %s6778 = scalar_lea.vmem [#allocation11], %s6777
          %6780 = dma.done %s6775, 4096
        $region56: #{tpu_custom_call.1} parent=51 // pred_fallthru
          _
      $region52: #{tpu_custom_call.1} parent=5 // pred_fallthru
        _
    $region6: #{tpu_custom_call.1} parent=1 // loop_footer
      %s20 = sadd.s32 1, %s16
    $region7: #{tpu_custom_call.1} parent=1 // loop_footer_branch
      %15 = sbr.rel target = $region3
    $region8: #{tpu_custom_call.1} parent=1 // loop_exit
      _
    %6781 = vsyncpa [#allocation6], 1
    %s6782 = scalar_lea.sflag [#allocation6], 1
    %6783 = vsyncpa %s6782, 1
    %6784 = vsyncpa [#allocation9], 1
    %6785 = vsyncpa [#allocation7], 1
    %s6786 = scalar_lea.sflag [#allocation7], 1
    %6787 = vsyncpa %s6786, 1

</llo_original>
